<compile_context>
chip_gen: v5e
topology: v5e:2x2
jax: 0.10.0
libtpu: 0.0.40
codegen_flags: <defaults>
</compile_context>

<pallas_src>
import functools

import jax
import jax.numpy as jnp
from jax import lax
from jax.experimental import pallas as pl
from jax.experimental.pallas import tpu as pltpu  # noqa: F401  (TPU backend assumed)


# (Ci, Co, K, stride, padding) — mirrors the nn.ConvTranspose2d calls in __init__.
_LAYERS = [
    (None, 128, 4, 1, 0),
    (128, 64, 3, 2, 1),
    (64, 32, 4, 2, 1),
    (32, 1, 4, 2, 1),
]
_BN_EPS = 1e-5


# ----------------------------- Pallas kernels ------------------------------ #

def _convt_relu_bn_kernel(xw_ref, w_ref, b_ref, g_ref, beta_ref, o_ref, *, wrow, eps):
    """Fused ConvTranspose2d + bias + ReLU + BatchNorm2d (batch statistics).

    xw_ref : (Hp*N*Wo, K*Ci)  rows ordered (hp, n, wo), cols (kw, ci)
    w_ref  : (K, K*Ci, Co)    stride-1 correlation weight, one slab per kh
    o_ref  : (Ho*N*Wo, Co)    rows ordered (ho, n, wo)
    The kh unfold is done here as row-shifted slices (shift = kh * wrow), so the
    K^2-duplicated im2col patches never exist in HBM.
    """
    K = w_ref.shape[0]
    R = o_ref.shape[0]
    acc = jnp.dot(xw_ref[0:R, :], w_ref[0], preferred_element_type=jnp.float32)
    for kh in range(1, K):
        acc = acc + jnp.dot(xw_ref[kh * wrow:kh * wrow + R, :], w_ref[kh],
                            preferred_element_type=jnp.float32)
    y = jnp.maximum(acc + b_ref[...], 0.0)                       # bias + ReLU
    mean = jnp.mean(y, axis=0, keepdims=True)                    # stats over N*H*W rows
    var = jnp.mean(y * y, axis=0, keepdims=True) - mean * mean   # single-pass biased var
    scale = lax.rsqrt(var + eps) * g_ref[...]
    o_ref[...] = (y - mean) * scale + beta_ref[...]


def _convt_tanh_kernel(xp_ref, w_ref, b_ref, o_ref, *, wrow):
    """Fused last ConvTranspose2d (Co=1) + bias + Tanh with lane-dense output.

    xp_ref : (Hp*N, Wp*Ci)      rows ordered (hp, n), cols (wp, ci)
    w_ref  : (K, Wp*Ci, Wo*Co)  block-Toeplitz-along-W weight (precomputed at init)
    o_ref  : (Ho*N, Wo*Co)      lane axis carries spatial W positions
    """
    K = w_ref.shape[0]
    R = o_ref.shape[0]
    acc = jnp.dot(xp_ref[0:R, :], w_ref[0], preferred_element_type=jnp.float32)
    for kh in range(1, K):
        acc = acc + jnp.dot(xp_ref[kh * wrow:kh * wrow + R, :], w_ref[kh],
                            preferred_element_type=jnp.float32)
    o_ref[...] = jnp.tanh(acc + b_ref[...])


def _full_spec(shape):
    n = len(shape)
    return pl.BlockSpec(shape, lambda: (0,) * n)


def fused_convt_relu_bn(xw, w2, b2, g2, beta2, rows_out, wrow, eps=_BN_EPS):
    S, KC = xw.shape
    K, _, Co = w2.shape
    return pl.pallas_call(
        functools.partial(_convt_relu_bn_kernel, wrow=wrow, eps=eps),
        out_shape=jax.ShapeDtypeStruct((rows_out, Co), jnp.float32),
        in_specs=[_full_spec((S, KC)), _full_spec((K, KC, Co)),
                  _full_spec((1, Co)), _full_spec((1, Co)), _full_spec((1, Co))],
        out_specs=_full_spec((rows_out, Co)),
    )(xw, w2, b2, g2, beta2)


def fused_convt_tanh(xp2, wT, bT, rows_out, wrow):
    S, WC = xp2.shape
    K, _, WoCo = wT.shape
    return pl.pallas_call(
        functools.partial(_convt_tanh_kernel, wrow=wrow),
        out_shape=jax.ShapeDtypeStruct((rows_out, WoCo), jnp.float32),
        in_specs=[_full_spec((S, WC)), _full_spec((K, WC, WoCo)), _full_spec((1, WoCo))],
        out_specs=_full_spec((rows_out, WoCo)),
    )(xp2, wT, bT)


# ------------------------------- parameters --------------------------------- #

def init_generator_params(key, z_dim, h_in=1, w_in=1):
    """PyTorch-layout weights plus precomputed, kernel-ready forms (hoisted transforms)."""
    params = []
    hi, wi = h_in, w_in
    for i, (ci, co, k, s, p) in enumerate(_LAYERS):
        ci = z_dim if ci is None else ci
        key, k1, k2 = jax.random.split(key, 3)
        bound = 1.0 / float(co * k * k) ** 0.5
        w = jax.random.uniform(k1, (ci, co, k, k), jnp.float32, -bound, bound)
        b = jax.random.uniform(k2, (co,), jnp.float32, -bound, bound)
        gamma = jnp.ones((co,), jnp.float32)
        beta = jnp.zeros((co,), jnp.float32)
        layer = {"w": w, "b": b, "gamma": gamma, "beta": beta}

        # Equivalent stride-1 correlation weight (flip + transpose), hoisted to init.
        w_conv = jnp.flip(w, axis=(2, 3)).transpose(2, 3, 0, 1)      # (K, K, Ci, Co)
        ho = (hi - 1) * s - 2 * p + k
        wo = (wi - 1) * s - 2 * p + k
        wp = wo + k - 1
        if i < len(_LAYERS) - 1:
            layer["w2"] = w_conv.reshape(k, k * ci, co)              # (K, K*Ci, Co)
            layer["b2"] = b.reshape(1, co)
            layer["gamma2"] = gamma.reshape(1, co)
            layer["beta2"] = beta.reshape(1, co)
        else:
            # Block-Toeplitz-along-W weight (K, Wp*Ci, Wo*Co): T[kh,(wp,ci),(wo,co)]
            #   = w_conv[kh, wp-wo, ci, co] for 0 <= wp-wo < K else 0.  Tiny: Co == 1.
            kw = jnp.arange(wp)[:, None] - jnp.arange(wo)[None, :]   # (Wp, Wo)
            valid = ((kw >= 0) & (kw < k)).astype(jnp.float32)
            tw = w_conv[:, jnp.clip(kw, 0, k - 1)] * valid[None, :, :, None, None]
            layer["wT"] = tw.transpose(0, 1, 3, 2, 4).reshape(k, wp * ci, wo * co)
            layer["bT"] = jnp.tile(b, (wo,)).reshape(1, wo * co)
        params.append(layer)
        hi, wi = ho, wo
    return params


# --------------------------------- forward ---------------------------------- #

def generator_forward(params, x_nchw):
    """x: (N, z_dim, 1, 1) latent (NCHW) -> (N, 1, 28, 28) image, Tanh output."""
    N = x_nchw.shape[0]
    # Work in (H, N, W, C) layout so the in-kernel per-kh shift is one contiguous slice.
    x = jnp.transpose(x_nchw.astype(jnp.float32), (2, 0, 3, 1))
    n_layers = len(_LAYERS)
    for i, (lp, (_, co, K, s, p)) in enumerate(zip(params, _LAYERS)):
        Hi, _, Wi, Ci = x.shape
        pe = K - 1 - p
        # Zero-dilate by the stride and edge-pad in ONE op (interior padding).
        xp = lax.pad(x, jnp.float32(0),
                     ((pe, pe, s - 1), (0, 0, 0), (pe, pe, s - 1), (0, 0, 0)))
        Hp, _, Wp, _ = xp.shape
        Ho, Wo = Hp - (K - 1), Wp - (K - 1)
        if i < n_layers - 1:
            # Unfold along W only (K_w-fold, small): rows (hp, n, wo), cols (kw, ci).
            xw = jnp.stack([xp[:, :, kw:kw + Wo, :] for kw in range(K)], axis=3)
            xw = xw.reshape(Hp * N * Wo, K * Ci)
            y = fused_convt_relu_bn(xw, lp["w2"], lp["b2"], lp["gamma2"], lp["beta2"],
                                    rows_out=Ho * N * Wo, wrow=N * Wo)
        else:
            # Last layer: Toeplitz weight handles the W unfold -> lane-dense (Ho*N, Wo).
            xp2 = xp.reshape(Hp * N, Wp * Ci)
            y = fused_convt_tanh(xp2, lp["wT"], lp["bT"], rows_out=Ho * N, wrow=N)
        x = y.reshape(Ho, N, Wo, co)
    return jnp.transpose(x, (1, 3, 0, 2))   # (H, N, W, C) -> NCHW


# ----------------------------- pure-JAX reference ---------------------------- #

def _ref_conv_transpose(x, w_t, b, s, p):
    K = w_t.shape[2]
    w_conv = jnp.flip(w_t, axis=(2, 3)).transpose(1, 0, 2, 3)  # (Co, Ci, K, K)
    y = lax.conv_general_dilated(
        x, w_conv, window_strides=(1, 1),
        padding=[(K - 1 - p, K - 1 - p)] * 2,
        lhs_dilation=(s, s),
        dimension_numbers=("NCHW", "OIHW", "NCHW"))
    return y + b.reshape(1, -1, 1, 1)


def generator_reference(params, x):
    for i, (lp, (_, _, k, s, p)) in enumerate(zip(params, _LAYERS)):
        last = i == len(_LAYERS) - 1
        y = _ref_conv_transpose(x, lp["w"], lp["b"], s, p)
        if last:
            x = jnp.tanh(y)
        else:
            y = jnp.maximum(y, 0.0)
            mean = jnp.mean(y, axis=(0, 2, 3), keepdims=True)
            var = jnp.mean((y - mean) ** 2, axis=(0, 2, 3), keepdims=True)
            x = ((y - mean) * lax.rsqrt(var + _BN_EPS)
                 * lp["gamma"].reshape(1, -1, 1, 1) + lp["beta"].reshape(1, -1, 1, 1))
    return x


# ----------------------------------- main ------------------------------------ #

if __name__ == "__main__":
    z_dim = 8
    key = jax.random.PRNGKey(0)
    kp, kx = jax.random.split(key)
    params = init_generator_params(kp, z_dim)
    x = jax.random.normal(kx, (2, z_dim, 1, 1), jnp.float32)   # latent (N, z_dim, 1, 1)

    fwd = jax.jit(generator_forward)   # 4 Pallas calls + thin glue -> one program
    out = jax.block_until_ready(fwd(params, x))
    assert out.shape == (2, 1, 28, 28), out.shape

    ref = jax.block_until_ready(generator_reference(params, x))
    err = float(jnp.max(jnp.abs(out - ref)))
    assert jnp.allclose(out, ref, atol=2e-3, rtol=2e-3), err

    print("KERNEL_OK")
</pallas_src>

<mosaic_0001>
module attributes {stable_mosaic.version = 11 : i64} {
  func.func @_convt_relu_bn_kernel(%arg0: memref<56x32xf32, #tpu.memory_space<vmem>>, %arg1: memref<4x32x128xf32, #tpu.memory_space<vmem>>, %arg2: memref<1x128xf32, #tpu.memory_space<vmem>>, %arg3: memref<1x128xf32, #tpu.memory_space<vmem>>, %arg4: memref<1x128xf32, #tpu.memory_space<vmem>>, %arg5: memref<32x128xf32, #tpu.memory_space<vmem>>) attributes {dimension_semantics = [], scalar_prefetch = 0 : i64, scratch_operands = 0 : i64, tpu.core_type = #tpu.core_type<tc>} {
    %c0 = arith.constant 0 : index
    %c0_0 = arith.constant 0 : index
    %0 = vector.load %arg0[%c0, %c0_0] : memref<56x32xf32, #tpu.memory_space<vmem>>, vector<32x32xf32>
    %c0_1 = arith.constant 0 : index
    %c0_2 = arith.constant 0 : index
    %c0_3 = arith.constant 0 : index
    %1 = vector.load %arg1[%c0_1, %c0_2, %c0_3] : memref<4x32x128xf32, #tpu.memory_space<vmem>>, vector<1x32x128xf32>
    %2 = vector.shape_cast %1 : vector<1x32x128xf32> to vector<32x128xf32>
    %cst = arith.constant dense<0.000000e+00> : vector<32x128xf32>
    %3 = tpu.matmul %0, %2, %cst {dimension_numbers = #tpu.dot_dimension_numbers<[1], [0], [0], [1], [0, 0, 1, 1], [], []>} : vector<32x32xf32>, vector<32x128xf32>, vector<32x128xf32> -> vector<32x128xf32>
    %c8 = arith.constant 8 : index
    %c0_4 = arith.constant 0 : index
    %4 = vector.load %arg0[%c8, %c0_4] : memref<56x32xf32, #tpu.memory_space<vmem>>, vector<32x32xf32>
    %c1 = arith.constant 1 : index
    %c0_5 = arith.constant 0 : index
    %c0_6 = arith.constant 0 : index
    %5 = vector.load %arg1[%c1, %c0_5, %c0_6] : memref<4x32x128xf32, #tpu.memory_space<vmem>>, vector<1x32x128xf32>
    %6 = vector.shape_cast %5 : vector<1x32x128xf32> to vector<32x128xf32>
    %cst_7 = arith.constant dense<0.000000e+00> : vector<32x128xf32>
    %7 = tpu.matmul %4, %6, %cst_7 {dimension_numbers = #tpu.dot_dimension_numbers<[1], [0], [0], [1], [0, 0, 1, 1], [], []>} : vector<32x32xf32>, vector<32x128xf32>, vector<32x128xf32> -> vector<32x128xf32>
    %8 = arith.addf %3, %7 : vector<32x128xf32>
    %c16 = arith.constant 16 : index
    %c0_8 = arith.constant 0 : index
    %9 = vector.load %arg0[%c16, %c0_8] : memref<56x32xf32, #tpu.memory_space<vmem>>, vector<32x32xf32>
    %c2 = arith.constant 2 : index
    %c0_9 = arith.constant 0 : index
    %c0_10 = arith.constant 0 : index
    %10 = vector.load %arg1[%c2, %c0_9, %c0_10] : memref<4x32x128xf32, #tpu.memory_space<vmem>>, vector<1x32x128xf32>
    %11 = vector.shape_cast %10 : vector<1x32x128xf32> to vector<32x128xf32>
    %cst_11 = arith.constant dense<0.000000e+00> : vector<32x128xf32>
    %12 = tpu.matmul %9, %11, %cst_11 {dimension_numbers = #tpu.dot_dimension_numbers<[1], [0], [0], [1], [0, 0, 1, 1], [], []>} : vector<32x32xf32>, vector<32x128xf32>, vector<32x128xf32> -> vector<32x128xf32>
    %13 = arith.addf %8, %12 : vector<32x128xf32>
    %c24 = arith.constant 24 : index
    %c0_12 = arith.constant 0 : index
    %14 = vector.load %arg0[%c24, %c0_12] : memref<56x32xf32, #tpu.memory_space<vmem>>, vector<32x32xf32>
    %c3 = arith.constant 3 : index
    %c0_13 = arith.constant 0 : index
    %c0_14 = arith.constant 0 : index
    %15 = vector.load %arg1[%c3, %c0_13, %c0_14] : memref<4x32x128xf32, #tpu.memory_space<vmem>>, vector<1x32x128xf32>
    %16 = vector.shape_cast %15 : vector<1x32x128xf32> to vector<32x128xf32>
    %cst_15 = arith.constant dense<0.000000e+00> : vector<32x128xf32>
    %17 = tpu.matmul %14, %16, %cst_15 {dimension_numbers = #tpu.dot_dimension_numbers<[1], [0], [0], [1], [0, 0, 1, 1], [], []>} : vector<32x32xf32>, vector<32x128xf32>, vector<32x128xf32> -> vector<32x128xf32>
    %18 = arith.addf %13, %17 : vector<32x128xf32>
    %c0_16 = arith.constant 0 : index
    %c0_17 = arith.constant 0 : index
    %19 = vector.load %arg2[%c0_16, %c0_17] : memref<1x128xf32, #tpu.memory_space<vmem>>, vector<1x128xf32>
    %20 = vector.broadcast %19 : vector<1x128xf32> to vector<32x128xf32>
    %21 = arith.addf %18, %20 : vector<32x128xf32>
    %cst_18 = arith.constant 0.000000e+00 : f32
    %22 = vector.broadcast %cst_18 : f32 to vector<32x128xf32>
    %23 = arith.maximumf %21, %22 : vector<32x128xf32>
    %cst_19 = arith.constant dense<0.000000e+00> : vector<128xf32>
    %24 = vector.multi_reduction <add>, %23, %cst_19 [0] : vector<32x128xf32> to vector<128xf32>
    %25 = vector.shape_cast %24 : vector<128xf32> to vector<1x128xf32>
    %cst_20 = arith.constant 3.200000e+01 : f32
    %26 = vector.broadcast %cst_20 : f32 to vector<1x128xf32>
    %27 = arith.divf %25, %26 : vector<1x128xf32>
    %28 = arith.mulf %23, %23 : vector<32x128xf32>
    %cst_21 = arith.constant dense<0.000000e+00> : vector<128xf32>
    %29 = vector.multi_reduction <add>, %28, %cst_21 [0] : vector<32x128xf32> to vector<128xf32>
    %30 = vector.shape_cast %29 : vector<128xf32> to vector<1x128xf32>
    %cst_22 = arith.constant 3.200000e+01 : f32
    %31 = vector.broadcast %cst_22 : f32 to vector<1x128xf32>
    %32 = arith.divf %30, %31 : vector<1x128xf32>
    %33 = arith.mulf %27, %27 : vector<1x128xf32>
    %34 = arith.subf %32, %33 : vector<1x128xf32>
    %cst_23 = arith.constant 9.99999974E-6 : f32
    %35 = vector.broadcast %cst_23 : f32 to vector<1x128xf32>
    %36 = arith.addf %34, %35 : vector<1x128xf32>
    %37 = math.rsqrt %36 : vector<1x128xf32>
    %c0_24 = arith.constant 0 : index
    %c0_25 = arith.constant 0 : index
    %38 = vector.load %arg3[%c0_24, %c0_25] : memref<1x128xf32, #tpu.memory_space<vmem>>, vector<1x128xf32>
    %39 = arith.mulf %37, %38 : vector<1x128xf32>
    %40 = vector.broadcast %27 : vector<1x128xf32> to vector<32x128xf32>
    %41 = arith.subf %23, %40 : vector<32x128xf32>
    %42 = vector.broadcast %39 : vector<1x128xf32> to vector<32x128xf32>
    %43 = arith.mulf %41, %42 : vector<32x128xf32>
    %c0_26 = arith.constant 0 : index
    %c0_27 = arith.constant 0 : index
    %44 = vector.load %arg4[%c0_26, %c0_27] : memref<1x128xf32, #tpu.memory_space<vmem>>, vector<1x128xf32>
    %45 = vector.broadcast %44 : vector<1x128xf32> to vector<32x128xf32>
    %46 = arith.addf %43, %45 : vector<32x128xf32>
    %c0_28 = arith.constant 0 : index
    %c0_29 = arith.constant 0 : index
    %47 = vector.load %arg5[%c0_28, %c0_29] : memref<32x128xf32, #tpu.memory_space<vmem>>, vector<32x128xf32>
    tpu.vector_store %arg5[%c0_28, %c0_29], %46 {strides = array<i32>} : memref<32x128xf32, #tpu.memory_space<vmem>>, vector<32x128xf32>,
    return
  }
}

module attributes {stable_mosaic.version = 11 : i64} {
  func.func @_convt_relu_bn_kernel(%arg0: memref<126x384xf32, #tpu.memory_space<vmem>>, %arg1: memref<3x384x64xf32, #tpu.memory_space<vmem>>, %arg2: memref<1x64xf32, #tpu.memory_space<vmem>>, %arg3: memref<1x64xf32, #tpu.memory_space<vmem>>, %arg4: memref<1x64xf32, #tpu.memory_space<vmem>>, %arg5: memref<98x64xf32, #tpu.memory_space<vmem>>) attributes {dimension_semantics = [], scalar_prefetch = 0 : i64, scratch_operands = 0 : i64, tpu.core_type = #tpu.core_type<tc>} {
    %c0 = arith.constant 0 : index
    %c0_0 = arith.constant 0 : index
    %0 = vector.load %arg0[%c0, %c0_0] : memref<126x384xf32, #tpu.memory_space<vmem>>, vector<98x384xf32>
    %c0_1 = arith.constant 0 : index
    %c0_2 = arith.constant 0 : index
    %c0_3 = arith.constant 0 : index
    %1 = vector.load %arg1[%c0_1, %c0_2, %c0_3] : memref<3x384x64xf32, #tpu.memory_space<vmem>>, vector<1x384x64xf32>
    %2 = vector.shape_cast %1 : vector<1x384x64xf32> to vector<384x64xf32>
    %cst = arith.constant dense<0.000000e+00> : vector<98x64xf32>
    %3 = tpu.matmul %0, %2, %cst {dimension_numbers = #tpu.dot_dimension_numbers<[1], [0], [0], [1], [0, 0, 1, 1], [], []>} : vector<98x384xf32>, vector<384x64xf32>, vector<98x64xf32> -> vector<98x64xf32>
    %c14 = arith.constant 14 : index
    %c0_4 = arith.constant 0 : index
    %4 = vector.load %arg0[%c14, %c0_4] : memref<126x384xf32, #tpu.memory_space<vmem>>, vector<98x384xf32>
    %c1 = arith.constant 1 : index
    %c0_5 = arith.constant 0 : index
    %c0_6 = arith.constant 0 : index
    %5 = vector.load %arg1[%c1, %c0_5, %c0_6] : memref<3x384x64xf32, #tpu.memory_space<vmem>>, vector<1x384x64xf32>
    %6 = vector.shape_cast %5 : vector<1x384x64xf32> to vector<384x64xf32>
    %cst_7 = arith.constant dense<0.000000e+00> : vector<98x64xf32>
    %7 = tpu.matmul %4, %6, %cst_7 {dimension_numbers = #tpu.dot_dimension_numbers<[1], [0], [0], [1], [0, 0, 1, 1], [], []>} : vector<98x384xf32>, vector<384x64xf32>, vector<98x64xf32> -> vector<98x64xf32>
    %8 = arith.addf %3, %7 : vector<98x64xf32>
    %c28 = arith.constant 28 : index
    %c0_8 = arith.constant 0 : index
    %9 = vector.load %arg0[%c28, %c0_8] : memref<126x384xf32, #tpu.memory_space<vmem>>, vector<98x384xf32>
    %c2 = arith.constant 2 : index
    %c0_9 = arith.constant 0 : index
    %c0_10 = arith.constant 0 : index
    %10 = vector.load %arg1[%c2, %c0_9, %c0_10] : memref<3x384x64xf32, #tpu.memory_space<vmem>>, vector<1x384x64xf32>
    %11 = vector.shape_cast %10 : vector<1x384x64xf32> to vector<384x64xf32>
    %cst_11 = arith.constant dense<0.000000e+00> : vector<98x64xf32>
    %12 = tpu.matmul %9, %11, %cst_11 {dimension_numbers = #tpu.dot_dimension_numbers<[1], [0], [0], [1], [0, 0, 1, 1], [], []>} : vector<98x384xf32>, vector<384x64xf32>, vector<98x64xf32> -> vector<98x64xf32>
    %13 = arith.addf %8, %12 : vector<98x64xf32>
    %c0_12 = arith.constant 0 : index
    %c0_13 = arith.constant 0 : index
    %14 = vector.load %arg2[%c0_12, %c0_13] : memref<1x64xf32, #tpu.memory_space<vmem>>, vector<1x64xf32>
    %15 = vector.broadcast %14 : vector<1x64xf32> to vector<98x64xf32>
    %16 = arith.addf %13, %15 : vector<98x64xf32>
    %cst_14 = arith.constant 0.000000e+00 : f32
    %17 = vector.broadcast %cst_14 : f32 to vector<98x64xf32>
    %18 = arith.maximumf %16, %17 : vector<98x64xf32>
    %cst_15 = arith.constant dense<0.000000e+00> : vector<64xf32>
    %19 = vector.multi_reduction <add>, %18, %cst_15 [0] : vector<98x64xf32> to vector<64xf32>
    %20 = vector.shape_cast %19 : vector<64xf32> to vector<1x64xf32>
    %cst_16 = arith.constant 9.800000e+01 : f32
    %21 = vector.broadcast %cst_16 : f32 to vector<1x64xf32>
    %22 = arith.divf %20, %21 : vector<1x64xf32>
    %23 = arith.mulf %18, %18 : vector<98x64xf32>
    %cst_17 = arith.constant dense<0.000000e+00> : vector<64xf32>
    %24 = vector.multi_reduction <add>, %23, %cst_17 [0] : vector<98x64xf32> to vector<64xf32>
    %25 = vector.shape_cast %24 : vector<64xf32> to vector<1x64xf32>
    %cst_18 = arith.constant 9.800000e+01 : f32
    %26 = vector.broadcast %cst_18 : f32 to vector<1x64xf32>
    %27 = arith.divf %25, %26 : vector<1x64xf32>
    %28 = arith.mulf %22, %22 : vector<1x64xf32>
    %29 = arith.subf %27, %28 : vector<1x64xf32>
    %cst_19 = arith.constant 9.99999974E-6 : f32
    %30 = vector.broadcast %cst_19 : f32 to vector<1x64xf32>
    %31 = arith.addf %29, %30 : vector<1x64xf32>
    %32 = math.rsqrt %31 : vector<1x64xf32>
    %c0_20 = arith.constant 0 : index
    %c0_21 = arith.constant 0 : index
    %33 = vector.load %arg3[%c0_20, %c0_21] : memref<1x64xf32, #tpu.memory_space<vmem>>, vector<1x64xf32>
    %34 = arith.mulf %32, %33 : vector<1x64xf32>
    %35 = vector.broadcast %22 : vector<1x64xf32> to vector<98x64xf32>
    %36 = arith.subf %18, %35 : vector<98x64xf32>
    %37 = vector.broadcast %34 : vector<1x64xf32> to vector<98x64xf32>
    %38 = arith.mulf %36, %37 : vector<98x64xf32>
    %c0_22 = arith.constant 0 : index
    %c0_23 = arith.constant 0 : index
    %39 = vector.load %arg4[%c0_22, %c0_23] : memref<1x64xf32, #tpu.memory_space<vmem>>, vector<1x64xf32>
    %40 = vector.broadcast %39 : vector<1x64xf32> to vector<98x64xf32>
    %41 = arith.addf %38, %40 : vector<98x64xf32>
    %c0_24 = arith.constant 0 : index
    %c0_25 = arith.constant 0 : index
    %42 = vector.load %arg5[%c0_24, %c0_25] : memref<98x64xf32, #tpu.memory_space<vmem>>, vector<98x64xf32>
    tpu.vector_store %arg5[%c0_24, %c0_25], %41 {strides = array<i32>} : memref<98x64xf32, #tpu.memory_space<vmem>>, vector<98x64xf32>,
    return
  }
}

module attributes {stable_mosaic.version = 11 : i64} {
  func.func @_convt_relu_bn_kernel(%arg0: memref<476x256xf32, #tpu.memory_space<vmem>>, %arg1: memref<4x256x32xf32, #tpu.memory_space<vmem>>, %arg2: memref<1x32xf32, #tpu.memory_space<vmem>>, %arg3: memref<1x32xf32, #tpu.memory_space<vmem>>, %arg4: memref<1x32xf32, #tpu.memory_space<vmem>>, %arg5: memref<392x32xf32, #tpu.memory_space<vmem>>) attributes {dimension_semantics = [], scalar_prefetch = 0 : i64, scratch_operands = 0 : i64, tpu.core_type = #tpu.core_type<tc>} {
    %c0 = arith.constant 0 : index
    %c0_0 = arith.constant 0 : index
    %0 = vector.load %arg0[%c0, %c0_0] : memref<476x256xf32, #tpu.memory_space<vmem>>, vector<392x256xf32>
    %c0_1 = arith.constant 0 : index
    %c0_2 = arith.constant 0 : index
    %c0_3 = arith.constant 0 : index
    %1 = vector.load %arg1[%c0_1, %c0_2, %c0_3] : memref<4x256x32xf32, #tpu.memory_space<vmem>>, vector<1x256x32xf32>
    %2 = vector.shape_cast %1 : vector<1x256x32xf32> to vector<256x32xf32>
    %cst = arith.constant dense<0.000000e+00> : vector<392x32xf32>
    %3 = tpu.matmul %0, %2, %cst {dimension_numbers = #tpu.dot_dimension_numbers<[1], [0], [0], [1], [0, 0, 1, 1], [], []>} : vector<392x256xf32>, vector<256x32xf32>, vector<392x32xf32> -> vector<392x32xf32>
    %c28 = arith.constant 28 : index
    %c0_4 = arith.constant 0 : index
    %4 = vector.load %arg0[%c28, %c0_4] : memref<476x256xf32, #tpu.memory_space<vmem>>, vector<392x256xf32>
    %c1 = arith.constant 1 : index
    %c0_5 = arith.constant 0 : index
    %c0_6 = arith.constant 0 : index
    %5 = vector.load %arg1[%c1, %c0_5, %c0_6] : memref<4x256x32xf32, #tpu.memory_space<vmem>>, vector<1x256x32xf32>
    %6 = vector.shape_cast %5 : vector<1x256x32xf32> to vector<256x32xf32>
    %cst_7 = arith.constant dense<0.000000e+00> : vector<392x32xf32>
    %7 = tpu.matmul %4, %6, %cst_7 {dimension_numbers = #tpu.dot_dimension_numbers<[1], [0], [0], [1], [0, 0, 1, 1], [], []>} : vector<392x256xf32>, vector<256x32xf32>, vector<392x32xf32> -> vector<392x32xf32>
    %8 = arith.addf %3, %7 : vector<392x32xf32>
    %c56 = arith.constant 56 : index
    %c0_8 = arith.constant 0 : index
    %9 = vector.load %arg0[%c56, %c0_8] : memref<476x256xf32, #tpu.memory_space<vmem>>, vector<392x256xf32>
    %c2 = arith.constant 2 : index
    %c0_9 = arith.constant 0 : index
    %c0_10 = arith.constant 0 : index
    %10 = vector.load %arg1[%c2, %c0_9, %c0_10] : memref<4x256x32xf32, #tpu.memory_space<vmem>>, vector<1x256x32xf32>
    %11 = vector.shape_cast %10 : vector<1x256x32xf32> to vector<256x32xf32>
    %cst_11 = arith.constant dense<0.000000e+00> : vector<392x32xf32>
    %12 = tpu.matmul %9, %11, %cst_11 {dimension_numbers = #tpu.dot_dimension_numbers<[1], [0], [0], [1], [0, 0, 1, 1], [], []>} : vector<392x256xf32>, vector<256x32xf32>, vector<392x32xf32> -> vector<392x32xf32>
    %13 = arith.addf %8, %12 : vector<392x32xf32>
    %c84 = arith.constant 84 : index
    %c0_12 = arith.constant 0 : index
    %14 = vector.load %arg0[%c84, %c0_12] : memref<476x256xf32, #tpu.memory_space<vmem>>, vector<392x256xf32>
    %c3 = arith.constant 3 : index
    %c0_13 = arith.constant 0 : index
    %c0_14 = arith.constant 0 : index
    %15 = vector.load %arg1[%c3, %c0_13, %c0_14] : memref<4x256x32xf32, #tpu.memory_space<vmem>>, vector<1x256x32xf32>
    %16 = vector.shape_cast %15 : vector<1x256x32xf32> to vector<256x32xf32>
    %cst_15 = arith.constant dense<0.000000e+00> : vector<392x32xf32>
    %17 = tpu.matmul %14, %16, %cst_15 {dimension_numbers = #tpu.dot_dimension_numbers<[1], [0], [0], [1], [0, 0, 1, 1], [], []>} : vector<392x256xf32>, vector<256x32xf32>, vector<392x32xf32> -> vector<392x32xf32>
    %18 = arith.addf %13, %17 : vector<392x32xf32>
    %c0_16 = arith.constant 0 : index
    %c0_17 = arith.constant 0 : index
    %19 = vector.load %arg2[%c0_16, %c0_17] : memref<1x32xf32, #tpu.memory_space<vmem>>, vector<1x32xf32>
    %20 = vector.broadcast %19 : vector<1x32xf32> to vector<392x32xf32>
    %21 = arith.addf %18, %20 : vector<392x32xf32>
    %cst_18 = arith.constant 0.000000e+00 : f32
    %22 = vector.broadcast %cst_18 : f32 to vector<392x32xf32>
    %23 = arith.maximumf %21, %22 : vector<392x32xf32>
    %cst_19 = arith.constant dense<0.000000e+00> : vector<32xf32>
    %24 = vector.multi_reduction <add>, %23, %cst_19 [0] : vector<392x32xf32> to vector<32xf32>
    %25 = vector.shape_cast %24 : vector<32xf32> to vector<1x32xf32>
    %cst_20 = arith.constant 3.920000e+02 : f32
    %26 = vector.broadcast %cst_20 : f32 to vector<1x32xf32>
    %27 = arith.divf %25, %26 : vector<1x32xf32>
    %28 = arith.mulf %23, %23 : vector<392x32xf32>
    %cst_21 = arith.constant dense<0.000000e+00> : vector<32xf32>
    %29 = vector.multi_reduction <add>, %28, %cst_21 [0] : vector<392x32xf32> to vector<32xf32>
    %30 = vector.shape_cast %29 : vector<32xf32> to vector<1x32xf32>
    %cst_22 = arith.constant 3.920000e+02 : f32
    %31 = vector.broadcast %cst_22 : f32 to vector<1x32xf32>
    %32 = arith.divf %30, %31 : vector<1x32xf32>
    %33 = arith.mulf %27, %27 : vector<1x32xf32>
    %34 = arith.subf %32, %33 : vector<1x32xf32>
    %cst_23 = arith.constant 9.99999974E-6 : f32
    %35 = vector.broadcast %cst_23 : f32 to vector<1x32xf32>
    %36 = arith.addf %34, %35 : vector<1x32xf32>
    %37 = math.rsqrt %36 : vector<1x32xf32>
    %c0_24 = arith.constant 0 : index
    %c0_25 = arith.constant 0 : index
    %38 = vector.load %arg3[%c0_24, %c0_25] : memref<1x32xf32, #tpu.memory_space<vmem>>, vector<1x32xf32>
    %39 = arith.mulf %37, %38 : vector<1x32xf32>
    %40 = vector.broadcast %27 : vector<1x32xf32> to vector<392x32xf32>
    %41 = arith.subf %23, %40 : vector<392x32xf32>
    %42 = vector.broadcast %39 : vector<1x32xf32> to vector<392x32xf32>
    %43 = arith.mulf %41, %42 : vector<392x32xf32>
    %c0_26 = arith.constant 0 : index
    %c0_27 = arith.constant 0 : index
    %44 = vector.load %arg4[%c0_26, %c0_27] : memref<1x32xf32, #tpu.memory_space<vmem>>, vector<1x32xf32>
    %45 = vector.broadcast %44 : vector<1x32xf32> to vector<392x32xf32>
    %46 = arith.addf %43, %45 : vector<392x32xf32>
    %c0_28 = arith.constant 0 : index
    %c0_29 = arith.constant 0 : index
    %47 = vector.load %arg5[%c0_28, %c0_29] : memref<392x32xf32, #tpu.memory_space<vmem>>, vector<392x32xf32>
    tpu.vector_store %arg5[%c0_28, %c0_29], %46 {strides = array<i32>} : memref<392x32xf32, #tpu.memory_space<vmem>>, vector<392x32xf32>,
    return
  }
}

module attributes {stable_mosaic.version = 11 : i64} {
  func.func @_convt_tanh_kernel(%arg0: memref<62x992xf32, #tpu.memory_space<vmem>>, %arg1: memref<4x992x28xf32, #tpu.memory_space<vmem>>, %arg2: memref<1x28xf32, #tpu.memory_space<vmem>>, %arg3: memref<56x28xf32, #tpu.memory_space<vmem>>) attributes {dimension_semantics = [], scalar_prefetch = 0 : i64, scratch_operands = 0 : i64, tpu.core_type = #tpu.core_type<tc>} {
    %c0 = arith.constant 0 : index
    %c0_0 = arith.constant 0 : index
    %0 = vector.load %arg0[%c0, %c0_0] : memref<62x992xf32, #tpu.memory_space<vmem>>, vector<56x992xf32>
    %c0_1 = arith.constant 0 : index
    %c0_2 = arith.constant 0 : index
    %c0_3 = arith.constant 0 : index
    %1 = vector.load %arg1[%c0_1, %c0_2, %c0_3] : memref<4x992x28xf32, #tpu.memory_space<vmem>>, vector<1x992x28xf32>
    %2 = vector.shape_cast %1 : vector<1x992x28xf32> to vector<992x28xf32>
    %cst = arith.constant dense<0.000000e+00> : vector<56x28xf32>
    %3 = tpu.matmul %0, %2, %cst {dimension_numbers = #tpu.dot_dimension_numbers<[1], [0], [0], [1], [0, 0, 1, 1], [], []>} : vector<56x992xf32>, vector<992x28xf32>, vector<56x28xf32> -> vector<56x28xf32>
    %c2 = arith.constant 2 : index
    %c0_4 = arith.constant 0 : index
    %4 = vector.load %arg0[%c2, %c0_4] : memref<62x992xf32, #tpu.memory_space<vmem>>, vector<56x992xf32>
    %c1 = arith.constant 1 : index
    %c0_5 = arith.constant 0 : index
    %c0_6 = arith.constant 0 : index
    %5 = vector.load %arg1[%c1, %c0_5, %c0_6] : memref<4x992x28xf32, #tpu.memory_space<vmem>>, vector<1x992x28xf32>
    %6 = vector.shape_cast %5 : vector<1x992x28xf32> to vector<992x28xf32>
    %cst_7 = arith.constant dense<0.000000e+00> : vector<56x28xf32>
    %7 = tpu.matmul %4, %6, %cst_7 {dimension_numbers = #tpu.dot_dimension_numbers<[1], [0], [0], [1], [0, 0, 1, 1], [], []>} : vector<56x992xf32>, vector<992x28xf32>, vector<56x28xf32> -> vector<56x28xf32>
    %8 = arith.addf %3, %7 : vector<56x28xf32>
    %c4 = arith.constant 4 : index
    %c0_8 = arith.constant 0 : index
    %9 = vector.load %arg0[%c4, %c0_8] : memref<62x992xf32, #tpu.memory_space<vmem>>, vector<56x992xf32>
    %c2_9 = arith.constant 2 : index
    %c0_10 = arith.constant 0 : index
    %c0_11 = arith.constant 0 : index
    %10 = vector.load %arg1[%c2_9, %c0_10, %c0_11] : memref<4x992x28xf32, #tpu.memory_space<vmem>>, vector<1x992x28xf32>
    %11 = vector.shape_cast %10 : vector<1x992x28xf32> to vector<992x28xf32>
    %cst_12 = arith.constant dense<0.000000e+00> : vector<56x28xf32>
    %12 = tpu.matmul %9, %11, %cst_12 {dimension_numbers = #tpu.dot_dimension_numbers<[1], [0], [0], [1], [0, 0, 1, 1], [], []>} : vector<56x992xf32>, vector<992x28xf32>, vector<56x28xf32> -> vector<56x28xf32>
    %13 = arith.addf %8, %12 : vector<56x28xf32>
    %c6 = arith.constant 6 : index
    %c0_13 = arith.constant 0 : index
    %14 = vector.load %arg0[%c6, %c0_13] : memref<62x992xf32, #tpu.memory_space<vmem>>, vector<56x992xf32>
    %c3 = arith.constant 3 : index
    %c0_14 = arith.constant 0 : index
    %c0_15 = arith.constant 0 : index
    %15 = vector.load %arg1[%c3, %c0_14, %c0_15] : memref<4x992x28xf32, #tpu.memory_space<vmem>>, vector<1x992x28xf32>
    %16 = vector.shape_cast %15 : vector<1x992x28xf32> to vector<992x28xf32>
    %cst_16 = arith.constant dense<0.000000e+00> : vector<56x28xf32>
    %17 = tpu.matmul %14, %16, %cst_16 {dimension_numbers = #tpu.dot_dimension_numbers<[1], [0], [0], [1], [0, 0, 1, 1], [], []>} : vector<56x992xf32>, vector<992x28xf32>, vector<56x28xf32> -> vector<56x28xf32>
    %18 = arith.addf %13, %17 : vector<56x28xf32>
    %c0_17 = arith.constant 0 : index
    %c0_18 = arith.constant 0 : index
    %19 = vector.load %arg2[%c0_17, %c0_18] : memref<1x28xf32, #tpu.memory_space<vmem>>, vector<1x28xf32>
    %20 = vector.broadcast %19 : vector<1x28xf32> to vector<56x28xf32>
    %21 = arith.addf %18, %20 : vector<56x28xf32>
    %22 = math.tanh %21 : vector<56x28xf32>
    %c0_19 = arith.constant 0 : index
    %c0_20 = arith.constant 0 : index
    %23 = vector.load %arg3[%c0_19, %c0_20] : memref<56x28xf32, #tpu.memory_space<vmem>>, vector<56x28xf32>
    tpu.vector_store %arg3[%c0_19, %c0_20], %22 {strides = array<i32>} : memref<56x28xf32, #tpu.memory_space<vmem>>, vector<56x28xf32>,
    return
  }
}

</mosaic_0001>

<llo_original>
// kernel: generator_forward.4
$region0: #{generator_forward.4}
  #allocation0 [shape = 'u32[]', space=smem, size = 0x4, offset = 0x4, fixed_abs, tag = 'smem constant byte address 0x4 - core index']
  #allocation1 [shape = 'u32[72,128]{1,0:T(1,128)}', space=vmem, size = 0x9000, scoped, tag = 'internal scratch']
  %s0 = inlined_call_operand.vmem [shape: f32[56,32], index: 0, kind: input, shape index: {}]
  %s1 = inlined_call_operand.hbm [shape: f32[4,32,128], index: 1, kind: input, shape index: {}]
  %s2 = inlined_call_operand.hbm [shape: f32[1,128], index: 2, kind: input, shape index: {}]
  %s3 = inlined_call_operand.hbm [shape: f32[1,128], index: 3, kind: input, shape index: {}]
  %s4 = inlined_call_operand.hbm [shape: f32[1,128], index: 4, kind: input, shape index: {}]
  %s5 = inlined_call_operand.vmem [shape: f32[32,128], index: 5, kind: output, shape index: {}]
  %s6 = sld [smem:[#allocation0]]
  $region46: #{generator_forward.4} parent=0
    _
  %s8 = ssub.s32 1, %s6
  %s9 = scalar_select 0, %s8, %s6
  $region1: #{generator_forward.4} parent=0
    #allocation2 [shape = 'u8[65536]{0}', space=vmem, size = 0x10000, scoped, tag = 'input window, operand 1, single buffered']
    #allocation3 [shape = 's32[1]{0}', space=sflag, size = 0x4, scoped, tag = 'scoped memory for generator_forward.4']
    #allocation4 [shape = 'u8[512]{0}', space=vmem, size = 0x400, scoped, tag = 'input window, operand 2, single buffered']
    #allocation5 [shape = 's32[1]{0}', space=sflag, size = 0x4, scoped, tag = 'scoped memory for generator_forward.4']
    #allocation6 [shape = 'u8[512]{0}', space=vmem, size = 0x400, scoped, tag = 'input window, operand 3, single buffered']
    #allocation7 [shape = 'u8[512]{0}', space=vmem, size = 0x400, scoped, tag = 'input window, operand 4, single buffered']
    #allocation8 [shape = 's32[1]{0}', space=sflag, size = 0x4, scoped, tag = 'scoped memory for generator_forward.4']
    %10 = vsyncpa [#allocation3], 0
    %11 = vsyncpa [#allocation5], 0
    %12 = vsyncpa [#allocation8], 0
    // Predicated region
    $region2: #{generator_forward.4} parent=1 // pred_check
      _
    $region3: #{generator_forward.4} parent=1 // pred_check_branch
      %14 = sbr.rel (0) target = $region5
    $region4: #{generator_forward.4} parent=1 // pred_region
      _
    $region5: #{generator_forward.4} parent=1 // pred_fallthru
      _
    // Predicated region
    $region6: #{generator_forward.4} parent=1 // pred_check
      _
    $region7: #{generator_forward.4} parent=1 // pred_check_branch
      %16 = sbr.rel (0) target = $region9
    $region8: #{generator_forward.4} parent=1 // pred_region
      %18 = vsyncadd [#allocation3], 0
      %s19 = sshll.u32 %s1, 4
      %s20 = int_to_ptr.hbm [resolvable:$true] %s19
      %s21 = sshll.u32 [#allocation2], 4
      %s22 = int_to_ptr.vmem [resolvable:$true] %s21
      %27 = dma.hbm_to_vmem [thread:$0]  %s20, 2048, %s22, [#allocation3], 128, 128, 8
    $region9: #{generator_forward.4} parent=1 // pred_fallthru
      _
    // Predicated region
    $region10: #{generator_forward.4} parent=1 // pred_check
      _
    $region11: #{generator_forward.4} parent=1 // pred_check_branch
      %29 = sbr.rel (0) target = $region13
    $region12: #{generator_forward.4} parent=1 // pred_region
      %31 = vsyncadd [#allocation5], 0
      %s33 = sshll.u32 %s2, 4
      %s34 = int_to_ptr.hbm [resolvable:$true] %s33
      %s35 = sshll.u32 [#allocation4], 4
      %s36 = int_to_ptr.vmem [resolvable:$true] %s35
      %38 = dma.hbm_to_vmem [thread:$0]  %s34, 16, %s36, [#allocation5]
    $region13: #{generator_forward.4} parent=1 // pred_fallthru
      _
    // Predicated region
    $region14: #{generator_forward.4} parent=1 // pred_check
      _
    $region15: #{generator_forward.4} parent=1 // pred_check_branch
      %40 = sbr.rel (0) target = $region17
    $region16: #{generator_forward.4} parent=1 // pred_region
      %42 = vsyncadd [#allocation5], 0
      %s44 = sshll.u32 %s3, 4
      %s45 = int_to_ptr.hbm [resolvable:$true] %s44
      %s46 = sshll.u32 [#allocation6], 4
      %s47 = int_to_ptr.vmem [resolvable:$true] %s46
      %49 = dma.hbm_to_vmem [thread:$0]  %s45, 16, %s47, [#allocation5]
    $region17: #{generator_forward.4} parent=1 // pred_fallthru
      _
    // Predicated region
    $region18: #{generator_forward.4} parent=1 // pred_check
      _
    $region19: #{generator_forward.4} parent=1 // pred_check_branch
      %51 = sbr.rel (0) target = $region21
    $region20: #{generator_forward.4} parent=1 // pred_region
      %53 = vsyncadd [#allocation8], 0
      %s55 = sshll.u32 %s4, 4
      %s56 = int_to_ptr.hbm [resolvable:$true] %s55
      %s57 = sshll.u32 [#allocation7], 4
      %s58 = int_to_ptr.vmem [resolvable:$true] %s57
      %60 = dma.hbm_to_vmem [thread:$0]  %s56, 16, %s58, [#allocation8]
    $region21: #{generator_forward.4} parent=1 // pred_fallthru
      _
    // Predicated region
    $region22: #{generator_forward.4} parent=1 // pred_check
      _
    $region23: #{generator_forward.4} parent=1 // pred_check_branch
      %62 = sbr.rel (0) target = $region25
    $region24: #{generator_forward.4} parent=1 // pred_region
      %64 = dma.done [#allocation3], 2048
    $region25: #{generator_forward.4} parent=1 // pred_fallthru
      _
    // Predicated region
    $region26: #{generator_forward.4} parent=1 // pred_check
      _
    $region27: #{generator_forward.4} parent=1 // pred_check_branch
      %66 = sbr.rel (0) target = $region29
    $region28: #{generator_forward.4} parent=1 // pred_region
      %68 = dma.done [#allocation5], 16
    $region29: #{generator_forward.4} parent=1 // pred_fallthru
      _
    // Predicated region
    $region30: #{generator_forward.4} parent=1 // pred_check
      _
    $region31: #{generator_forward.4} parent=1 // pred_check_branch
      %70 = sbr.rel (0) target = $region33
    $region32: #{generator_forward.4} parent=1 // pred_region
      %72 = dma.done [#allocation5], 16
    $region33: #{generator_forward.4} parent=1 // pred_fallthru
      _
    // Predicated region
    $region34: #{generator_forward.4} parent=1 // pred_check
      _
    $region35: #{generator_forward.4} parent=1 // pred_check_branch
      %74 = sbr.rel (0) target = $region37
    $region36: #{generator_forward.4} parent=1 // pred_region
      %76 = dma.done [#allocation8], 16
    $region37: #{generator_forward.4} parent=1 // pred_fallthru
      _
    %v77 = vld [vmem:[%s0] sm:$0xff]
    %v78 = vld [vmem:[%s0 + $0x8] sm:$0xff]
    %v79 = vld [vmem:[%s0 + $0x10] sm:$0xff]
    %v80 = vld [vmem:[%s0 + $0x18] sm:$0xff]
    %v81 = vld [vmem:[#allocation2] sm:$0xff]
    %v82 = vld [vmem:[#allocation2 + $0x8] sm:$0xff]
    %v83 = vld [vmem:[#allocation2 + $0x10] sm:$0xff]
    %v84 = vld [vmem:[#allocation2 + $0x18] sm:$0xff]
    %v85 = vld [vmem:[%s0 + $0x20] sm:$0xff]
    %s86 = scalar_lea.vmem [#allocation2], 32
    %v87 = vld [vmem:[%s86] sm:$0xff]
    %v88 = vld [vmem:[%s86 + $0x8] sm:$0xff]
    %v89 = vld [vmem:[%s86 + $0x10] sm:$0xff]
    %v90 = vld [vmem:[%s86 + $0x18] sm:$0xff]
    %vm91 = vcmask 261120
    %v93 = vsel %vm91, %v78, 0
    %v96 = vsel %vm91, %v79, 0
    %v99 = vsel %vm91, %v80, 0
    %v102 = vsel %vm91, %v85, 0
    %104 = vmatpush.msra.mxu0 0.0
    %105 = vmatpush.msra.mxu0 0.0
    %106 = vmatpush.msra.mxu0 0.0
    %107 = vmatpush.msra.mxu0 0.0
    %108 = vmatpush.msra.mxu0 0.0
    %109 = vmatpush.msra.mxu0 0.0
    %110 = vmatpush.msra.mxu0 0.0
    %111 = vmatpush.msra.mxu0 0.0
    %112 = vmatpush.msra.mxu0 0.0
    %113 = vmatpush.msra.mxu0 0.0
    %114 = vmatpush.msra.mxu0 0.0
    %115 = vmatpush.msra.mxu0 0.0
    %116 = vmatpush.msra.mxu0 %v90
    %117 = vmatpush.msra.mxu0 %v89
    %118 = vmatpush.msra.mxu0 %v88
    %119 = vmatpush.msra.mxu0 %v87
    %120 = vmatmul.f32.gmra.mxu0 %v93
    %v121 = vpop.f32.mrf.mxu0
    %v122 = vadd.f32 0.0, %v121
    %123 = vmatmul.f32.gmra.mxu0 %v96
    %v124 = vpop.f32.mrf.mxu0
    %v125 = vadd.f32 0.0, %v124
    %126 = vmatmul.f32.gmra.mxu0 %v99
    %v127 = vpop.f32.mrf.mxu0
    %v128 = vadd.f32 0.0, %v127
    %129 = vmatmul.f32.gmra.mxu0 %v102
    %v130 = vpop.f32.mrf.mxu0
    %v131 = vadd.f32 0.0, %v130
    %132 = vdwg.mxu0
    %v134 = vsel %vm91, %v77, 0
    %136 = vmatpush.msra.mxu0 0.0
    %137 = vmatpush.msra.mxu0 0.0
    %138 = vmatpush.msra.mxu0 0.0
    %139 = vmatpush.msra.mxu0 0.0
    %140 = vmatpush.msra.mxu0 0.0
    %141 = vmatpush.msra.mxu0 0.0
    %142 = vmatpush.msra.mxu0 0.0
    %143 = vmatpush.msra.mxu0 0.0
    %144 = vmatpush.msra.mxu0 0.0
    %145 = vmatpush.msra.mxu0 0.0
    %146 = vmatpush.msra.mxu0 0.0
    %147 = vmatpush.msra.mxu0 0.0
    %148 = vmatpush.msra.mxu0 %v84
    %149 = vmatpush.msra.mxu0 %v83
    %150 = vmatpush.msra.mxu0 %v82
    %151 = vmatpush.msra.mxu0 %v81
    %152 = vmatmul.f32.gmra.mxu0 %v134
    %v153 = vpop.f32.mrf.mxu0
    %v154 = vadd.f32 %v122, %v153
    %155 = vmatmul.f32.gmra.mxu0 %v93
    %v156 = vpop.f32.mrf.mxu0
    %v157 = vadd.f32 %v125, %v156
    %158 = vmatmul.f32.gmra.mxu0 %v96
    %v159 = vpop.f32.mrf.mxu0
    %v160 = vadd.f32 %v128, %v159
    %161 = vmatmul.f32.gmra.mxu0 %v99
    %v162 = vpop.f32.mrf.mxu0
    %v163 = vadd.f32 %v131, %v162
    %164 = vdwg.mxu0
    %v165 = vld [vmem:[%s0 + $0x10] sm:$0xff]
    %v166 = vld [vmem:[%s0 + $0x18] sm:$0xff]
    %v167 = vld [vmem:[%s0 + $0x20] sm:$0xff]
    %v168 = vld [vmem:[%s0 + $0x28] sm:$0xff]
    %s169 = scalar_lea.vmem [#allocation2], 64
    %v170 = vld [vmem:[%s169] sm:$0xff]
    %v171 = vld [vmem:[%s169 + $0x8] sm:$0xff]
    %v172 = vld [vmem:[%s169 + $0x10] sm:$0xff]
    %v173 = vld [vmem:[%s169 + $0x18] sm:$0xff]
    %v175 = vsel %vm91, %v165, 0
    %v178 = vsel %vm91, %v166, 0
    %v181 = vsel %vm91, %v167, 0
    %v184 = vsel %vm91, %v168, 0
    %186 = vmatpush.msra.mxu0 0.0
    %187 = vmatpush.msra.mxu0 0.0
    %188 = vmatpush.msra.mxu0 0.0
    %189 = vmatpush.msra.mxu0 0.0
    %190 = vmatpush.msra.mxu0 0.0
    %191 = vmatpush.msra.mxu0 0.0
    %192 = vmatpush.msra.mxu0 0.0
    %193 = vmatpush.msra.mxu0 0.0
    %194 = vmatpush.msra.mxu0 0.0
    %195 = vmatpush.msra.mxu0 0.0
    %196 = vmatpush.msra.mxu0 0.0
    %197 = vmatpush.msra.mxu0 0.0
    %198 = vmatpush.msra.mxu0 %v173
    %199 = vmatpush.msra.mxu0 %v172
    %200 = vmatpush.msra.mxu0 %v171
    %201 = vmatpush.msra.mxu0 %v170
    %202 = vmatmul.f32.gmra.mxu0 %v175
    %v203 = vpop.f32.mrf.mxu0
    %v204 = vadd.f32 0.0, %v203
    %205 = vmatmul.f32.gmra.mxu0 %v178
    %v206 = vpop.f32.mrf.mxu0
    %v207 = vadd.f32 0.0, %v206
    %208 = vmatmul.f32.gmra.mxu0 %v181
    %v209 = vpop.f32.mrf.mxu0
    %v210 = vadd.f32 0.0, %v209
    %211 = vmatmul.f32.gmra.mxu0 %v184
    %v212 = vpop.f32.mrf.mxu0
    %v213 = vadd.f32 0.0, %v212
    %214 = vdwg.mxu0
    %v215 = vadd.f32 %v154, %v204
    %v216 = vadd.f32 %v157, %v207
    %v217 = vadd.f32 %v160, %v210
    %v218 = vadd.f32 %v163, %v213
    %v219 = vld [vmem:[%s0 + $0x18] sm:$0xff]
    %v220 = vld [vmem:[%s0 + $0x20] sm:$0xff]
    %v221 = vld [vmem:[%s0 + $0x28] sm:$0xff]
    %v222 = vld [vmem:[%s0 + $0x30] sm:$0xff]
    %s223 = scalar_lea.vmem [#allocation2], 96
    %v224 = vld [vmem:[%s223] sm:$0xff]
    %v225 = vld [vmem:[%s223 + $0x8] sm:$0xff]
    %v226 = vld [vmem:[%s223 + $0x10] sm:$0xff]
    %v227 = vld [vmem:[%s223 + $0x18] sm:$0xff]
    %v229 = vsel %vm91, %v219, 0
    %v232 = vsel %vm91, %v220, 0
    %v235 = vsel %vm91, %v221, 0
    %v238 = vsel %vm91, %v222, 0
    %240 = vmatpush.msra.mxu0 0.0
    %241 = vmatpush.msra.mxu0 0.0
    %242 = vmatpush.msra.mxu0 0.0
    %243 = vmatpush.msra.mxu0 0.0
    %244 = vmatpush.msra.mxu0 0.0
    %245 = vmatpush.msra.mxu0 0.0
    %246 = vmatpush.msra.mxu0 0.0
    %247 = vmatpush.msra.mxu0 0.0
    %248 = vmatpush.msra.mxu0 0.0
    %249 = vmatpush.msra.mxu0 0.0
    %250 = vmatpush.msra.mxu0 0.0
    %251 = vmatpush.msra.mxu0 0.0
    %252 = vmatpush.msra.mxu0 %v227
    %253 = vmatpush.msra.mxu0 %v226
    %254 = vmatpush.msra.mxu0 %v225
    %255 = vmatpush.msra.mxu0 %v224
    %256 = vmatmul.f32.gmra.mxu0 %v229
    %v257 = vpop.f32.mrf.mxu0
    %v258 = vadd.f32 0.0, %v257
    %259 = vmatmul.f32.gmra.mxu0 %v232
    %v260 = vpop.f32.mrf.mxu0
    %v261 = vadd.f32 0.0, %v260
    %262 = vmatmul.f32.gmra.mxu0 %v235
    %v263 = vpop.f32.mrf.mxu0
    %v264 = vadd.f32 0.0, %v263
    %265 = vmatmul.f32.gmra.mxu0 %v238
    %v266 = vpop.f32.mrf.mxu0
    %v267 = vadd.f32 0.0, %v266
    %268 = vdwg.mxu0
    %v269 = vadd.f32 %v215, %v258
    %v270 = vadd.f32 %v216, %v261
    %v271 = vadd.f32 %v217, %v264
    %v272 = vadd.f32 %v218, %v267
    %v273 = vld [vmem:[#allocation4] sm:$0x1]
    %v275 = vperm.slane %v273, 0
    %v277 = vadd.f32 %v269, %v275
    %v278 = vadd.f32 %v270, %v275
    %v279 = vadd.f32 %v271, %v275
    %v280 = vadd.f32 %v272, %v275
    %v281 = vmax.f32 %v277, 0.0
    %v282 = vmax.f32 %v278, 0.0
    %v283 = vmax.f32 %v279, 0.0
    %v284 = vmax.f32 %v280, 0.0
    %v285 = vadd.f32 %v281, %v282
    %v286 = vadd.f32 %v285, %v283
    %v287 = vadd.f32 %v286, %v284
    %v288 = vrot.slane %v287, 4
    %v289 = vadd.f32 %v287, %v288
    %v290 = vrot.slane %v289, 2
    %v291 = vadd.f32 %v289, %v290
    %v292 = vrot.slane %v291, 1
    %v293 = vadd.f32 %v291, %v292
    %v294 = vrcp.pop 32.0
    %v295 = vmul.f32 32.0, %v294
    %v296 = vsub.f32 1.0, %v295
    %v297 = vmul.f32 %v294, %v296
    %v298 = vadd.f32 %v294, %v297
    %vm299 = vweird.f32 %v294
    %v300 = vsel %vm299, %v294, %v298
    %v301 = vmul.f32 %v293, %v300
    %v302 = vmul.f32 %v281, %v281
    %v303 = vmul.f32 %v282, %v282
    %v304 = vmul.f32 %v283, %v283
    %v305 = vmul.f32 %v284, %v284
    %v306 = vadd.f32 %v302, %v303
    %v307 = vadd.f32 %v306, %v304
    %v308 = vadd.f32 %v307, %v305
    %v309 = vrot.slane %v308, 4
    %v310 = vadd.f32 %v308, %v309
    %v311 = vrot.slane %v310, 2
    %v312 = vadd.f32 %v310, %v311
    %v313 = vrot.slane %v312, 1
    %v314 = vadd.f32 %v312, %v313
    %v315 = vmul.f32 %v314, %v300
    %v316 = vmul.f32 %v301, %v301
    %v317 = vsub.f32 %v315, %v316
    %v318 = vadd.f32 %v317, 1e-05
    %v319 = vrsqrt.pop %v318
    %v320 = vmul.f32 %v319, %v318
    %v321 = vmul.f32 %v320, %v319
    %v322 = vmul.f32 0.5, %v321
    %v323 = vsub.f32 1.5, %v322
    %v324 = vmul.f32 %v319, %v323
    %vm325 = vweird.f32 %v318
    %vm326 = vweird.f32 %v319
    %vm327 = vmor %vm325, %vm326
    %v328 = vsel %vm327, %v319, %v324
    %v329 = vld [vmem:[#allocation6] sm:$0x1]
    %v330 = vmul.f32 %v328, %v329
    %v331 = vsub.f32 %v281, %v301
    %v332 = vsub.f32 %v282, %v301
    %v333 = vsub.f32 %v283, %v301
    %v334 = vsub.f32 %v284, %v301
    %v335 = vperm.slane %v330, 0
    %v336 = vmul.f32 %v331, %v335
    %v337 = vmul.f32 %v332, %v335
    %v338 = vmul.f32 %v333, %v335
    %v339 = vmul.f32 %v334, %v335
    %v340 = vld [vmem:[#allocation7] sm:$0x1]
    %v342 = vperm.slane %v340, 0
    %v344 = vadd.f32 %v336, %v342
    %v345 = vadd.f32 %v337, %v342
    %v346 = vadd.f32 %v338, %v342
    %v347 = vadd.f32 %v339, %v342
    %348 = vst [vmem:[%s5] sm:$0xff] %v344
    %349 = vst [vmem:[%s5 + $0x8] sm:$0xff] %v345
    %350 = vst [vmem:[%s5 + $0x10] sm:$0xff] %v346
    %351 = vst [vmem:[%s5 + $0x18] sm:$0xff] %v347
    // Predicated region
    $region38: #{generator_forward.4} parent=1 // pred_check
      _
    $region39: #{generator_forward.4} parent=1 // pred_check_branch
      %353 = sbr.rel (0) target = $region41
    $region40: #{generator_forward.4} parent=1 // pred_region
      _
    $region41: #{generator_forward.4} parent=1 // pred_fallthru
      _
    // Predicated region
    $region42: #{generator_forward.4} parent=1 // pred_check
      _
    $region43: #{generator_forward.4} parent=1 // pred_check_branch
      %355 = sbr.rel (0) target = $region45
    $region44: #{generator_forward.4} parent=1 // pred_region
      _
    $region45: #{generator_forward.4} parent=1 // pred_fallthru
      _
    %356 = vsyncpa [#allocation3], 1
    %357 = vsyncpa [#allocation5], 1
    %358 = vsyncpa [#allocation8], 1

// kernel: generator_forward.5
$region0: #{generator_forward.5}
  #allocation0 [shape = 'u32[]', space=smem, size = 0x4, offset = 0x4, fixed_abs, tag = 'smem constant byte address 0x4 - core index']
  #allocation1 [shape = 'u32[72,128]{1,0:T(1,128)}', space=vmem, size = 0x9000, scoped, tag = 'internal scratch']
  %s0 = inlined_call_operand.vmem [shape: f32[126,384], index: 0, kind: input, shape index: {}]
  %s1 = inlined_call_operand.vmem [shape: f32[3,384,64], index: 1, kind: input, shape index: {}]
  %s2 = inlined_call_operand.vmem [shape: f32[1,64], index: 2, kind: input, shape index: {}]
  %s3 = inlined_call_operand.vmem [shape: f32[1,64], index: 3, kind: input, shape index: {}]
  %s4 = inlined_call_operand.vmem [shape: f32[1,64], index: 4, kind: input, shape index: {}]
  %s5 = inlined_call_operand.vmem [shape: f32[98,64], index: 5, kind: output, shape index: {}]
  %s6 = sld [smem:[#allocation0]]
  $region30: #{generator_forward.5} parent=0
    _
  %s8 = ssub.s32 1, %s6
  %s9 = scalar_select 0, %s8, %s6
  // Predicated region
  $region2: #{generator_forward.5} parent=0 // pred_check
    _
  $region3: #{generator_forward.5} parent=0 // pred_check_branch
    %11 = sbr.rel (0) target = $region5
  $region4: #{generator_forward.5} parent=0 // pred_region
    _
  $region5: #{generator_forward.5} parent=0 // pred_fallthru
    _
  // Predicated region
  $region6: #{generator_forward.5} parent=0 // pred_check
    _
  $region7: #{generator_forward.5} parent=0 // pred_check_branch
    %13 = sbr.rel (0) target = $region9
  $region8: #{generator_forward.5} parent=0 // pred_region
    _
  $region9: #{generator_forward.5} parent=0 // pred_fallthru
    _
  // Predicated region
  $region10: #{generator_forward.5} parent=0 // pred_check
    _
  $region11: #{generator_forward.5} parent=0 // pred_check_branch
    %15 = sbr.rel (0) target = $region13
  $region12: #{generator_forward.5} parent=0 // pred_region
    _
  $region13: #{generator_forward.5} parent=0 // pred_fallthru
    _
  // Predicated region
  $region14: #{generator_forward.5} parent=0 // pred_check
    _
  $region15: #{generator_forward.5} parent=0 // pred_check_branch
    %17 = sbr.rel (0) target = $region17
  $region16: #{generator_forward.5} parent=0 // pred_region
    _
  $region17: #{generator_forward.5} parent=0 // pred_fallthru
    _
  // Predicated region
  $region18: #{generator_forward.5} parent=0 // pred_check
    _
  $region19: #{generator_forward.5} parent=0 // pred_check_branch
    %19 = sbr.rel (0) target = $region21
  $region20: #{generator_forward.5} parent=0 // pred_region
    _
  $region21: #{generator_forward.5} parent=0 // pred_fallthru
    _
  %v20 = vld [vmem:[%s0] sm:$0xff]
  %v21 = vld [vmem:[%s0 + $0x8] sm:$0xff]
  %v22 = vld [vmem:[%s0 + $0x10] sm:$0xff]
  %v23 = vld [vmem:[%s0 + $0x18] sm:$0xff]
  %v24 = vld [vmem:[%s0 + $0x20] sm:$0xff]
  %v25 = vld [vmem:[%s0 + $0x28] sm:$0xff]
  %v26 = vld [vmem:[%s0 + $0x30] sm:$0xff]
  %v27 = vld [vmem:[%s0 + $0x38] sm:$0xff]
  %v28 = vld [vmem:[%s0 + $0x40] sm:$0xff]
  %v29 = vld [vmem:[%s0 + $0x48] sm:$0xff]
  %v30 = vld [vmem:[%s0 + $0x50] sm:$0xff]
  %v31 = vld [vmem:[%s0 + $0x58] sm:$0xff]
  %v32 = vld [vmem:[%s0 + $0x60] sm:$0xff]
  %v33 = vld [vmem:[%s0 + $0x68] sm:$0xff]
  %v34 = vld [vmem:[%s0 + $0x70] sm:$0xff]
  %v35 = vld [vmem:[%s0 + $0x78] sm:$0xff]
  %v36 = vld [vmem:[%s0 + $0x80] sm:$0xff]
  %v37 = vld [vmem:[%s0 + $0x88] sm:$0xff]
  %v38 = vld [vmem:[%s0 + $0x90] sm:$0xff]
  %v39 = vld [vmem:[%s0 + $0x98] sm:$0xff]
  %v40 = vld [vmem:[%s0 + $0xa0] sm:$0xff]
  %v41 = vld [vmem:[%s0 + $0xa8] sm:$0xff]
  %v42 = vld [vmem:[%s0 + $0xb0] sm:$0xff]
  %v43 = vld [vmem:[%s0 + $0xb8] sm:$0xff]
  %v44 = vld [vmem:[%s0 + $0xc0] sm:$0xff]
  %v45 = vld [vmem:[%s0 + $0xc8] sm:$0xff]
  %v46 = vld [vmem:[%s0 + $0xd0] sm:$0xff]
  %v47 = vld [vmem:[%s0 + $0xd8] sm:$0xff]
  %v48 = vld [vmem:[%s0 + $0xe0] sm:$0xff]
  %v49 = vld [vmem:[%s0 + $0xe8] sm:$0xff]
  %v50 = vld [vmem:[%s0 + $0xf0] sm:$0xff]
  %v51 = vld [vmem:[%s0 + $0xf8] sm:$0xff]
  %v52 = vld [vmem:[%s0 + $0x100] sm:$0xff]
  %v53 = vld [vmem:[%s0 + $0x108] sm:$0xff]
  %v54 = vld [vmem:[%s0 + $0x110] sm:$0xff]
  %v55 = vld [vmem:[%s0 + $0x118] sm:$0xff]
  %v56 = vld [vmem:[%s0 + $0x120] sm:$0x3]
  %v57 = vld [vmem:[%s0 + $0x128] sm:$0x3]
  %v58 = vld [vmem:[%s0 + $0x130] sm:$0x3]
  %v59 = vld [vmem:[%s1] sm:$0xff]
  %v60 = vld [vmem:[%s1 + $0x8] sm:$0xff]
  %v61 = vld [vmem:[%s1 + $0x10] sm:$0xff]
  %v62 = vld [vmem:[%s1 + $0x18] sm:$0xff]
  %v63 = vld [vmem:[%s1 + $0x20] sm:$0xff]
  %v64 = vld [vmem:[%s1 + $0x28] sm:$0xff]
  %v65 = vld [vmem:[%s1 + $0x30] sm:$0xff]
  %v66 = vld [vmem:[%s1 + $0x38] sm:$0xff]
  %v67 = vld [vmem:[%s1 + $0x40] sm:$0xff]
  %v68 = vld [vmem:[%s1 + $0x48] sm:$0xff]
  %v69 = vld [vmem:[%s1 + $0x50] sm:$0xff]
  %v70 = vld [vmem:[%s1 + $0x58] sm:$0xff]
  %v71 = vld [vmem:[%s1 + $0x60] sm:$0xff]
  %v72 = vld [vmem:[%s1 + $0x68] sm:$0xff]
  %v73 = vld [vmem:[%s1 + $0x70] sm:$0xff]
  %v74 = vld [vmem:[%s1 + $0x78] sm:$0xff]
  %v75 = vld [vmem:[%s1 + $0x80] sm:$0xff]
  %v76 = vld [vmem:[%s1 + $0x88] sm:$0xff]
  %v77 = vld [vmem:[%s1 + $0x90] sm:$0xff]
  %v78 = vld [vmem:[%s1 + $0x98] sm:$0xff]
  %v79 = vld [vmem:[%s1 + $0xa0] sm:$0xff]
  %v80 = vld [vmem:[%s1 + $0xa8] sm:$0xff]
  %v81 = vld [vmem:[%s1 + $0xb0] sm:$0xff]
  %v82 = vld [vmem:[%s1 + $0xb8] sm:$0xff]
  %v83 = vld [vmem:[%s1 + $0xc0] sm:$0xff]
  %v84 = vld [vmem:[%s1 + $0xc8] sm:$0xff]
  %v85 = vld [vmem:[%s1 + $0xd0] sm:$0xff]
  %v86 = vld [vmem:[%s1 + $0xd8] sm:$0xff]
  %v87 = vld [vmem:[%s1 + $0xe0] sm:$0xff]
  %v88 = vld [vmem:[%s1 + $0xe8] sm:$0xff]
  %v89 = vld [vmem:[%s1 + $0xf0] sm:$0xff]
  %v90 = vld [vmem:[%s1 + $0xf8] sm:$0xff]
  %v91 = vld [vmem:[%s1 + $0x100] sm:$0xff]
  %v92 = vld [vmem:[%s1 + $0x108] sm:$0xff]
  %v93 = vld [vmem:[%s1 + $0x110] sm:$0xff]
  %v94 = vld [vmem:[%s1 + $0x118] sm:$0xff]
  %v95 = vld [vmem:[%s1 + $0x120] sm:$0xff]
  %v96 = vld [vmem:[%s1 + $0x128] sm:$0xff]
  %v97 = vld [vmem:[%s1 + $0x130] sm:$0xff]
  %v98 = vld [vmem:[%s1 + $0x138] sm:$0xff]
  %v99 = vld [vmem:[%s1 + $0x140] sm:$0xff]
  %v100 = vld [vmem:[%s1 + $0x148] sm:$0xff]
  %v101 = vld [vmem:[%s1 + $0x150] sm:$0xff]
  %v102 = vld [vmem:[%s1 + $0x158] sm:$0xff]
  %v103 = vld [vmem:[%s1 + $0x160] sm:$0xff]
  %v104 = vld [vmem:[%s1 + $0x168] sm:$0xff]
  %v105 = vld [vmem:[%s1 + $0x170] sm:$0xff]
  %v106 = vld [vmem:[%s1 + $0x178] sm:$0xff]
  %v107 = vld [vmem:[%s0 + $0x18] sm:$0xc0]
  %v108 = vld [vmem:[%s0 + $0x20] sm:$0xc0]
  %v109 = vld [vmem:[%s0 + $0x28] sm:$0xc0]
  %v110 = vld [vmem:[%s0 + $0x120] sm:$0xff]
  %v111 = vld [vmem:[%s0 + $0x128] sm:$0xff]
  %v112 = vld [vmem:[%s0 + $0x130] sm:$0xff]
  %v113 = vld [vmem:[%s0 + $0x138] sm:$0xff]
  %v114 = vld [vmem:[%s0 + $0x140] sm:$0xff]
  %v115 = vld [vmem:[%s0 + $0x148] sm:$0xff]
  %s116 = scalar_lea.vmem %s1, 384
  %v117 = vld [vmem:[%s116] sm:$0xff]
  %v118 = vld [vmem:[%s116 + $0x8] sm:$0xff]
  %v119 = vld [vmem:[%s116 + $0x10] sm:$0xff]
  %v120 = vld [vmem:[%s116 + $0x18] sm:$0xff]
  %v121 = vld [vmem:[%s116 + $0x20] sm:$0xff]
  %v122 = vld [vmem:[%s116 + $0x28] sm:$0xff]
  %v123 = vld [vmem:[%s116 + $0x30] sm:$0xff]
  %v124 = vld [vmem:[%s116 + $0x38] sm:$0xff]
  %v125 = vld [vmem:[%s116 + $0x40] sm:$0xff]
  %v126 = vld [vmem:[%s116 + $0x48] sm:$0xff]
  %v127 = vld [vmem:[%s116 + $0x50] sm:$0xff]
  %v128 = vld [vmem:[%s116 + $0x58] sm:$0xff]
  %v129 = vld [vmem:[%s116 + $0x60] sm:$0xff]
  %v130 = vld [vmem:[%s116 + $0x68] sm:$0xff]
  %v131 = vld [vmem:[%s116 + $0x70] sm:$0xff]
  %v132 = vld [vmem:[%s116 + $0x78] sm:$0xff]
  %v133 = vld [vmem:[%s116 + $0x80] sm:$0xff]
  %v134 = vld [vmem:[%s116 + $0x88] sm:$0xff]
  %v135 = vld [vmem:[%s116 + $0x90] sm:$0xff]
  %v136 = vld [vmem:[%s116 + $0x98] sm:$0xff]
  %v137 = vld [vmem:[%s116 + $0xa0] sm:$0xff]
  %v138 = vld [vmem:[%s116 + $0xa8] sm:$0xff]
  %v139 = vld [vmem:[%s116 + $0xb0] sm:$0xff]
  %v140 = vld [vmem:[%s116 + $0xb8] sm:$0xff]
  %v141 = vld [vmem:[%s116 + $0xc0] sm:$0xff]
  %v142 = vld [vmem:[%s116 + $0xc8] sm:$0xff]
  %v143 = vld [vmem:[%s116 + $0xd0] sm:$0xff]
  %v144 = vld [vmem:[%s116 + $0xd8] sm:$0xff]
  %v145 = vld [vmem:[%s116 + $0xe0] sm:$0xff]
  %v146 = vld [vmem:[%s116 + $0xe8] sm:$0xff]
  %v147 = vld [vmem:[%s116 + $0xf0] sm:$0xff]
  %v148 = vld [vmem:[%s116 + $0xf8] sm:$0xff]
  %v149 = vld [vmem:[%s116 + $0x100] sm:$0xff]
  %v150 = vld [vmem:[%s116 + $0x108] sm:$0xff]
  %v151 = vld [vmem:[%s116 + $0x110] sm:$0xff]
  %v152 = vld [vmem:[%s116 + $0x118] sm:$0xff]
  %v153 = vld [vmem:[%s116 + $0x120] sm:$0xff]
  %v154 = vld [vmem:[%s116 + $0x128] sm:$0xff]
  %v155 = vld [vmem:[%s116 + $0x130] sm:$0xff]
  %v156 = vld [vmem:[%s116 + $0x138] sm:$0xff]
  %v157 = vld [vmem:[%s116 + $0x140] sm:$0xff]
  %v158 = vld [vmem:[%s116 + $0x148] sm:$0xff]
  %v159 = vld [vmem:[%s116 + $0x150] sm:$0xff]
  %v160 = vld [vmem:[%s116 + $0x158] sm:$0xff]
  %v161 = vld [vmem:[%s116 + $0x160] sm:$0xff]
  %v162 = vld [vmem:[%s116 + $0x168] sm:$0xff]
  %v163 = vld [vmem:[%s116 + $0x170] sm:$0xff]
  %v164 = vld [vmem:[%s116 + $0x178] sm:$0xff]
  %vm204 = vcmask 1041408
  %v205 = vrot.slane %v107, 6
  %v206 = vrot.slane %v26, 6
  %v207 = vsel %vm204, %v205, %v206
  %v208 = vrot.slane %v108, 6
  %v209 = vrot.slane %v27, 6
  %v210 = vsel %vm204, %v208, %v209
  %v211 = vrot.slane %v109, 6
  %v212 = vrot.slane %v28, 6
  %v213 = vsel %vm204, %v211, %v212
  %v214 = vrot.slane %v29, 6
  %v215 = vsel %vm204, %v206, %v214
  %v216 = vrot.slane %v30, 6
  %v217 = vsel %vm204, %v209, %v216
  %v218 = vrot.slane %v31, 6
  %v219 = vsel %vm204, %v212, %v218
  %v220 = vrot.slane %v32, 6
  %v221 = vsel %vm204, %v214, %v220
  %v222 = vrot.slane %v33, 6
  %v223 = vsel %vm204, %v216, %v222
  %v224 = vrot.slane %v34, 6
  %v225 = vsel %vm204, %v218, %v224
  %v226 = vrot.slane %v35, 6
  %v227 = vsel %vm204, %v220, %v226
  %v228 = vrot.slane %v36, 6
  %v229 = vsel %vm204, %v222, %v228
  %v230 = vrot.slane %v37, 6
  %v231 = vsel %vm204, %v224, %v230
  %v232 = vrot.slane %v38, 6
  %v233 = vsel %vm204, %v226, %v232
  %v234 = vrot.slane %v39, 6
  %v235 = vsel %vm204, %v228, %v234
  %v236 = vrot.slane %v40, 6
  %v237 = vsel %vm204, %v230, %v236
  %v238 = vrot.slane %v41, 6
  %v239 = vsel %vm204, %v232, %v238
  %v240 = vrot.slane %v42, 6
  %v241 = vsel %vm204, %v234, %v240
  %v242 = vrot.slane %v43, 6
  %v243 = vsel %vm204, %v236, %v242
  %v244 = vrot.slane %v44, 6
  %v245 = vsel %vm204, %v238, %v244
  %v246 = vrot.slane %v45, 6
  %v247 = vsel %vm204, %v240, %v246
  %v248 = vrot.slane %v46, 6
  %v249 = vsel %vm204, %v242, %v248
  %v250 = vrot.slane %v47, 6
  %v251 = vsel %vm204, %v244, %v250
  %v252 = vrot.slane %v48, 6
  %v253 = vsel %vm204, %v246, %v252
  %v254 = vrot.slane %v49, 6
  %v255 = vsel %vm204, %v248, %v254
  %v256 = vrot.slane %v50, 6
  %v257 = vsel %vm204, %v250, %v256
  %v258 = vrot.slane %v51, 6
  %v259 = vsel %vm204, %v252, %v258
  %v260 = vrot.slane %v52, 6
  %v261 = vsel %vm204, %v254, %v260
  %v262 = vrot.slane %v53, 6
  %v263 = vsel %vm204, %v256, %v262
  %v264 = vrot.slane %v54, 6
  %v265 = vsel %vm204, %v258, %v264
  %v266 = vrot.slane %v55, 6
  %v267 = vsel %vm204, %v260, %v266
  %v268 = vrot.slane %v110, 6
  %v269 = vsel %vm204, %v262, %v268
  %v270 = vrot.slane %v111, 6
  %v271 = vsel %vm204, %v264, %v270
  %v272 = vrot.slane %v112, 6
  %v273 = vsel %vm204, %v266, %v272
  %v274 = vrot.slane %v113, 6
  %v275 = vsel %vm204, %v268, %v274
  %v276 = vrot.slane %v114, 6
  %v277 = vsel %vm204, %v270, %v276
  %v278 = vrot.slane %v115, 6
  %v279 = vsel %vm204, %v272, %v278
  %319 = vmatpush.msra.mxu0 %v132
  %320 = vmatpush.msra.mxu0 %v131
  %321 = vmatpush.msra.mxu0 %v130
  %322 = vmatpush.msra.mxu0 %v129
  %323 = vmatpush.msra.mxu0 %v128
  %324 = vmatpush.msra.mxu0 %v127
  %325 = vmatpush.msra.mxu0 %v126
  %326 = vmatpush.msra.mxu0 %v125
  %327 = vmatpush.msra.mxu0 %v124
  %328 = vmatpush.msra.mxu0 %v123
  %329 = vmatpush.msra.mxu0 %v122
  %330 = vmatpush.msra.mxu0 %v121
  %331 = vmatpush.msra.mxu0 %v120
  %332 = vmatpush.msra.mxu0 %v119
  %333 = vmatpush.msra.mxu0 %v118
  %334 = vmatpush.msra.mxu0 %v117
  %335 = vmatmul.f32.gmra.mxu0 %v207
  %v336 = vpop.f32.mrf.mxu0
  %v337 = vadd.f32 0.0, %v336
  %338 = vmatmul.f32.gmra.mxu0 %v215
  %v339 = vpop.f32.mrf.mxu0
  %v340 = vadd.f32 0.0, %v339
  %341 = vmatmul.f32.gmra.mxu0 %v221
  %v342 = vpop.f32.mrf.mxu0
  %v343 = vadd.f32 0.0, %v342
  %344 = vmatmul.f32.gmra.mxu0 %v227
  %v345 = vpop.f32.mrf.mxu0
  %v346 = vadd.f32 0.0, %v345
  %347 = vmatmul.f32.gmra.mxu0 %v233
  %v348 = vpop.f32.mrf.mxu0
  %v349 = vadd.f32 0.0, %v348
  %350 = vmatmul.f32.gmra.mxu0 %v239
  %v351 = vpop.f32.mrf.mxu0
  %v352 = vadd.f32 0.0, %v351
  %353 = vmatmul.f32.gmra.mxu0 %v245
  %v354 = vpop.f32.mrf.mxu0
  %v355 = vadd.f32 0.0, %v354
  %356 = vmatmul.f32.gmra.mxu0 %v251
  %v357 = vpop.f32.mrf.mxu0
  %v358 = vadd.f32 0.0, %v357
  %359 = vmatmul.f32.gmra.mxu0 %v257
  %v360 = vpop.f32.mrf.mxu0
  %v361 = vadd.f32 0.0, %v360
  %362 = vmatmul.f32.gmra.mxu0 %v263
  %v363 = vpop.f32.mrf.mxu0
  %v364 = vadd.f32 0.0, %v363
  %365 = vmatmul.f32.gmra.mxu0 %v269
  %v366 = vpop.f32.mrf.mxu0
  %v367 = vadd.f32 0.0, %v366
  %368 = vmatmul.f32.gmra.mxu0 %v275
  %v369 = vpop.f32.mrf.mxu0
  %v370 = vadd.f32 0.0, %v369
  %371 = vmatmul.f32.gmra.mxu0 %v274
  %v372 = vpop.f32.mrf.mxu0
  %v373 = vadd.f32 0.0, %v372
  %374 = vdwg.mxu0
  %375 = vmatpush.msra.mxu0 %v148
  %376 = vmatpush.msra.mxu0 %v147
  %377 = vmatpush.msra.mxu0 %v146
  %378 = vmatpush.msra.mxu0 %v145
  %379 = vmatpush.msra.mxu0 %v144
  %380 = vmatpush.msra.mxu0 %v143
  %381 = vmatpush.msra.mxu0 %v142
  %382 = vmatpush.msra.mxu0 %v141
  %383 = vmatpush.msra.mxu0 %v140
  %384 = vmatpush.msra.mxu0 %v139
  %385 = vmatpush.msra.mxu0 %v138
  %386 = vmatpush.msra.mxu0 %v137
  %387 = vmatpush.msra.mxu0 %v136
  %388 = vmatpush.msra.mxu0 %v135
  %389 = vmatpush.msra.mxu0 %v134
  %390 = vmatpush.msra.mxu0 %v133
  %391 = vmatmul.f32.gmra.mxu0 %v210
  %v392 = vpop.f32.mrf.mxu0
  %v393 = vadd.f32 %v337, %v392
  %394 = vmatmul.f32.gmra.mxu0 %v217
  %v395 = vpop.f32.mrf.mxu0
  %v396 = vadd.f32 %v340, %v395
  %397 = vmatmul.f32.gmra.mxu0 %v223
  %v398 = vpop.f32.mrf.mxu0
  %v399 = vadd.f32 %v343, %v398
  %400 = vmatmul.f32.gmra.mxu0 %v229
  %v401 = vpop.f32.mrf.mxu0
  %v402 = vadd.f32 %v346, %v401
  %403 = vmatmul.f32.gmra.mxu0 %v235
  %v404 = vpop.f32.mrf.mxu0
  %v405 = vadd.f32 %v349, %v404
  %406 = vmatmul.f32.gmra.mxu0 %v241
  %v407 = vpop.f32.mrf.mxu0
  %v408 = vadd.f32 %v352, %v407
  %409 = vmatmul.f32.gmra.mxu0 %v247
  %v410 = vpop.f32.mrf.mxu0
  %v411 = vadd.f32 %v355, %v410
  %412 = vmatmul.f32.gmra.mxu0 %v253
  %v413 = vpop.f32.mrf.mxu0
  %v414 = vadd.f32 %v358, %v413
  %415 = vmatmul.f32.gmra.mxu0 %v259
  %v416 = vpop.f32.mrf.mxu0
  %v417 = vadd.f32 %v361, %v416
  %418 = vmatmul.f32.gmra.mxu0 %v265
  %v419 = vpop.f32.mrf.mxu0
  %v420 = vadd.f32 %v364, %v419
  %421 = vmatmul.f32.gmra.mxu0 %v271
  %v422 = vpop.f32.mrf.mxu0
  %v423 = vadd.f32 %v367, %v422
  %424 = vmatmul.f32.gmra.mxu0 %v277
  %v425 = vpop.f32.mrf.mxu0
  %v426 = vadd.f32 %v370, %v425
  %427 = vmatmul.f32.gmra.mxu0 %v276
  %v428 = vpop.f32.mrf.mxu0
  %v429 = vadd.f32 %v373, %v428
  %430 = vdwg.mxu0
  %431 = vmatpush.msra.mxu0 %v164
  %432 = vmatpush.msra.mxu0 %v163
  %433 = vmatpush.msra.mxu0 %v162
  %434 = vmatpush.msra.mxu0 %v161
  %435 = vmatpush.msra.mxu0 %v160
  %436 = vmatpush.msra.mxu0 %v159
  %437 = vmatpush.msra.mxu0 %v158
  %438 = vmatpush.msra.mxu0 %v157
  %439 = vmatpush.msra.mxu0 %v156
  %440 = vmatpush.msra.mxu0 %v155
  %441 = vmatpush.msra.mxu0 %v154
  %442 = vmatpush.msra.mxu0 %v153
  %443 = vmatpush.msra.mxu0 %v152
  %444 = vmatpush.msra.mxu0 %v151
  %445 = vmatpush.msra.mxu0 %v150
  %446 = vmatpush.msra.mxu0 %v149
  %447 = vmatmul.f32.gmra.mxu0 %v213
  %v448 = vpop.f32.mrf.mxu0
  %v449 = vadd.f32 %v393, %v448
  %450 = vmatmul.f32.gmra.mxu0 %v219
  %v451 = vpop.f32.mrf.mxu0
  %v452 = vadd.f32 %v396, %v451
  %453 = vmatmul.f32.gmra.mxu0 %v225
  %v454 = vpop.f32.mrf.mxu0
  %v455 = vadd.f32 %v399, %v454
  %456 = vmatmul.f32.gmra.mxu0 %v231
  %v457 = vpop.f32.mrf.mxu0
  %v458 = vadd.f32 %v402, %v457
  %459 = vmatmul.f32.gmra.mxu0 %v237
  %v460 = vpop.f32.mrf.mxu0
  %v461 = vadd.f32 %v405, %v460
  %462 = vmatmul.f32.gmra.mxu0 %v243
  %v463 = vpop.f32.mrf.mxu0
  %v464 = vadd.f32 %v408, %v463
  %465 = vmatmul.f32.gmra.mxu0 %v249
  %v466 = vpop.f32.mrf.mxu0
  %v467 = vadd.f32 %v411, %v466
  %468 = vmatmul.f32.gmra.mxu0 %v255
  %v469 = vpop.f32.mrf.mxu0
  %v470 = vadd.f32 %v414, %v469
  %471 = vmatmul.f32.gmra.mxu0 %v261
  %v472 = vpop.f32.mrf.mxu0
  %v473 = vadd.f32 %v417, %v472
  %474 = vmatmul.f32.gmra.mxu0 %v267
  %v475 = vpop.f32.mrf.mxu0
  %v476 = vadd.f32 %v420, %v475
  %477 = vmatmul.f32.gmra.mxu0 %v273
  %v478 = vpop.f32.mrf.mxu0
  %v479 = vadd.f32 %v423, %v478
  %480 = vmatmul.f32.gmra.mxu0 %v279
  %v481 = vpop.f32.mrf.mxu0
  %v482 = vadd.f32 %v426, %v481
  %483 = vmatmul.f32.gmra.mxu0 %v278
  %v484 = vpop.f32.mrf.mxu0
  %v485 = vadd.f32 %v429, %v484
  %486 = vdwg.mxu0
  %487 = vmatpush.msra.mxu0 %v74
  %488 = vmatpush.msra.mxu0 %v73
  %489 = vmatpush.msra.mxu0 %v72
  %490 = vmatpush.msra.mxu0 %v71
  %491 = vmatpush.msra.mxu0 %v70
  %492 = vmatpush.msra.mxu0 %v69
  %493 = vmatpush.msra.mxu0 %v68
  %494 = vmatpush.msra.mxu0 %v67
  %495 = vmatpush.msra.mxu0 %v66
  %496 = vmatpush.msra.mxu0 %v65
  %497 = vmatpush.msra.mxu0 %v64
  %498 = vmatpush.msra.mxu0 %v63
  %499 = vmatpush.msra.mxu0 %v62
  %500 = vmatpush.msra.mxu0 %v61
  %501 = vmatpush.msra.mxu0 %v60
  %502 = vmatpush.msra.mxu0 %v59
  %503 = vmatmul.f32.gmra.mxu0 %v20
  %v504 = vpop.f32.mrf.mxu0
  %v505 = vadd.f32 %v449, %v504
  %506 = vmatmul.f32.gmra.mxu0 %v23
  %v507 = vpop.f32.mrf.mxu0
  %v508 = vadd.f32 %v452, %v507
  %509 = vmatmul.f32.gmra.mxu0 %v26
  %v510 = vpop.f32.mrf.mxu0
  %v511 = vadd.f32 %v455, %v510
  %512 = vmatmul.f32.gmra.mxu0 %v29
  %v513 = vpop.f32.mrf.mxu0
  %v514 = vadd.f32 %v458, %v513
  %515 = vmatmul.f32.gmra.mxu0 %v32
  %v516 = vpop.f32.mrf.mxu0
  %v517 = vadd.f32 %v461, %v516
  %518 = vmatmul.f32.gmra.mxu0 %v35
  %v519 = vpop.f32.mrf.mxu0
  %v520 = vadd.f32 %v464, %v519
  %521 = vmatmul.f32.gmra.mxu0 %v38
  %v522 = vpop.f32.mrf.mxu0
  %v523 = vadd.f32 %v467, %v522
  %524 = vmatmul.f32.gmra.mxu0 %v41
  %v525 = vpop.f32.mrf.mxu0
  %v526 = vadd.f32 %v470, %v525
  %527 = vmatmul.f32.gmra.mxu0 %v44
  %v528 = vpop.f32.mrf.mxu0
  %v529 = vadd.f32 %v473, %v528
  %530 = vmatmul.f32.gmra.mxu0 %v47
  %v531 = vpop.f32.mrf.mxu0
  %v532 = vadd.f32 %v476, %v531
  %533 = vmatmul.f32.gmra.mxu0 %v50
  %v534 = vpop.f32.mrf.mxu0
  %v535 = vadd.f32 %v479, %v534
  %536 = vmatmul.f32.gmra.mxu0 %v53
  %v537 = vpop.f32.mrf.mxu0
  %v538 = vadd.f32 %v482, %v537
  %539 = vmatmul.f32.gmra.mxu0 %v56
  %v540 = vpop.f32.mrf.mxu0
  %v541 = vadd.f32 %v485, %v540
  %542 = vdwg.mxu0
  %543 = vmatpush.msra.mxu0 %v90
  %544 = vmatpush.msra.mxu0 %v89
  %545 = vmatpush.msra.mxu0 %v88
  %546 = vmatpush.msra.mxu0 %v87
  %547 = vmatpush.msra.mxu0 %v86
  %548 = vmatpush.msra.mxu0 %v85
  %549 = vmatpush.msra.mxu0 %v84
  %550 = vmatpush.msra.mxu0 %v83
  %551 = vmatpush.msra.mxu0 %v82
  %552 = vmatpush.msra.mxu0 %v81
  %553 = vmatpush.msra.mxu0 %v80
  %554 = vmatpush.msra.mxu0 %v79
  %555 = vmatpush.msra.mxu0 %v78
  %556 = vmatpush.msra.mxu0 %v77
  %557 = vmatpush.msra.mxu0 %v76
  %558 = vmatpush.msra.mxu0 %v75
  %559 = vmatmul.f32.gmra.mxu0 %v21
  %v560 = vpop.f32.mrf.mxu0
  %v561 = vadd.f32 %v505, %v560
  %562 = vmatmul.f32.gmra.mxu0 %v24
  %v563 = vpop.f32.mrf.mxu0
  %v564 = vadd.f32 %v508, %v563
  %565 = vmatmul.f32.gmra.mxu0 %v27
  %v566 = vpop.f32.mrf.mxu0
  %v567 = vadd.f32 %v511, %v566
  %568 = vmatmul.f32.gmra.mxu0 %v30
  %v569 = vpop.f32.mrf.mxu0
  %v570 = vadd.f32 %v514, %v569
  %571 = vmatmul.f32.gmra.mxu0 %v33
  %v572 = vpop.f32.mrf.mxu0
  %v573 = vadd.f32 %v517, %v572
  %574 = vmatmul.f32.gmra.mxu0 %v36
  %v575 = vpop.f32.mrf.mxu0
  %v576 = vadd.f32 %v520, %v575
  %577 = vmatmul.f32.gmra.mxu0 %v39
  %v578 = vpop.f32.mrf.mxu0
  %v579 = vadd.f32 %v523, %v578
  %580 = vmatmul.f32.gmra.mxu0 %v42
  %v581 = vpop.f32.mrf.mxu0
  %v582 = vadd.f32 %v526, %v581
  %583 = vmatmul.f32.gmra.mxu0 %v45
  %v584 = vpop.f32.mrf.mxu0
  %v585 = vadd.f32 %v529, %v584
  %586 = vmatmul.f32.gmra.mxu0 %v48
  %v587 = vpop.f32.mrf.mxu0
  %v588 = vadd.f32 %v532, %v587
  %589 = vmatmul.f32.gmra.mxu0 %v51
  %v590 = vpop.f32.mrf.mxu0
  %v591 = vadd.f32 %v535, %v590
  %592 = vmatmul.f32.gmra.mxu0 %v54
  %v593 = vpop.f32.mrf.mxu0
  %v594 = vadd.f32 %v538, %v593
  %595 = vmatmul.f32.gmra.mxu0 %v57
  %v596 = vpop.f32.mrf.mxu0
  %v597 = vadd.f32 %v541, %v596
  %598 = vdwg.mxu0
  %599 = vmatpush.msra.mxu0 %v106
  %600 = vmatpush.msra.mxu0 %v105
  %601 = vmatpush.msra.mxu0 %v104
  %602 = vmatpush.msra.mxu0 %v103
  %603 = vmatpush.msra.mxu0 %v102
  %604 = vmatpush.msra.mxu0 %v101
  %605 = vmatpush.msra.mxu0 %v100
  %606 = vmatpush.msra.mxu0 %v99
  %607 = vmatpush.msra.mxu0 %v98
  %608 = vmatpush.msra.mxu0 %v97
  %609 = vmatpush.msra.mxu0 %v96
  %610 = vmatpush.msra.mxu0 %v95
  %611 = vmatpush.msra.mxu0 %v94
  %612 = vmatpush.msra.mxu0 %v93
  %613 = vmatpush.msra.mxu0 %v92
  %614 = vmatpush.msra.mxu0 %v91
  %615 = vmatmul.f32.gmra.mxu0 %v22
  %v616 = vpop.f32.mrf.mxu0
  %v617 = vadd.f32 %v561, %v616
  %618 = vmatmul.f32.gmra.mxu0 %v25
  %v619 = vpop.f32.mrf.mxu0
  %v620 = vadd.f32 %v564, %v619
  %621 = vmatmul.f32.gmra.mxu0 %v28
  %v622 = vpop.f32.mrf.mxu0
  %v623 = vadd.f32 %v567, %v622
  %624 = vmatmul.f32.gmra.mxu0 %v31
  %v625 = vpop.f32.mrf.mxu0
  %v626 = vadd.f32 %v570, %v625
  %627 = vmatmul.f32.gmra.mxu0 %v34
  %v628 = vpop.f32.mrf.mxu0
  %v629 = vadd.f32 %v573, %v628
  %630 = vmatmul.f32.gmra.mxu0 %v37
  %v631 = vpop.f32.mrf.mxu0
  %v632 = vadd.f32 %v576, %v631
  %633 = vmatmul.f32.gmra.mxu0 %v40
  %v634 = vpop.f32.mrf.mxu0
  %v635 = vadd.f32 %v579, %v634
  %636 = vmatmul.f32.gmra.mxu0 %v43
  %v637 = vpop.f32.mrf.mxu0
  %v638 = vadd.f32 %v582, %v637
  %639 = vmatmul.f32.gmra.mxu0 %v46
  %v640 = vpop.f32.mrf.mxu0
  %v641 = vadd.f32 %v585, %v640
  %642 = vmatmul.f32.gmra.mxu0 %v49
  %v643 = vpop.f32.mrf.mxu0
  %v644 = vadd.f32 %v588, %v643
  %645 = vmatmul.f32.gmra.mxu0 %v52
  %v646 = vpop.f32.mrf.mxu0
  %v647 = vadd.f32 %v591, %v646
  %648 = vmatmul.f32.gmra.mxu0 %v55
  %v649 = vpop.f32.mrf.mxu0
  %v650 = vadd.f32 %v594, %v649
  %651 = vmatmul.f32.gmra.mxu0 %v58
  %v652 = vpop.f32.mrf.mxu0
  %v653 = vadd.f32 %v597, %v652
  %654 = vdwg.mxu0
  %v655 = vld [vmem:[%s0 + $0x48] sm:$0xf0]
  %v656 = vld [vmem:[%s0 + $0x50] sm:$0xf0]
  %v657 = vld [vmem:[%s0 + $0x58] sm:$0xf0]
  %v658 = vld [vmem:[%s0 + $0x60] sm:$0xff]
  %v659 = vld [vmem:[%s0 + $0x68] sm:$0xff]
  %v660 = vld [vmem:[%s0 + $0x70] sm:$0xff]
  %v661 = vld [vmem:[%s0 + $0x78] sm:$0xff]
  %v662 = vld [vmem:[%s0 + $0x80] sm:$0xff]
  %v663 = vld [vmem:[%s0 + $0x88] sm:$0xff]
  %v664 = vld [vmem:[%s0 + $0x90] sm:$0xff]
  %v665 = vld [vmem:[%s0 + $0x98] sm:$0xff]
  %v666 = vld [vmem:[%s0 + $0xa0] sm:$0xff]
  %v667 = vld [vmem:[%s0 + $0xa8] sm:$0xff]
  %v668 = vld [vmem:[%s0 + $0xb0] sm:$0xff]
  %v669 = vld [vmem:[%s0 + $0xb8] sm:$0xff]
  %v670 = vld [vmem:[%s0 + $0xc0] sm:$0xff]
  %v671 = vld [vmem:[%s0 + $0xc8] sm:$0xff]
  %v672 = vld [vmem:[%s0 + $0xd0] sm:$0xff]
  %v673 = vld [vmem:[%s0 + $0xd8] sm:$0xff]
  %v674 = vld [vmem:[%s0 + $0xe0] sm:$0xff]
  %v675 = vld [vmem:[%s0 + $0xe8] sm:$0xff]
  %v676 = vld [vmem:[%s0 + $0xf0] sm:$0xff]
  %v677 = vld [vmem:[%s0 + $0xf8] sm:$0xff]
  %v678 = vld [vmem:[%s0 + $0x100] sm:$0xff]
  %v679 = vld [vmem:[%s0 + $0x108] sm:$0xff]
  %v680 = vld [vmem:[%s0 + $0x110] sm:$0xff]
  %v681 = vld [vmem:[%s0 + $0x118] sm:$0xff]
  %v682 = vld [vmem:[%s0 + $0x120] sm:$0xff]
  %v683 = vld [vmem:[%s0 + $0x128] sm:$0xff]
  %v684 = vld [vmem:[%s0 + $0x130] sm:$0xff]
  %v685 = vld [vmem:[%s0 + $0x138] sm:$0xff]
  %v686 = vld [vmem:[%s0 + $0x140] sm:$0xff]
  %v687 = vld [vmem:[%s0 + $0x148] sm:$0xff]
  %v688 = vld [vmem:[%s0 + $0x150] sm:$0xff]
  %v689 = vld [vmem:[%s0 + $0x158] sm:$0xff]
  %v690 = vld [vmem:[%s0 + $0x160] sm:$0xff]
  %v691 = vld [vmem:[%s0 + $0x168] sm:$0x3f]
  %v692 = vld [vmem:[%s0 + $0x170] sm:$0x3f]
  %v693 = vld [vmem:[%s0 + $0x178] sm:$0x3f]
  %s694 = scalar_lea.vmem %s1, 768
  %v695 = vld [vmem:[%s694] sm:$0xff]
  %v696 = vld [vmem:[%s694 + $0x8] sm:$0xff]
  %v697 = vld [vmem:[%s694 + $0x10] sm:$0xff]
  %v698 = vld [vmem:[%s694 + $0x18] sm:$0xff]
  %v699 = vld [vmem:[%s694 + $0x20] sm:$0xff]
  %v700 = vld [vmem:[%s694 + $0x28] sm:$0xff]
  %v701 = vld [vmem:[%s694 + $0x30] sm:$0xff]
  %v702 = vld [vmem:[%s694 + $0x38] sm:$0xff]
  %v703 = vld [vmem:[%s694 + $0x40] sm:$0xff]
  %v704 = vld [vmem:[%s694 + $0x48] sm:$0xff]
  %v705 = vld [vmem:[%s694 + $0x50] sm:$0xff]
  %v706 = vld [vmem:[%s694 + $0x58] sm:$0xff]
  %v707 = vld [vmem:[%s694 + $0x60] sm:$0xff]
  %v708 = vld [vmem:[%s694 + $0x68] sm:$0xff]
  %v709 = vld [vmem:[%s694 + $0x70] sm:$0xff]
  %v710 = vld [vmem:[%s694 + $0x78] sm:$0xff]
  %v711 = vld [vmem:[%s694 + $0x80] sm:$0xff]
  %v712 = vld [vmem:[%s694 + $0x88] sm:$0xff]
  %v713 = vld [vmem:[%s694 + $0x90] sm:$0xff]
  %v714 = vld [vmem:[%s694 + $0x98] sm:$0xff]
  %v715 = vld [vmem:[%s694 + $0xa0] sm:$0xff]
  %v716 = vld [vmem:[%s694 + $0xa8] sm:$0xff]
  %v717 = vld [vmem:[%s694 + $0xb0] sm:$0xff]
  %v718 = vld [vmem:[%s694 + $0xb8] sm:$0xff]
  %v719 = vld [vmem:[%s694 + $0xc0] sm:$0xff]
  %v720 = vld [vmem:[%s694 + $0xc8] sm:$0xff]
  %v721 = vld [vmem:[%s694 + $0xd0] sm:$0xff]
  %v722 = vld [vmem:[%s694 + $0xd8] sm:$0xff]
  %v723 = vld [vmem:[%s694 + $0xe0] sm:$0xff]
  %v724 = vld [vmem:[%s694 + $0xe8] sm:$0xff]
  %v725 = vld [vmem:[%s694 + $0xf0] sm:$0xff]
  %v726 = vld [vmem:[%s694 + $0xf8] sm:$0xff]
  %v727 = vld [vmem:[%s694 + $0x100] sm:$0xff]
  %v728 = vld [vmem:[%s694 + $0x108] sm:$0xff]
  %v729 = vld [vmem:[%s694 + $0x110] sm:$0xff]
  %v730 = vld [vmem:[%s694 + $0x118] sm:$0xff]
  %v731 = vld [vmem:[%s694 + $0x120] sm:$0xff]
  %v732 = vld [vmem:[%s694 + $0x128] sm:$0xff]
  %v733 = vld [vmem:[%s694 + $0x130] sm:$0xff]
  %v734 = vld [vmem:[%s694 + $0x138] sm:$0xff]
  %v735 = vld [vmem:[%s694 + $0x140] sm:$0xff]
  %v736 = vld [vmem:[%s694 + $0x148] sm:$0xff]
  %v737 = vld [vmem:[%s694 + $0x150] sm:$0xff]
  %v738 = vld [vmem:[%s694 + $0x158] sm:$0xff]
  %v739 = vld [vmem:[%s694 + $0x160] sm:$0xff]
  %v740 = vld [vmem:[%s694 + $0x168] sm:$0xff]
  %v741 = vld [vmem:[%s694 + $0x170] sm:$0xff]
  %v742 = vld [vmem:[%s694 + $0x178] sm:$0xff]
  %vm782 = vcmask 1043456
  %v783 = vrot.slane %v655, 4
  %v784 = vrot.slane %v658, 4
  %v785 = vsel %vm782, %v783, %v784
  %v786 = vrot.slane %v656, 4
  %v787 = vrot.slane %v659, 4
  %v788 = vsel %vm782, %v786, %v787
  %v789 = vrot.slane %v657, 4
  %v790 = vrot.slane %v660, 4
  %v791 = vsel %vm782, %v789, %v790
  %v792 = vrot.slane %v661, 4
  %v793 = vsel %vm782, %v784, %v792
  %v794 = vrot.slane %v662, 4
  %v795 = vsel %vm782, %v787, %v794
  %v796 = vrot.slane %v663, 4
  %v797 = vsel %vm782, %v790, %v796
  %v798 = vrot.slane %v664, 4
  %v799 = vsel %vm782, %v792, %v798
  %v800 = vrot.slane %v665, 4
  %v801 = vsel %vm782, %v794, %v800
  %v802 = vrot.slane %v666, 4
  %v803 = vsel %vm782, %v796, %v802
  %v804 = vrot.slane %v667, 4
  %v805 = vsel %vm782, %v798, %v804
  %v806 = vrot.slane %v668, 4
  %v807 = vsel %vm782, %v800, %v806
  %v808 = vrot.slane %v669, 4
  %v809 = vsel %vm782, %v802, %v808
  %v810 = vrot.slane %v670, 4
  %v811 = vsel %vm782, %v804, %v810
  %v812 = vrot.slane %v671, 4
  %v813 = vsel %vm782, %v806, %v812
  %v814 = vrot.slane %v672, 4
  %v815 = vsel %vm782, %v808, %v814
  %v816 = vrot.slane %v673, 4
  %v817 = vsel %vm782, %v810, %v816
  %v818 = vrot.slane %v674, 4
  %v819 = vsel %vm782, %v812, %v818
  %v820 = vrot.slane %v675, 4
  %v821 = vsel %vm782, %v814, %v820
  %v822 = vrot.slane %v676, 4
  %v823 = vsel %vm782, %v816, %v822
  %v824 = vrot.slane %v677, 4
  %v825 = vsel %vm782, %v818, %v824
  %v826 = vrot.slane %v678, 4
  %v827 = vsel %vm782, %v820, %v826
  %v828 = vrot.slane %v679, 4
  %v829 = vsel %vm782, %v822, %v828
  %v830 = vrot.slane %v680, 4
  %v831 = vsel %vm782, %v824, %v830
  %v832 = vrot.slane %v681, 4
  %v833 = vsel %vm782, %v826, %v832
  %v834 = vrot.slane %v682, 4
  %v835 = vsel %vm782, %v828, %v834
  %v836 = vrot.slane %v683, 4
  %v837 = vsel %vm782, %v830, %v836
  %v838 = vrot.slane %v684, 4
  %v839 = vsel %vm782, %v832, %v838
  %v840 = vrot.slane %v685, 4
  %v841 = vsel %vm782, %v834, %v840
  %v842 = vrot.slane %v686, 4
  %v843 = vsel %vm782, %v836, %v842
  %v844 = vrot.slane %v687, 4
  %v845 = vsel %vm782, %v838, %v844
  %v846 = vrot.slane %v688, 4
  %v847 = vsel %vm782, %v840, %v846
  %v848 = vrot.slane %v689, 4
  %v849 = vsel %vm782, %v842, %v848
  %v850 = vrot.slane %v690, 4
  %v851 = vsel %vm782, %v844, %v850
  %v852 = vrot.slane %v691, 4
  %v853 = vsel %vm782, %v846, %v852
  %v854 = vrot.slane %v692, 4
  %v855 = vsel %vm782, %v848, %v854
  %v856 = vrot.slane %v693, 4
  %v857 = vsel %vm782, %v850, %v856
  %897 = vmatpush.msra.mxu0 %v710
  %898 = vmatpush.msra.mxu0 %v709
  %899 = vmatpush.msra.mxu0 %v708
  %900 = vmatpush.msra.mxu0 %v707
  %901 = vmatpush.msra.mxu0 %v706
  %902 = vmatpush.msra.mxu0 %v705
  %903 = vmatpush.msra.mxu0 %v704
  %904 = vmatpush.msra.mxu0 %v703
  %905 = vmatpush.msra.mxu0 %v702
  %906 = vmatpush.msra.mxu0 %v701
  %907 = vmatpush.msra.mxu0 %v700
  %908 = vmatpush.msra.mxu0 %v699
  %909 = vmatpush.msra.mxu0 %v698
  %910 = vmatpush.msra.mxu0 %v697
  %911 = vmatpush.msra.mxu0 %v696
  %912 = vmatpush.msra.mxu0 %v695
  %913 = vmatmul.f32.gmra.mxu0 %v785
  %v914 = vpop.f32.mrf.mxu0
  %v915 = vadd.f32 0.0, %v914
  %916 = vmatmul.f32.gmra.mxu0 %v793
  %v917 = vpop.f32.mrf.mxu0
  %v918 = vadd.f32 0.0, %v917
  %919 = vmatmul.f32.gmra.mxu0 %v799
  %v920 = vpop.f32.mrf.mxu0
  %v921 = vadd.f32 0.0, %v920
  %922 = vmatmul.f32.gmra.mxu0 %v805
  %v923 = vpop.f32.mrf.mxu0
  %v924 = vadd.f32 0.0, %v923
  %925 = vmatmul.f32.gmra.mxu0 %v811
  %v926 = vpop.f32.mrf.mxu0
  %v927 = vadd.f32 0.0, %v926
  %928 = vmatmul.f32.gmra.mxu0 %v817
  %v929 = vpop.f32.mrf.mxu0
  %v930 = vadd.f32 0.0, %v929
  %931 = vmatmul.f32.gmra.mxu0 %v823
  %v932 = vpop.f32.mrf.mxu0
  %v933 = vadd.f32 0.0, %v932
  %934 = vmatmul.f32.gmra.mxu0 %v829
  %v935 = vpop.f32.mrf.mxu0
  %v936 = vadd.f32 0.0, %v935
  %937 = vmatmul.f32.gmra.mxu0 %v835
  %v938 = vpop.f32.mrf.mxu0
  %v939 = vadd.f32 0.0, %v938
  %940 = vmatmul.f32.gmra.mxu0 %v841
  %v941 = vpop.f32.mrf.mxu0
  %v942 = vadd.f32 0.0, %v941
  %943 = vmatmul.f32.gmra.mxu0 %v847
  %v944 = vpop.f32.mrf.mxu0
  %v945 = vadd.f32 0.0, %v944
  %946 = vmatmul.f32.gmra.mxu0 %v853
  %v947 = vpop.f32.mrf.mxu0
  %v948 = vadd.f32 0.0, %v947
  %949 = vmatmul.f32.gmra.mxu0 %v852
  %v950 = vpop.f32.mrf.mxu0
  %v951 = vadd.f32 0.0, %v950
  %952 = vdwg.mxu0
  %953 = vmatpush.msra.mxu0 %v726
  %954 = vmatpush.msra.mxu0 %v725
  %955 = vmatpush.msra.mxu0 %v724
  %956 = vmatpush.msra.mxu0 %v723
  %957 = vmatpush.msra.mxu0 %v722
  %958 = vmatpush.msra.mxu0 %v721
  %959 = vmatpush.msra.mxu0 %v720
  %960 = vmatpush.msra.mxu0 %v719
  %961 = vmatpush.msra.mxu0 %v718
  %962 = vmatpush.msra.mxu0 %v717
  %963 = vmatpush.msra.mxu0 %v716
  %964 = vmatpush.msra.mxu0 %v715
  %965 = vmatpush.msra.mxu0 %v714
  %966 = vmatpush.msra.mxu0 %v713
  %967 = vmatpush.msra.mxu0 %v712
  %968 = vmatpush.msra.mxu0 %v711
  %969 = vmatmul.f32.gmra.mxu0 %v788
  %v970 = vpop.f32.mrf.mxu0
  %v971 = vadd.f32 %v915, %v970
  %972 = vmatmul.f32.gmra.mxu0 %v795
  %v973 = vpop.f32.mrf.mxu0
  %v974 = vadd.f32 %v918, %v973
  %975 = vmatmul.f32.gmra.mxu0 %v801
  %v976 = vpop.f32.mrf.mxu0
  %v977 = vadd.f32 %v921, %v976
  %978 = vmatmul.f32.gmra.mxu0 %v807
  %v979 = vpop.f32.mrf.mxu0
  %v980 = vadd.f32 %v924, %v979
  %981 = vmatmul.f32.gmra.mxu0 %v813
  %v982 = vpop.f32.mrf.mxu0
  %v983 = vadd.f32 %v927, %v982
  %984 = vmatmul.f32.gmra.mxu0 %v819
  %v985 = vpop.f32.mrf.mxu0
  %v986 = vadd.f32 %v930, %v985
  %987 = vmatmul.f32.gmra.mxu0 %v825
  %v988 = vpop.f32.mrf.mxu0
  %v989 = vadd.f32 %v933, %v988
  %990 = vmatmul.f32.gmra.mxu0 %v831
  %v991 = vpop.f32.mrf.mxu0
  %v992 = vadd.f32 %v936, %v991
  %993 = vmatmul.f32.gmra.mxu0 %v837
  %v994 = vpop.f32.mrf.mxu0
  %v995 = vadd.f32 %v939, %v994
  %996 = vmatmul.f32.gmra.mxu0 %v843
  %v997 = vpop.f32.mrf.mxu0
  %v998 = vadd.f32 %v942, %v997
  %999 = vmatmul.f32.gmra.mxu0 %v849
  %v1000 = vpop.f32.mrf.mxu0
  %v1001 = vadd.f32 %v945, %v1000
  %1002 = vmatmul.f32.gmra.mxu0 %v855
  %v1003 = vpop.f32.mrf.mxu0
  %v1004 = vadd.f32 %v948, %v1003
  %1005 = vmatmul.f32.gmra.mxu0 %v854
  %v1006 = vpop.f32.mrf.mxu0
  %v1007 = vadd.f32 %v951, %v1006
  %1008 = vdwg.mxu0
  %1009 = vmatpush.msra.mxu0 %v742
  %1010 = vmatpush.msra.mxu0 %v741
  %1011 = vmatpush.msra.mxu0 %v740
  %1012 = vmatpush.msra.mxu0 %v739
  %1013 = vmatpush.msra.mxu0 %v738
  %1014 = vmatpush.msra.mxu0 %v737
  %1015 = vmatpush.msra.mxu0 %v736
  %1016 = vmatpush.msra.mxu0 %v735
  %1017 = vmatpush.msra.mxu0 %v734
  %1018 = vmatpush.msra.mxu0 %v733
  %1019 = vmatpush.msra.mxu0 %v732
  %1020 = vmatpush.msra.mxu0 %v731
  %1021 = vmatpush.msra.mxu0 %v730
  %1022 = vmatpush.msra.mxu0 %v729
  %1023 = vmatpush.msra.mxu0 %v728
  %1024 = vmatpush.msra.mxu0 %v727
  %1025 = vmatmul.f32.gmra.mxu0 %v791
  %v1026 = vpop.f32.mrf.mxu0
  %v1027 = vadd.f32 %v971, %v1026
  %1028 = vmatmul.f32.gmra.mxu0 %v797
  %v1029 = vpop.f32.mrf.mxu0
  %v1030 = vadd.f32 %v974, %v1029
  %1031 = vmatmul.f32.gmra.mxu0 %v803
  %v1032 = vpop.f32.mrf.mxu0
  %v1033 = vadd.f32 %v977, %v1032
  %1034 = vmatmul.f32.gmra.mxu0 %v809
  %v1035 = vpop.f32.mrf.mxu0
  %v1036 = vadd.f32 %v980, %v1035
  %1037 = vmatmul.f32.gmra.mxu0 %v815
  %v1038 = vpop.f32.mrf.mxu0
  %v1039 = vadd.f32 %v983, %v1038
  %1040 = vmatmul.f32.gmra.mxu0 %v821
  %v1041 = vpop.f32.mrf.mxu0
  %v1042 = vadd.f32 %v986, %v1041
  %1043 = vmatmul.f32.gmra.mxu0 %v827
  %v1044 = vpop.f32.mrf.mxu0
  %v1045 = vadd.f32 %v989, %v1044
  %1046 = vmatmul.f32.gmra.mxu0 %v833
  %v1047 = vpop.f32.mrf.mxu0
  %v1048 = vadd.f32 %v992, %v1047
  %1049 = vmatmul.f32.gmra.mxu0 %v839
  %v1050 = vpop.f32.mrf.mxu0
  %v1051 = vadd.f32 %v995, %v1050
  %1052 = vmatmul.f32.gmra.mxu0 %v845
  %v1053 = vpop.f32.mrf.mxu0
  %v1054 = vadd.f32 %v998, %v1053
  %1055 = vmatmul.f32.gmra.mxu0 %v851
  %v1056 = vpop.f32.mrf.mxu0
  %v1057 = vadd.f32 %v1001, %v1056
  %1058 = vmatmul.f32.gmra.mxu0 %v857
  %v1059 = vpop.f32.mrf.mxu0
  %v1060 = vadd.f32 %v1004, %v1059
  %1061 = vmatmul.f32.gmra.mxu0 %v856
  %v1062 = vpop.f32.mrf.mxu0
  %v1063 = vadd.f32 %v1007, %v1062
  %1064 = vdwg.mxu0
  %v1065 = vadd.f32 %v617, %v1027
  %v1066 = vadd.f32 %v620, %v1030
  %v1067 = vadd.f32 %v623, %v1033
  %v1068 = vadd.f32 %v626, %v1036
  %v1069 = vadd.f32 %v629, %v1039
  %v1070 = vadd.f32 %v632, %v1042
  %v1071 = vadd.f32 %v635, %v1045
  %v1072 = vadd.f32 %v638, %v1048
  %v1073 = vadd.f32 %v641, %v1051
  %v1074 = vadd.f32 %v644, %v1054
  %v1075 = vadd.f32 %v647, %v1057
  %v1076 = vadd.f32 %v650, %v1060
  %v1077 = vadd.f32 %v653, %v1063
  %v1078 = vld [vmem:[%s2] sm:$0x1]
  %v1080 = vperm.slane %v1078, 0
  %v1082 = vadd.f32 %v1065, %v1080
  %v1083 = vadd.f32 %v1066, %v1080
  %v1084 = vadd.f32 %v1067, %v1080
  %v1085 = vadd.f32 %v1068, %v1080
  %v1086 = vadd.f32 %v1069, %v1080
  %v1087 = vadd.f32 %v1070, %v1080
  %v1088 = vadd.f32 %v1071, %v1080
  %v1089 = vadd.f32 %v1072, %v1080
  %v1090 = vadd.f32 %v1073, %v1080
  %v1091 = vadd.f32 %v1074, %v1080
  %v1092 = vadd.f32 %v1075, %v1080
  %v1093 = vadd.f32 %v1076, %v1080
  %v1094 = vadd.f32 %v1077, %v1080
  %v1095 = vmax.f32 %v1082, 0.0
  %v1096 = vmax.f32 %v1083, 0.0
  %v1097 = vmax.f32 %v1084, 0.0
  %v1098 = vmax.f32 %v1085, 0.0
  %v1099 = vmax.f32 %v1086, 0.0
  %v1100 = vmax.f32 %v1087, 0.0
  %v1101 = vmax.f32 %v1088, 0.0
  %v1102 = vmax.f32 %v1089, 0.0
  %v1103 = vmax.f32 %v1090, 0.0
  %v1104 = vmax.f32 %v1091, 0.0
  %v1105 = vmax.f32 %v1092, 0.0
  %v1106 = vmax.f32 %v1093, 0.0
  %v1107 = vmax.f32 %v1094, 0.0
  %vm1108 = vcmask 523264
  %v1109 = vsel %vm1108, %v1095, 0.0
  %v1110 = vsel %vm1108, %v1096, 0.0
  %v1111 = vadd.f32 %v1109, %v1110
  %v1112 = vsel %vm1108, %v1097, 0.0
  %v1113 = vadd.f32 %v1111, %v1112
  %v1114 = vsel %vm1108, %v1098, 0.0
  %v1115 = vadd.f32 %v1113, %v1114
  %v1116 = vsel %vm1108, %v1099, 0.0
  %v1117 = vadd.f32 %v1115, %v1116
  %v1118 = vsel %vm1108, %v1100, 0.0
  %v1119 = vadd.f32 %v1117, %v1118
  %v1120 = vsel %vm1108, %v1101, 0.0
  %v1121 = vadd.f32 %v1119, %v1120
  %v1122 = vsel %vm1108, %v1102, 0.0
  %v1123 = vadd.f32 %v1121, %v1122
  %v1124 = vsel %vm1108, %v1103, 0.0
  %v1125 = vadd.f32 %v1123, %v1124
  %v1126 = vsel %vm1108, %v1104, 0.0
  %v1127 = vadd.f32 %v1125, %v1126
  %v1128 = vsel %vm1108, %v1105, 0.0
  %v1129 = vadd.f32 %v1127, %v1128
  %v1130 = vsel %vm1108, %v1106, 0.0
  %v1131 = vadd.f32 %v1129, %v1130
  %vm1132 = vcmask 517120
  %v1133 = vsel %vm1132, %v1107, 0.0
  %v1134 = vadd.f32 %v1131, %v1133
  %v1135 = vrot.slane %v1134, 4
  %v1136 = vadd.f32 %v1134, %v1135
  %v1137 = vrot.slane %v1136, 2
  %v1138 = vadd.f32 %v1136, %v1137
  %v1139 = vrot.slane %v1138, 1
  %v1140 = vadd.f32 %v1138, %v1139
  %v1141 = vrcp.pop 98.0
  %v1142 = vmul.f32 98.0, %v1141
  %v1143 = vsub.f32 1.0, %v1142
  %v1144 = vmul.f32 %v1141, %v1143
  %v1145 = vadd.f32 %v1141, %v1144
  %vm1146 = vweird.f32 %v1141
  %v1147 = vsel %vm1146, %v1141, %v1145
  %v1148 = vmul.f32 %v1140, %v1147
  %v1149 = vmul.f32 %v1095, %v1095
  %v1150 = vmul.f32 %v1096, %v1096
  %v1151 = vmul.f32 %v1097, %v1097
  %v1152 = vmul.f32 %v1098, %v1098
  %v1153 = vmul.f32 %v1099, %v1099
  %v1154 = vmul.f32 %v1100, %v1100
  %v1155 = vmul.f32 %v1101, %v1101
  %v1156 = vmul.f32 %v1102, %v1102
  %v1157 = vmul.f32 %v1103, %v1103
  %v1158 = vmul.f32 %v1104, %v1104
  %v1159 = vmul.f32 %v1105, %v1105
  %v1160 = vmul.f32 %v1106, %v1106
  %v1161 = vmul.f32 %v1107, %v1107
  %v1162 = vsel %vm1108, %v1149, 0.0
  %v1163 = vsel %vm1108, %v1150, 0.0
  %v1164 = vadd.f32 %v1162, %v1163
  %v1165 = vsel %vm1108, %v1151, 0.0
  %v1166 = vadd.f32 %v1164, %v1165
  %v1167 = vsel %vm1108, %v1152, 0.0
  %v1168 = vadd.f32 %v1166, %v1167
  %v1169 = vsel %vm1108, %v1153, 0.0
  %v1170 = vadd.f32 %v1168, %v1169
  %v1171 = vsel %vm1108, %v1154, 0.0
  %v1172 = vadd.f32 %v1170, %v1171
  %v1173 = vsel %vm1108, %v1155, 0.0
  %v1174 = vadd.f32 %v1172, %v1173
  %v1175 = vsel %vm1108, %v1156, 0.0
  %v1176 = vadd.f32 %v1174, %v1175
  %v1177 = vsel %vm1108, %v1157, 0.0
  %v1178 = vadd.f32 %v1176, %v1177
  %v1179 = vsel %vm1108, %v1158, 0.0
  %v1180 = vadd.f32 %v1178, %v1179
  %v1181 = vsel %vm1108, %v1159, 0.0
  %v1182 = vadd.f32 %v1180, %v1181
  %v1183 = vsel %vm1108, %v1160, 0.0
  %v1184 = vadd.f32 %v1182, %v1183
  %v1185 = vsel %vm1132, %v1161, 0.0
  %v1186 = vadd.f32 %v1184, %v1185
  %v1187 = vrot.slane %v1186, 4
  %v1188 = vadd.f32 %v1186, %v1187
  %v1189 = vrot.slane %v1188, 2
  %v1190 = vadd.f32 %v1188, %v1189
  %v1191 = vrot.slane %v1190, 1
  %v1192 = vadd.f32 %v1190, %v1191
  %v1193 = vmul.f32 %v1192, %v1147
  %v1194 = vmul.f32 %v1148, %v1148
  %v1195 = vsub.f32 %v1193, %v1194
  %v1196 = vadd.f32 %v1195, 1e-05
  %v1197 = vrsqrt.pop %v1196
  %v1198 = vmul.f32 %v1197, %v1196
  %v1199 = vmul.f32 %v1198, %v1197
  %v1200 = vmul.f32 0.5, %v1199
  %v1201 = vsub.f32 1.5, %v1200
  %v1202 = vmul.f32 %v1197, %v1201
  %vm1203 = vweird.f32 %v1196
  %vm1204 = vweird.f32 %v1197
  %vm1205 = vmor %vm1203, %vm1204
  %v1206 = vsel %vm1205, %v1197, %v1202
  %v1207 = vld [vmem:[%s3] sm:$0x1]
  %v1208 = vmul.f32 %v1206, %v1207
  %v1209 = vsub.f32 %v1095, %v1148
  %v1210 = vsub.f32 %v1096, %v1148
  %v1211 = vsub.f32 %v1097, %v1148
  %v1212 = vsub.f32 %v1098, %v1148
  %v1213 = vsub.f32 %v1099, %v1148
  %v1214 = vsub.f32 %v1100, %v1148
  %v1215 = vsub.f32 %v1101, %v1148
  %v1216 = vsub.f32 %v1102, %v1148
  %v1217 = vsub.f32 %v1103, %v1148
  %v1218 = vsub.f32 %v1104, %v1148
  %v1219 = vsub.f32 %v1105, %v1148
  %v1220 = vsub.f32 %v1106, %v1148
  %v1221 = vsub.f32 %v1107, %v1148
  %v1222 = vperm.slane %v1208, 0
  %v1223 = vmul.f32 %v1209, %v1222
  %v1224 = vmul.f32 %v1210, %v1222
  %v1225 = vmul.f32 %v1211, %v1222
  %v1226 = vmul.f32 %v1212, %v1222
  %v1227 = vmul.f32 %v1213, %v1222
  %v1228 = vmul.f32 %v1214, %v1222
  %v1229 = vmul.f32 %v1215, %v1222
  %v1230 = vmul.f32 %v1216, %v1222
  %v1231 = vmul.f32 %v1217, %v1222
  %v1232 = vmul.f32 %v1218, %v1222
  %v1233 = vmul.f32 %v1219, %v1222
  %v1234 = vmul.f32 %v1220, %v1222
  %v1235 = vmul.f32 %v1221, %v1222
  %v1236 = vld [vmem:[%s4] sm:$0x1]
  %v1238 = vperm.slane %v1236, 0
  %v1240 = vadd.f32 %v1223, %v1238
  %v1241 = vadd.f32 %v1224, %v1238
  %v1242 = vadd.f32 %v1225, %v1238
  %v1243 = vadd.f32 %v1226, %v1238
  %v1244 = vadd.f32 %v1227, %v1238
  %v1245 = vadd.f32 %v1228, %v1238
  %v1246 = vadd.f32 %v1229, %v1238
  %v1247 = vadd.f32 %v1230, %v1238
  %v1248 = vadd.f32 %v1231, %v1238
  %v1249 = vadd.f32 %v1232, %v1238
  %v1250 = vadd.f32 %v1233, %v1238
  %v1251 = vadd.f32 %v1234, %v1238
  %v1252 = vadd.f32 %v1235, %v1238
  %1253 = vst.msk [vmem:[%s5] sm:$0xff] %vm1108, %v1240
  %1254 = vst.msk [vmem:[%s5 + $0x8] sm:$0xff] %vm1108, %v1241
  %1255 = vst.msk [vmem:[%s5 + $0x10] sm:$0xff] %vm1108, %v1242
  %1256 = vst.msk [vmem:[%s5 + $0x18] sm:$0xff] %vm1108, %v1243
  %1257 = vst.msk [vmem:[%s5 + $0x20] sm:$0xff] %vm1108, %v1244
  %1258 = vst.msk [vmem:[%s5 + $0x28] sm:$0xff] %vm1108, %v1245
  %1259 = vst.msk [vmem:[%s5 + $0x30] sm:$0xff] %vm1108, %v1246
  %1260 = vst.msk [vmem:[%s5 + $0x38] sm:$0xff] %vm1108, %v1247
  %1261 = vst.msk [vmem:[%s5 + $0x40] sm:$0xff] %vm1108, %v1248
  %1262 = vst.msk [vmem:[%s5 + $0x48] sm:$0xff] %vm1108, %v1249
  %1263 = vst.msk [vmem:[%s5 + $0x50] sm:$0xff] %vm1108, %v1250
  %1264 = vst.msk [vmem:[%s5 + $0x58] sm:$0xff] %vm1108, %v1251
  %1265 = vst.msk [vmem:[%s5 + $0x60] sm:$0x3] %vm1132, %v1252
  // Predicated region
  $region22: #{generator_forward.5} parent=0 // pred_check
    _
  $region23: #{generator_forward.5} parent=0 // pred_check_branch
    %1267 = sbr.rel (0) target = $region25
  $region24: #{generator_forward.5} parent=0 // pred_region
    _
  $region25: #{generator_forward.5} parent=0 // pred_fallthru
    _
  // Predicated region
  $region26: #{generator_forward.5} parent=0 // pred_check
    _
  $region27: #{generator_forward.5} parent=0 // pred_check_branch
    %1269 = sbr.rel (0) target = $region29
  $region28: #{generator_forward.5} parent=0 // pred_region
    _
  $region29: #{generator_forward.5} parent=0 // pred_fallthru
    _

// kernel: generator_forward.6
$region0: #{generator_forward.6}
  #allocation0 [shape = 'u32[]', space=smem, size = 0x4, offset = 0x4, fixed_abs, tag = 'smem constant byte address 0x4 - core index']
  #allocation1 [shape = 'u32[72,128]{1,0:T(1,128)}', space=vmem, size = 0x9000, scoped, tag = 'internal scratch']
  %s0 = inlined_call_operand.vmem [shape: f32[476,256], index: 0, kind: input, shape index: {}]
  %s1 = inlined_call_operand.vmem [shape: f32[4,256,32], index: 1, kind: input, shape index: {}]
  %s2 = inlined_call_operand.vmem [shape: f32[1,32], index: 2, kind: input, shape index: {}]
  %s3 = inlined_call_operand.vmem [shape: f32[1,32], index: 3, kind: input, shape index: {}]
  %s4 = inlined_call_operand.vmem [shape: f32[1,32], index: 4, kind: input, shape index: {}]
  %s5 = inlined_call_operand.vmem [shape: f32[392,32], index: 5, kind: output, shape index: {}]
  %s6 = sld [smem:[#allocation0]]
  $region30: #{generator_forward.6} parent=0
    _
  %s8 = ssub.s32 1, %s6
  %s9 = scalar_select 0, %s8, %s6
  // Predicated region
  $region2: #{generator_forward.6} parent=0 // pred_check
    _
  $region3: #{generator_forward.6} parent=0 // pred_check_branch
    %11 = sbr.rel (0) target = $region5
  $region4: #{generator_forward.6} parent=0 // pred_region
    _
  $region5: #{generator_forward.6} parent=0 // pred_fallthru
    _
  // Predicated region
  $region6: #{generator_forward.6} parent=0 // pred_check
    _
  $region7: #{generator_forward.6} parent=0 // pred_check_branch
    %13 = sbr.rel (0) target = $region9
  $region8: #{generator_forward.6} parent=0 // pred_region
    _
  $region9: #{generator_forward.6} parent=0 // pred_fallthru
    _
  // Predicated region
  $region10: #{generator_forward.6} parent=0 // pred_check
    _
  $region11: #{generator_forward.6} parent=0 // pred_check_branch
    %15 = sbr.rel (0) target = $region13
  $region12: #{generator_forward.6} parent=0 // pred_region
    _
  $region13: #{generator_forward.6} parent=0 // pred_fallthru
    _
  // Predicated region
  $region14: #{generator_forward.6} parent=0 // pred_check
    _
  $region15: #{generator_forward.6} parent=0 // pred_check_branch
    %17 = sbr.rel (0) target = $region17
  $region16: #{generator_forward.6} parent=0 // pred_region
    _
  $region17: #{generator_forward.6} parent=0 // pred_fallthru
    _
  // Predicated region
  $region18: #{generator_forward.6} parent=0 // pred_check
    _
  $region19: #{generator_forward.6} parent=0 // pred_check_branch
    %19 = sbr.rel (0) target = $region21
  $region20: #{generator_forward.6} parent=0 // pred_region
    _
  $region21: #{generator_forward.6} parent=0 // pred_fallthru
    _
  %v20 = vld [vmem:[%s0] sm:$0xff]
  %v21 = vld [vmem:[%s0 + $0x8] sm:$0xff]
  %v22 = vld [vmem:[%s0 + $0x10] sm:$0xff]
  %v23 = vld [vmem:[%s0 + $0x18] sm:$0xff]
  %v24 = vld [vmem:[%s0 + $0x20] sm:$0xff]
  %v25 = vld [vmem:[%s0 + $0x28] sm:$0xff]
  %v26 = vld [vmem:[%s0 + $0x30] sm:$0xff]
  %v27 = vld [vmem:[%s0 + $0x38] sm:$0xff]
  %v28 = vld [vmem:[%s0 + $0x40] sm:$0xff]
  %v29 = vld [vmem:[%s0 + $0x48] sm:$0xff]
  %v30 = vld [vmem:[%s0 + $0x50] sm:$0xff]
  %v31 = vld [vmem:[%s0 + $0x58] sm:$0xff]
  %v32 = vld [vmem:[%s0 + $0x60] sm:$0xff]
  %v33 = vld [vmem:[%s0 + $0x68] sm:$0xff]
  %v34 = vld [vmem:[%s0 + $0x70] sm:$0xff]
  %v35 = vld [vmem:[%s0 + $0x78] sm:$0xff]
  %v36 = vld [vmem:[%s0 + $0x80] sm:$0xff]
  %v37 = vld [vmem:[%s0 + $0x88] sm:$0xff]
  %v38 = vld [vmem:[%s0 + $0x90] sm:$0xff]
  %v39 = vld [vmem:[%s0 + $0x98] sm:$0xff]
  %v40 = vld [vmem:[%s0 + $0xa0] sm:$0xff]
  %v41 = vld [vmem:[%s0 + $0xa8] sm:$0xff]
  %v42 = vld [vmem:[%s0 + $0xb0] sm:$0xff]
  %v43 = vld [vmem:[%s0 + $0xb8] sm:$0xff]
  %v44 = vld [vmem:[%s0 + $0xc0] sm:$0xff]
  %v45 = vld [vmem:[%s0 + $0xc8] sm:$0xff]
  %v46 = vld [vmem:[%s0 + $0xd0] sm:$0xff]
  %v47 = vld [vmem:[%s0 + $0xd8] sm:$0xff]
  %v48 = vld [vmem:[%s0 + $0xe0] sm:$0xff]
  %v49 = vld [vmem:[%s0 + $0xe8] sm:$0xff]
  %v50 = vld [vmem:[%s0 + $0xf0] sm:$0xff]
  %v51 = vld [vmem:[%s0 + $0xf8] sm:$0xff]
  %v52 = vld [vmem:[%s0 + $0x100] sm:$0xff]
  %v53 = vld [vmem:[%s0 + $0x108] sm:$0xff]
  %v54 = vld [vmem:[%s0 + $0x110] sm:$0xff]
  %v55 = vld [vmem:[%s0 + $0x118] sm:$0xff]
  %v56 = vld [vmem:[%s0 + $0x120] sm:$0xff]
  %v57 = vld [vmem:[%s0 + $0x128] sm:$0xff]
  %v58 = vld [vmem:[%s0 + $0x130] sm:$0xff]
  %v59 = vld [vmem:[%s0 + $0x138] sm:$0xff]
  %v60 = vld [vmem:[%s0 + $0x140] sm:$0xff]
  %v61 = vld [vmem:[%s0 + $0x148] sm:$0xff]
  %v62 = vld [vmem:[%s0 + $0x150] sm:$0xff]
  %v63 = vld [vmem:[%s0 + $0x158] sm:$0xff]
  %v64 = vld [vmem:[%s0 + $0x160] sm:$0xff]
  %v65 = vld [vmem:[%s0 + $0x168] sm:$0xff]
  %v66 = vld [vmem:[%s0 + $0x170] sm:$0xff]
  %v67 = vld [vmem:[%s0 + $0x178] sm:$0xff]
  %v68 = vld [vmem:[%s0 + $0x180] sm:$0xff]
  %v69 = vld [vmem:[%s0 + $0x188] sm:$0xff]
  %v70 = vld [vmem:[%s0 + $0x190] sm:$0xff]
  %v71 = vld [vmem:[%s0 + $0x198] sm:$0xff]
  %v72 = vld [vmem:[%s0 + $0x1a0] sm:$0xff]
  %v73 = vld [vmem:[%s0 + $0x1a8] sm:$0xff]
  %v74 = vld [vmem:[%s0 + $0x1b0] sm:$0xff]
  %v75 = vld [vmem:[%s0 + $0x1b8] sm:$0xff]
  %v76 = vld [vmem:[%s0 + $0x1c0] sm:$0xff]
  %v77 = vld [vmem:[%s0 + $0x1c8] sm:$0xff]
  %v78 = vld [vmem:[%s0 + $0x1d0] sm:$0xff]
  %v79 = vld [vmem:[%s0 + $0x1d8] sm:$0xff]
  %v80 = vld [vmem:[%s0 + $0x1e0] sm:$0xff]
  %v81 = vld [vmem:[%s0 + $0x1e8] sm:$0xff]
  %v82 = vld [vmem:[%s0 + $0x1f0] sm:$0xff]
  %v83 = vld [vmem:[%s0 + $0x1f8] sm:$0xff]
  %v84 = vld [vmem:[%s0 + $0x200] sm:$0xff]
  %v85 = vld [vmem:[%s0 + $0x208] sm:$0xff]
  %v86 = vld [vmem:[%s0 + $0x210] sm:$0xff]
  %v87 = vld [vmem:[%s0 + $0x218] sm:$0xff]
  %v88 = vld [vmem:[%s0 + $0x220] sm:$0xff]
  %v89 = vld [vmem:[%s0 + $0x228] sm:$0xff]
  %v90 = vld [vmem:[%s0 + $0x230] sm:$0xff]
  %v91 = vld [vmem:[%s0 + $0x238] sm:$0xff]
  %v92 = vld [vmem:[%s0 + $0x240] sm:$0xff]
  %v93 = vld [vmem:[%s0 + $0x248] sm:$0xff]
  %v94 = vld [vmem:[%s0 + $0x250] sm:$0xff]
  %v95 = vld [vmem:[%s0 + $0x258] sm:$0xff]
  %v96 = vld [vmem:[%s0 + $0x260] sm:$0xff]
  %v97 = vld [vmem:[%s0 + $0x268] sm:$0xff]
  %v98 = vld [vmem:[%s0 + $0x270] sm:$0xff]
  %v99 = vld [vmem:[%s0 + $0x278] sm:$0xff]
  %v100 = vld [vmem:[%s0 + $0x280] sm:$0xff]
  %v101 = vld [vmem:[%s0 + $0x288] sm:$0xff]
  %v102 = vld [vmem:[%s0 + $0x290] sm:$0xff]
  %v103 = vld [vmem:[%s0 + $0x298] sm:$0xff]
  %v104 = vld [vmem:[%s0 + $0x2a0] sm:$0xff]
  %v105 = vld [vmem:[%s0 + $0x2a8] sm:$0xff]
  %v106 = vld [vmem:[%s0 + $0x2b0] sm:$0xff]
  %v107 = vld [vmem:[%s0 + $0x2b8] sm:$0xff]
  %v108 = vld [vmem:[%s0 + $0x2c0] sm:$0xff]
  %v109 = vld [vmem:[%s0 + $0x2c8] sm:$0xff]
  %v110 = vld [vmem:[%s0 + $0x2d0] sm:$0xff]
  %v111 = vld [vmem:[%s0 + $0x2d8] sm:$0xff]
  %v112 = vld [vmem:[%s0 + $0x2e0] sm:$0xff]
  %v113 = vld [vmem:[%s0 + $0x2e8] sm:$0xff]
  %v114 = vld [vmem:[%s0 + $0x2f0] sm:$0xff]
  %v115 = vld [vmem:[%s0 + $0x2f8] sm:$0xff]
  %v116 = vld [vmem:[%s0 + $0x300] sm:$0xff]
  %v117 = vld [vmem:[%s0 + $0x308] sm:$0xff]
  %v118 = vld [vmem:[%s1] sm:$0xff]
  %v119 = vld [vmem:[%s1 + $0x8] sm:$0xff]
  %v120 = vld [vmem:[%s1 + $0x10] sm:$0xff]
  %v121 = vld [vmem:[%s1 + $0x18] sm:$0xff]
  %v122 = vld [vmem:[%s1 + $0x20] sm:$0xff]
  %v123 = vld [vmem:[%s1 + $0x28] sm:$0xff]
  %v124 = vld [vmem:[%s1 + $0x30] sm:$0xff]
  %v125 = vld [vmem:[%s1 + $0x38] sm:$0xff]
  %v126 = vld [vmem:[%s1 + $0x40] sm:$0xff]
  %v127 = vld [vmem:[%s1 + $0x48] sm:$0xff]
  %v128 = vld [vmem:[%s1 + $0x50] sm:$0xff]
  %v129 = vld [vmem:[%s1 + $0x58] sm:$0xff]
  %v130 = vld [vmem:[%s1 + $0x60] sm:$0xff]
  %v131 = vld [vmem:[%s1 + $0x68] sm:$0xff]
  %v132 = vld [vmem:[%s1 + $0x70] sm:$0xff]
  %v133 = vld [vmem:[%s1 + $0x78] sm:$0xff]
  %v134 = vld [vmem:[%s1 + $0x80] sm:$0xff]
  %v135 = vld [vmem:[%s1 + $0x88] sm:$0xff]
  %v136 = vld [vmem:[%s1 + $0x90] sm:$0xff]
  %v137 = vld [vmem:[%s1 + $0x98] sm:$0xff]
  %v138 = vld [vmem:[%s1 + $0xa0] sm:$0xff]
  %v139 = vld [vmem:[%s1 + $0xa8] sm:$0xff]
  %v140 = vld [vmem:[%s1 + $0xb0] sm:$0xff]
  %v141 = vld [vmem:[%s1 + $0xb8] sm:$0xff]
  %v142 = vld [vmem:[%s1 + $0xc0] sm:$0xff]
  %v143 = vld [vmem:[%s1 + $0xc8] sm:$0xff]
  %v144 = vld [vmem:[%s1 + $0xd0] sm:$0xff]
  %v145 = vld [vmem:[%s1 + $0xd8] sm:$0xff]
  %v146 = vld [vmem:[%s1 + $0xe0] sm:$0xff]
  %v147 = vld [vmem:[%s1 + $0xe8] sm:$0xff]
  %v148 = vld [vmem:[%s1 + $0xf0] sm:$0xff]
  %v149 = vld [vmem:[%s1 + $0xf8] sm:$0xff]
  %v150 = vld [vmem:[%s0 + $0x30] sm:$0xf0]
  %v151 = vld [vmem:[%s0 + $0x38] sm:$0xf0]
  %v152 = vld [vmem:[%s0 + $0x310] sm:$0xff]
  %v153 = vld [vmem:[%s0 + $0x318] sm:$0xff]
  %v154 = vld [vmem:[%s0 + $0x320] sm:$0xff]
  %v155 = vld [vmem:[%s0 + $0x328] sm:$0xff]
  %v156 = vld [vmem:[%s0 + $0x330] sm:$0xff]
  %v157 = vld [vmem:[%s0 + $0x338] sm:$0xff]
  %v158 = vld [vmem:[%s0 + $0x340] sm:$0xf]
  %v159 = vld [vmem:[%s0 + $0x348] sm:$0xf]
  %s160 = scalar_lea.vmem %s1, 256
  %v161 = vld [vmem:[%s160] sm:$0xff]
  %v162 = vld [vmem:[%s160 + $0x8] sm:$0xff]
  %v163 = vld [vmem:[%s160 + $0x10] sm:$0xff]
  %v164 = vld [vmem:[%s160 + $0x18] sm:$0xff]
  %v165 = vld [vmem:[%s160 + $0x20] sm:$0xff]
  %v166 = vld [vmem:[%s160 + $0x28] sm:$0xff]
  %v167 = vld [vmem:[%s160 + $0x30] sm:$0xff]
  %v168 = vld [vmem:[%s160 + $0x38] sm:$0xff]
  %v169 = vld [vmem:[%s160 + $0x40] sm:$0xff]
  %v170 = vld [vmem:[%s160 + $0x48] sm:$0xff]
  %v171 = vld [vmem:[%s160 + $0x50] sm:$0xff]
  %v172 = vld [vmem:[%s160 + $0x58] sm:$0xff]
  %v173 = vld [vmem:[%s160 + $0x60] sm:$0xff]
  %v174 = vld [vmem:[%s160 + $0x68] sm:$0xff]
  %v175 = vld [vmem:[%s160 + $0x70] sm:$0xff]
  %v176 = vld [vmem:[%s160 + $0x78] sm:$0xff]
  %v177 = vld [vmem:[%s160 + $0x80] sm:$0xff]
  %v178 = vld [vmem:[%s160 + $0x88] sm:$0xff]
  %v179 = vld [vmem:[%s160 + $0x90] sm:$0xff]
  %v180 = vld [vmem:[%s160 + $0x98] sm:$0xff]
  %v181 = vld [vmem:[%s160 + $0xa0] sm:$0xff]
  %v182 = vld [vmem:[%s160 + $0xa8] sm:$0xff]
  %v183 = vld [vmem:[%s160 + $0xb0] sm:$0xff]
  %v184 = vld [vmem:[%s160 + $0xb8] sm:$0xff]
  %v185 = vld [vmem:[%s160 + $0xc0] sm:$0xff]
  %v186 = vld [vmem:[%s160 + $0xc8] sm:$0xff]
  %v187 = vld [vmem:[%s160 + $0xd0] sm:$0xff]
  %v188 = vld [vmem:[%s160 + $0xd8] sm:$0xff]
  %v189 = vld [vmem:[%s160 + $0xe0] sm:$0xff]
  %v190 = vld [vmem:[%s160 + $0xe8] sm:$0xff]
  %v191 = vld [vmem:[%s160 + $0xf0] sm:$0xff]
  %v192 = vld [vmem:[%s160 + $0xf8] sm:$0xff]
  %vm293 = vcmask 1043456
  %v294 = vrot.slane %v150, 4
  %v295 = vrot.slane %v28, 4
  %v296 = vsel %vm293, %v294, %v295
  %v297 = vrot.slane %v151, 4
  %v298 = vrot.slane %v29, 4
  %v299 = vsel %vm293, %v297, %v298
  %v300 = vrot.slane %v30, 4
  %v301 = vsel %vm293, %v295, %v300
  %v302 = vrot.slane %v31, 4
  %v303 = vsel %vm293, %v298, %v302
  %v304 = vrot.slane %v32, 4
  %v305 = vsel %vm293, %v300, %v304
  %v306 = vrot.slane %v33, 4
  %v307 = vsel %vm293, %v302, %v306
  %v308 = vrot.slane %v34, 4
  %v309 = vsel %vm293, %v304, %v308
  %v310 = vrot.slane %v35, 4
  %v311 = vsel %vm293, %v306, %v310
  %v312 = vrot.slane %v36, 4
  %v313 = vsel %vm293, %v308, %v312
  %v314 = vrot.slane %v37, 4
  %v315 = vsel %vm293, %v310, %v314
  %v316 = vrot.slane %v38, 4
  %v317 = vsel %vm293, %v312, %v316
  %v318 = vrot.slane %v39, 4
  %v319 = vsel %vm293, %v314, %v318
  %v320 = vrot.slane %v40, 4
  %v321 = vsel %vm293, %v316, %v320
  %v322 = vrot.slane %v41, 4
  %v323 = vsel %vm293, %v318, %v322
  %v324 = vrot.slane %v42, 4
  %v325 = vsel %vm293, %v320, %v324
  %v326 = vrot.slane %v43, 4
  %v327 = vsel %vm293, %v322, %v326
  %v328 = vrot.slane %v44, 4
  %v329 = vsel %vm293, %v324, %v328
  %v330 = vrot.slane %v45, 4
  %v331 = vsel %vm293, %v326, %v330
  %v332 = vrot.slane %v46, 4
  %v333 = vsel %vm293, %v328, %v332
  %v334 = vrot.slane %v47, 4
  %v335 = vsel %vm293, %v330, %v334
  %v336 = vrot.slane %v48, 4
  %v337 = vsel %vm293, %v332, %v336
  %v338 = vrot.slane %v49, 4
  %v339 = vsel %vm293, %v334, %v338
  %v340 = vrot.slane %v50, 4
  %v341 = vsel %vm293, %v336, %v340
  %v342 = vrot.slane %v51, 4
  %v343 = vsel %vm293, %v338, %v342
  %v344 = vrot.slane %v52, 4
  %v345 = vsel %vm293, %v340, %v344
  %v346 = vrot.slane %v53, 4
  %v347 = vsel %vm293, %v342, %v346
  %v348 = vrot.slane %v54, 4
  %v349 = vsel %vm293, %v344, %v348
  %v350 = vrot.slane %v55, 4
  %v351 = vsel %vm293, %v346, %v350
  %v352 = vrot.slane %v56, 4
  %v353 = vsel %vm293, %v348, %v352
  %v354 = vrot.slane %v57, 4
  %v355 = vsel %vm293, %v350, %v354
  %v356 = vrot.slane %v58, 4
  %v357 = vsel %vm293, %v352, %v356
  %v358 = vrot.slane %v59, 4
  %v359 = vsel %vm293, %v354, %v358
  %v360 = vrot.slane %v60, 4
  %v361 = vsel %vm293, %v356, %v360
  %v362 = vrot.slane %v61, 4
  %v363 = vsel %vm293, %v358, %v362
  %v364 = vrot.slane %v62, 4
  %v365 = vsel %vm293, %v360, %v364
  %v366 = vrot.slane %v63, 4
  %v367 = vsel %vm293, %v362, %v366
  %v368 = vrot.slane %v64, 4
  %v369 = vsel %vm293, %v364, %v368
  %v370 = vrot.slane %v65, 4
  %v371 = vsel %vm293, %v366, %v370
  %v372 = vrot.slane %v66, 4
  %v373 = vsel %vm293, %v368, %v372
  %v374 = vrot.slane %v67, 4
  %v375 = vsel %vm293, %v370, %v374
  %v376 = vrot.slane %v68, 4
  %v377 = vsel %vm293, %v372, %v376
  %v378 = vrot.slane %v69, 4
  %v379 = vsel %vm293, %v374, %v378
  %v380 = vrot.slane %v70, 4
  %v381 = vsel %vm293, %v376, %v380
  %v382 = vrot.slane %v71, 4
  %v383 = vsel %vm293, %v378, %v382
  %v384 = vrot.slane %v72, 4
  %v385 = vsel %vm293, %v380, %v384
  %v386 = vrot.slane %v73, 4
  %v387 = vsel %vm293, %v382, %v386
  %v388 = vrot.slane %v74, 4
  %v389 = vsel %vm293, %v384, %v388
  %v390 = vrot.slane %v75, 4
  %v391 = vsel %vm293, %v386, %v390
  %v392 = vrot.slane %v76, 4
  %v393 = vsel %vm293, %v388, %v392
  %v394 = vrot.slane %v77, 4
  %v395 = vsel %vm293, %v390, %v394
  %v396 = vrot.slane %v78, 4
  %v397 = vsel %vm293, %v392, %v396
  %v398 = vrot.slane %v79, 4
  %v399 = vsel %vm293, %v394, %v398
  %v400 = vrot.slane %v80, 4
  %v401 = vsel %vm293, %v396, %v400
  %v402 = vrot.slane %v81, 4
  %v403 = vsel %vm293, %v398, %v402
  %v404 = vrot.slane %v82, 4
  %v405 = vsel %vm293, %v400, %v404
  %v406 = vrot.slane %v83, 4
  %v407 = vsel %vm293, %v402, %v406
  %v408 = vrot.slane %v84, 4
  %v409 = vsel %vm293, %v404, %v408
  %v410 = vrot.slane %v85, 4
  %v411 = vsel %vm293, %v406, %v410
  %v412 = vrot.slane %v86, 4
  %v413 = vsel %vm293, %v408, %v412
  %v414 = vrot.slane %v87, 4
  %v415 = vsel %vm293, %v410, %v414
  %v416 = vrot.slane %v88, 4
  %v417 = vsel %vm293, %v412, %v416
  %v418 = vrot.slane %v89, 4
  %v419 = vsel %vm293, %v414, %v418
  %v420 = vrot.slane %v90, 4
  %v421 = vsel %vm293, %v416, %v420
  %v422 = vrot.slane %v91, 4
  %v423 = vsel %vm293, %v418, %v422
  %v424 = vrot.slane %v92, 4
  %v425 = vsel %vm293, %v420, %v424
  %v426 = vrot.slane %v93, 4
  %v427 = vsel %vm293, %v422, %v426
  %v428 = vrot.slane %v94, 4
  %v429 = vsel %vm293, %v424, %v428
  %v430 = vrot.slane %v95, 4
  %v431 = vsel %vm293, %v426, %v430
  %v432 = vrot.slane %v96, 4
  %v433 = vsel %vm293, %v428, %v432
  %v434 = vrot.slane %v97, 4
  %v435 = vsel %vm293, %v430, %v434
  %v436 = vrot.slane %v98, 4
  %v437 = vsel %vm293, %v432, %v436
  %v438 = vrot.slane %v99, 4
  %v439 = vsel %vm293, %v434, %v438
  %v440 = vrot.slane %v100, 4
  %v441 = vsel %vm293, %v436, %v440
  %v442 = vrot.slane %v101, 4
  %v443 = vsel %vm293, %v438, %v442
  %v444 = vrot.slane %v102, 4
  %v445 = vsel %vm293, %v440, %v444
  %v446 = vrot.slane %v103, 4
  %v447 = vsel %vm293, %v442, %v446
  %v448 = vrot.slane %v104, 4
  %v449 = vsel %vm293, %v444, %v448
  %v450 = vrot.slane %v105, 4
  %v451 = vsel %vm293, %v446, %v450
  %v452 = vrot.slane %v106, 4
  %v453 = vsel %vm293, %v448, %v452
  %v454 = vrot.slane %v107, 4
  %v455 = vsel %vm293, %v450, %v454
  %v456 = vrot.slane %v108, 4
  %v457 = vsel %vm293, %v452, %v456
  %v458 = vrot.slane %v109, 4
  %v459 = vsel %vm293, %v454, %v458
  %v460 = vrot.slane %v110, 4
  %v461 = vsel %vm293, %v456, %v460
  %v462 = vrot.slane %v111, 4
  %v463 = vsel %vm293, %v458, %v462
  %v464 = vrot.slane %v112, 4
  %v465 = vsel %vm293, %v460, %v464
  %v466 = vrot.slane %v113, 4
  %v467 = vsel %vm293, %v462, %v466
  %v468 = vrot.slane %v114, 4
  %v469 = vsel %vm293, %v464, %v468
  %v470 = vrot.slane %v115, 4
  %v471 = vsel %vm293, %v466, %v470
  %v472 = vrot.slane %v116, 4
  %v473 = vsel %vm293, %v468, %v472
  %v474 = vrot.slane %v117, 4
  %v475 = vsel %vm293, %v470, %v474
  %v476 = vrot.slane %v152, 4
  %v477 = vsel %vm293, %v472, %v476
  %v478 = vrot.slane %v153, 4
  %v479 = vsel %vm293, %v474, %v478
  %v480 = vrot.slane %v154, 4
  %v481 = vsel %vm293, %v476, %v480
  %v482 = vrot.slane %v155, 4
  %v483 = vsel %vm293, %v478, %v482
  %v484 = vrot.slane %v156, 4
  %v485 = vsel %vm293, %v480, %v484
  %v486 = vrot.slane %v157, 4
  %v487 = vsel %vm293, %v482, %v486
  %v488 = vrot.slane %v158, 4
  %v489 = vsel %vm293, %v484, %v488
  %v490 = vrot.slane %v159, 4
  %v491 = vsel %vm293, %v486, %v490
  %590 = vmatpush.msra.mxu0 %v176
  %591 = vmatpush.msra.mxu0 %v175
  %592 = vmatpush.msra.mxu0 %v174
  %593 = vmatpush.msra.mxu0 %v173
  %594 = vmatpush.msra.mxu0 %v172
  %595 = vmatpush.msra.mxu0 %v171
  %596 = vmatpush.msra.mxu0 %v170
  %597 = vmatpush.msra.mxu0 %v169
  %598 = vmatpush.msra.mxu0 %v168
  %599 = vmatpush.msra.mxu0 %v167
  %600 = vmatpush.msra.mxu0 %v166
  %601 = vmatpush.msra.mxu0 %v165
  %602 = vmatpush.msra.mxu0 %v164
  %603 = vmatpush.msra.mxu0 %v163
  %604 = vmatpush.msra.mxu0 %v162
  %605 = vmatpush.msra.mxu0 %v161
  %606 = vmatmul.f32.gmra.mxu0 %v296
  %v607 = vpop.f32.mrf.mxu0
  %v608 = vadd.f32 0.0, %v607
  %609 = vmatmul.f32.gmra.mxu0 %v301
  %v610 = vpop.f32.mrf.mxu0
  %v611 = vadd.f32 0.0, %v610
  %612 = vmatmul.f32.gmra.mxu0 %v305
  %v613 = vpop.f32.mrf.mxu0
  %v614 = vadd.f32 0.0, %v613
  %615 = vmatmul.f32.gmra.mxu0 %v309
  %v616 = vpop.f32.mrf.mxu0
  %v617 = vadd.f32 0.0, %v616
  %618 = vmatmul.f32.gmra.mxu0 %v313
  %v619 = vpop.f32.mrf.mxu0
  %v620 = vadd.f32 0.0, %v619
  %621 = vmatmul.f32.gmra.mxu0 %v317
  %v622 = vpop.f32.mrf.mxu0
  %v623 = vadd.f32 0.0, %v622
  %624 = vmatmul.f32.gmra.mxu0 %v321
  %v625 = vpop.f32.mrf.mxu0
  %v626 = vadd.f32 0.0, %v625
  %627 = vmatmul.f32.gmra.mxu0 %v325
  %v628 = vpop.f32.mrf.mxu0
  %v629 = vadd.f32 0.0, %v628
  %630 = vmatmul.f32.gmra.mxu0 %v329
  %v631 = vpop.f32.mrf.mxu0
  %v632 = vadd.f32 0.0, %v631
  %633 = vmatmul.f32.gmra.mxu0 %v333
  %v634 = vpop.f32.mrf.mxu0
  %v635 = vadd.f32 0.0, %v634
  %636 = vmatmul.f32.gmra.mxu0 %v337
  %v637 = vpop.f32.mrf.mxu0
  %v638 = vadd.f32 0.0, %v637
  %639 = vmatmul.f32.gmra.mxu0 %v341
  %v640 = vpop.f32.mrf.mxu0
  %v641 = vadd.f32 0.0, %v640
  %642 = vmatmul.f32.gmra.mxu0 %v345
  %v643 = vpop.f32.mrf.mxu0
  %v644 = vadd.f32 0.0, %v643
  %645 = vmatmul.f32.gmra.mxu0 %v349
  %v646 = vpop.f32.mrf.mxu0
  %v647 = vadd.f32 0.0, %v646
  %648 = vmatmul.f32.gmra.mxu0 %v353
  %v649 = vpop.f32.mrf.mxu0
  %v650 = vadd.f32 0.0, %v649
  %651 = vmatmul.f32.gmra.mxu0 %v357
  %v652 = vpop.f32.mrf.mxu0
  %v653 = vadd.f32 0.0, %v652
  %654 = vmatmul.f32.gmra.mxu0 %v361
  %v655 = vpop.f32.mrf.mxu0
  %v656 = vadd.f32 0.0, %v655
  %657 = vmatmul.f32.gmra.mxu0 %v365
  %v658 = vpop.f32.mrf.mxu0
  %v659 = vadd.f32 0.0, %v658
  %660 = vmatmul.f32.gmra.mxu0 %v369
  %v661 = vpop.f32.mrf.mxu0
  %v662 = vadd.f32 0.0, %v661
  %663 = vmatmul.f32.gmra.mxu0 %v373
  %v664 = vpop.f32.mrf.mxu0
  %v665 = vadd.f32 0.0, %v664
  %666 = vmatmul.f32.gmra.mxu0 %v377
  %v667 = vpop.f32.mrf.mxu0
  %v668 = vadd.f32 0.0, %v667
  %669 = vmatmul.f32.gmra.mxu0 %v381
  %v670 = vpop.f32.mrf.mxu0
  %v671 = vadd.f32 0.0, %v670
  %672 = vmatmul.f32.gmra.mxu0 %v385
  %v673 = vpop.f32.mrf.mxu0
  %v674 = vadd.f32 0.0, %v673
  %675 = vmatmul.f32.gmra.mxu0 %v389
  %v676 = vpop.f32.mrf.mxu0
  %v677 = vadd.f32 0.0, %v676
  %678 = vmatmul.f32.gmra.mxu0 %v393
  %v679 = vpop.f32.mrf.mxu0
  %v680 = vadd.f32 0.0, %v679
  %681 = vmatmul.f32.gmra.mxu0 %v397
  %v682 = vpop.f32.mrf.mxu0
  %v683 = vadd.f32 0.0, %v682
  %684 = vmatmul.f32.gmra.mxu0 %v401
  %v685 = vpop.f32.mrf.mxu0
  %v686 = vadd.f32 0.0, %v685
  %687 = vmatmul.f32.gmra.mxu0 %v405
  %v688 = vpop.f32.mrf.mxu0
  %v689 = vadd.f32 0.0, %v688
  %690 = vmatmul.f32.gmra.mxu0 %v409
  %v691 = vpop.f32.mrf.mxu0
  %v692 = vadd.f32 0.0, %v691
  %693 = vmatmul.f32.gmra.mxu0 %v413
  %v694 = vpop.f32.mrf.mxu0
  %v695 = vadd.f32 0.0, %v694
  %696 = vmatmul.f32.gmra.mxu0 %v417
  %v697 = vpop.f32.mrf.mxu0
  %v698 = vadd.f32 0.0, %v697
  %699 = vmatmul.f32.gmra.mxu0 %v421
  %v700 = vpop.f32.mrf.mxu0
  %v701 = vadd.f32 0.0, %v700
  %702 = vmatmul.f32.gmra.mxu0 %v425
  %v703 = vpop.f32.mrf.mxu0
  %v704 = vadd.f32 0.0, %v703
  %705 = vmatmul.f32.gmra.mxu0 %v429
  %v706 = vpop.f32.mrf.mxu0
  %v707 = vadd.f32 0.0, %v706
  %708 = vmatmul.f32.gmra.mxu0 %v433
  %v709 = vpop.f32.mrf.mxu0
  %v710 = vadd.f32 0.0, %v709
  %711 = vmatmul.f32.gmra.mxu0 %v437
  %v712 = vpop.f32.mrf.mxu0
  %v713 = vadd.f32 0.0, %v712
  %714 = vmatmul.f32.gmra.mxu0 %v441
  %v715 = vpop.f32.mrf.mxu0
  %v716 = vadd.f32 0.0, %v715
  %717 = vmatmul.f32.gmra.mxu0 %v445
  %v718 = vpop.f32.mrf.mxu0
  %v719 = vadd.f32 0.0, %v718
  %720 = vmatmul.f32.gmra.mxu0 %v449
  %v721 = vpop.f32.mrf.mxu0
  %v722 = vadd.f32 0.0, %v721
  %723 = vmatmul.f32.gmra.mxu0 %v453
  %v724 = vpop.f32.mrf.mxu0
  %v725 = vadd.f32 0.0, %v724
  %726 = vmatmul.f32.gmra.mxu0 %v457
  %v727 = vpop.f32.mrf.mxu0
  %v728 = vadd.f32 0.0, %v727
  %729 = vmatmul.f32.gmra.mxu0 %v461
  %v730 = vpop.f32.mrf.mxu0
  %v731 = vadd.f32 0.0, %v730
  %732 = vmatmul.f32.gmra.mxu0 %v465
  %v733 = vpop.f32.mrf.mxu0
  %v734 = vadd.f32 0.0, %v733
  %735 = vmatmul.f32.gmra.mxu0 %v469
  %v736 = vpop.f32.mrf.mxu0
  %v737 = vadd.f32 0.0, %v736
  %738 = vmatmul.f32.gmra.mxu0 %v473
  %v739 = vpop.f32.mrf.mxu0
  %v740 = vadd.f32 0.0, %v739
  %741 = vmatmul.f32.gmra.mxu0 %v477
  %v742 = vpop.f32.mrf.mxu0
  %v743 = vadd.f32 0.0, %v742
  %744 = vmatmul.f32.gmra.mxu0 %v481
  %v745 = vpop.f32.mrf.mxu0
  %v746 = vadd.f32 0.0, %v745
  %747 = vmatmul.f32.gmra.mxu0 %v485
  %v748 = vpop.f32.mrf.mxu0
  %v749 = vadd.f32 0.0, %v748
  %750 = vmatmul.f32.gmra.mxu0 %v489
  %v751 = vpop.f32.mrf.mxu0
  %v752 = vadd.f32 0.0, %v751
  %753 = vdwg.mxu0
  %754 = vmatpush.msra.mxu0 %v192
  %755 = vmatpush.msra.mxu0 %v191
  %756 = vmatpush.msra.mxu0 %v190
  %757 = vmatpush.msra.mxu0 %v189
  %758 = vmatpush.msra.mxu0 %v188
  %759 = vmatpush.msra.mxu0 %v187
  %760 = vmatpush.msra.mxu0 %v186
  %761 = vmatpush.msra.mxu0 %v185
  %762 = vmatpush.msra.mxu0 %v184
  %763 = vmatpush.msra.mxu0 %v183
  %764 = vmatpush.msra.mxu0 %v182
  %765 = vmatpush.msra.mxu0 %v181
  %766 = vmatpush.msra.mxu0 %v180
  %767 = vmatpush.msra.mxu0 %v179
  %768 = vmatpush.msra.mxu0 %v178
  %769 = vmatpush.msra.mxu0 %v177
  %770 = vmatmul.f32.gmra.mxu0 %v299
  %v771 = vpop.f32.mrf.mxu0
  %v772 = vadd.f32 %v608, %v771
  %773 = vmatmul.f32.gmra.mxu0 %v303
  %v774 = vpop.f32.mrf.mxu0
  %v775 = vadd.f32 %v611, %v774
  %776 = vmatmul.f32.gmra.mxu0 %v307
  %v777 = vpop.f32.mrf.mxu0
  %v778 = vadd.f32 %v614, %v777
  %779 = vmatmul.f32.gmra.mxu0 %v311
  %v780 = vpop.f32.mrf.mxu0
  %v781 = vadd.f32 %v617, %v780
  %782 = vmatmul.f32.gmra.mxu0 %v315
  %v783 = vpop.f32.mrf.mxu0
  %v784 = vadd.f32 %v620, %v783
  %785 = vmatmul.f32.gmra.mxu0 %v319
  %v786 = vpop.f32.mrf.mxu0
  %v787 = vadd.f32 %v623, %v786
  %788 = vmatmul.f32.gmra.mxu0 %v323
  %v789 = vpop.f32.mrf.mxu0
  %v790 = vadd.f32 %v626, %v789
  %791 = vmatmul.f32.gmra.mxu0 %v327
  %v792 = vpop.f32.mrf.mxu0
  %v793 = vadd.f32 %v629, %v792
  %794 = vmatmul.f32.gmra.mxu0 %v331
  %v795 = vpop.f32.mrf.mxu0
  %v796 = vadd.f32 %v632, %v795
  %797 = vmatmul.f32.gmra.mxu0 %v335
  %v798 = vpop.f32.mrf.mxu0
  %v799 = vadd.f32 %v635, %v798
  %800 = vmatmul.f32.gmra.mxu0 %v339
  %v801 = vpop.f32.mrf.mxu0
  %v802 = vadd.f32 %v638, %v801
  %803 = vmatmul.f32.gmra.mxu0 %v343
  %v804 = vpop.f32.mrf.mxu0
  %v805 = vadd.f32 %v641, %v804
  %806 = vmatmul.f32.gmra.mxu0 %v347
  %v807 = vpop.f32.mrf.mxu0
  %v808 = vadd.f32 %v644, %v807
  %809 = vmatmul.f32.gmra.mxu0 %v351
  %v810 = vpop.f32.mrf.mxu0
  %v811 = vadd.f32 %v647, %v810
  %812 = vmatmul.f32.gmra.mxu0 %v355
  %v813 = vpop.f32.mrf.mxu0
  %v814 = vadd.f32 %v650, %v813
  %815 = vmatmul.f32.gmra.mxu0 %v359
  %v816 = vpop.f32.mrf.mxu0
  %v817 = vadd.f32 %v653, %v816
  %818 = vmatmul.f32.gmra.mxu0 %v363
  %v819 = vpop.f32.mrf.mxu0
  %v820 = vadd.f32 %v656, %v819
  %821 = vmatmul.f32.gmra.mxu0 %v367
  %v822 = vpop.f32.mrf.mxu0
  %v823 = vadd.f32 %v659, %v822
  %824 = vmatmul.f32.gmra.mxu0 %v371
  %v825 = vpop.f32.mrf.mxu0
  %v826 = vadd.f32 %v662, %v825
  %827 = vmatmul.f32.gmra.mxu0 %v375
  %v828 = vpop.f32.mrf.mxu0
  %v829 = vadd.f32 %v665, %v828
  %830 = vmatmul.f32.gmra.mxu0 %v379
  %v831 = vpop.f32.mrf.mxu0
  %v832 = vadd.f32 %v668, %v831
  %833 = vmatmul.f32.gmra.mxu0 %v383
  %v834 = vpop.f32.mrf.mxu0
  %v835 = vadd.f32 %v671, %v834
  %836 = vmatmul.f32.gmra.mxu0 %v387
  %v837 = vpop.f32.mrf.mxu0
  %v838 = vadd.f32 %v674, %v837
  %839 = vmatmul.f32.gmra.mxu0 %v391
  %v840 = vpop.f32.mrf.mxu0
  %v841 = vadd.f32 %v677, %v840
  %842 = vmatmul.f32.gmra.mxu0 %v395
  %v843 = vpop.f32.mrf.mxu0
  %v844 = vadd.f32 %v680, %v843
  %845 = vmatmul.f32.gmra.mxu0 %v399
  %v846 = vpop.f32.mrf.mxu0
  %v847 = vadd.f32 %v683, %v846
  %848 = vmatmul.f32.gmra.mxu0 %v403
  %v849 = vpop.f32.mrf.mxu0
  %v850 = vadd.f32 %v686, %v849
  %851 = vmatmul.f32.gmra.mxu0 %v407
  %v852 = vpop.f32.mrf.mxu0
  %v853 = vadd.f32 %v689, %v852
  %854 = vmatmul.f32.gmra.mxu0 %v411
  %v855 = vpop.f32.mrf.mxu0
  %v856 = vadd.f32 %v692, %v855
  %857 = vmatmul.f32.gmra.mxu0 %v415
  %v858 = vpop.f32.mrf.mxu0
  %v859 = vadd.f32 %v695, %v858
  %860 = vmatmul.f32.gmra.mxu0 %v419
  %v861 = vpop.f32.mrf.mxu0
  %v862 = vadd.f32 %v698, %v861
  %863 = vmatmul.f32.gmra.mxu0 %v423
  %v864 = vpop.f32.mrf.mxu0
  %v865 = vadd.f32 %v701, %v864
  %866 = vmatmul.f32.gmra.mxu0 %v427
  %v867 = vpop.f32.mrf.mxu0
  %v868 = vadd.f32 %v704, %v867
  %869 = vmatmul.f32.gmra.mxu0 %v431
  %v870 = vpop.f32.mrf.mxu0
  %v871 = vadd.f32 %v707, %v870
  %872 = vmatmul.f32.gmra.mxu0 %v435
  %v873 = vpop.f32.mrf.mxu0
  %v874 = vadd.f32 %v710, %v873
  %875 = vmatmul.f32.gmra.mxu0 %v439
  %v876 = vpop.f32.mrf.mxu0
  %v877 = vadd.f32 %v713, %v876
  %878 = vmatmul.f32.gmra.mxu0 %v443
  %v879 = vpop.f32.mrf.mxu0
  %v880 = vadd.f32 %v716, %v879
  %881 = vmatmul.f32.gmra.mxu0 %v447
  %v882 = vpop.f32.mrf.mxu0
  %v883 = vadd.f32 %v719, %v882
  %884 = vmatmul.f32.gmra.mxu0 %v451
  %v885 = vpop.f32.mrf.mxu0
  %v886 = vadd.f32 %v722, %v885
  %887 = vmatmul.f32.gmra.mxu0 %v455
  %v888 = vpop.f32.mrf.mxu0
  %v889 = vadd.f32 %v725, %v888
  %890 = vmatmul.f32.gmra.mxu0 %v459
  %v891 = vpop.f32.mrf.mxu0
  %v892 = vadd.f32 %v728, %v891
  %893 = vmatmul.f32.gmra.mxu0 %v463
  %v894 = vpop.f32.mrf.mxu0
  %v895 = vadd.f32 %v731, %v894
  %896 = vmatmul.f32.gmra.mxu0 %v467
  %v897 = vpop.f32.mrf.mxu0
  %v898 = vadd.f32 %v734, %v897
  %899 = vmatmul.f32.gmra.mxu0 %v471
  %v900 = vpop.f32.mrf.mxu0
  %v901 = vadd.f32 %v737, %v900
  %902 = vmatmul.f32.gmra.mxu0 %v475
  %v903 = vpop.f32.mrf.mxu0
  %v904 = vadd.f32 %v740, %v903
  %905 = vmatmul.f32.gmra.mxu0 %v479
  %v906 = vpop.f32.mrf.mxu0
  %v907 = vadd.f32 %v743, %v906
  %908 = vmatmul.f32.gmra.mxu0 %v483
  %v909 = vpop.f32.mrf.mxu0
  %v910 = vadd.f32 %v746, %v909
  %911 = vmatmul.f32.gmra.mxu0 %v487
  %v912 = vpop.f32.mrf.mxu0
  %v913 = vadd.f32 %v749, %v912
  %914 = vmatmul.f32.gmra.mxu0 %v491
  %v915 = vpop.f32.mrf.mxu0
  %v916 = vadd.f32 %v752, %v915
  %917 = vdwg.mxu0
  %918 = vmatpush.msra.mxu0 %v133
  %919 = vmatpush.msra.mxu0 %v132
  %920 = vmatpush.msra.mxu0 %v131
  %921 = vmatpush.msra.mxu0 %v130
  %922 = vmatpush.msra.mxu0 %v129
  %923 = vmatpush.msra.mxu0 %v128
  %924 = vmatpush.msra.mxu0 %v127
  %925 = vmatpush.msra.mxu0 %v126
  %926 = vmatpush.msra.mxu0 %v125
  %927 = vmatpush.msra.mxu0 %v124
  %928 = vmatpush.msra.mxu0 %v123
  %929 = vmatpush.msra.mxu0 %v122
  %930 = vmatpush.msra.mxu0 %v121
  %931 = vmatpush.msra.mxu0 %v120
  %932 = vmatpush.msra.mxu0 %v119
  %933 = vmatpush.msra.mxu0 %v118
  %934 = vmatmul.f32.gmra.mxu0 %v20
  %v935 = vpop.f32.mrf.mxu0
  %v936 = vadd.f32 %v772, %v935
  %937 = vmatmul.f32.gmra.mxu0 %v22
  %v938 = vpop.f32.mrf.mxu0
  %v939 = vadd.f32 %v775, %v938
  %940 = vmatmul.f32.gmra.mxu0 %v24
  %v941 = vpop.f32.mrf.mxu0
  %v942 = vadd.f32 %v778, %v941
  %943 = vmatmul.f32.gmra.mxu0 %v26
  %v944 = vpop.f32.mrf.mxu0
  %v945 = vadd.f32 %v781, %v944
  %946 = vmatmul.f32.gmra.mxu0 %v28
  %v947 = vpop.f32.mrf.mxu0
  %v948 = vadd.f32 %v784, %v947
  %949 = vmatmul.f32.gmra.mxu0 %v30
  %v950 = vpop.f32.mrf.mxu0
  %v951 = vadd.f32 %v787, %v950
  %952 = vmatmul.f32.gmra.mxu0 %v32
  %v953 = vpop.f32.mrf.mxu0
  %v954 = vadd.f32 %v790, %v953
  %955 = vmatmul.f32.gmra.mxu0 %v34
  %v956 = vpop.f32.mrf.mxu0
  %v957 = vadd.f32 %v793, %v956
  %958 = vmatmul.f32.gmra.mxu0 %v36
  %v959 = vpop.f32.mrf.mxu0
  %v960 = vadd.f32 %v796, %v959
  %961 = vmatmul.f32.gmra.mxu0 %v38
  %v962 = vpop.f32.mrf.mxu0
  %v963 = vadd.f32 %v799, %v962
  %964 = vmatmul.f32.gmra.mxu0 %v40
  %v965 = vpop.f32.mrf.mxu0
  %v966 = vadd.f32 %v802, %v965
  %967 = vmatmul.f32.gmra.mxu0 %v42
  %v968 = vpop.f32.mrf.mxu0
  %v969 = vadd.f32 %v805, %v968
  %970 = vmatmul.f32.gmra.mxu0 %v44
  %v971 = vpop.f32.mrf.mxu0
  %v972 = vadd.f32 %v808, %v971
  %973 = vmatmul.f32.gmra.mxu0 %v46
  %v974 = vpop.f32.mrf.mxu0
  %v975 = vadd.f32 %v811, %v974
  %976 = vmatmul.f32.gmra.mxu0 %v48
  %v977 = vpop.f32.mrf.mxu0
  %v978 = vadd.f32 %v814, %v977
  %979 = vmatmul.f32.gmra.mxu0 %v50
  %v980 = vpop.f32.mrf.mxu0
  %v981 = vadd.f32 %v817, %v980
  %982 = vmatmul.f32.gmra.mxu0 %v52
  %v983 = vpop.f32.mrf.mxu0
  %v984 = vadd.f32 %v820, %v983
  %985 = vmatmul.f32.gmra.mxu0 %v54
  %v986 = vpop.f32.mrf.mxu0
  %v987 = vadd.f32 %v823, %v986
  %988 = vmatmul.f32.gmra.mxu0 %v56
  %v989 = vpop.f32.mrf.mxu0
  %v990 = vadd.f32 %v826, %v989
  %991 = vmatmul.f32.gmra.mxu0 %v58
  %v992 = vpop.f32.mrf.mxu0
  %v993 = vadd.f32 %v829, %v992
  %994 = vmatmul.f32.gmra.mxu0 %v60
  %v995 = vpop.f32.mrf.mxu0
  %v996 = vadd.f32 %v832, %v995
  %997 = vmatmul.f32.gmra.mxu0 %v62
  %v998 = vpop.f32.mrf.mxu0
  %v999 = vadd.f32 %v835, %v998
  %1000 = vmatmul.f32.gmra.mxu0 %v64
  %v1001 = vpop.f32.mrf.mxu0
  %v1002 = vadd.f32 %v838, %v1001
  %1003 = vmatmul.f32.gmra.mxu0 %v66
  %v1004 = vpop.f32.mrf.mxu0
  %v1005 = vadd.f32 %v841, %v1004
  %1006 = vmatmul.f32.gmra.mxu0 %v68
  %v1007 = vpop.f32.mrf.mxu0
  %v1008 = vadd.f32 %v844, %v1007
  %1009 = vmatmul.f32.gmra.mxu0 %v70
  %v1010 = vpop.f32.mrf.mxu0
  %v1011 = vadd.f32 %v847, %v1010
  %1012 = vmatmul.f32.gmra.mxu0 %v72
  %v1013 = vpop.f32.mrf.mxu0
  %v1014 = vadd.f32 %v850, %v1013
  %1015 = vmatmul.f32.gmra.mxu0 %v74
  %v1016 = vpop.f32.mrf.mxu0
  %v1017 = vadd.f32 %v853, %v1016
  %1018 = vmatmul.f32.gmra.mxu0 %v76
  %v1019 = vpop.f32.mrf.mxu0
  %v1020 = vadd.f32 %v856, %v1019
  %1021 = vmatmul.f32.gmra.mxu0 %v78
  %v1022 = vpop.f32.mrf.mxu0
  %v1023 = vadd.f32 %v859, %v1022
  %1024 = vmatmul.f32.gmra.mxu0 %v80
  %v1025 = vpop.f32.mrf.mxu0
  %v1026 = vadd.f32 %v862, %v1025
  %1027 = vmatmul.f32.gmra.mxu0 %v82
  %v1028 = vpop.f32.mrf.mxu0
  %v1029 = vadd.f32 %v865, %v1028
  %1030 = vmatmul.f32.gmra.mxu0 %v84
  %v1031 = vpop.f32.mrf.mxu0
  %v1032 = vadd.f32 %v868, %v1031
  %1033 = vmatmul.f32.gmra.mxu0 %v86
  %v1034 = vpop.f32.mrf.mxu0
  %v1035 = vadd.f32 %v871, %v1034
  %1036 = vmatmul.f32.gmra.mxu0 %v88
  %v1037 = vpop.f32.mrf.mxu0
  %v1038 = vadd.f32 %v874, %v1037
  %1039 = vmatmul.f32.gmra.mxu0 %v90
  %v1040 = vpop.f32.mrf.mxu0
  %v1041 = vadd.f32 %v877, %v1040
  %1042 = vmatmul.f32.gmra.mxu0 %v92
  %v1043 = vpop.f32.mrf.mxu0
  %v1044 = vadd.f32 %v880, %v1043
  %1045 = vmatmul.f32.gmra.mxu0 %v94
  %v1046 = vpop.f32.mrf.mxu0
  %v1047 = vadd.f32 %v883, %v1046
  %1048 = vmatmul.f32.gmra.mxu0 %v96
  %v1049 = vpop.f32.mrf.mxu0
  %v1050 = vadd.f32 %v886, %v1049
  %1051 = vmatmul.f32.gmra.mxu0 %v98
  %v1052 = vpop.f32.mrf.mxu0
  %v1053 = vadd.f32 %v889, %v1052
  %1054 = vmatmul.f32.gmra.mxu0 %v100
  %v1055 = vpop.f32.mrf.mxu0
  %v1056 = vadd.f32 %v892, %v1055
  %1057 = vmatmul.f32.gmra.mxu0 %v102
  %v1058 = vpop.f32.mrf.mxu0
  %v1059 = vadd.f32 %v895, %v1058
  %1060 = vmatmul.f32.gmra.mxu0 %v104
  %v1061 = vpop.f32.mrf.mxu0
  %v1062 = vadd.f32 %v898, %v1061
  %1063 = vmatmul.f32.gmra.mxu0 %v106
  %v1064 = vpop.f32.mrf.mxu0
  %v1065 = vadd.f32 %v901, %v1064
  %1066 = vmatmul.f32.gmra.mxu0 %v108
  %v1067 = vpop.f32.mrf.mxu0
  %v1068 = vadd.f32 %v904, %v1067
  %1069 = vmatmul.f32.gmra.mxu0 %v110
  %v1070 = vpop.f32.mrf.mxu0
  %v1071 = vadd.f32 %v907, %v1070
  %1072 = vmatmul.f32.gmra.mxu0 %v112
  %v1073 = vpop.f32.mrf.mxu0
  %v1074 = vadd.f32 %v910, %v1073
  %1075 = vmatmul.f32.gmra.mxu0 %v114
  %v1076 = vpop.f32.mrf.mxu0
  %v1077 = vadd.f32 %v913, %v1076
  %1078 = vmatmul.f32.gmra.mxu0 %v116
  %v1079 = vpop.f32.mrf.mxu0
  %v1080 = vadd.f32 %v916, %v1079
  %1081 = vdwg.mxu0
  %1082 = vmatpush.msra.mxu0 %v149
  %1083 = vmatpush.msra.mxu0 %v148
  %1084 = vmatpush.msra.mxu0 %v147
  %1085 = vmatpush.msra.mxu0 %v146
  %1086 = vmatpush.msra.mxu0 %v145
  %1087 = vmatpush.msra.mxu0 %v144
  %1088 = vmatpush.msra.mxu0 %v143
  %1089 = vmatpush.msra.mxu0 %v142
  %1090 = vmatpush.msra.mxu0 %v141
  %1091 = vmatpush.msra.mxu0 %v140
  %1092 = vmatpush.msra.mxu0 %v139
  %1093 = vmatpush.msra.mxu0 %v138
  %1094 = vmatpush.msra.mxu0 %v137
  %1095 = vmatpush.msra.mxu0 %v136
  %1096 = vmatpush.msra.mxu0 %v135
  %1097 = vmatpush.msra.mxu0 %v134
  %1098 = vmatmul.f32.gmra.mxu0 %v21
  %v1099 = vpop.f32.mrf.mxu0
  %v1100 = vadd.f32 %v936, %v1099
  %1101 = vmatmul.f32.gmra.mxu0 %v23
  %v1102 = vpop.f32.mrf.mxu0
  %v1103 = vadd.f32 %v939, %v1102
  %1104 = vmatmul.f32.gmra.mxu0 %v25
  %v1105 = vpop.f32.mrf.mxu0
  %v1106 = vadd.f32 %v942, %v1105
  %1107 = vmatmul.f32.gmra.mxu0 %v27
  %v1108 = vpop.f32.mrf.mxu0
  %v1109 = vadd.f32 %v945, %v1108
  %1110 = vmatmul.f32.gmra.mxu0 %v29
  %v1111 = vpop.f32.mrf.mxu0
  %v1112 = vadd.f32 %v948, %v1111
  %1113 = vmatmul.f32.gmra.mxu0 %v31
  %v1114 = vpop.f32.mrf.mxu0
  %v1115 = vadd.f32 %v951, %v1114
  %1116 = vmatmul.f32.gmra.mxu0 %v33
  %v1117 = vpop.f32.mrf.mxu0
  %v1118 = vadd.f32 %v954, %v1117
  %1119 = vmatmul.f32.gmra.mxu0 %v35
  %v1120 = vpop.f32.mrf.mxu0
  %v1121 = vadd.f32 %v957, %v1120
  %1122 = vmatmul.f32.gmra.mxu0 %v37
  %v1123 = vpop.f32.mrf.mxu0
  %v1124 = vadd.f32 %v960, %v1123
  %1125 = vmatmul.f32.gmra.mxu0 %v39
  %v1126 = vpop.f32.mrf.mxu0
  %v1127 = vadd.f32 %v963, %v1126
  %1128 = vmatmul.f32.gmra.mxu0 %v41
  %v1129 = vpop.f32.mrf.mxu0
  %v1130 = vadd.f32 %v966, %v1129
  %1131 = vmatmul.f32.gmra.mxu0 %v43
  %v1132 = vpop.f32.mrf.mxu0
  %v1133 = vadd.f32 %v969, %v1132
  %1134 = vmatmul.f32.gmra.mxu0 %v45
  %v1135 = vpop.f32.mrf.mxu0
  %v1136 = vadd.f32 %v972, %v1135
  %1137 = vmatmul.f32.gmra.mxu0 %v47
  %v1138 = vpop.f32.mrf.mxu0
  %v1139 = vadd.f32 %v975, %v1138
  %1140 = vmatmul.f32.gmra.mxu0 %v49
  %v1141 = vpop.f32.mrf.mxu0
  %v1142 = vadd.f32 %v978, %v1141
  %1143 = vmatmul.f32.gmra.mxu0 %v51
  %v1144 = vpop.f32.mrf.mxu0
  %v1145 = vadd.f32 %v981, %v1144
  %1146 = vmatmul.f32.gmra.mxu0 %v53
  %v1147 = vpop.f32.mrf.mxu0
  %v1148 = vadd.f32 %v984, %v1147
  %1149 = vmatmul.f32.gmra.mxu0 %v55
  %v1150 = vpop.f32.mrf.mxu0
  %v1151 = vadd.f32 %v987, %v1150
  %1152 = vmatmul.f32.gmra.mxu0 %v57
  %v1153 = vpop.f32.mrf.mxu0
  %v1154 = vadd.f32 %v990, %v1153
  %1155 = vmatmul.f32.gmra.mxu0 %v59
  %v1156 = vpop.f32.mrf.mxu0
  %v1157 = vadd.f32 %v993, %v1156
  %1158 = vmatmul.f32.gmra.mxu0 %v61
  %v1159 = vpop.f32.mrf.mxu0
  %v1160 = vadd.f32 %v996, %v1159
  %1161 = vmatmul.f32.gmra.mxu0 %v63
  %v1162 = vpop.f32.mrf.mxu0
  %v1163 = vadd.f32 %v999, %v1162
  %1164 = vmatmul.f32.gmra.mxu0 %v65
  %v1165 = vpop.f32.mrf.mxu0
  %v1166 = vadd.f32 %v1002, %v1165
  %1167 = vmatmul.f32.gmra.mxu0 %v67
  %v1168 = vpop.f32.mrf.mxu0
  %v1169 = vadd.f32 %v1005, %v1168
  %1170 = vmatmul.f32.gmra.mxu0 %v69
  %v1171 = vpop.f32.mrf.mxu0
  %v1172 = vadd.f32 %v1008, %v1171
  %1173 = vmatmul.f32.gmra.mxu0 %v71
  %v1174 = vpop.f32.mrf.mxu0
  %v1175 = vadd.f32 %v1011, %v1174
  %1176 = vmatmul.f32.gmra.mxu0 %v73
  %v1177 = vpop.f32.mrf.mxu0
  %v1178 = vadd.f32 %v1014, %v1177
  %1179 = vmatmul.f32.gmra.mxu0 %v75
  %v1180 = vpop.f32.mrf.mxu0
  %v1181 = vadd.f32 %v1017, %v1180
  %1182 = vmatmul.f32.gmra.mxu0 %v77
  %v1183 = vpop.f32.mrf.mxu0
  %v1184 = vadd.f32 %v1020, %v1183
  %1185 = vmatmul.f32.gmra.mxu0 %v79
  %v1186 = vpop.f32.mrf.mxu0
  %v1187 = vadd.f32 %v1023, %v1186
  %1188 = vmatmul.f32.gmra.mxu0 %v81
  %v1189 = vpop.f32.mrf.mxu0
  %v1190 = vadd.f32 %v1026, %v1189
  %1191 = vmatmul.f32.gmra.mxu0 %v83
  %v1192 = vpop.f32.mrf.mxu0
  %v1193 = vadd.f32 %v1029, %v1192
  %1194 = vmatmul.f32.gmra.mxu0 %v85
  %v1195 = vpop.f32.mrf.mxu0
  %v1196 = vadd.f32 %v1032, %v1195
  %1197 = vmatmul.f32.gmra.mxu0 %v87
  %v1198 = vpop.f32.mrf.mxu0
  %v1199 = vadd.f32 %v1035, %v1198
  %1200 = vmatmul.f32.gmra.mxu0 %v89
  %v1201 = vpop.f32.mrf.mxu0
  %v1202 = vadd.f32 %v1038, %v1201
  %1203 = vmatmul.f32.gmra.mxu0 %v91
  %v1204 = vpop.f32.mrf.mxu0
  %v1205 = vadd.f32 %v1041, %v1204
  %1206 = vmatmul.f32.gmra.mxu0 %v93
  %v1207 = vpop.f32.mrf.mxu0
  %v1208 = vadd.f32 %v1044, %v1207
  %1209 = vmatmul.f32.gmra.mxu0 %v95
  %v1210 = vpop.f32.mrf.mxu0
  %v1211 = vadd.f32 %v1047, %v1210
  %1212 = vmatmul.f32.gmra.mxu0 %v97
  %v1213 = vpop.f32.mrf.mxu0
  %v1214 = vadd.f32 %v1050, %v1213
  %1215 = vmatmul.f32.gmra.mxu0 %v99
  %v1216 = vpop.f32.mrf.mxu0
  %v1217 = vadd.f32 %v1053, %v1216
  %1218 = vmatmul.f32.gmra.mxu0 %v101
  %v1219 = vpop.f32.mrf.mxu0
  %v1220 = vadd.f32 %v1056, %v1219
  %1221 = vmatmul.f32.gmra.mxu0 %v103
  %v1222 = vpop.f32.mrf.mxu0
  %v1223 = vadd.f32 %v1059, %v1222
  %1224 = vmatmul.f32.gmra.mxu0 %v105
  %v1225 = vpop.f32.mrf.mxu0
  %v1226 = vadd.f32 %v1062, %v1225
  %1227 = vmatmul.f32.gmra.mxu0 %v107
  %v1228 = vpop.f32.mrf.mxu0
  %v1229 = vadd.f32 %v1065, %v1228
  %1230 = vmatmul.f32.gmra.mxu0 %v109
  %v1231 = vpop.f32.mrf.mxu0
  %v1232 = vadd.f32 %v1068, %v1231
  %1233 = vmatmul.f32.gmra.mxu0 %v111
  %v1234 = vpop.f32.mrf.mxu0
  %v1235 = vadd.f32 %v1071, %v1234
  %1236 = vmatmul.f32.gmra.mxu0 %v113
  %v1237 = vpop.f32.mrf.mxu0
  %v1238 = vadd.f32 %v1074, %v1237
  %1239 = vmatmul.f32.gmra.mxu0 %v115
  %v1240 = vpop.f32.mrf.mxu0
  %v1241 = vadd.f32 %v1077, %v1240
  %1242 = vmatmul.f32.gmra.mxu0 %v117
  %v1243 = vpop.f32.mrf.mxu0
  %v1244 = vadd.f32 %v1080, %v1243
  %1245 = vdwg.mxu0
  %v1246 = vld [vmem:[%s0 + $0x70] sm:$0xff]
  %v1247 = vld [vmem:[%s0 + $0x78] sm:$0xff]
  %v1248 = vld [vmem:[%s0 + $0x80] sm:$0xff]
  %v1249 = vld [vmem:[%s0 + $0x88] sm:$0xff]
  %v1250 = vld [vmem:[%s0 + $0x90] sm:$0xff]
  %v1251 = vld [vmem:[%s0 + $0x98] sm:$0xff]
  %v1252 = vld [vmem:[%s0 + $0xa0] sm:$0xff]
  %v1253 = vld [vmem:[%s0 + $0xa8] sm:$0xff]
  %v1254 = vld [vmem:[%s0 + $0xb0] sm:$0xff]
  %v1255 = vld [vmem:[%s0 + $0xb8] sm:$0xff]
  %v1256 = vld [vmem:[%s0 + $0xc0] sm:$0xff]
  %v1257 = vld [vmem:[%s0 + $0xc8] sm:$0xff]
  %v1258 = vld [vmem:[%s0 + $0xd0] sm:$0xff]
  %v1259 = vld [vmem:[%s0 + $0xd8] sm:$0xff]
  %v1260 = vld [vmem:[%s0 + $0xe0] sm:$0xff]
  %v1261 = vld [vmem:[%s0 + $0xe8] sm:$0xff]
  %v1262 = vld [vmem:[%s0 + $0xf0] sm:$0xff]
  %v1263 = vld [vmem:[%s0 + $0xf8] sm:$0xff]
  %v1264 = vld [vmem:[%s0 + $0x100] sm:$0xff]
  %v1265 = vld [vmem:[%s0 + $0x108] sm:$0xff]
  %v1266 = vld [vmem:[%s0 + $0x110] sm:$0xff]
  %v1267 = vld [vmem:[%s0 + $0x118] sm:$0xff]
  %v1268 = vld [vmem:[%s0 + $0x120] sm:$0xff]
  %v1269 = vld [vmem:[%s0 + $0x128] sm:$0xff]
  %v1270 = vld [vmem:[%s0 + $0x130] sm:$0xff]
  %v1271 = vld [vmem:[%s0 + $0x138] sm:$0xff]
  %v1272 = vld [vmem:[%s0 + $0x140] sm:$0xff]
  %v1273 = vld [vmem:[%s0 + $0x148] sm:$0xff]
  %v1274 = vld [vmem:[%s0 + $0x150] sm:$0xff]
  %v1275 = vld [vmem:[%s0 + $0x158] sm:$0xff]
  %v1276 = vld [vmem:[%s0 + $0x160] sm:$0xff]
  %v1277 = vld [vmem:[%s0 + $0x168] sm:$0xff]
  %v1278 = vld [vmem:[%s0 + $0x170] sm:$0xff]
  %v1279 = vld [vmem:[%s0 + $0x178] sm:$0xff]
  %v1280 = vld [vmem:[%s0 + $0x180] sm:$0xff]
  %v1281 = vld [vmem:[%s0 + $0x188] sm:$0xff]
  %v1282 = vld [vmem:[%s0 + $0x190] sm:$0xff]
  %v1283 = vld [vmem:[%s0 + $0x198] sm:$0xff]
  %v1284 = vld [vmem:[%s0 + $0x1a0] sm:$0xff]
  %v1285 = vld [vmem:[%s0 + $0x1a8] sm:$0xff]
  %v1286 = vld [vmem:[%s0 + $0x1b0] sm:$0xff]
  %v1287 = vld [vmem:[%s0 + $0x1b8] sm:$0xff]
  %v1288 = vld [vmem:[%s0 + $0x1c0] sm:$0xff]
  %v1289 = vld [vmem:[%s0 + $0x1c8] sm:$0xff]
  %v1290 = vld [vmem:[%s0 + $0x1d0] sm:$0xff]
  %v1291 = vld [vmem:[%s0 + $0x1d8] sm:$0xff]
  %v1292 = vld [vmem:[%s0 + $0x1e0] sm:$0xff]
  %v1293 = vld [vmem:[%s0 + $0x1e8] sm:$0xff]
  %v1294 = vld [vmem:[%s0 + $0x1f0] sm:$0xff]
  %v1295 = vld [vmem:[%s0 + $0x1f8] sm:$0xff]
  %v1296 = vld [vmem:[%s0 + $0x200] sm:$0xff]
  %v1297 = vld [vmem:[%s0 + $0x208] sm:$0xff]
  %v1298 = vld [vmem:[%s0 + $0x210] sm:$0xff]
  %v1299 = vld [vmem:[%s0 + $0x218] sm:$0xff]
  %v1300 = vld [vmem:[%s0 + $0x220] sm:$0xff]
  %v1301 = vld [vmem:[%s0 + $0x228] sm:$0xff]
  %v1302 = vld [vmem:[%s0 + $0x230] sm:$0xff]
  %v1303 = vld [vmem:[%s0 + $0x238] sm:$0xff]
  %v1304 = vld [vmem:[%s0 + $0x240] sm:$0xff]
  %v1305 = vld [vmem:[%s0 + $0x248] sm:$0xff]
  %v1306 = vld [vmem:[%s0 + $0x250] sm:$0xff]
  %v1307 = vld [vmem:[%s0 + $0x258] sm:$0xff]
  %v1308 = vld [vmem:[%s0 + $0x260] sm:$0xff]
  %v1309 = vld [vmem:[%s0 + $0x268] sm:$0xff]
  %v1310 = vld [vmem:[%s0 + $0x270] sm:$0xff]
  %v1311 = vld [vmem:[%s0 + $0x278] sm:$0xff]
  %v1312 = vld [vmem:[%s0 + $0x280] sm:$0xff]
  %v1313 = vld [vmem:[%s0 + $0x288] sm:$0xff]
  %v1314 = vld [vmem:[%s0 + $0x290] sm:$0xff]
  %v1315 = vld [vmem:[%s0 + $0x298] sm:$0xff]
  %v1316 = vld [vmem:[%s0 + $0x2a0] sm:$0xff]
  %v1317 = vld [vmem:[%s0 + $0x2a8] sm:$0xff]
  %v1318 = vld [vmem:[%s0 + $0x2b0] sm:$0xff]
  %v1319 = vld [vmem:[%s0 + $0x2b8] sm:$0xff]
  %v1320 = vld [vmem:[%s0 + $0x2c0] sm:$0xff]
  %v1321 = vld [vmem:[%s0 + $0x2c8] sm:$0xff]
  %v1322 = vld [vmem:[%s0 + $0x2d0] sm:$0xff]
  %v1323 = vld [vmem:[%s0 + $0x2d8] sm:$0xff]
  %v1324 = vld [vmem:[%s0 + $0x2e0] sm:$0xff]
  %v1325 = vld [vmem:[%s0 + $0x2e8] sm:$0xff]
  %v1326 = vld [vmem:[%s0 + $0x2f0] sm:$0xff]
  %v1327 = vld [vmem:[%s0 + $0x2f8] sm:$0xff]
  %v1328 = vld [vmem:[%s0 + $0x300] sm:$0xff]
  %v1329 = vld [vmem:[%s0 + $0x308] sm:$0xff]
  %v1330 = vld [vmem:[%s0 + $0x310] sm:$0xff]
  %v1331 = vld [vmem:[%s0 + $0x318] sm:$0xff]
  %v1332 = vld [vmem:[%s0 + $0x320] sm:$0xff]
  %v1333 = vld [vmem:[%s0 + $0x328] sm:$0xff]
  %v1334 = vld [vmem:[%s0 + $0x330] sm:$0xff]
  %v1335 = vld [vmem:[%s0 + $0x338] sm:$0xff]
  %v1336 = vld [vmem:[%s0 + $0x340] sm:$0xff]
  %v1337 = vld [vmem:[%s0 + $0x348] sm:$0xff]
  %v1338 = vld [vmem:[%s0 + $0x350] sm:$0xff]
  %v1339 = vld [vmem:[%s0 + $0x358] sm:$0xff]
  %v1340 = vld [vmem:[%s0 + $0x360] sm:$0xff]
  %v1341 = vld [vmem:[%s0 + $0x368] sm:$0xff]
  %v1342 = vld [vmem:[%s0 + $0x370] sm:$0xff]
  %v1343 = vld [vmem:[%s0 + $0x378] sm:$0xff]
  %s1344 = scalar_lea.vmem %s1, 512
  %v1345 = vld [vmem:[%s1344] sm:$0xff]
  %v1346 = vld [vmem:[%s1344 + $0x8] sm:$0xff]
  %v1347 = vld [vmem:[%s1344 + $0x10] sm:$0xff]
  %v1348 = vld [vmem:[%s1344 + $0x18] sm:$0xff]
  %v1349 = vld [vmem:[%s1344 + $0x20] sm:$0xff]
  %v1350 = vld [vmem:[%s1344 + $0x28] sm:$0xff]
  %v1351 = vld [vmem:[%s1344 + $0x30] sm:$0xff]
  %v1352 = vld [vmem:[%s1344 + $0x38] sm:$0xff]
  %v1353 = vld [vmem:[%s1344 + $0x40] sm:$0xff]
  %v1354 = vld [vmem:[%s1344 + $0x48] sm:$0xff]
  %v1355 = vld [vmem:[%s1344 + $0x50] sm:$0xff]
  %v1356 = vld [vmem:[%s1344 + $0x58] sm:$0xff]
  %v1357 = vld [vmem:[%s1344 + $0x60] sm:$0xff]
  %v1358 = vld [vmem:[%s1344 + $0x68] sm:$0xff]
  %v1359 = vld [vmem:[%s1344 + $0x70] sm:$0xff]
  %v1360 = vld [vmem:[%s1344 + $0x78] sm:$0xff]
  %v1361 = vld [vmem:[%s1344 + $0x80] sm:$0xff]
  %v1362 = vld [vmem:[%s1344 + $0x88] sm:$0xff]
  %v1363 = vld [vmem:[%s1344 + $0x90] sm:$0xff]
  %v1364 = vld [vmem:[%s1344 + $0x98] sm:$0xff]
  %v1365 = vld [vmem:[%s1344 + $0xa0] sm:$0xff]
  %v1366 = vld [vmem:[%s1344 + $0xa8] sm:$0xff]
  %v1367 = vld [vmem:[%s1344 + $0xb0] sm:$0xff]
  %v1368 = vld [vmem:[%s1344 + $0xb8] sm:$0xff]
  %v1369 = vld [vmem:[%s1344 + $0xc0] sm:$0xff]
  %v1370 = vld [vmem:[%s1344 + $0xc8] sm:$0xff]
  %v1371 = vld [vmem:[%s1344 + $0xd0] sm:$0xff]
  %v1372 = vld [vmem:[%s1344 + $0xd8] sm:$0xff]
  %v1373 = vld [vmem:[%s1344 + $0xe0] sm:$0xff]
  %v1374 = vld [vmem:[%s1344 + $0xe8] sm:$0xff]
  %v1375 = vld [vmem:[%s1344 + $0xf0] sm:$0xff]
  %v1376 = vld [vmem:[%s1344 + $0xf8] sm:$0xff]
  %1377 = vmatpush.msra.mxu0 %v1360
  %1378 = vmatpush.msra.mxu0 %v1359
  %1379 = vmatpush.msra.mxu0 %v1358
  %1380 = vmatpush.msra.mxu0 %v1357
  %1381 = vmatpush.msra.mxu0 %v1356
  %1382 = vmatpush.msra.mxu0 %v1355
  %1383 = vmatpush.msra.mxu0 %v1354
  %1384 = vmatpush.msra.mxu0 %v1353
  %1385 = vmatpush.msra.mxu0 %v1352
  %1386 = vmatpush.msra.mxu0 %v1351
  %1387 = vmatpush.msra.mxu0 %v1350
  %1388 = vmatpush.msra.mxu0 %v1349
  %1389 = vmatpush.msra.mxu0 %v1348
  %1390 = vmatpush.msra.mxu0 %v1347
  %1391 = vmatpush.msra.mxu0 %v1346
  %1392 = vmatpush.msra.mxu0 %v1345
  %1393 = vmatmul.f32.gmra.mxu0 %v1246
  %v1394 = vpop.f32.mrf.mxu0
  %v1395 = vadd.f32 0.0, %v1394
  %1396 = vmatmul.f32.gmra.mxu0 %v1248
  %v1397 = vpop.f32.mrf.mxu0
  %v1398 = vadd.f32 0.0, %v1397
  %1399 = vmatmul.f32.gmra.mxu0 %v1250
  %v1400 = vpop.f32.mrf.mxu0
  %v1401 = vadd.f32 0.0, %v1400
  %1402 = vmatmul.f32.gmra.mxu0 %v1252
  %v1403 = vpop.f32.mrf.mxu0
  %v1404 = vadd.f32 0.0, %v1403
  %1405 = vmatmul.f32.gmra.mxu0 %v1254
  %v1406 = vpop.f32.mrf.mxu0
  %v1407 = vadd.f32 0.0, %v1406
  %1408 = vmatmul.f32.gmra.mxu0 %v1256
  %v1409 = vpop.f32.mrf.mxu0
  %v1410 = vadd.f32 0.0, %v1409
  %1411 = vmatmul.f32.gmra.mxu0 %v1258
  %v1412 = vpop.f32.mrf.mxu0
  %v1413 = vadd.f32 0.0, %v1412
  %1414 = vmatmul.f32.gmra.mxu0 %v1260
  %v1415 = vpop.f32.mrf.mxu0
  %v1416 = vadd.f32 0.0, %v1415
  %1417 = vmatmul.f32.gmra.mxu0 %v1262
  %v1418 = vpop.f32.mrf.mxu0
  %v1419 = vadd.f32 0.0, %v1418
  %1420 = vmatmul.f32.gmra.mxu0 %v1264
  %v1421 = vpop.f32.mrf.mxu0
  %v1422 = vadd.f32 0.0, %v1421
  %1423 = vmatmul.f32.gmra.mxu0 %v1266
  %v1424 = vpop.f32.mrf.mxu0
  %v1425 = vadd.f32 0.0, %v1424
  %1426 = vmatmul.f32.gmra.mxu0 %v1268
  %v1427 = vpop.f32.mrf.mxu0
  %v1428 = vadd.f32 0.0, %v1427
  %1429 = vmatmul.f32.gmra.mxu0 %v1270
  %v1430 = vpop.f32.mrf.mxu0
  %v1431 = vadd.f32 0.0, %v1430
  %1432 = vmatmul.f32.gmra.mxu0 %v1272
  %v1433 = vpop.f32.mrf.mxu0
  %v1434 = vadd.f32 0.0, %v1433
  %1435 = vmatmul.f32.gmra.mxu0 %v1274
  %v1436 = vpop.f32.mrf.mxu0
  %v1437 = vadd.f32 0.0, %v1436
  %1438 = vmatmul.f32.gmra.mxu0 %v1276
  %v1439 = vpop.f32.mrf.mxu0
  %v1440 = vadd.f32 0.0, %v1439
  %1441 = vmatmul.f32.gmra.mxu0 %v1278
  %v1442 = vpop.f32.mrf.mxu0
  %v1443 = vadd.f32 0.0, %v1442
  %1444 = vmatmul.f32.gmra.mxu0 %v1280
  %v1445 = vpop.f32.mrf.mxu0
  %v1446 = vadd.f32 0.0, %v1445
  %1447 = vmatmul.f32.gmra.mxu0 %v1282
  %v1448 = vpop.f32.mrf.mxu0
  %v1449 = vadd.f32 0.0, %v1448
  %1450 = vmatmul.f32.gmra.mxu0 %v1284
  %v1451 = vpop.f32.mrf.mxu0
  %v1452 = vadd.f32 0.0, %v1451
  %1453 = vmatmul.f32.gmra.mxu0 %v1286
  %v1454 = vpop.f32.mrf.mxu0
  %v1455 = vadd.f32 0.0, %v1454
  %1456 = vmatmul.f32.gmra.mxu0 %v1288
  %v1457 = vpop.f32.mrf.mxu0
  %v1458 = vadd.f32 0.0, %v1457
  %1459 = vmatmul.f32.gmra.mxu0 %v1290
  %v1460 = vpop.f32.mrf.mxu0
  %v1461 = vadd.f32 0.0, %v1460
  %1462 = vmatmul.f32.gmra.mxu0 %v1292
  %v1463 = vpop.f32.mrf.mxu0
  %v1464 = vadd.f32 0.0, %v1463
  %1465 = vmatmul.f32.gmra.mxu0 %v1294
  %v1466 = vpop.f32.mrf.mxu0
  %v1467 = vadd.f32 0.0, %v1466
  %1468 = vmatmul.f32.gmra.mxu0 %v1296
  %v1469 = vpop.f32.mrf.mxu0
  %v1470 = vadd.f32 0.0, %v1469
  %1471 = vmatmul.f32.gmra.mxu0 %v1298
  %v1472 = vpop.f32.mrf.mxu0
  %v1473 = vadd.f32 0.0, %v1472
  %1474 = vmatmul.f32.gmra.mxu0 %v1300
  %v1475 = vpop.f32.mrf.mxu0
  %v1476 = vadd.f32 0.0, %v1475
  %1477 = vmatmul.f32.gmra.mxu0 %v1302
  %v1478 = vpop.f32.mrf.mxu0
  %v1479 = vadd.f32 0.0, %v1478
  %1480 = vmatmul.f32.gmra.mxu0 %v1304
  %v1481 = vpop.f32.mrf.mxu0
  %v1482 = vadd.f32 0.0, %v1481
  %1483 = vmatmul.f32.gmra.mxu0 %v1306
  %v1484 = vpop.f32.mrf.mxu0
  %v1485 = vadd.f32 0.0, %v1484
  %1486 = vmatmul.f32.gmra.mxu0 %v1308
  %v1487 = vpop.f32.mrf.mxu0
  %v1488 = vadd.f32 0.0, %v1487
  %1489 = vmatmul.f32.gmra.mxu0 %v1310
  %v1490 = vpop.f32.mrf.mxu0
  %v1491 = vadd.f32 0.0, %v1490
  %1492 = vmatmul.f32.gmra.mxu0 %v1312
  %v1493 = vpop.f32.mrf.mxu0
  %v1494 = vadd.f32 0.0, %v1493
  %1495 = vmatmul.f32.gmra.mxu0 %v1314
  %v1496 = vpop.f32.mrf.mxu0
  %v1497 = vadd.f32 0.0, %v1496
  %1498 = vmatmul.f32.gmra.mxu0 %v1316
  %v1499 = vpop.f32.mrf.mxu0
  %v1500 = vadd.f32 0.0, %v1499
  %1501 = vmatmul.f32.gmra.mxu0 %v1318
  %v1502 = vpop.f32.mrf.mxu0
  %v1503 = vadd.f32 0.0, %v1502
  %1504 = vmatmul.f32.gmra.mxu0 %v1320
  %v1505 = vpop.f32.mrf.mxu0
  %v1506 = vadd.f32 0.0, %v1505
  %1507 = vmatmul.f32.gmra.mxu0 %v1322
  %v1508 = vpop.f32.mrf.mxu0
  %v1509 = vadd.f32 0.0, %v1508
  %1510 = vmatmul.f32.gmra.mxu0 %v1324
  %v1511 = vpop.f32.mrf.mxu0
  %v1512 = vadd.f32 0.0, %v1511
  %1513 = vmatmul.f32.gmra.mxu0 %v1326
  %v1514 = vpop.f32.mrf.mxu0
  %v1515 = vadd.f32 0.0, %v1514
  %1516 = vmatmul.f32.gmra.mxu0 %v1328
  %v1517 = vpop.f32.mrf.mxu0
  %v1518 = vadd.f32 0.0, %v1517
  %1519 = vmatmul.f32.gmra.mxu0 %v1330
  %v1520 = vpop.f32.mrf.mxu0
  %v1521 = vadd.f32 0.0, %v1520
  %1522 = vmatmul.f32.gmra.mxu0 %v1332
  %v1523 = vpop.f32.mrf.mxu0
  %v1524 = vadd.f32 0.0, %v1523
  %1525 = vmatmul.f32.gmra.mxu0 %v1334
  %v1526 = vpop.f32.mrf.mxu0
  %v1527 = vadd.f32 0.0, %v1526
  %1528 = vmatmul.f32.gmra.mxu0 %v1336
  %v1529 = vpop.f32.mrf.mxu0
  %v1530 = vadd.f32 0.0, %v1529
  %1531 = vmatmul.f32.gmra.mxu0 %v1338
  %v1532 = vpop.f32.mrf.mxu0
  %v1533 = vadd.f32 0.0, %v1532
  %1534 = vmatmul.f32.gmra.mxu0 %v1340
  %v1535 = vpop.f32.mrf.mxu0
  %v1536 = vadd.f32 0.0, %v1535
  %1537 = vmatmul.f32.gmra.mxu0 %v1342
  %v1538 = vpop.f32.mrf.mxu0
  %v1539 = vadd.f32 0.0, %v1538
  %1540 = vdwg.mxu0
  %1541 = vmatpush.msra.mxu0 %v1376
  %1542 = vmatpush.msra.mxu0 %v1375
  %1543 = vmatpush.msra.mxu0 %v1374
  %1544 = vmatpush.msra.mxu0 %v1373
  %1545 = vmatpush.msra.mxu0 %v1372
  %1546 = vmatpush.msra.mxu0 %v1371
  %1547 = vmatpush.msra.mxu0 %v1370
  %1548 = vmatpush.msra.mxu0 %v1369
  %1549 = vmatpush.msra.mxu0 %v1368
  %1550 = vmatpush.msra.mxu0 %v1367
  %1551 = vmatpush.msra.mxu0 %v1366
  %1552 = vmatpush.msra.mxu0 %v1365
  %1553 = vmatpush.msra.mxu0 %v1364
  %1554 = vmatpush.msra.mxu0 %v1363
  %1555 = vmatpush.msra.mxu0 %v1362
  %1556 = vmatpush.msra.mxu0 %v1361
  %1557 = vmatmul.f32.gmra.mxu0 %v1247
  %v1558 = vpop.f32.mrf.mxu0
  %v1559 = vadd.f32 %v1395, %v1558
  %1560 = vmatmul.f32.gmra.mxu0 %v1249
  %v1561 = vpop.f32.mrf.mxu0
  %v1562 = vadd.f32 %v1398, %v1561
  %1563 = vmatmul.f32.gmra.mxu0 %v1251
  %v1564 = vpop.f32.mrf.mxu0
  %v1565 = vadd.f32 %v1401, %v1564
  %1566 = vmatmul.f32.gmra.mxu0 %v1253
  %v1567 = vpop.f32.mrf.mxu0
  %v1568 = vadd.f32 %v1404, %v1567
  %1569 = vmatmul.f32.gmra.mxu0 %v1255
  %v1570 = vpop.f32.mrf.mxu0
  %v1571 = vadd.f32 %v1407, %v1570
  %1572 = vmatmul.f32.gmra.mxu0 %v1257
  %v1573 = vpop.f32.mrf.mxu0
  %v1574 = vadd.f32 %v1410, %v1573
  %1575 = vmatmul.f32.gmra.mxu0 %v1259
  %v1576 = vpop.f32.mrf.mxu0
  %v1577 = vadd.f32 %v1413, %v1576
  %1578 = vmatmul.f32.gmra.mxu0 %v1261
  %v1579 = vpop.f32.mrf.mxu0
  %v1580 = vadd.f32 %v1416, %v1579
  %1581 = vmatmul.f32.gmra.mxu0 %v1263
  %v1582 = vpop.f32.mrf.mxu0
  %v1583 = vadd.f32 %v1419, %v1582
  %1584 = vmatmul.f32.gmra.mxu0 %v1265
  %v1585 = vpop.f32.mrf.mxu0
  %v1586 = vadd.f32 %v1422, %v1585
  %1587 = vmatmul.f32.gmra.mxu0 %v1267
  %v1588 = vpop.f32.mrf.mxu0
  %v1589 = vadd.f32 %v1425, %v1588
  %1590 = vmatmul.f32.gmra.mxu0 %v1269
  %v1591 = vpop.f32.mrf.mxu0
  %v1592 = vadd.f32 %v1428, %v1591
  %1593 = vmatmul.f32.gmra.mxu0 %v1271
  %v1594 = vpop.f32.mrf.mxu0
  %v1595 = vadd.f32 %v1431, %v1594
  %1596 = vmatmul.f32.gmra.mxu0 %v1273
  %v1597 = vpop.f32.mrf.mxu0
  %v1598 = vadd.f32 %v1434, %v1597
  %1599 = vmatmul.f32.gmra.mxu0 %v1275
  %v1600 = vpop.f32.mrf.mxu0
  %v1601 = vadd.f32 %v1437, %v1600
  %1602 = vmatmul.f32.gmra.mxu0 %v1277
  %v1603 = vpop.f32.mrf.mxu0
  %v1604 = vadd.f32 %v1440, %v1603
  %1605 = vmatmul.f32.gmra.mxu0 %v1279
  %v1606 = vpop.f32.mrf.mxu0
  %v1607 = vadd.f32 %v1443, %v1606
  %1608 = vmatmul.f32.gmra.mxu0 %v1281
  %v1609 = vpop.f32.mrf.mxu0
  %v1610 = vadd.f32 %v1446, %v1609
  %1611 = vmatmul.f32.gmra.mxu0 %v1283
  %v1612 = vpop.f32.mrf.mxu0
  %v1613 = vadd.f32 %v1449, %v1612
  %1614 = vmatmul.f32.gmra.mxu0 %v1285
  %v1615 = vpop.f32.mrf.mxu0
  %v1616 = vadd.f32 %v1452, %v1615
  %1617 = vmatmul.f32.gmra.mxu0 %v1287
  %v1618 = vpop.f32.mrf.mxu0
  %v1619 = vadd.f32 %v1455, %v1618
  %1620 = vmatmul.f32.gmra.mxu0 %v1289
  %v1621 = vpop.f32.mrf.mxu0
  %v1622 = vadd.f32 %v1458, %v1621
  %1623 = vmatmul.f32.gmra.mxu0 %v1291
  %v1624 = vpop.f32.mrf.mxu0
  %v1625 = vadd.f32 %v1461, %v1624
  %1626 = vmatmul.f32.gmra.mxu0 %v1293
  %v1627 = vpop.f32.mrf.mxu0
  %v1628 = vadd.f32 %v1464, %v1627
  %1629 = vmatmul.f32.gmra.mxu0 %v1295
  %v1630 = vpop.f32.mrf.mxu0
  %v1631 = vadd.f32 %v1467, %v1630
  %1632 = vmatmul.f32.gmra.mxu0 %v1297
  %v1633 = vpop.f32.mrf.mxu0
  %v1634 = vadd.f32 %v1470, %v1633
  %1635 = vmatmul.f32.gmra.mxu0 %v1299
  %v1636 = vpop.f32.mrf.mxu0
  %v1637 = vadd.f32 %v1473, %v1636
  %1638 = vmatmul.f32.gmra.mxu0 %v1301
  %v1639 = vpop.f32.mrf.mxu0
  %v1640 = vadd.f32 %v1476, %v1639
  %1641 = vmatmul.f32.gmra.mxu0 %v1303
  %v1642 = vpop.f32.mrf.mxu0
  %v1643 = vadd.f32 %v1479, %v1642
  %1644 = vmatmul.f32.gmra.mxu0 %v1305
  %v1645 = vpop.f32.mrf.mxu0
  %v1646 = vadd.f32 %v1482, %v1645
  %1647 = vmatmul.f32.gmra.mxu0 %v1307
  %v1648 = vpop.f32.mrf.mxu0
  %v1649 = vadd.f32 %v1485, %v1648
  %1650 = vmatmul.f32.gmra.mxu0 %v1309
  %v1651 = vpop.f32.mrf.mxu0
  %v1652 = vadd.f32 %v1488, %v1651
  %1653 = vmatmul.f32.gmra.mxu0 %v1311
  %v1654 = vpop.f32.mrf.mxu0
  %v1655 = vadd.f32 %v1491, %v1654
  %1656 = vmatmul.f32.gmra.mxu0 %v1313
  %v1657 = vpop.f32.mrf.mxu0
  %v1658 = vadd.f32 %v1494, %v1657
  %1659 = vmatmul.f32.gmra.mxu0 %v1315
  %v1660 = vpop.f32.mrf.mxu0
  %v1661 = vadd.f32 %v1497, %v1660
  %1662 = vmatmul.f32.gmra.mxu0 %v1317
  %v1663 = vpop.f32.mrf.mxu0
  %v1664 = vadd.f32 %v1500, %v1663
  %1665 = vmatmul.f32.gmra.mxu0 %v1319
  %v1666 = vpop.f32.mrf.mxu0
  %v1667 = vadd.f32 %v1503, %v1666
  %1668 = vmatmul.f32.gmra.mxu0 %v1321
  %v1669 = vpop.f32.mrf.mxu0
  %v1670 = vadd.f32 %v1506, %v1669
  %1671 = vmatmul.f32.gmra.mxu0 %v1323
  %v1672 = vpop.f32.mrf.mxu0
  %v1673 = vadd.f32 %v1509, %v1672
  %1674 = vmatmul.f32.gmra.mxu0 %v1325
  %v1675 = vpop.f32.mrf.mxu0
  %v1676 = vadd.f32 %v1512, %v1675
  %1677 = vmatmul.f32.gmra.mxu0 %v1327
  %v1678 = vpop.f32.mrf.mxu0
  %v1679 = vadd.f32 %v1515, %v1678
  %1680 = vmatmul.f32.gmra.mxu0 %v1329
  %v1681 = vpop.f32.mrf.mxu0
  %v1682 = vadd.f32 %v1518, %v1681
  %1683 = vmatmul.f32.gmra.mxu0 %v1331
  %v1684 = vpop.f32.mrf.mxu0
  %v1685 = vadd.f32 %v1521, %v1684
  %1686 = vmatmul.f32.gmra.mxu0 %v1333
  %v1687 = vpop.f32.mrf.mxu0
  %v1688 = vadd.f32 %v1524, %v1687
  %1689 = vmatmul.f32.gmra.mxu0 %v1335
  %v1690 = vpop.f32.mrf.mxu0
  %v1691 = vadd.f32 %v1527, %v1690
  %1692 = vmatmul.f32.gmra.mxu0 %v1337
  %v1693 = vpop.f32.mrf.mxu0
  %v1694 = vadd.f32 %v1530, %v1693
  %1695 = vmatmul.f32.gmra.mxu0 %v1339
  %v1696 = vpop.f32.mrf.mxu0
  %v1697 = vadd.f32 %v1533, %v1696
  %1698 = vmatmul.f32.gmra.mxu0 %v1341
  %v1699 = vpop.f32.mrf.mxu0
  %v1700 = vadd.f32 %v1536, %v1699
  %1701 = vmatmul.f32.gmra.mxu0 %v1343
  %v1702 = vpop.f32.mrf.mxu0
  %v1703 = vadd.f32 %v1539, %v1702
  %1704 = vdwg.mxu0
  %v1705 = vadd.f32 %v1100, %v1559
  %v1706 = vadd.f32 %v1103, %v1562
  %v1707 = vadd.f32 %v1106, %v1565
  %v1708 = vadd.f32 %v1109, %v1568
  %v1709 = vadd.f32 %v1112, %v1571
  %v1710 = vadd.f32 %v1115, %v1574
  %v1711 = vadd.f32 %v1118, %v1577
  %v1712 = vadd.f32 %v1121, %v1580
  %v1713 = vadd.f32 %v1124, %v1583
  %v1714 = vadd.f32 %v1127, %v1586
  %v1715 = vadd.f32 %v1130, %v1589
  %v1716 = vadd.f32 %v1133, %v1592
  %v1717 = vadd.f32 %v1136, %v1595
  %v1718 = vadd.f32 %v1139, %v1598
  %v1719 = vadd.f32 %v1142, %v1601
  %v1720 = vadd.f32 %v1145, %v1604
  %v1721 = vadd.f32 %v1148, %v1607
  %v1722 = vadd.f32 %v1151, %v1610
  %v1723 = vadd.f32 %v1154, %v1613
  %v1724 = vadd.f32 %v1157, %v1616
  %v1725 = vadd.f32 %v1160, %v1619
  %v1726 = vadd.f32 %v1163, %v1622
  %v1727 = vadd.f32 %v1166, %v1625
  %v1728 = vadd.f32 %v1169, %v1628
  %v1729 = vadd.f32 %v1172, %v1631
  %v1730 = vadd.f32 %v1175, %v1634
  %v1731 = vadd.f32 %v1178, %v1637
  %v1732 = vadd.f32 %v1181, %v1640
  %v1733 = vadd.f32 %v1184, %v1643
  %v1734 = vadd.f32 %v1187, %v1646
  %v1735 = vadd.f32 %v1190, %v1649
  %v1736 = vadd.f32 %v1193, %v1652
  %v1737 = vadd.f32 %v1196, %v1655
  %v1738 = vadd.f32 %v1199, %v1658
  %v1739 = vadd.f32 %v1202, %v1661
  %v1740 = vadd.f32 %v1205, %v1664
  %v1741 = vadd.f32 %v1208, %v1667
  %v1742 = vadd.f32 %v1211, %v1670
  %v1743 = vadd.f32 %v1214, %v1673
  %v1744 = vadd.f32 %v1217, %v1676
  %v1745 = vadd.f32 %v1220, %v1679
  %v1746 = vadd.f32 %v1223, %v1682
  %v1747 = vadd.f32 %v1226, %v1685
  %v1748 = vadd.f32 %v1229, %v1688
  %v1749 = vadd.f32 %v1232, %v1691
  %v1750 = vadd.f32 %v1235, %v1694
  %v1751 = vadd.f32 %v1238, %v1697
  %v1752 = vadd.f32 %v1241, %v1700
  %v1753 = vadd.f32 %v1244, %v1703
  %v1754 = vld [vmem:[%s0 + $0xa0] sm:$0xf0]
  %v1755 = vld [vmem:[%s0 + $0xa8] sm:$0xf0]
  %v1756 = vld [vmem:[%s0 + $0xb0] sm:$0xff]
  %v1757 = vld [vmem:[%s0 + $0xb8] sm:$0xff]
  %v1758 = vld [vmem:[%s0 + $0xc0] sm:$0xff]
  %v1759 = vld [vmem:[%s0 + $0xc8] sm:$0xff]
  %v1760 = vld [vmem:[%s0 + $0xd0] sm:$0xff]
  %v1761 = vld [vmem:[%s0 + $0xd8] sm:$0xff]
  %v1762 = vld [vmem:[%s0 + $0xe0] sm:$0xff]
  %v1763 = vld [vmem:[%s0 + $0xe8] sm:$0xff]
  %v1764 = vld [vmem:[%s0 + $0xf0] sm:$0xff]
  %v1765 = vld [vmem:[%s0 + $0xf8] sm:$0xff]
  %v1766 = vld [vmem:[%s0 + $0x100] sm:$0xff]
  %v1767 = vld [vmem:[%s0 + $0x108] sm:$0xff]
  %v1768 = vld [vmem:[%s0 + $0x110] sm:$0xff]
  %v1769 = vld [vmem:[%s0 + $0x118] sm:$0xff]
  %v1770 = vld [vmem:[%s0 + $0x120] sm:$0xff]
  %v1771 = vld [vmem:[%s0 + $0x128] sm:$0xff]
  %v1772 = vld [vmem:[%s0 + $0x130] sm:$0xff]
  %v1773 = vld [vmem:[%s0 + $0x138] sm:$0xff]
  %v1774 = vld [vmem:[%s0 + $0x140] sm:$0xff]
  %v1775 = vld [vmem:[%s0 + $0x148] sm:$0xff]
  %v1776 = vld [vmem:[%s0 + $0x150] sm:$0xff]
  %v1777 = vld [vmem:[%s0 + $0x158] sm:$0xff]
  %v1778 = vld [vmem:[%s0 + $0x160] sm:$0xff]
  %v1779 = vld [vmem:[%s0 + $0x168] sm:$0xff]
  %v1780 = vld [vmem:[%s0 + $0x170] sm:$0xff]
  %v1781 = vld [vmem:[%s0 + $0x178] sm:$0xff]
  %v1782 = vld [vmem:[%s0 + $0x180] sm:$0xff]
  %v1783 = vld [vmem:[%s0 + $0x188] sm:$0xff]
  %v1784 = vld [vmem:[%s0 + $0x190] sm:$0xff]
  %v1785 = vld [vmem:[%s0 + $0x198] sm:$0xff]
  %v1786 = vld [vmem:[%s0 + $0x1a0] sm:$0xff]
  %v1787 = vld [vmem:[%s0 + $0x1a8] sm:$0xff]
  %v1788 = vld [vmem:[%s0 + $0x1b0] sm:$0xff]
  %v1789 = vld [vmem:[%s0 + $0x1b8] sm:$0xff]
  %v1790 = vld [vmem:[%s0 + $0x1c0] sm:$0xff]
  %v1791 = vld [vmem:[%s0 + $0x1c8] sm:$0xff]
  %v1792 = vld [vmem:[%s0 + $0x1d0] sm:$0xff]
  %v1793 = vld [vmem:[%s0 + $0x1d8] sm:$0xff]
  %v1794 = vld [vmem:[%s0 + $0x1e0] sm:$0xff]
  %v1795 = vld [vmem:[%s0 + $0x1e8] sm:$0xff]
  %v1796 = vld [vmem:[%s0 + $0x1f0] sm:$0xff]
  %v1797 = vld [vmem:[%s0 + $0x1f8] sm:$0xff]
  %v1798 = vld [vmem:[%s0 + $0x200] sm:$0xff]
  %v1799 = vld [vmem:[%s0 + $0x208] sm:$0xff]
  %v1800 = vld [vmem:[%s0 + $0x210] sm:$0xff]
  %v1801 = vld [vmem:[%s0 + $0x218] sm:$0xff]
  %v1802 = vld [vmem:[%s0 + $0x220] sm:$0xff]
  %v1803 = vld [vmem:[%s0 + $0x228] sm:$0xff]
  %v1804 = vld [vmem:[%s0 + $0x230] sm:$0xff]
  %v1805 = vld [vmem:[%s0 + $0x238] sm:$0xff]
  %v1806 = vld [vmem:[%s0 + $0x240] sm:$0xff]
  %v1807 = vld [vmem:[%s0 + $0x248] sm:$0xff]
  %v1808 = vld [vmem:[%s0 + $0x250] sm:$0xff]
  %v1809 = vld [vmem:[%s0 + $0x258] sm:$0xff]
  %v1810 = vld [vmem:[%s0 + $0x260] sm:$0xff]
  %v1811 = vld [vmem:[%s0 + $0x268] sm:$0xff]
  %v1812 = vld [vmem:[%s0 + $0x270] sm:$0xff]
  %v1813 = vld [vmem:[%s0 + $0x278] sm:$0xff]
  %v1814 = vld [vmem:[%s0 + $0x280] sm:$0xff]
  %v1815 = vld [vmem:[%s0 + $0x288] sm:$0xff]
  %v1816 = vld [vmem:[%s0 + $0x290] sm:$0xff]
  %v1817 = vld [vmem:[%s0 + $0x298] sm:$0xff]
  %v1818 = vld [vmem:[%s0 + $0x2a0] sm:$0xff]
  %v1819 = vld [vmem:[%s0 + $0x2a8] sm:$0xff]
  %v1820 = vld [vmem:[%s0 + $0x2b0] sm:$0xff]
  %v1821 = vld [vmem:[%s0 + $0x2b8] sm:$0xff]
  %v1822 = vld [vmem:[%s0 + $0x2c0] sm:$0xff]
  %v1823 = vld [vmem:[%s0 + $0x2c8] sm:$0xff]
  %v1824 = vld [vmem:[%s0 + $0x2d0] sm:$0xff]
  %v1825 = vld [vmem:[%s0 + $0x2d8] sm:$0xff]
  %v1826 = vld [vmem:[%s0 + $0x2e0] sm:$0xff]
  %v1827 = vld [vmem:[%s0 + $0x2e8] sm:$0xff]
  %v1828 = vld [vmem:[%s0 + $0x2f0] sm:$0xff]
  %v1829 = vld [vmem:[%s0 + $0x2f8] sm:$0xff]
  %v1830 = vld [vmem:[%s0 + $0x300] sm:$0xff]
  %v1831 = vld [vmem:[%s0 + $0x308] sm:$0xff]
  %v1832 = vld [vmem:[%s0 + $0x310] sm:$0xff]
  %v1833 = vld [vmem:[%s0 + $0x318] sm:$0xff]
  %v1834 = vld [vmem:[%s0 + $0x320] sm:$0xff]
  %v1835 = vld [vmem:[%s0 + $0x328] sm:$0xff]
  %v1836 = vld [vmem:[%s0 + $0x330] sm:$0xff]
  %v1837 = vld [vmem:[%s0 + $0x338] sm:$0xff]
  %v1838 = vld [vmem:[%s0 + $0x340] sm:$0xff]
  %v1839 = vld [vmem:[%s0 + $0x348] sm:$0xff]
  %v1840 = vld [vmem:[%s0 + $0x350] sm:$0xff]
  %v1841 = vld [vmem:[%s0 + $0x358] sm:$0xff]
  %v1842 = vld [vmem:[%s0 + $0x360] sm:$0xff]
  %v1843 = vld [vmem:[%s0 + $0x368] sm:$0xff]
  %v1844 = vld [vmem:[%s0 + $0x370] sm:$0xff]
  %v1845 = vld [vmem:[%s0 + $0x378] sm:$0xff]
  %v1846 = vld [vmem:[%s0 + $0x380] sm:$0xff]
  %v1847 = vld [vmem:[%s0 + $0x388] sm:$0xff]
  %v1848 = vld [vmem:[%s0 + $0x390] sm:$0xff]
  %v1849 = vld [vmem:[%s0 + $0x398] sm:$0xff]
  %v1850 = vld [vmem:[%s0 + $0x3a0] sm:$0xff]
  %v1851 = vld [vmem:[%s0 + $0x3a8] sm:$0xff]
  %v1852 = vld [vmem:[%s0 + $0x3b0] sm:$0xf]
  %v1853 = vld [vmem:[%s0 + $0x3b8] sm:$0xf]
  %s1854 = scalar_lea.vmem %s1, 768
  %v1855 = vld [vmem:[%s1854] sm:$0xff]
  %v1856 = vld [vmem:[%s1854 + $0x8] sm:$0xff]
  %v1857 = vld [vmem:[%s1854 + $0x10] sm:$0xff]
  %v1858 = vld [vmem:[%s1854 + $0x18] sm:$0xff]
  %v1859 = vld [vmem:[%s1854 + $0x20] sm:$0xff]
  %v1860 = vld [vmem:[%s1854 + $0x28] sm:$0xff]
  %v1861 = vld [vmem:[%s1854 + $0x30] sm:$0xff]
  %v1862 = vld [vmem:[%s1854 + $0x38] sm:$0xff]
  %v1863 = vld [vmem:[%s1854 + $0x40] sm:$0xff]
  %v1864 = vld [vmem:[%s1854 + $0x48] sm:$0xff]
  %v1865 = vld [vmem:[%s1854 + $0x50] sm:$0xff]
  %v1866 = vld [vmem:[%s1854 + $0x58] sm:$0xff]
  %v1867 = vld [vmem:[%s1854 + $0x60] sm:$0xff]
  %v1868 = vld [vmem:[%s1854 + $0x68] sm:$0xff]
  %v1869 = vld [vmem:[%s1854 + $0x70] sm:$0xff]
  %v1870 = vld [vmem:[%s1854 + $0x78] sm:$0xff]
  %v1871 = vld [vmem:[%s1854 + $0x80] sm:$0xff]
  %v1872 = vld [vmem:[%s1854 + $0x88] sm:$0xff]
  %v1873 = vld [vmem:[%s1854 + $0x90] sm:$0xff]
  %v1874 = vld [vmem:[%s1854 + $0x98] sm:$0xff]
  %v1875 = vld [vmem:[%s1854 + $0xa0] sm:$0xff]
  %v1876 = vld [vmem:[%s1854 + $0xa8] sm:$0xff]
  %v1877 = vld [vmem:[%s1854 + $0xb0] sm:$0xff]
  %v1878 = vld [vmem:[%s1854 + $0xb8] sm:$0xff]
  %v1879 = vld [vmem:[%s1854 + $0xc0] sm:$0xff]
  %v1880 = vld [vmem:[%s1854 + $0xc8] sm:$0xff]
  %v1881 = vld [vmem:[%s1854 + $0xd0] sm:$0xff]
  %v1882 = vld [vmem:[%s1854 + $0xd8] sm:$0xff]
  %v1883 = vld [vmem:[%s1854 + $0xe0] sm:$0xff]
  %v1884 = vld [vmem:[%s1854 + $0xe8] sm:$0xff]
  %v1885 = vld [vmem:[%s1854 + $0xf0] sm:$0xff]
  %v1886 = vld [vmem:[%s1854 + $0xf8] sm:$0xff]
  %v1987 = vrot.slane %v1754, 4
  %v1988 = vrot.slane %v1756, 4
  %v1989 = vsel %vm293, %v1987, %v1988
  %v1990 = vrot.slane %v1755, 4
  %v1991 = vrot.slane %v1757, 4
  %v1992 = vsel %vm293, %v1990, %v1991
  %v1993 = vrot.slane %v1758, 4
  %v1994 = vsel %vm293, %v1988, %v1993
  %v1995 = vrot.slane %v1759, 4
  %v1996 = vsel %vm293, %v1991, %v1995
  %v1997 = vrot.slane %v1760, 4
  %v1998 = vsel %vm293, %v1993, %v1997
  %v1999 = vrot.slane %v1761, 4
  %v2000 = vsel %vm293, %v1995, %v1999
  %v2001 = vrot.slane %v1762, 4
  %v2002 = vsel %vm293, %v1997, %v2001
  %v2003 = vrot.slane %v1763, 4
  %v2004 = vsel %vm293, %v1999, %v2003
  %v2005 = vrot.slane %v1764, 4
  %v2006 = vsel %vm293, %v2001, %v2005
  %v2007 = vrot.slane %v1765, 4
  %v2008 = vsel %vm293, %v2003, %v2007
  %v2009 = vrot.slane %v1766, 4
  %v2010 = vsel %vm293, %v2005, %v2009
  %v2011 = vrot.slane %v1767, 4
  %v2012 = vsel %vm293, %v2007, %v2011
  %v2013 = vrot.slane %v1768, 4
  %v2014 = vsel %vm293, %v2009, %v2013
  %v2015 = vrot.slane %v1769, 4
  %v2016 = vsel %vm293, %v2011, %v2015
  %v2017 = vrot.slane %v1770, 4
  %v2018 = vsel %vm293, %v2013, %v2017
  %v2019 = vrot.slane %v1771, 4
  %v2020 = vsel %vm293, %v2015, %v2019
  %v2021 = vrot.slane %v1772, 4
  %v2022 = vsel %vm293, %v2017, %v2021
  %v2023 = vrot.slane %v1773, 4
  %v2024 = vsel %vm293, %v2019, %v2023
  %v2025 = vrot.slane %v1774, 4
  %v2026 = vsel %vm293, %v2021, %v2025
  %v2027 = vrot.slane %v1775, 4
  %v2028 = vsel %vm293, %v2023, %v2027
  %v2029 = vrot.slane %v1776, 4
  %v2030 = vsel %vm293, %v2025, %v2029
  %v2031 = vrot.slane %v1777, 4
  %v2032 = vsel %vm293, %v2027, %v2031
  %v2033 = vrot.slane %v1778, 4
  %v2034 = vsel %vm293, %v2029, %v2033
  %v2035 = vrot.slane %v1779, 4
  %v2036 = vsel %vm293, %v2031, %v2035
  %v2037 = vrot.slane %v1780, 4
  %v2038 = vsel %vm293, %v2033, %v2037
  %v2039 = vrot.slane %v1781, 4
  %v2040 = vsel %vm293, %v2035, %v2039
  %v2041 = vrot.slane %v1782, 4
  %v2042 = vsel %vm293, %v2037, %v2041
  %v2043 = vrot.slane %v1783, 4
  %v2044 = vsel %vm293, %v2039, %v2043
  %v2045 = vrot.slane %v1784, 4
  %v2046 = vsel %vm293, %v2041, %v2045
  %v2047 = vrot.slane %v1785, 4
  %v2048 = vsel %vm293, %v2043, %v2047
  %v2049 = vrot.slane %v1786, 4
  %v2050 = vsel %vm293, %v2045, %v2049
  %v2051 = vrot.slane %v1787, 4
  %v2052 = vsel %vm293, %v2047, %v2051
  %v2053 = vrot.slane %v1788, 4
  %v2054 = vsel %vm293, %v2049, %v2053
  %v2055 = vrot.slane %v1789, 4
  %v2056 = vsel %vm293, %v2051, %v2055
  %v2057 = vrot.slane %v1790, 4
  %v2058 = vsel %vm293, %v2053, %v2057
  %v2059 = vrot.slane %v1791, 4
  %v2060 = vsel %vm293, %v2055, %v2059
  %v2061 = vrot.slane %v1792, 4
  %v2062 = vsel %vm293, %v2057, %v2061
  %v2063 = vrot.slane %v1793, 4
  %v2064 = vsel %vm293, %v2059, %v2063
  %v2065 = vrot.slane %v1794, 4
  %v2066 = vsel %vm293, %v2061, %v2065
  %v2067 = vrot.slane %v1795, 4
  %v2068 = vsel %vm293, %v2063, %v2067
  %v2069 = vrot.slane %v1796, 4
  %v2070 = vsel %vm293, %v2065, %v2069
  %v2071 = vrot.slane %v1797, 4
  %v2072 = vsel %vm293, %v2067, %v2071
  %v2073 = vrot.slane %v1798, 4
  %v2074 = vsel %vm293, %v2069, %v2073
  %v2075 = vrot.slane %v1799, 4
  %v2076 = vsel %vm293, %v2071, %v2075
  %v2077 = vrot.slane %v1800, 4
  %v2078 = vsel %vm293, %v2073, %v2077
  %v2079 = vrot.slane %v1801, 4
  %v2080 = vsel %vm293, %v2075, %v2079
  %v2081 = vrot.slane %v1802, 4
  %v2082 = vsel %vm293, %v2077, %v2081
  %v2083 = vrot.slane %v1803, 4
  %v2084 = vsel %vm293, %v2079, %v2083
  %v2085 = vrot.slane %v1804, 4
  %v2086 = vsel %vm293, %v2081, %v2085
  %v2087 = vrot.slane %v1805, 4
  %v2088 = vsel %vm293, %v2083, %v2087
  %v2089 = vrot.slane %v1806, 4
  %v2090 = vsel %vm293, %v2085, %v2089
  %v2091 = vrot.slane %v1807, 4
  %v2092 = vsel %vm293, %v2087, %v2091
  %v2093 = vrot.slane %v1808, 4
  %v2094 = vsel %vm293, %v2089, %v2093
  %v2095 = vrot.slane %v1809, 4
  %v2096 = vsel %vm293, %v2091, %v2095
  %v2097 = vrot.slane %v1810, 4
  %v2098 = vsel %vm293, %v2093, %v2097
  %v2099 = vrot.slane %v1811, 4
  %v2100 = vsel %vm293, %v2095, %v2099
  %v2101 = vrot.slane %v1812, 4
  %v2102 = vsel %vm293, %v2097, %v2101
  %v2103 = vrot.slane %v1813, 4
  %v2104 = vsel %vm293, %v2099, %v2103
  %v2105 = vrot.slane %v1814, 4
  %v2106 = vsel %vm293, %v2101, %v2105
  %v2107 = vrot.slane %v1815, 4
  %v2108 = vsel %vm293, %v2103, %v2107
  %v2109 = vrot.slane %v1816, 4
  %v2110 = vsel %vm293, %v2105, %v2109
  %v2111 = vrot.slane %v1817, 4
  %v2112 = vsel %vm293, %v2107, %v2111
  %v2113 = vrot.slane %v1818, 4
  %v2114 = vsel %vm293, %v2109, %v2113
  %v2115 = vrot.slane %v1819, 4
  %v2116 = vsel %vm293, %v2111, %v2115
  %v2117 = vrot.slane %v1820, 4
  %v2118 = vsel %vm293, %v2113, %v2117
  %v2119 = vrot.slane %v1821, 4
  %v2120 = vsel %vm293, %v2115, %v2119
  %v2121 = vrot.slane %v1822, 4
  %v2122 = vsel %vm293, %v2117, %v2121
  %v2123 = vrot.slane %v1823, 4
  %v2124 = vsel %vm293, %v2119, %v2123
  %v2125 = vrot.slane %v1824, 4
  %v2126 = vsel %vm293, %v2121, %v2125
  %v2127 = vrot.slane %v1825, 4
  %v2128 = vsel %vm293, %v2123, %v2127
  %v2129 = vrot.slane %v1826, 4
  %v2130 = vsel %vm293, %v2125, %v2129
  %v2131 = vrot.slane %v1827, 4
  %v2132 = vsel %vm293, %v2127, %v2131
  %v2133 = vrot.slane %v1828, 4
  %v2134 = vsel %vm293, %v2129, %v2133
  %v2135 = vrot.slane %v1829, 4
  %v2136 = vsel %vm293, %v2131, %v2135
  %v2137 = vrot.slane %v1830, 4
  %v2138 = vsel %vm293, %v2133, %v2137
  %v2139 = vrot.slane %v1831, 4
  %v2140 = vsel %vm293, %v2135, %v2139
  %v2141 = vrot.slane %v1832, 4
  %v2142 = vsel %vm293, %v2137, %v2141
  %v2143 = vrot.slane %v1833, 4
  %v2144 = vsel %vm293, %v2139, %v2143
  %v2145 = vrot.slane %v1834, 4
  %v2146 = vsel %vm293, %v2141, %v2145
  %v2147 = vrot.slane %v1835, 4
  %v2148 = vsel %vm293, %v2143, %v2147
  %v2149 = vrot.slane %v1836, 4
  %v2150 = vsel %vm293, %v2145, %v2149
  %v2151 = vrot.slane %v1837, 4
  %v2152 = vsel %vm293, %v2147, %v2151
  %v2153 = vrot.slane %v1838, 4
  %v2154 = vsel %vm293, %v2149, %v2153
  %v2155 = vrot.slane %v1839, 4
  %v2156 = vsel %vm293, %v2151, %v2155
  %v2157 = vrot.slane %v1840, 4
  %v2158 = vsel %vm293, %v2153, %v2157
  %v2159 = vrot.slane %v1841, 4
  %v2160 = vsel %vm293, %v2155, %v2159
  %v2161 = vrot.slane %v1842, 4
  %v2162 = vsel %vm293, %v2157, %v2161
  %v2163 = vrot.slane %v1843, 4
  %v2164 = vsel %vm293, %v2159, %v2163
  %v2165 = vrot.slane %v1844, 4
  %v2166 = vsel %vm293, %v2161, %v2165
  %v2167 = vrot.slane %v1845, 4
  %v2168 = vsel %vm293, %v2163, %v2167
  %v2169 = vrot.slane %v1846, 4
  %v2170 = vsel %vm293, %v2165, %v2169
  %v2171 = vrot.slane %v1847, 4
  %v2172 = vsel %vm293, %v2167, %v2171
  %v2173 = vrot.slane %v1848, 4
  %v2174 = vsel %vm293, %v2169, %v2173
  %v2175 = vrot.slane %v1849, 4
  %v2176 = vsel %vm293, %v2171, %v2175
  %v2177 = vrot.slane %v1850, 4
  %v2178 = vsel %vm293, %v2173, %v2177
  %v2179 = vrot.slane %v1851, 4
  %v2180 = vsel %vm293, %v2175, %v2179
  %v2181 = vrot.slane %v1852, 4
  %v2182 = vsel %vm293, %v2177, %v2181
  %v2183 = vrot.slane %v1853, 4
  %v2184 = vsel %vm293, %v2179, %v2183
  %2283 = vmatpush.msra.mxu0 %v1870
  %2284 = vmatpush.msra.mxu0 %v1869
  %2285 = vmatpush.msra.mxu0 %v1868
  %2286 = vmatpush.msra.mxu0 %v1867
  %2287 = vmatpush.msra.mxu0 %v1866
  %2288 = vmatpush.msra.mxu0 %v1865
  %2289 = vmatpush.msra.mxu0 %v1864
  %2290 = vmatpush.msra.mxu0 %v1863
  %2291 = vmatpush.msra.mxu0 %v1862
  %2292 = vmatpush.msra.mxu0 %v1861
  %2293 = vmatpush.msra.mxu0 %v1860
  %2294 = vmatpush.msra.mxu0 %v1859
  %2295 = vmatpush.msra.mxu0 %v1858
  %2296 = vmatpush.msra.mxu0 %v1857
  %2297 = vmatpush.msra.mxu0 %v1856
  %2298 = vmatpush.msra.mxu0 %v1855
  %2299 = vmatmul.f32.gmra.mxu0 %v1989
  %v2300 = vpop.f32.mrf.mxu0
  %v2301 = vadd.f32 0.0, %v2300
  %2302 = vmatmul.f32.gmra.mxu0 %v1994
  %v2303 = vpop.f32.mrf.mxu0
  %v2304 = vadd.f32 0.0, %v2303
  %2305 = vmatmul.f32.gmra.mxu0 %v1998
  %v2306 = vpop.f32.mrf.mxu0
  %v2307 = vadd.f32 0.0, %v2306
  %2308 = vmatmul.f32.gmra.mxu0 %v2002
  %v2309 = vpop.f32.mrf.mxu0
  %v2310 = vadd.f32 0.0, %v2309
  %2311 = vmatmul.f32.gmra.mxu0 %v2006
  %v2312 = vpop.f32.mrf.mxu0
  %v2313 = vadd.f32 0.0, %v2312
  %2314 = vmatmul.f32.gmra.mxu0 %v2010
  %v2315 = vpop.f32.mrf.mxu0
  %v2316 = vadd.f32 0.0, %v2315
  %2317 = vmatmul.f32.gmra.mxu0 %v2014
  %v2318 = vpop.f32.mrf.mxu0
  %v2319 = vadd.f32 0.0, %v2318
  %2320 = vmatmul.f32.gmra.mxu0 %v2018
  %v2321 = vpop.f32.mrf.mxu0
  %v2322 = vadd.f32 0.0, %v2321
  %2323 = vmatmul.f32.gmra.mxu0 %v2022
  %v2324 = vpop.f32.mrf.mxu0
  %v2325 = vadd.f32 0.0, %v2324
  %2326 = vmatmul.f32.gmra.mxu0 %v2026
  %v2327 = vpop.f32.mrf.mxu0
  %v2328 = vadd.f32 0.0, %v2327
  %2329 = vmatmul.f32.gmra.mxu0 %v2030
  %v2330 = vpop.f32.mrf.mxu0
  %v2331 = vadd.f32 0.0, %v2330
  %2332 = vmatmul.f32.gmra.mxu0 %v2034
  %v2333 = vpop.f32.mrf.mxu0
  %v2334 = vadd.f32 0.0, %v2333
  %2335 = vmatmul.f32.gmra.mxu0 %v2038
  %v2336 = vpop.f32.mrf.mxu0
  %v2337 = vadd.f32 0.0, %v2336
  %2338 = vmatmul.f32.gmra.mxu0 %v2042
  %v2339 = vpop.f32.mrf.mxu0
  %v2340 = vadd.f32 0.0, %v2339
  %2341 = vmatmul.f32.gmra.mxu0 %v2046
  %v2342 = vpop.f32.mrf.mxu0
  %v2343 = vadd.f32 0.0, %v2342
  %2344 = vmatmul.f32.gmra.mxu0 %v2050
  %v2345 = vpop.f32.mrf.mxu0
  %v2346 = vadd.f32 0.0, %v2345
  %2347 = vmatmul.f32.gmra.mxu0 %v2054
  %v2348 = vpop.f32.mrf.mxu0
  %v2349 = vadd.f32 0.0, %v2348
  %2350 = vmatmul.f32.gmra.mxu0 %v2058
  %v2351 = vpop.f32.mrf.mxu0
  %v2352 = vadd.f32 0.0, %v2351
  %2353 = vmatmul.f32.gmra.mxu0 %v2062
  %v2354 = vpop.f32.mrf.mxu0
  %v2355 = vadd.f32 0.0, %v2354
  %2356 = vmatmul.f32.gmra.mxu0 %v2066
  %v2357 = vpop.f32.mrf.mxu0
  %v2358 = vadd.f32 0.0, %v2357
  %2359 = vmatmul.f32.gmra.mxu0 %v2070
  %v2360 = vpop.f32.mrf.mxu0
  %v2361 = vadd.f32 0.0, %v2360
  %2362 = vmatmul.f32.gmra.mxu0 %v2074
  %v2363 = vpop.f32.mrf.mxu0
  %v2364 = vadd.f32 0.0, %v2363
  %2365 = vmatmul.f32.gmra.mxu0 %v2078
  %v2366 = vpop.f32.mrf.mxu0
  %v2367 = vadd.f32 0.0, %v2366
  %2368 = vmatmul.f32.gmra.mxu0 %v2082
  %v2369 = vpop.f32.mrf.mxu0
  %v2370 = vadd.f32 0.0, %v2369
  %2371 = vmatmul.f32.gmra.mxu0 %v2086
  %v2372 = vpop.f32.mrf.mxu0
  %v2373 = vadd.f32 0.0, %v2372
  %2374 = vmatmul.f32.gmra.mxu0 %v2090
  %v2375 = vpop.f32.mrf.mxu0
  %v2376 = vadd.f32 0.0, %v2375
  %2377 = vmatmul.f32.gmra.mxu0 %v2094
  %v2378 = vpop.f32.mrf.mxu0
  %v2379 = vadd.f32 0.0, %v2378
  %2380 = vmatmul.f32.gmra.mxu0 %v2098
  %v2381 = vpop.f32.mrf.mxu0
  %v2382 = vadd.f32 0.0, %v2381
  %2383 = vmatmul.f32.gmra.mxu0 %v2102
  %v2384 = vpop.f32.mrf.mxu0
  %v2385 = vadd.f32 0.0, %v2384
  %2386 = vmatmul.f32.gmra.mxu0 %v2106
  %v2387 = vpop.f32.mrf.mxu0
  %v2388 = vadd.f32 0.0, %v2387
  %2389 = vmatmul.f32.gmra.mxu0 %v2110
  %v2390 = vpop.f32.mrf.mxu0
  %v2391 = vadd.f32 0.0, %v2390
  %2392 = vmatmul.f32.gmra.mxu0 %v2114
  %v2393 = vpop.f32.mrf.mxu0
  %v2394 = vadd.f32 0.0, %v2393
  %2395 = vmatmul.f32.gmra.mxu0 %v2118
  %v2396 = vpop.f32.mrf.mxu0
  %v2397 = vadd.f32 0.0, %v2396
  %2398 = vmatmul.f32.gmra.mxu0 %v2122
  %v2399 = vpop.f32.mrf.mxu0
  %v2400 = vadd.f32 0.0, %v2399
  %2401 = vmatmul.f32.gmra.mxu0 %v2126
  %v2402 = vpop.f32.mrf.mxu0
  %v2403 = vadd.f32 0.0, %v2402
  %2404 = vmatmul.f32.gmra.mxu0 %v2130
  %v2405 = vpop.f32.mrf.mxu0
  %v2406 = vadd.f32 0.0, %v2405
  %2407 = vmatmul.f32.gmra.mxu0 %v2134
  %v2408 = vpop.f32.mrf.mxu0
  %v2409 = vadd.f32 0.0, %v2408
  %2410 = vmatmul.f32.gmra.mxu0 %v2138
  %v2411 = vpop.f32.mrf.mxu0
  %v2412 = vadd.f32 0.0, %v2411
  %2413 = vmatmul.f32.gmra.mxu0 %v2142
  %v2414 = vpop.f32.mrf.mxu0
  %v2415 = vadd.f32 0.0, %v2414
  %2416 = vmatmul.f32.gmra.mxu0 %v2146
  %v2417 = vpop.f32.mrf.mxu0
  %v2418 = vadd.f32 0.0, %v2417
  %2419 = vmatmul.f32.gmra.mxu0 %v2150
  %v2420 = vpop.f32.mrf.mxu0
  %v2421 = vadd.f32 0.0, %v2420
  %2422 = vmatmul.f32.gmra.mxu0 %v2154
  %v2423 = vpop.f32.mrf.mxu0
  %v2424 = vadd.f32 0.0, %v2423
  %2425 = vmatmul.f32.gmra.mxu0 %v2158
  %v2426 = vpop.f32.mrf.mxu0
  %v2427 = vadd.f32 0.0, %v2426
  %2428 = vmatmul.f32.gmra.mxu0 %v2162
  %v2429 = vpop.f32.mrf.mxu0
  %v2430 = vadd.f32 0.0, %v2429
  %2431 = vmatmul.f32.gmra.mxu0 %v2166
  %v2432 = vpop.f32.mrf.mxu0
  %v2433 = vadd.f32 0.0, %v2432
  %2434 = vmatmul.f32.gmra.mxu0 %v2170
  %v2435 = vpop.f32.mrf.mxu0
  %v2436 = vadd.f32 0.0, %v2435
  %2437 = vmatmul.f32.gmra.mxu0 %v2174
  %v2438 = vpop.f32.mrf.mxu0
  %v2439 = vadd.f32 0.0, %v2438
  %2440 = vmatmul.f32.gmra.mxu0 %v2178
  %v2441 = vpop.f32.mrf.mxu0
  %v2442 = vadd.f32 0.0, %v2441
  %2443 = vmatmul.f32.gmra.mxu0 %v2182
  %v2444 = vpop.f32.mrf.mxu0
  %v2445 = vadd.f32 0.0, %v2444
  %2446 = vdwg.mxu0
  %2447 = vmatpush.msra.mxu0 %v1886
  %2448 = vmatpush.msra.mxu0 %v1885
  %2449 = vmatpush.msra.mxu0 %v1884
  %2450 = vmatpush.msra.mxu0 %v1883
  %2451 = vmatpush.msra.mxu0 %v1882
  %2452 = vmatpush.msra.mxu0 %v1881
  %2453 = vmatpush.msra.mxu0 %v1880
  %2454 = vmatpush.msra.mxu0 %v1879
  %2455 = vmatpush.msra.mxu0 %v1878
  %2456 = vmatpush.msra.mxu0 %v1877
  %2457 = vmatpush.msra.mxu0 %v1876
  %2458 = vmatpush.msra.mxu0 %v1875
  %2459 = vmatpush.msra.mxu0 %v1874
  %2460 = vmatpush.msra.mxu0 %v1873
  %2461 = vmatpush.msra.mxu0 %v1872
  %2462 = vmatpush.msra.mxu0 %v1871
  %2463 = vmatmul.f32.gmra.mxu0 %v1992
  %v2464 = vpop.f32.mrf.mxu0
  %v2465 = vadd.f32 %v2301, %v2464
  %2466 = vmatmul.f32.gmra.mxu0 %v1996
  %v2467 = vpop.f32.mrf.mxu0
  %v2468 = vadd.f32 %v2304, %v2467
  %2469 = vmatmul.f32.gmra.mxu0 %v2000
  %v2470 = vpop.f32.mrf.mxu0
  %v2471 = vadd.f32 %v2307, %v2470
  %2472 = vmatmul.f32.gmra.mxu0 %v2004
  %v2473 = vpop.f32.mrf.mxu0
  %v2474 = vadd.f32 %v2310, %v2473
  %2475 = vmatmul.f32.gmra.mxu0 %v2008
  %v2476 = vpop.f32.mrf.mxu0
  %v2477 = vadd.f32 %v2313, %v2476
  %2478 = vmatmul.f32.gmra.mxu0 %v2012
  %v2479 = vpop.f32.mrf.mxu0
  %v2480 = vadd.f32 %v2316, %v2479
  %2481 = vmatmul.f32.gmra.mxu0 %v2016
  %v2482 = vpop.f32.mrf.mxu0
  %v2483 = vadd.f32 %v2319, %v2482
  %2484 = vmatmul.f32.gmra.mxu0 %v2020
  %v2485 = vpop.f32.mrf.mxu0
  %v2486 = vadd.f32 %v2322, %v2485
  %2487 = vmatmul.f32.gmra.mxu0 %v2024
  %v2488 = vpop.f32.mrf.mxu0
  %v2489 = vadd.f32 %v2325, %v2488
  %2490 = vmatmul.f32.gmra.mxu0 %v2028
  %v2491 = vpop.f32.mrf.mxu0
  %v2492 = vadd.f32 %v2328, %v2491
  %2493 = vmatmul.f32.gmra.mxu0 %v2032
  %v2494 = vpop.f32.mrf.mxu0
  %v2495 = vadd.f32 %v2331, %v2494
  %2496 = vmatmul.f32.gmra.mxu0 %v2036
  %v2497 = vpop.f32.mrf.mxu0
  %v2498 = vadd.f32 %v2334, %v2497
  %2499 = vmatmul.f32.gmra.mxu0 %v2040
  %v2500 = vpop.f32.mrf.mxu0
  %v2501 = vadd.f32 %v2337, %v2500
  %2502 = vmatmul.f32.gmra.mxu0 %v2044
  %v2503 = vpop.f32.mrf.mxu0
  %v2504 = vadd.f32 %v2340, %v2503
  %2505 = vmatmul.f32.gmra.mxu0 %v2048
  %v2506 = vpop.f32.mrf.mxu0
  %v2507 = vadd.f32 %v2343, %v2506
  %2508 = vmatmul.f32.gmra.mxu0 %v2052
  %v2509 = vpop.f32.mrf.mxu0
  %v2510 = vadd.f32 %v2346, %v2509
  %2511 = vmatmul.f32.gmra.mxu0 %v2056
  %v2512 = vpop.f32.mrf.mxu0
  %v2513 = vadd.f32 %v2349, %v2512
  %2514 = vmatmul.f32.gmra.mxu0 %v2060
  %v2515 = vpop.f32.mrf.mxu0
  %v2516 = vadd.f32 %v2352, %v2515
  %2517 = vmatmul.f32.gmra.mxu0 %v2064
  %v2518 = vpop.f32.mrf.mxu0
  %v2519 = vadd.f32 %v2355, %v2518
  %2520 = vmatmul.f32.gmra.mxu0 %v2068
  %v2521 = vpop.f32.mrf.mxu0
  %v2522 = vadd.f32 %v2358, %v2521
  %2523 = vmatmul.f32.gmra.mxu0 %v2072
  %v2524 = vpop.f32.mrf.mxu0
  %v2525 = vadd.f32 %v2361, %v2524
  %2526 = vmatmul.f32.gmra.mxu0 %v2076
  %v2527 = vpop.f32.mrf.mxu0
  %v2528 = vadd.f32 %v2364, %v2527
  %2529 = vmatmul.f32.gmra.mxu0 %v2080
  %v2530 = vpop.f32.mrf.mxu0
  %v2531 = vadd.f32 %v2367, %v2530
  %2532 = vmatmul.f32.gmra.mxu0 %v2084
  %v2533 = vpop.f32.mrf.mxu0
  %v2534 = vadd.f32 %v2370, %v2533
  %2535 = vmatmul.f32.gmra.mxu0 %v2088
  %v2536 = vpop.f32.mrf.mxu0
  %v2537 = vadd.f32 %v2373, %v2536
  %2538 = vmatmul.f32.gmra.mxu0 %v2092
  %v2539 = vpop.f32.mrf.mxu0
  %v2540 = vadd.f32 %v2376, %v2539
  %2541 = vmatmul.f32.gmra.mxu0 %v2096
  %v2542 = vpop.f32.mrf.mxu0
  %v2543 = vadd.f32 %v2379, %v2542
  %2544 = vmatmul.f32.gmra.mxu0 %v2100
  %v2545 = vpop.f32.mrf.mxu0
  %v2546 = vadd.f32 %v2382, %v2545
  %2547 = vmatmul.f32.gmra.mxu0 %v2104
  %v2548 = vpop.f32.mrf.mxu0
  %v2549 = vadd.f32 %v2385, %v2548
  %2550 = vmatmul.f32.gmra.mxu0 %v2108
  %v2551 = vpop.f32.mrf.mxu0
  %v2552 = vadd.f32 %v2388, %v2551
  %2553 = vmatmul.f32.gmra.mxu0 %v2112
  %v2554 = vpop.f32.mrf.mxu0
  %v2555 = vadd.f32 %v2391, %v2554
  %2556 = vmatmul.f32.gmra.mxu0 %v2116
  %v2557 = vpop.f32.mrf.mxu0
  %v2558 = vadd.f32 %v2394, %v2557
  %2559 = vmatmul.f32.gmra.mxu0 %v2120
  %v2560 = vpop.f32.mrf.mxu0
  %v2561 = vadd.f32 %v2397, %v2560
  %2562 = vmatmul.f32.gmra.mxu0 %v2124
  %v2563 = vpop.f32.mrf.mxu0
  %v2564 = vadd.f32 %v2400, %v2563
  %2565 = vmatmul.f32.gmra.mxu0 %v2128
  %v2566 = vpop.f32.mrf.mxu0
  %v2567 = vadd.f32 %v2403, %v2566
  %2568 = vmatmul.f32.gmra.mxu0 %v2132
  %v2569 = vpop.f32.mrf.mxu0
  %v2570 = vadd.f32 %v2406, %v2569
  %2571 = vmatmul.f32.gmra.mxu0 %v2136
  %v2572 = vpop.f32.mrf.mxu0
  %v2573 = vadd.f32 %v2409, %v2572
  %2574 = vmatmul.f32.gmra.mxu0 %v2140
  %v2575 = vpop.f32.mrf.mxu0
  %v2576 = vadd.f32 %v2412, %v2575
  %2577 = vmatmul.f32.gmra.mxu0 %v2144
  %v2578 = vpop.f32.mrf.mxu0
  %v2579 = vadd.f32 %v2415, %v2578
  %2580 = vmatmul.f32.gmra.mxu0 %v2148
  %v2581 = vpop.f32.mrf.mxu0
  %v2582 = vadd.f32 %v2418, %v2581
  %2583 = vmatmul.f32.gmra.mxu0 %v2152
  %v2584 = vpop.f32.mrf.mxu0
  %v2585 = vadd.f32 %v2421, %v2584
  %2586 = vmatmul.f32.gmra.mxu0 %v2156
  %v2587 = vpop.f32.mrf.mxu0
  %v2588 = vadd.f32 %v2424, %v2587
  %2589 = vmatmul.f32.gmra.mxu0 %v2160
  %v2590 = vpop.f32.mrf.mxu0
  %v2591 = vadd.f32 %v2427, %v2590
  %2592 = vmatmul.f32.gmra.mxu0 %v2164
  %v2593 = vpop.f32.mrf.mxu0
  %v2594 = vadd.f32 %v2430, %v2593
  %2595 = vmatmul.f32.gmra.mxu0 %v2168
  %v2596 = vpop.f32.mrf.mxu0
  %v2597 = vadd.f32 %v2433, %v2596
  %2598 = vmatmul.f32.gmra.mxu0 %v2172
  %v2599 = vpop.f32.mrf.mxu0
  %v2600 = vadd.f32 %v2436, %v2599
  %2601 = vmatmul.f32.gmra.mxu0 %v2176
  %v2602 = vpop.f32.mrf.mxu0
  %v2603 = vadd.f32 %v2439, %v2602
  %2604 = vmatmul.f32.gmra.mxu0 %v2180
  %v2605 = vpop.f32.mrf.mxu0
  %v2606 = vadd.f32 %v2442, %v2605
  %2607 = vmatmul.f32.gmra.mxu0 %v2184
  %v2608 = vpop.f32.mrf.mxu0
  %v2609 = vadd.f32 %v2445, %v2608
  %2610 = vdwg.mxu0
  %v2611 = vadd.f32 %v1705, %v2465
  %v2612 = vadd.f32 %v1706, %v2468
  %v2613 = vadd.f32 %v1707, %v2471
  %v2614 = vadd.f32 %v1708, %v2474
  %v2615 = vadd.f32 %v1709, %v2477
  %v2616 = vadd.f32 %v1710, %v2480
  %v2617 = vadd.f32 %v1711, %v2483
  %v2618 = vadd.f32 %v1712, %v2486
  %v2619 = vadd.f32 %v1713, %v2489
  %v2620 = vadd.f32 %v1714, %v2492
  %v2621 = vadd.f32 %v1715, %v2495
  %v2622 = vadd.f32 %v1716, %v2498
  %v2623 = vadd.f32 %v1717, %v2501
  %v2624 = vadd.f32 %v1718, %v2504
  %v2625 = vadd.f32 %v1719, %v2507
  %v2626 = vadd.f32 %v1720, %v2510
  %v2627 = vadd.f32 %v1721, %v2513
  %v2628 = vadd.f32 %v1722, %v2516
  %v2629 = vadd.f32 %v1723, %v2519
  %v2630 = vadd.f32 %v1724, %v2522
  %v2631 = vadd.f32 %v1725, %v2525
  %v2632 = vadd.f32 %v1726, %v2528
  %v2633 = vadd.f32 %v1727, %v2531
  %v2634 = vadd.f32 %v1728, %v2534
  %v2635 = vadd.f32 %v1729, %v2537
  %v2636 = vadd.f32 %v1730, %v2540
  %v2637 = vadd.f32 %v1731, %v2543
  %v2638 = vadd.f32 %v1732, %v2546
  %v2639 = vadd.f32 %v1733, %v2549
  %v2640 = vadd.f32 %v1734, %v2552
  %v2641 = vadd.f32 %v1735, %v2555
  %v2642 = vadd.f32 %v1736, %v2558
  %v2643 = vadd.f32 %v1737, %v2561
  %v2644 = vadd.f32 %v1738, %v2564
  %v2645 = vadd.f32 %v1739, %v2567
  %v2646 = vadd.f32 %v1740, %v2570
  %v2647 = vadd.f32 %v1741, %v2573
  %v2648 = vadd.f32 %v1742, %v2576
  %v2649 = vadd.f32 %v1743, %v2579
  %v2650 = vadd.f32 %v1744, %v2582
  %v2651 = vadd.f32 %v1745, %v2585
  %v2652 = vadd.f32 %v1746, %v2588
  %v2653 = vadd.f32 %v1747, %v2591
  %v2654 = vadd.f32 %v1748, %v2594
  %v2655 = vadd.f32 %v1749, %v2597
  %v2656 = vadd.f32 %v1750, %v2600
  %v2657 = vadd.f32 %v1751, %v2603
  %v2658 = vadd.f32 %v1752, %v2606
  %v2659 = vadd.f32 %v1753, %v2609
  %v2660 = vld [vmem:[%s2] sm:$0x1]
  %v2662 = vperm.slane %v2660, 0
  %v2664 = vadd.f32 %v2611, %v2662
  %v2665 = vadd.f32 %v2612, %v2662
  %v2666 = vadd.f32 %v2613, %v2662
  %v2667 = vadd.f32 %v2614, %v2662
  %v2668 = vadd.f32 %v2615, %v2662
  %v2669 = vadd.f32 %v2616, %v2662
  %v2670 = vadd.f32 %v2617, %v2662
  %v2671 = vadd.f32 %v2618, %v2662
  %v2672 = vadd.f32 %v2619, %v2662
  %v2673 = vadd.f32 %v2620, %v2662
  %v2674 = vadd.f32 %v2621, %v2662
  %v2675 = vadd.f32 %v2622, %v2662
  %v2676 = vadd.f32 %v2623, %v2662
  %v2677 = vadd.f32 %v2624, %v2662
  %v2678 = vadd.f32 %v2625, %v2662
  %v2679 = vadd.f32 %v2626, %v2662
  %v2680 = vadd.f32 %v2627, %v2662
  %v2681 = vadd.f32 %v2628, %v2662
  %v2682 = vadd.f32 %v2629, %v2662
  %v2683 = vadd.f32 %v2630, %v2662
  %v2684 = vadd.f32 %v2631, %v2662
  %v2685 = vadd.f32 %v2632, %v2662
  %v2686 = vadd.f32 %v2633, %v2662
  %v2687 = vadd.f32 %v2634, %v2662
  %v2688 = vadd.f32 %v2635, %v2662
  %v2689 = vadd.f32 %v2636, %v2662
  %v2690 = vadd.f32 %v2637, %v2662
  %v2691 = vadd.f32 %v2638, %v2662
  %v2692 = vadd.f32 %v2639, %v2662
  %v2693 = vadd.f32 %v2640, %v2662
  %v2694 = vadd.f32 %v2641, %v2662
  %v2695 = vadd.f32 %v2642, %v2662
  %v2696 = vadd.f32 %v2643, %v2662
  %v2697 = vadd.f32 %v2644, %v2662
  %v2698 = vadd.f32 %v2645, %v2662
  %v2699 = vadd.f32 %v2646, %v2662
  %v2700 = vadd.f32 %v2647, %v2662
  %v2701 = vadd.f32 %v2648, %v2662
  %v2702 = vadd.f32 %v2649, %v2662
  %v2703 = vadd.f32 %v2650, %v2662
  %v2704 = vadd.f32 %v2651, %v2662
  %v2705 = vadd.f32 %v2652, %v2662
  %v2706 = vadd.f32 %v2653, %v2662
  %v2707 = vadd.f32 %v2654, %v2662
  %v2708 = vadd.f32 %v2655, %v2662
  %v2709 = vadd.f32 %v2656, %v2662
  %v2710 = vadd.f32 %v2657, %v2662
  %v2711 = vadd.f32 %v2658, %v2662
  %v2712 = vadd.f32 %v2659, %v2662
  %v2713 = vmax.f32 %v2664, 0.0
  %v2714 = vmax.f32 %v2665, 0.0
  %v2715 = vmax.f32 %v2666, 0.0
  %v2716 = vmax.f32 %v2667, 0.0
  %v2717 = vmax.f32 %v2668, 0.0
  %v2718 = vmax.f32 %v2669, 0.0
  %v2719 = vmax.f32 %v2670, 0.0
  %v2720 = vmax.f32 %v2671, 0.0
  %v2721 = vmax.f32 %v2672, 0.0
  %v2722 = vmax.f32 %v2673, 0.0
  %v2723 = vmax.f32 %v2674, 0.0
  %v2724 = vmax.f32 %v2675, 0.0
  %v2725 = vmax.f32 %v2676, 0.0
  %v2726 = vmax.f32 %v2677, 0.0
  %v2727 = vmax.f32 %v2678, 0.0
  %v2728 = vmax.f32 %v2679, 0.0
  %v2729 = vmax.f32 %v2680, 0.0
  %v2730 = vmax.f32 %v2681, 0.0
  %v2731 = vmax.f32 %v2682, 0.0
  %v2732 = vmax.f32 %v2683, 0.0
  %v2733 = vmax.f32 %v2684, 0.0
  %v2734 = vmax.f32 %v2685, 0.0
  %v2735 = vmax.f32 %v2686, 0.0
  %v2736 = vmax.f32 %v2687, 0.0
  %v2737 = vmax.f32 %v2688, 0.0
  %v2738 = vmax.f32 %v2689, 0.0
  %v2739 = vmax.f32 %v2690, 0.0
  %v2740 = vmax.f32 %v2691, 0.0
  %v2741 = vmax.f32 %v2692, 0.0
  %v2742 = vmax.f32 %v2693, 0.0
  %v2743 = vmax.f32 %v2694, 0.0
  %v2744 = vmax.f32 %v2695, 0.0
  %v2745 = vmax.f32 %v2696, 0.0
  %v2746 = vmax.f32 %v2697, 0.0
  %v2747 = vmax.f32 %v2698, 0.0
  %v2748 = vmax.f32 %v2699, 0.0
  %v2749 = vmax.f32 %v2700, 0.0
  %v2750 = vmax.f32 %v2701, 0.0
  %v2751 = vmax.f32 %v2702, 0.0
  %v2752 = vmax.f32 %v2703, 0.0
  %v2753 = vmax.f32 %v2704, 0.0
  %v2754 = vmax.f32 %v2705, 0.0
  %v2755 = vmax.f32 %v2706, 0.0
  %v2756 = vmax.f32 %v2707, 0.0
  %v2757 = vmax.f32 %v2708, 0.0
  %v2758 = vmax.f32 %v2709, 0.0
  %v2759 = vmax.f32 %v2710, 0.0
  %v2760 = vmax.f32 %v2711, 0.0
  %v2761 = vmax.f32 %v2712, 0.0
  %vm2762 = vcmask 261120
  %v2763 = vsel %vm2762, %v2713, 0.0
  %v2764 = vsel %vm2762, %v2714, 0.0
  %v2765 = vadd.f32 %v2763, %v2764
  %v2766 = vsel %vm2762, %v2715, 0.0
  %v2767 = vadd.f32 %v2765, %v2766
  %v2768 = vsel %vm2762, %v2716, 0.0
  %v2769 = vadd.f32 %v2767, %v2768
  %v2770 = vsel %vm2762, %v2717, 0.0
  %v2771 = vadd.f32 %v2769, %v2770
  %v2772 = vsel %vm2762, %v2718, 0.0
  %v2773 = vadd.f32 %v2771, %v2772
  %v2774 = vsel %vm2762, %v2719, 0.0
  %v2775 = vadd.f32 %v2773, %v2774
  %v2776 = vsel %vm2762, %v2720, 0.0
  %v2777 = vadd.f32 %v2775, %v2776
  %v2778 = vsel %vm2762, %v2721, 0.0
  %v2779 = vadd.f32 %v2777, %v2778
  %v2780 = vsel %vm2762, %v2722, 0.0
  %v2781 = vadd.f32 %v2779, %v2780
  %v2782 = vsel %vm2762, %v2723, 0.0
  %v2783 = vadd.f32 %v2781, %v2782
  %v2784 = vsel %vm2762, %v2724, 0.0
  %v2785 = vadd.f32 %v2783, %v2784
  %v2786 = vsel %vm2762, %v2725, 0.0
  %v2787 = vadd.f32 %v2785, %v2786
  %v2788 = vsel %vm2762, %v2726, 0.0
  %v2789 = vadd.f32 %v2787, %v2788
  %v2790 = vsel %vm2762, %v2727, 0.0
  %v2791 = vadd.f32 %v2789, %v2790
  %v2792 = vsel %vm2762, %v2728, 0.0
  %v2793 = vadd.f32 %v2791, %v2792
  %v2794 = vsel %vm2762, %v2729, 0.0
  %v2795 = vadd.f32 %v2793, %v2794
  %v2796 = vsel %vm2762, %v2730, 0.0
  %v2797 = vadd.f32 %v2795, %v2796
  %v2798 = vsel %vm2762, %v2731, 0.0
  %v2799 = vadd.f32 %v2797, %v2798
  %v2800 = vsel %vm2762, %v2732, 0.0
  %v2801 = vadd.f32 %v2799, %v2800
  %v2802 = vsel %vm2762, %v2733, 0.0
  %v2803 = vadd.f32 %v2801, %v2802
  %v2804 = vsel %vm2762, %v2734, 0.0
  %v2805 = vadd.f32 %v2803, %v2804
  %v2806 = vsel %vm2762, %v2735, 0.0
  %v2807 = vadd.f32 %v2805, %v2806
  %v2808 = vsel %vm2762, %v2736, 0.0
  %v2809 = vadd.f32 %v2807, %v2808
  %v2810 = vsel %vm2762, %v2737, 0.0
  %v2811 = vadd.f32 %v2809, %v2810
  %v2812 = vsel %vm2762, %v2738, 0.0
  %v2813 = vadd.f32 %v2811, %v2812
  %v2814 = vsel %vm2762, %v2739, 0.0
  %v2815 = vadd.f32 %v2813, %v2814
  %v2816 = vsel %vm2762, %v2740, 0.0
  %v2817 = vadd.f32 %v2815, %v2816
  %v2818 = vsel %vm2762, %v2741, 0.0
  %v2819 = vadd.f32 %v2817, %v2818
  %v2820 = vsel %vm2762, %v2742, 0.0
  %v2821 = vadd.f32 %v2819, %v2820
  %v2822 = vsel %vm2762, %v2743, 0.0
  %v2823 = vadd.f32 %v2821, %v2822
  %v2824 = vsel %vm2762, %v2744, 0.0
  %v2825 = vadd.f32 %v2823, %v2824
  %v2826 = vsel %vm2762, %v2745, 0.0
  %v2827 = vadd.f32 %v2825, %v2826
  %v2828 = vsel %vm2762, %v2746, 0.0
  %v2829 = vadd.f32 %v2827, %v2828
  %v2830 = vsel %vm2762, %v2747, 0.0
  %v2831 = vadd.f32 %v2829, %v2830
  %v2832 = vsel %vm2762, %v2748, 0.0
  %v2833 = vadd.f32 %v2831, %v2832
  %v2834 = vsel %vm2762, %v2749, 0.0
  %v2835 = vadd.f32 %v2833, %v2834
  %v2836 = vsel %vm2762, %v2750, 0.0
  %v2837 = vadd.f32 %v2835, %v2836
  %v2838 = vsel %vm2762, %v2751, 0.0
  %v2839 = vadd.f32 %v2837, %v2838
  %v2840 = vsel %vm2762, %v2752, 0.0
  %v2841 = vadd.f32 %v2839, %v2840
  %v2842 = vsel %vm2762, %v2753, 0.0
  %v2843 = vadd.f32 %v2841, %v2842
  %v2844 = vsel %vm2762, %v2754, 0.0
  %v2845 = vadd.f32 %v2843, %v2844
  %v2846 = vsel %vm2762, %v2755, 0.0
  %v2847 = vadd.f32 %v2845, %v2846
  %v2848 = vsel %vm2762, %v2756, 0.0
  %v2849 = vadd.f32 %v2847, %v2848
  %v2850 = vsel %vm2762, %v2757, 0.0
  %v2851 = vadd.f32 %v2849, %v2850
  %v2852 = vsel %vm2762, %v2758, 0.0
  %v2853 = vadd.f32 %v2851, %v2852
  %v2854 = vsel %vm2762, %v2759, 0.0
  %v2855 = vadd.f32 %v2853, %v2854
  %v2856 = vsel %vm2762, %v2760, 0.0
  %v2857 = vadd.f32 %v2855, %v2856
  %v2858 = vsel %vm2762, %v2761, 0.0
  %v2859 = vadd.f32 %v2857, %v2858
  %v2860 = vrot.slane %v2859, 4
  %v2861 = vadd.f32 %v2859, %v2860
  %v2862 = vrot.slane %v2861, 2
  %v2863 = vadd.f32 %v2861, %v2862
  %v2864 = vrot.slane %v2863, 1
  %v2865 = vadd.f32 %v2863, %v2864
  %v2866 = vrcp.pop 392.0
  %v2867 = vmul.f32 392.0, %v2866
  %v2868 = vsub.f32 1.0, %v2867
  %v2869 = vmul.f32 %v2866, %v2868
  %v2870 = vadd.f32 %v2866, %v2869
  %vm2871 = vweird.f32 %v2866
  %v2872 = vsel %vm2871, %v2866, %v2870
  %v2873 = vmul.f32 %v2865, %v2872
  %v2874 = vmul.f32 %v2713, %v2713
  %v2875 = vmul.f32 %v2714, %v2714
  %v2876 = vmul.f32 %v2715, %v2715
  %v2877 = vmul.f32 %v2716, %v2716
  %v2878 = vmul.f32 %v2717, %v2717
  %v2879 = vmul.f32 %v2718, %v2718
  %v2880 = vmul.f32 %v2719, %v2719
  %v2881 = vmul.f32 %v2720, %v2720
  %v2882 = vmul.f32 %v2721, %v2721
  %v2883 = vmul.f32 %v2722, %v2722
  %v2884 = vmul.f32 %v2723, %v2723
  %v2885 = vmul.f32 %v2724, %v2724
  %v2886 = vmul.f32 %v2725, %v2725
  %v2887 = vmul.f32 %v2726, %v2726
  %v2888 = vmul.f32 %v2727, %v2727
  %v2889 = vmul.f32 %v2728, %v2728
  %v2890 = vmul.f32 %v2729, %v2729
  %v2891 = vmul.f32 %v2730, %v2730
  %v2892 = vmul.f32 %v2731, %v2731
  %v2893 = vmul.f32 %v2732, %v2732
  %v2894 = vmul.f32 %v2733, %v2733
  %v2895 = vmul.f32 %v2734, %v2734
  %v2896 = vmul.f32 %v2735, %v2735
  %v2897 = vmul.f32 %v2736, %v2736
  %v2898 = vmul.f32 %v2737, %v2737
  %v2899 = vmul.f32 %v2738, %v2738
  %v2900 = vmul.f32 %v2739, %v2739
  %v2901 = vmul.f32 %v2740, %v2740
  %v2902 = vmul.f32 %v2741, %v2741
  %v2903 = vmul.f32 %v2742, %v2742
  %v2904 = vmul.f32 %v2743, %v2743
  %v2905 = vmul.f32 %v2744, %v2744
  %v2906 = vmul.f32 %v2745, %v2745
  %v2907 = vmul.f32 %v2746, %v2746
  %v2908 = vmul.f32 %v2747, %v2747
  %v2909 = vmul.f32 %v2748, %v2748
  %v2910 = vmul.f32 %v2749, %v2749
  %v2911 = vmul.f32 %v2750, %v2750
  %v2912 = vmul.f32 %v2751, %v2751
  %v2913 = vmul.f32 %v2752, %v2752
  %v2914 = vmul.f32 %v2753, %v2753
  %v2915 = vmul.f32 %v2754, %v2754
  %v2916 = vmul.f32 %v2755, %v2755
  %v2917 = vmul.f32 %v2756, %v2756
  %v2918 = vmul.f32 %v2757, %v2757
  %v2919 = vmul.f32 %v2758, %v2758
  %v2920 = vmul.f32 %v2759, %v2759
  %v2921 = vmul.f32 %v2760, %v2760
  %v2922 = vmul.f32 %v2761, %v2761
  %v2923 = vsel %vm2762, %v2874, 0.0
  %v2924 = vsel %vm2762, %v2875, 0.0
  %v2925 = vadd.f32 %v2923, %v2924
  %v2926 = vsel %vm2762, %v2876, 0.0
  %v2927 = vadd.f32 %v2925, %v2926
  %v2928 = vsel %vm2762, %v2877, 0.0
  %v2929 = vadd.f32 %v2927, %v2928
  %v2930 = vsel %vm2762, %v2878, 0.0
  %v2931 = vadd.f32 %v2929, %v2930
  %v2932 = vsel %vm2762, %v2879, 0.0
  %v2933 = vadd.f32 %v2931, %v2932
  %v2934 = vsel %vm2762, %v2880, 0.0
  %v2935 = vadd.f32 %v2933, %v2934
  %v2936 = vsel %vm2762, %v2881, 0.0
  %v2937 = vadd.f32 %v2935, %v2936
  %v2938 = vsel %vm2762, %v2882, 0.0
  %v2939 = vadd.f32 %v2937, %v2938
  %v2940 = vsel %vm2762, %v2883, 0.0
  %v2941 = vadd.f32 %v2939, %v2940
  %v2942 = vsel %vm2762, %v2884, 0.0
  %v2943 = vadd.f32 %v2941, %v2942
  %v2944 = vsel %vm2762, %v2885, 0.0
  %v2945 = vadd.f32 %v2943, %v2944
  %v2946 = vsel %vm2762, %v2886, 0.0
  %v2947 = vadd.f32 %v2945, %v2946
  %v2948 = vsel %vm2762, %v2887, 0.0
  %v2949 = vadd.f32 %v2947, %v2948
  %v2950 = vsel %vm2762, %v2888, 0.0
  %v2951 = vadd.f32 %v2949, %v2950
  %v2952 = vsel %vm2762, %v2889, 0.0
  %v2953 = vadd.f32 %v2951, %v2952
  %v2954 = vsel %vm2762, %v2890, 0.0
  %v2955 = vadd.f32 %v2953, %v2954
  %v2956 = vsel %vm2762, %v2891, 0.0
  %v2957 = vadd.f32 %v2955, %v2956
  %v2958 = vsel %vm2762, %v2892, 0.0
  %v2959 = vadd.f32 %v2957, %v2958
  %v2960 = vsel %vm2762, %v2893, 0.0
  %v2961 = vadd.f32 %v2959, %v2960
  %v2962 = vsel %vm2762, %v2894, 0.0
  %v2963 = vadd.f32 %v2961, %v2962
  %v2964 = vsel %vm2762, %v2895, 0.0
  %v2965 = vadd.f32 %v2963, %v2964
  %v2966 = vsel %vm2762, %v2896, 0.0
  %v2967 = vadd.f32 %v2965, %v2966
  %v2968 = vsel %vm2762, %v2897, 0.0
  %v2969 = vadd.f32 %v2967, %v2968
  %v2970 = vsel %vm2762, %v2898, 0.0
  %v2971 = vadd.f32 %v2969, %v2970
  %v2972 = vsel %vm2762, %v2899, 0.0
  %v2973 = vadd.f32 %v2971, %v2972
  %v2974 = vsel %vm2762, %v2900, 0.0
  %v2975 = vadd.f32 %v2973, %v2974
  %v2976 = vsel %vm2762, %v2901, 0.0
  %v2977 = vadd.f32 %v2975, %v2976
  %v2978 = vsel %vm2762, %v2902, 0.0
  %v2979 = vadd.f32 %v2977, %v2978
  %v2980 = vsel %vm2762, %v2903, 0.0
  %v2981 = vadd.f32 %v2979, %v2980
  %v2982 = vsel %vm2762, %v2904, 0.0
  %v2983 = vadd.f32 %v2981, %v2982
  %v2984 = vsel %vm2762, %v2905, 0.0
  %v2985 = vadd.f32 %v2983, %v2984
  %v2986 = vsel %vm2762, %v2906, 0.0
  %v2987 = vadd.f32 %v2985, %v2986
  %v2988 = vsel %vm2762, %v2907, 0.0
  %v2989 = vadd.f32 %v2987, %v2988
  %v2990 = vsel %vm2762, %v2908, 0.0
  %v2991 = vadd.f32 %v2989, %v2990
  %v2992 = vsel %vm2762, %v2909, 0.0
  %v2993 = vadd.f32 %v2991, %v2992
  %v2994 = vsel %vm2762, %v2910, 0.0
  %v2995 = vadd.f32 %v2993, %v2994
  %v2996 = vsel %vm2762, %v2911, 0.0
  %v2997 = vadd.f32 %v2995, %v2996
  %v2998 = vsel %vm2762, %v2912, 0.0
  %v2999 = vadd.f32 %v2997, %v2998
  %v3000 = vsel %vm2762, %v2913, 0.0
  %v3001 = vadd.f32 %v2999, %v3000
  %v3002 = vsel %vm2762, %v2914, 0.0
  %v3003 = vadd.f32 %v3001, %v3002
  %v3004 = vsel %vm2762, %v2915, 0.0
  %v3005 = vadd.f32 %v3003, %v3004
  %v3006 = vsel %vm2762, %v2916, 0.0
  %v3007 = vadd.f32 %v3005, %v3006
  %v3008 = vsel %vm2762, %v2917, 0.0
  %v3009 = vadd.f32 %v3007, %v3008
  %v3010 = vsel %vm2762, %v2918, 0.0
  %v3011 = vadd.f32 %v3009, %v3010
  %v3012 = vsel %vm2762, %v2919, 0.0
  %v3013 = vadd.f32 %v3011, %v3012
  %v3014 = vsel %vm2762, %v2920, 0.0
  %v3015 = vadd.f32 %v3013, %v3014
  %v3016 = vsel %vm2762, %v2921, 0.0
  %v3017 = vadd.f32 %v3015, %v3016
  %v3018 = vsel %vm2762, %v2922, 0.0
  %v3019 = vadd.f32 %v3017, %v3018
  %v3020 = vrot.slane %v3019, 4
  %v3021 = vadd.f32 %v3019, %v3020
  %v3022 = vrot.slane %v3021, 2
  %v3023 = vadd.f32 %v3021, %v3022
  %v3024 = vrot.slane %v3023, 1
  %v3025 = vadd.f32 %v3023, %v3024
  %v3026 = vmul.f32 %v3025, %v2872
  %v3027 = vmul.f32 %v2873, %v2873
  %v3028 = vsub.f32 %v3026, %v3027
  %v3029 = vadd.f32 %v3028, 1e-05
  %v3030 = vrsqrt.pop %v3029
  %v3031 = vmul.f32 %v3030, %v3029
  %v3032 = vmul.f32 %v3031, %v3030
  %v3033 = vmul.f32 0.5, %v3032
  %v3034 = vsub.f32 1.5, %v3033
  %v3035 = vmul.f32 %v3030, %v3034
  %vm3036 = vweird.f32 %v3029
  %vm3037 = vweird.f32 %v3030
  %vm3038 = vmor %vm3036, %vm3037
  %v3039 = vsel %vm3038, %v3030, %v3035
  %v3040 = vld [vmem:[%s3] sm:$0x1]
  %v3041 = vmul.f32 %v3039, %v3040
  %v3042 = vsub.f32 %v2713, %v2873
  %v3043 = vsub.f32 %v2714, %v2873
  %v3044 = vsub.f32 %v2715, %v2873
  %v3045 = vsub.f32 %v2716, %v2873
  %v3046 = vsub.f32 %v2717, %v2873
  %v3047 = vsub.f32 %v2718, %v2873
  %v3048 = vsub.f32 %v2719, %v2873
  %v3049 = vsub.f32 %v2720, %v2873
  %v3050 = vsub.f32 %v2721, %v2873
  %v3051 = vsub.f32 %v2722, %v2873
  %v3052 = vsub.f32 %v2723, %v2873
  %v3053 = vsub.f32 %v2724, %v2873
  %v3054 = vsub.f32 %v2725, %v2873
  %v3055 = vsub.f32 %v2726, %v2873
  %v3056 = vsub.f32 %v2727, %v2873
  %v3057 = vsub.f32 %v2728, %v2873
  %v3058 = vsub.f32 %v2729, %v2873
  %v3059 = vsub.f32 %v2730, %v2873
  %v3060 = vsub.f32 %v2731, %v2873
  %v3061 = vsub.f32 %v2732, %v2873
  %v3062 = vsub.f32 %v2733, %v2873
  %v3063 = vsub.f32 %v2734, %v2873
  %v3064 = vsub.f32 %v2735, %v2873
  %v3065 = vsub.f32 %v2736, %v2873
  %v3066 = vsub.f32 %v2737, %v2873
  %v3067 = vsub.f32 %v2738, %v2873
  %v3068 = vsub.f32 %v2739, %v2873
  %v3069 = vsub.f32 %v2740, %v2873
  %v3070 = vsub.f32 %v2741, %v2873
  %v3071 = vsub.f32 %v2742, %v2873
  %v3072 = vsub.f32 %v2743, %v2873
  %v3073 = vsub.f32 %v2744, %v2873
  %v3074 = vsub.f32 %v2745, %v2873
  %v3075 = vsub.f32 %v2746, %v2873
  %v3076 = vsub.f32 %v2747, %v2873
  %v3077 = vsub.f32 %v2748, %v2873
  %v3078 = vsub.f32 %v2749, %v2873
  %v3079 = vsub.f32 %v2750, %v2873
  %v3080 = vsub.f32 %v2751, %v2873
  %v3081 = vsub.f32 %v2752, %v2873
  %v3082 = vsub.f32 %v2753, %v2873
  %v3083 = vsub.f32 %v2754, %v2873
  %v3084 = vsub.f32 %v2755, %v2873
  %v3085 = vsub.f32 %v2756, %v2873
  %v3086 = vsub.f32 %v2757, %v2873
  %v3087 = vsub.f32 %v2758, %v2873
  %v3088 = vsub.f32 %v2759, %v2873
  %v3089 = vsub.f32 %v2760, %v2873
  %v3090 = vsub.f32 %v2761, %v2873
  %v3091 = vperm.slane %v3041, 0
  %v3092 = vmul.f32 %v3042, %v3091
  %v3093 = vmul.f32 %v3043, %v3091
  %v3094 = vmul.f32 %v3044, %v3091
  %v3095 = vmul.f32 %v3045, %v3091
  %v3096 = vmul.f32 %v3046, %v3091
  %v3097 = vmul.f32 %v3047, %v3091
  %v3098 = vmul.f32 %v3048, %v3091
  %v3099 = vmul.f32 %v3049, %v3091
  %v3100 = vmul.f32 %v3050, %v3091
  %v3101 = vmul.f32 %v3051, %v3091
  %v3102 = vmul.f32 %v3052, %v3091
  %v3103 = vmul.f32 %v3053, %v3091
  %v3104 = vmul.f32 %v3054, %v3091
  %v3105 = vmul.f32 %v3055, %v3091
  %v3106 = vmul.f32 %v3056, %v3091
  %v3107 = vmul.f32 %v3057, %v3091
  %v3108 = vmul.f32 %v3058, %v3091
  %v3109 = vmul.f32 %v3059, %v3091
  %v3110 = vmul.f32 %v3060, %v3091
  %v3111 = vmul.f32 %v3061, %v3091
  %v3112 = vmul.f32 %v3062, %v3091
  %v3113 = vmul.f32 %v3063, %v3091
  %v3114 = vmul.f32 %v3064, %v3091
  %v3115 = vmul.f32 %v3065, %v3091
  %v3116 = vmul.f32 %v3066, %v3091
  %v3117 = vmul.f32 %v3067, %v3091
  %v3118 = vmul.f32 %v3068, %v3091
  %v3119 = vmul.f32 %v3069, %v3091
  %v3120 = vmul.f32 %v3070, %v3091
  %v3121 = vmul.f32 %v3071, %v3091
  %v3122 = vmul.f32 %v3072, %v3091
  %v3123 = vmul.f32 %v3073, %v3091
  %v3124 = vmul.f32 %v3074, %v3091
  %v3125 = vmul.f32 %v3075, %v3091
  %v3126 = vmul.f32 %v3076, %v3091
  %v3127 = vmul.f32 %v3077, %v3091
  %v3128 = vmul.f32 %v3078, %v3091
  %v3129 = vmul.f32 %v3079, %v3091
  %v3130 = vmul.f32 %v3080, %v3091
  %v3131 = vmul.f32 %v3081, %v3091
  %v3132 = vmul.f32 %v3082, %v3091
  %v3133 = vmul.f32 %v3083, %v3091
  %v3134 = vmul.f32 %v3084, %v3091
  %v3135 = vmul.f32 %v3085, %v3091
  %v3136 = vmul.f32 %v3086, %v3091
  %v3137 = vmul.f32 %v3087, %v3091
  %v3138 = vmul.f32 %v3088, %v3091
  %v3139 = vmul.f32 %v3089, %v3091
  %v3140 = vmul.f32 %v3090, %v3091
  %v3141 = vld [vmem:[%s4] sm:$0x1]
  %v3143 = vperm.slane %v3141, 0
  %v3145 = vadd.f32 %v3092, %v3143
  %v3146 = vadd.f32 %v3093, %v3143
  %v3147 = vadd.f32 %v3094, %v3143
  %v3148 = vadd.f32 %v3095, %v3143
  %v3149 = vadd.f32 %v3096, %v3143
  %v3150 = vadd.f32 %v3097, %v3143
  %v3151 = vadd.f32 %v3098, %v3143
  %v3152 = vadd.f32 %v3099, %v3143
  %v3153 = vadd.f32 %v3100, %v3143
  %v3154 = vadd.f32 %v3101, %v3143
  %v3155 = vadd.f32 %v3102, %v3143
  %v3156 = vadd.f32 %v3103, %v3143
  %v3157 = vadd.f32 %v3104, %v3143
  %v3158 = vadd.f32 %v3105, %v3143
  %v3159 = vadd.f32 %v3106, %v3143
  %v3160 = vadd.f32 %v3107, %v3143
  %v3161 = vadd.f32 %v3108, %v3143
  %v3162 = vadd.f32 %v3109, %v3143
  %v3163 = vadd.f32 %v3110, %v3143
  %v3164 = vadd.f32 %v3111, %v3143
  %v3165 = vadd.f32 %v3112, %v3143
  %v3166 = vadd.f32 %v3113, %v3143
  %v3167 = vadd.f32 %v3114, %v3143
  %v3168 = vadd.f32 %v3115, %v3143
  %v3169 = vadd.f32 %v3116, %v3143
  %v3170 = vadd.f32 %v3117, %v3143
  %v3171 = vadd.f32 %v3118, %v3143
  %v3172 = vadd.f32 %v3119, %v3143
  %v3173 = vadd.f32 %v3120, %v3143
  %v3174 = vadd.f32 %v3121, %v3143
  %v3175 = vadd.f32 %v3122, %v3143
  %v3176 = vadd.f32 %v3123, %v3143
  %v3177 = vadd.f32 %v3124, %v3143
  %v3178 = vadd.f32 %v3125, %v3143
  %v3179 = vadd.f32 %v3126, %v3143
  %v3180 = vadd.f32 %v3127, %v3143
  %v3181 = vadd.f32 %v3128, %v3143
  %v3182 = vadd.f32 %v3129, %v3143
  %v3183 = vadd.f32 %v3130, %v3143
  %v3184 = vadd.f32 %v3131, %v3143
  %v3185 = vadd.f32 %v3132, %v3143
  %v3186 = vadd.f32 %v3133, %v3143
  %v3187 = vadd.f32 %v3134, %v3143
  %v3188 = vadd.f32 %v3135, %v3143
  %v3189 = vadd.f32 %v3136, %v3143
  %v3190 = vadd.f32 %v3137, %v3143
  %v3191 = vadd.f32 %v3138, %v3143
  %v3192 = vadd.f32 %v3139, %v3143
  %v3193 = vadd.f32 %v3140, %v3143
  %3194 = vst.msk [vmem:[%s5] sm:$0xff] %vm2762, %v3145
  %3195 = vst.msk [vmem:[%s5 + $0x8] sm:$0xff] %vm2762, %v3146
  %3196 = vst.msk [vmem:[%s5 + $0x10] sm:$0xff] %vm2762, %v3147
  %3197 = vst.msk [vmem:[%s5 + $0x18] sm:$0xff] %vm2762, %v3148
  %3198 = vst.msk [vmem:[%s5 + $0x20] sm:$0xff] %vm2762, %v3149
  %3199 = vst.msk [vmem:[%s5 + $0x28] sm:$0xff] %vm2762, %v3150
  %3200 = vst.msk [vmem:[%s5 + $0x30] sm:$0xff] %vm2762, %v3151
  %3201 = vst.msk [vmem:[%s5 + $0x38] sm:$0xff] %vm2762, %v3152
  %3202 = vst.msk [vmem:[%s5 + $0x40] sm:$0xff] %vm2762, %v3153
  %3203 = vst.msk [vmem:[%s5 + $0x48] sm:$0xff] %vm2762, %v3154
  %3204 = vst.msk [vmem:[%s5 + $0x50] sm:$0xff] %vm2762, %v3155
  %3205 = vst.msk [vmem:[%s5 + $0x58] sm:$0xff] %vm2762, %v3156
  %3206 = vst.msk [vmem:[%s5 + $0x60] sm:$0xff] %vm2762, %v3157
  %3207 = vst.msk [vmem:[%s5 + $0x68] sm:$0xff] %vm2762, %v3158
  %3208 = vst.msk [vmem:[%s5 + $0x70] sm:$0xff] %vm2762, %v3159
  %3209 = vst.msk [vmem:[%s5 + $0x78] sm:$0xff] %vm2762, %v3160
  %3210 = vst.msk [vmem:[%s5 + $0x80] sm:$0xff] %vm2762, %v3161
  %3211 = vst.msk [vmem:[%s5 + $0x88] sm:$0xff] %vm2762, %v3162
  %3212 = vst.msk [vmem:[%s5 + $0x90] sm:$0xff] %vm2762, %v3163
  %3213 = vst.msk [vmem:[%s5 + $0x98] sm:$0xff] %vm2762, %v3164
  %3214 = vst.msk [vmem:[%s5 + $0xa0] sm:$0xff] %vm2762, %v3165
  %3215 = vst.msk [vmem:[%s5 + $0xa8] sm:$0xff] %vm2762, %v3166
  %3216 = vst.msk [vmem:[%s5 + $0xb0] sm:$0xff] %vm2762, %v3167
  %3217 = vst.msk [vmem:[%s5 + $0xb8] sm:$0xff] %vm2762, %v3168
  %3218 = vst.msk [vmem:[%s5 + $0xc0] sm:$0xff] %vm2762, %v3169
  %3219 = vst.msk [vmem:[%s5 + $0xc8] sm:$0xff] %vm2762, %v3170
  %3220 = vst.msk [vmem:[%s5 + $0xd0] sm:$0xff] %vm2762, %v3171
  %3221 = vst.msk [vmem:[%s5 + $0xd8] sm:$0xff] %vm2762, %v3172
  %3222 = vst.msk [vmem:[%s5 + $0xe0] sm:$0xff] %vm2762, %v3173
  %3223 = vst.msk [vmem:[%s5 + $0xe8] sm:$0xff] %vm2762, %v3174
  %3224 = vst.msk [vmem:[%s5 + $0xf0] sm:$0xff] %vm2762, %v3175
  %3225 = vst.msk [vmem:[%s5 + $0xf8] sm:$0xff] %vm2762, %v3176
  %3226 = vst.msk [vmem:[%s5 + $0x100] sm:$0xff] %vm2762, %v3177
  %3227 = vst.msk [vmem:[%s5 + $0x108] sm:$0xff] %vm2762, %v3178
  %3228 = vst.msk [vmem:[%s5 + $0x110] sm:$0xff] %vm2762, %v3179
  %3229 = vst.msk [vmem:[%s5 + $0x118] sm:$0xff] %vm2762, %v3180
  %3230 = vst.msk [vmem:[%s5 + $0x120] sm:$0xff] %vm2762, %v3181
  %3231 = vst.msk [vmem:[%s5 + $0x128] sm:$0xff] %vm2762, %v3182
  %3232 = vst.msk [vmem:[%s5 + $0x130] sm:$0xff] %vm2762, %v3183
  %3233 = vst.msk [vmem:[%s5 + $0x138] sm:$0xff] %vm2762, %v3184
  %3234 = vst.msk [vmem:[%s5 + $0x140] sm:$0xff] %vm2762, %v3185
  %3235 = vst.msk [vmem:[%s5 + $0x148] sm:$0xff] %vm2762, %v3186
  %3236 = vst.msk [vmem:[%s5 + $0x150] sm:$0xff] %vm2762, %v3187
  %3237 = vst.msk [vmem:[%s5 + $0x158] sm:$0xff] %vm2762, %v3188
  %3238 = vst.msk [vmem:[%s5 + $0x160] sm:$0xff] %vm2762, %v3189
  %3239 = vst.msk [vmem:[%s5 + $0x168] sm:$0xff] %vm2762, %v3190
  %3240 = vst.msk [vmem:[%s5 + $0x170] sm:$0xff] %vm2762, %v3191
  %3241 = vst.msk [vmem:[%s5 + $0x178] sm:$0xff] %vm2762, %v3192
  %3242 = vst.msk [vmem:[%s5 + $0x180] sm:$0xff] %vm2762, %v3193
  // Predicated region
  $region22: #{generator_forward.6} parent=0 // pred_check
    _
  $region23: #{generator_forward.6} parent=0 // pred_check_branch
    %3244 = sbr.rel (0) target = $region25
  $region24: #{generator_forward.6} parent=0 // pred_region
    _
  $region25: #{generator_forward.6} parent=0 // pred_fallthru
    _
  // Predicated region
  $region26: #{generator_forward.6} parent=0 // pred_check
    _
  $region27: #{generator_forward.6} parent=0 // pred_check_branch
    %3246 = sbr.rel (0) target = $region29
  $region28: #{generator_forward.6} parent=0 // pred_region
    _
  $region29: #{generator_forward.6} parent=0 // pred_fallthru
    _

// kernel: generator_forward.7
$region0: #{generator_forward.7}
  #allocation0 [shape = 'u32[]', space=smem, size = 0x4, offset = 0x4, fixed_abs, tag = 'smem constant byte address 0x4 - core index']
  #allocation1 [shape = 'u32[72,128]{1,0:T(1,128)}', space=vmem, size = 0x9000, scoped, tag = 'internal scratch']
  %s0 = inlined_call_operand.vmem [shape: f32[62,992], index: 0, kind: input, shape index: {}]
  %s1 = inlined_call_operand.vmem [shape: f32[4,992,28], index: 1, kind: input, shape index: {}]
  %s2 = inlined_call_operand.vmem [shape: f32[1,28], index: 2, kind: input, shape index: {}]
  %s3 = inlined_call_operand.vmem [shape: f32[56,28], index: 3, kind: output, shape index: {}]
  %s4 = sld [smem:[#allocation0]]
  $region22: #{generator_forward.7} parent=0
    _
  %s6 = ssub.s32 1, %s4
  %s7 = scalar_select 0, %s6, %s4
  // Predicated region
  $region2: #{generator_forward.7} parent=0 // pred_check
    _
  $region3: #{generator_forward.7} parent=0 // pred_check_branch
    %9 = sbr.rel (0) target = $region5
  $region4: #{generator_forward.7} parent=0 // pred_region
    _
  $region5: #{generator_forward.7} parent=0 // pred_fallthru
    _
  // Predicated region
  $region6: #{generator_forward.7} parent=0 // pred_check
    _
  $region7: #{generator_forward.7} parent=0 // pred_check_branch
    %11 = sbr.rel (0) target = $region9
  $region8: #{generator_forward.7} parent=0 // pred_region
    _
  $region9: #{generator_forward.7} parent=0 // pred_fallthru
    _
  // Predicated region
  $region10: #{generator_forward.7} parent=0 // pred_check
    _
  $region11: #{generator_forward.7} parent=0 // pred_check_branch
    %13 = sbr.rel (0) target = $region13
  $region12: #{generator_forward.7} parent=0 // pred_region
    _
  $region13: #{generator_forward.7} parent=0 // pred_fallthru
    _
  %v14 = vld [vmem:[%s0] sm:$0xff]
  %v15 = vld [vmem:[%s0 + $0x8] sm:$0xff]
  %v16 = vld [vmem:[%s0 + $0x10] sm:$0xff]
  %v17 = vld [vmem:[%s0 + $0x18] sm:$0xff]
  %v18 = vld [vmem:[%s0 + $0x20] sm:$0xff]
  %v19 = vld [vmem:[%s0 + $0x28] sm:$0xff]
  %v20 = vld [vmem:[%s0 + $0x30] sm:$0xff]
  %v21 = vld [vmem:[%s0 + $0x38] sm:$0xff]
  %v22 = vld [vmem:[%s0 + $0x40] sm:$0xff]
  %v23 = vld [vmem:[%s0 + $0x48] sm:$0xff]
  %v24 = vld [vmem:[%s0 + $0x50] sm:$0xff]
  %v25 = vld [vmem:[%s0 + $0x58] sm:$0xff]
  %v26 = vld [vmem:[%s0 + $0x60] sm:$0xff]
  %v27 = vld [vmem:[%s0 + $0x68] sm:$0xff]
  %v28 = vld [vmem:[%s0 + $0x70] sm:$0xff]
  %v29 = vld [vmem:[%s0 + $0x78] sm:$0xff]
  %v30 = vld [vmem:[%s0 + $0x80] sm:$0xff]
  %v31 = vld [vmem:[%s0 + $0x88] sm:$0xff]
  %v32 = vld [vmem:[%s0 + $0x90] sm:$0xff]
  %v33 = vld [vmem:[%s0 + $0x98] sm:$0xff]
  %v34 = vld [vmem:[%s0 + $0xa0] sm:$0xff]
  %v35 = vld [vmem:[%s0 + $0xa8] sm:$0xff]
  %v36 = vld [vmem:[%s0 + $0xb0] sm:$0xff]
  %v37 = vld [vmem:[%s0 + $0xb8] sm:$0xff]
  %v38 = vld [vmem:[%s0 + $0xc0] sm:$0xff]
  %v39 = vld [vmem:[%s0 + $0xc8] sm:$0xff]
  %v40 = vld [vmem:[%s0 + $0xd0] sm:$0xff]
  %v41 = vld [vmem:[%s0 + $0xd8] sm:$0xff]
  %v42 = vld [vmem:[%s0 + $0xe0] sm:$0xff]
  %v43 = vld [vmem:[%s0 + $0xe8] sm:$0xff]
  %v44 = vld [vmem:[%s0 + $0xf0] sm:$0xff]
  %v45 = vld [vmem:[%s0 + $0xf8] sm:$0xff]
  %v46 = vld [vmem:[%s0 + $0x100] sm:$0xff]
  %v47 = vld [vmem:[%s0 + $0x108] sm:$0xff]
  %v48 = vld [vmem:[%s0 + $0x110] sm:$0xff]
  %v49 = vld [vmem:[%s0 + $0x118] sm:$0xff]
  %v50 = vld [vmem:[%s0 + $0x120] sm:$0xff]
  %v51 = vld [vmem:[%s0 + $0x128] sm:$0xff]
  %v52 = vld [vmem:[%s0 + $0x130] sm:$0xff]
  %v53 = vld [vmem:[%s0 + $0x138] sm:$0xff]
  %v54 = vld [vmem:[%s0 + $0x140] sm:$0xff]
  %v55 = vld [vmem:[%s0 + $0x148] sm:$0xff]
  %v56 = vld [vmem:[%s0 + $0x150] sm:$0xff]
  %v57 = vld [vmem:[%s0 + $0x158] sm:$0xff]
  %v58 = vld [vmem:[%s0 + $0x160] sm:$0xff]
  %v59 = vld [vmem:[%s0 + $0x168] sm:$0xff]
  %v60 = vld [vmem:[%s0 + $0x170] sm:$0xff]
  %v61 = vld [vmem:[%s0 + $0x178] sm:$0xff]
  %v62 = vld [vmem:[%s0 + $0x180] sm:$0xff]
  %v63 = vld [vmem:[%s0 + $0x188] sm:$0xff]
  %v64 = vld [vmem:[%s0 + $0x190] sm:$0xff]
  %v65 = vld [vmem:[%s0 + $0x198] sm:$0xff]
  %v66 = vld [vmem:[%s0 + $0x1a0] sm:$0xff]
  %v67 = vld [vmem:[%s0 + $0x1a8] sm:$0xff]
  %v68 = vld [vmem:[%s0 + $0x1b0] sm:$0xff]
  %v69 = vld [vmem:[%s0 + $0x1b8] sm:$0xff]
  %v70 = vld [vmem:[%s1] sm:$0xff]
  %v71 = vld [vmem:[%s1 + $0x8] sm:$0xff]
  %v72 = vld [vmem:[%s1 + $0x10] sm:$0xff]
  %v73 = vld [vmem:[%s1 + $0x18] sm:$0xff]
  %v74 = vld [vmem:[%s1 + $0x20] sm:$0xff]
  %v75 = vld [vmem:[%s1 + $0x28] sm:$0xff]
  %v76 = vld [vmem:[%s1 + $0x30] sm:$0xff]
  %v77 = vld [vmem:[%s1 + $0x38] sm:$0xff]
  %v78 = vld [vmem:[%s1 + $0x40] sm:$0xff]
  %v79 = vld [vmem:[%s1 + $0x48] sm:$0xff]
  %v80 = vld [vmem:[%s1 + $0x50] sm:$0xff]
  %v81 = vld [vmem:[%s1 + $0x58] sm:$0xff]
  %v82 = vld [vmem:[%s1 + $0x60] sm:$0xff]
  %v83 = vld [vmem:[%s1 + $0x68] sm:$0xff]
  %v84 = vld [vmem:[%s1 + $0x70] sm:$0xff]
  %v85 = vld [vmem:[%s1 + $0x78] sm:$0xff]
  %v86 = vld [vmem:[%s1 + $0x80] sm:$0xff]
  %v87 = vld [vmem:[%s1 + $0x88] sm:$0xff]
  %v88 = vld [vmem:[%s1 + $0x90] sm:$0xff]
  %v89 = vld [vmem:[%s1 + $0x98] sm:$0xff]
  %v90 = vld [vmem:[%s1 + $0xa0] sm:$0xff]
  %v91 = vld [vmem:[%s1 + $0xa8] sm:$0xff]
  %v92 = vld [vmem:[%s1 + $0xb0] sm:$0xff]
  %v93 = vld [vmem:[%s1 + $0xb8] sm:$0xff]
  %v94 = vld [vmem:[%s1 + $0xc0] sm:$0xff]
  %v95 = vld [vmem:[%s1 + $0xc8] sm:$0xff]
  %v96 = vld [vmem:[%s1 + $0xd0] sm:$0xff]
  %v97 = vld [vmem:[%s1 + $0xd8] sm:$0xff]
  %v98 = vld [vmem:[%s1 + $0xe0] sm:$0xff]
  %v99 = vld [vmem:[%s1 + $0xe8] sm:$0xff]
  %v100 = vld [vmem:[%s1 + $0xf0] sm:$0xff]
  %v101 = vld [vmem:[%s1 + $0xf8] sm:$0xff]
  %v102 = vld [vmem:[%s1 + $0x100] sm:$0xff]
  %v103 = vld [vmem:[%s1 + $0x108] sm:$0xff]
  %v104 = vld [vmem:[%s1 + $0x110] sm:$0xff]
  %v105 = vld [vmem:[%s1 + $0x118] sm:$0xff]
  %v106 = vld [vmem:[%s1 + $0x120] sm:$0xff]
  %v107 = vld [vmem:[%s1 + $0x128] sm:$0xff]
  %v108 = vld [vmem:[%s1 + $0x130] sm:$0xff]
  %v109 = vld [vmem:[%s1 + $0x138] sm:$0xff]
  %v110 = vld [vmem:[%s1 + $0x140] sm:$0xff]
  %v111 = vld [vmem:[%s1 + $0x148] sm:$0xff]
  %v112 = vld [vmem:[%s1 + $0x150] sm:$0xff]
  %v113 = vld [vmem:[%s1 + $0x158] sm:$0xff]
  %v114 = vld [vmem:[%s1 + $0x160] sm:$0xff]
  %v115 = vld [vmem:[%s1 + $0x168] sm:$0xff]
  %v116 = vld [vmem:[%s1 + $0x170] sm:$0xff]
  %v117 = vld [vmem:[%s1 + $0x178] sm:$0xff]
  %v118 = vld [vmem:[%s1 + $0x180] sm:$0xff]
  %v119 = vld [vmem:[%s1 + $0x188] sm:$0xff]
  %v120 = vld [vmem:[%s1 + $0x190] sm:$0xff]
  %v121 = vld [vmem:[%s1 + $0x198] sm:$0xff]
  %v122 = vld [vmem:[%s1 + $0x1a0] sm:$0xff]
  %v123 = vld [vmem:[%s1 + $0x1a8] sm:$0xff]
  %v124 = vld [vmem:[%s1 + $0x1b0] sm:$0xff]
  %v125 = vld [vmem:[%s1 + $0x1b8] sm:$0xff]
  %v126 = vld [vmem:[%s1 + $0x1c0] sm:$0xff]
  %v127 = vld [vmem:[%s1 + $0x1c8] sm:$0xff]
  %v128 = vld [vmem:[%s1 + $0x1d0] sm:$0xff]
  %v129 = vld [vmem:[%s1 + $0x1d8] sm:$0xff]
  %v130 = vld [vmem:[%s1 + $0x1e0] sm:$0xff]
  %v131 = vld [vmem:[%s1 + $0x1e8] sm:$0xff]
  %v132 = vld [vmem:[%s1 + $0x1f0] sm:$0xff]
  %v133 = vld [vmem:[%s1 + $0x1f8] sm:$0xff]
  %v134 = vld [vmem:[%s1 + $0x200] sm:$0xff]
  %v135 = vld [vmem:[%s1 + $0x208] sm:$0xff]
  %v136 = vld [vmem:[%s1 + $0x210] sm:$0xff]
  %v137 = vld [vmem:[%s1 + $0x218] sm:$0xff]
  %v138 = vld [vmem:[%s1 + $0x220] sm:$0xff]
  %v139 = vld [vmem:[%s1 + $0x228] sm:$0xff]
  %v140 = vld [vmem:[%s1 + $0x230] sm:$0xff]
  %v141 = vld [vmem:[%s1 + $0x238] sm:$0xff]
  %v142 = vld [vmem:[%s1 + $0x240] sm:$0xff]
  %v143 = vld [vmem:[%s1 + $0x248] sm:$0xff]
  %v144 = vld [vmem:[%s1 + $0x250] sm:$0xff]
  %v145 = vld [vmem:[%s1 + $0x258] sm:$0xff]
  %v146 = vld [vmem:[%s1 + $0x260] sm:$0xff]
  %v147 = vld [vmem:[%s1 + $0x268] sm:$0xff]
  %v148 = vld [vmem:[%s1 + $0x270] sm:$0xff]
  %v149 = vld [vmem:[%s1 + $0x278] sm:$0xff]
  %v150 = vld [vmem:[%s1 + $0x280] sm:$0xff]
  %v151 = vld [vmem:[%s1 + $0x288] sm:$0xff]
  %v152 = vld [vmem:[%s1 + $0x290] sm:$0xff]
  %v153 = vld [vmem:[%s1 + $0x298] sm:$0xff]
  %v154 = vld [vmem:[%s1 + $0x2a0] sm:$0xff]
  %v155 = vld [vmem:[%s1 + $0x2a8] sm:$0xff]
  %v156 = vld [vmem:[%s1 + $0x2b0] sm:$0xff]
  %v157 = vld [vmem:[%s1 + $0x2b8] sm:$0xff]
  %v158 = vld [vmem:[%s1 + $0x2c0] sm:$0xff]
  %v159 = vld [vmem:[%s1 + $0x2c8] sm:$0xff]
  %v160 = vld [vmem:[%s1 + $0x2d0] sm:$0xff]
  %v161 = vld [vmem:[%s1 + $0x2d8] sm:$0xff]
  %v162 = vld [vmem:[%s1 + $0x2e0] sm:$0xff]
  %v163 = vld [vmem:[%s1 + $0x2e8] sm:$0xff]
  %v164 = vld [vmem:[%s1 + $0x2f0] sm:$0xff]
  %v165 = vld [vmem:[%s1 + $0x2f8] sm:$0xff]
  %v166 = vld [vmem:[%s1 + $0x300] sm:$0xff]
  %v167 = vld [vmem:[%s1 + $0x308] sm:$0xff]
  %v168 = vld [vmem:[%s1 + $0x310] sm:$0xff]
  %v169 = vld [vmem:[%s1 + $0x318] sm:$0xff]
  %v170 = vld [vmem:[%s1 + $0x320] sm:$0xff]
  %v171 = vld [vmem:[%s1 + $0x328] sm:$0xff]
  %v172 = vld [vmem:[%s1 + $0x330] sm:$0xff]
  %v173 = vld [vmem:[%s1 + $0x338] sm:$0xff]
  %v174 = vld [vmem:[%s1 + $0x340] sm:$0xff]
  %v175 = vld [vmem:[%s1 + $0x348] sm:$0xff]
  %v176 = vld [vmem:[%s1 + $0x350] sm:$0xff]
  %v177 = vld [vmem:[%s1 + $0x358] sm:$0xff]
  %v178 = vld [vmem:[%s1 + $0x360] sm:$0xff]
  %v179 = vld [vmem:[%s1 + $0x368] sm:$0xff]
  %v180 = vld [vmem:[%s1 + $0x370] sm:$0xff]
  %v181 = vld [vmem:[%s1 + $0x378] sm:$0xff]
  %v182 = vld [vmem:[%s1 + $0x380] sm:$0xff]
  %v183 = vld [vmem:[%s1 + $0x388] sm:$0xff]
  %v184 = vld [vmem:[%s1 + $0x390] sm:$0xff]
  %v185 = vld [vmem:[%s1 + $0x398] sm:$0xff]
  %v186 = vld [vmem:[%s1 + $0x3a0] sm:$0xff]
  %v187 = vld [vmem:[%s1 + $0x3a8] sm:$0xff]
  %v188 = vld [vmem:[%s1 + $0x3b0] sm:$0xff]
  %v189 = vld [vmem:[%s1 + $0x3b8] sm:$0xff]
  %v190 = vld [vmem:[%s1 + $0x3c0] sm:$0xff]
  %v191 = vld [vmem:[%s1 + $0x3c8] sm:$0xff]
  %v192 = vld [vmem:[%s1 + $0x3d0] sm:$0xff]
  %v193 = vld [vmem:[%s1 + $0x3d8] sm:$0xff]
  %v194 = vld [vmem:[%s0] sm:$0xfc]
  %v195 = vld [vmem:[%s0 + $0x8] sm:$0xfc]
  %v196 = vld [vmem:[%s0 + $0x10] sm:$0xfc]
  %v197 = vld [vmem:[%s0 + $0x18] sm:$0xfc]
  %v198 = vld [vmem:[%s0 + $0x20] sm:$0xfc]
  %v199 = vld [vmem:[%s0 + $0x28] sm:$0xfc]
  %v200 = vld [vmem:[%s0 + $0x30] sm:$0xfc]
  %v201 = vld [vmem:[%s0 + $0x38] sm:$0xfc]
  %v202 = vld [vmem:[%s0 + $0x1c0] sm:$0x3]
  %v203 = vld [vmem:[%s0 + $0x1c8] sm:$0x3]
  %v204 = vld [vmem:[%s0 + $0x1d0] sm:$0x3]
  %v205 = vld [vmem:[%s0 + $0x1d8] sm:$0x3]
  %v206 = vld [vmem:[%s0 + $0x1e0] sm:$0x3]
  %v207 = vld [vmem:[%s0 + $0x1e8] sm:$0x3]
  %v208 = vld [vmem:[%s0 + $0x1f0] sm:$0x3]
  %v209 = vld [vmem:[%s0 + $0x1f8] sm:$0x3]
  %s210 = scalar_lea.vmem %s1, 992
  %v211 = vld [vmem:[%s210] sm:$0xff]
  %v212 = vld [vmem:[%s210 + $0x8] sm:$0xff]
  %v213 = vld [vmem:[%s210 + $0x10] sm:$0xff]
  %v214 = vld [vmem:[%s210 + $0x18] sm:$0xff]
  %v215 = vld [vmem:[%s210 + $0x20] sm:$0xff]
  %v216 = vld [vmem:[%s210 + $0x28] sm:$0xff]
  %v217 = vld [vmem:[%s210 + $0x30] sm:$0xff]
  %v218 = vld [vmem:[%s210 + $0x38] sm:$0xff]
  %v219 = vld [vmem:[%s210 + $0x40] sm:$0xff]
  %v220 = vld [vmem:[%s210 + $0x48] sm:$0xff]
  %v221 = vld [vmem:[%s210 + $0x50] sm:$0xff]
  %v222 = vld [vmem:[%s210 + $0x58] sm:$0xff]
  %v223 = vld [vmem:[%s210 + $0x60] sm:$0xff]
  %v224 = vld [vmem:[%s210 + $0x68] sm:$0xff]
  %v225 = vld [vmem:[%s210 + $0x70] sm:$0xff]
  %v226 = vld [vmem:[%s210 + $0x78] sm:$0xff]
  %v227 = vld [vmem:[%s210 + $0x80] sm:$0xff]
  %v228 = vld [vmem:[%s210 + $0x88] sm:$0xff]
  %v229 = vld [vmem:[%s210 + $0x90] sm:$0xff]
  %v230 = vld [vmem:[%s210 + $0x98] sm:$0xff]
  %v231 = vld [vmem:[%s210 + $0xa0] sm:$0xff]
  %v232 = vld [vmem:[%s210 + $0xa8] sm:$0xff]
  %v233 = vld [vmem:[%s210 + $0xb0] sm:$0xff]
  %v234 = vld [vmem:[%s210 + $0xb8] sm:$0xff]
  %v235 = vld [vmem:[%s210 + $0xc0] sm:$0xff]
  %v236 = vld [vmem:[%s210 + $0xc8] sm:$0xff]
  %v237 = vld [vmem:[%s210 + $0xd0] sm:$0xff]
  %v238 = vld [vmem:[%s210 + $0xd8] sm:$0xff]
  %v239 = vld [vmem:[%s210 + $0xe0] sm:$0xff]
  %v240 = vld [vmem:[%s210 + $0xe8] sm:$0xff]
  %v241 = vld [vmem:[%s210 + $0xf0] sm:$0xff]
  %v242 = vld [vmem:[%s210 + $0xf8] sm:$0xff]
  %v243 = vld [vmem:[%s210 + $0x100] sm:$0xff]
  %v244 = vld [vmem:[%s210 + $0x108] sm:$0xff]
  %v245 = vld [vmem:[%s210 + $0x110] sm:$0xff]
  %v246 = vld [vmem:[%s210 + $0x118] sm:$0xff]
  %v247 = vld [vmem:[%s210 + $0x120] sm:$0xff]
  %v248 = vld [vmem:[%s210 + $0x128] sm:$0xff]
  %v249 = vld [vmem:[%s210 + $0x130] sm:$0xff]
  %v250 = vld [vmem:[%s210 + $0x138] sm:$0xff]
  %v251 = vld [vmem:[%s210 + $0x140] sm:$0xff]
  %v252 = vld [vmem:[%s210 + $0x148] sm:$0xff]
  %v253 = vld [vmem:[%s210 + $0x150] sm:$0xff]
  %v254 = vld [vmem:[%s210 + $0x158] sm:$0xff]
  %v255 = vld [vmem:[%s210 + $0x160] sm:$0xff]
  %v256 = vld [vmem:[%s210 + $0x168] sm:$0xff]
  %v257 = vld [vmem:[%s210 + $0x170] sm:$0xff]
  %v258 = vld [vmem:[%s210 + $0x178] sm:$0xff]
  %v259 = vld [vmem:[%s210 + $0x180] sm:$0xff]
  %v260 = vld [vmem:[%s210 + $0x188] sm:$0xff]
  %v261 = vld [vmem:[%s210 + $0x190] sm:$0xff]
  %v262 = vld [vmem:[%s210 + $0x198] sm:$0xff]
  %v263 = vld [vmem:[%s210 + $0x1a0] sm:$0xff]
  %v264 = vld [vmem:[%s210 + $0x1a8] sm:$0xff]
  %v265 = vld [vmem:[%s210 + $0x1b0] sm:$0xff]
  %v266 = vld [vmem:[%s210 + $0x1b8] sm:$0xff]
  %v267 = vld [vmem:[%s210 + $0x1c0] sm:$0xff]
  %v268 = vld [vmem:[%s210 + $0x1c8] sm:$0xff]
  %v269 = vld [vmem:[%s210 + $0x1d0] sm:$0xff]
  %v270 = vld [vmem:[%s210 + $0x1d8] sm:$0xff]
  %v271 = vld [vmem:[%s210 + $0x1e0] sm:$0xff]
  %v272 = vld [vmem:[%s210 + $0x1e8] sm:$0xff]
  %v273 = vld [vmem:[%s210 + $0x1f0] sm:$0xff]
  %v274 = vld [vmem:[%s210 + $0x1f8] sm:$0xff]
  %v275 = vld [vmem:[%s210 + $0x200] sm:$0xff]
  %v276 = vld [vmem:[%s210 + $0x208] sm:$0xff]
  %v277 = vld [vmem:[%s210 + $0x210] sm:$0xff]
  %v278 = vld [vmem:[%s210 + $0x218] sm:$0xff]
  %v279 = vld [vmem:[%s210 + $0x220] sm:$0xff]
  %v280 = vld [vmem:[%s210 + $0x228] sm:$0xff]
  %v281 = vld [vmem:[%s210 + $0x230] sm:$0xff]
  %v282 = vld [vmem:[%s210 + $0x238] sm:$0xff]
  %v283 = vld [vmem:[%s210 + $0x240] sm:$0xff]
  %v284 = vld [vmem:[%s210 + $0x248] sm:$0xff]
  %v285 = vld [vmem:[%s210 + $0x250] sm:$0xff]
  %v286 = vld [vmem:[%s210 + $0x258] sm:$0xff]
  %v287 = vld [vmem:[%s210 + $0x260] sm:$0xff]
  %v288 = vld [vmem:[%s210 + $0x268] sm:$0xff]
  %v289 = vld [vmem:[%s210 + $0x270] sm:$0xff]
  %v290 = vld [vmem:[%s210 + $0x278] sm:$0xff]
  %v291 = vld [vmem:[%s210 + $0x280] sm:$0xff]
  %v292 = vld [vmem:[%s210 + $0x288] sm:$0xff]
  %v293 = vld [vmem:[%s210 + $0x290] sm:$0xff]
  %v294 = vld [vmem:[%s210 + $0x298] sm:$0xff]
  %v295 = vld [vmem:[%s210 + $0x2a0] sm:$0xff]
  %v296 = vld [vmem:[%s210 + $0x2a8] sm:$0xff]
  %v297 = vld [vmem:[%s210 + $0x2b0] sm:$0xff]
  %v298 = vld [vmem:[%s210 + $0x2b8] sm:$0xff]
  %v299 = vld [vmem:[%s210 + $0x2c0] sm:$0xff]
  %v300 = vld [vmem:[%s210 + $0x2c8] sm:$0xff]
  %v301 = vld [vmem:[%s210 + $0x2d0] sm:$0xff]
  %v302 = vld [vmem:[%s210 + $0x2d8] sm:$0xff]
  %v303 = vld [vmem:[%s210 + $0x2e0] sm:$0xff]
  %v304 = vld [vmem:[%s210 + $0x2e8] sm:$0xff]
  %v305 = vld [vmem:[%s210 + $0x2f0] sm:$0xff]
  %v306 = vld [vmem:[%s210 + $0x2f8] sm:$0xff]
  %v307 = vld [vmem:[%s210 + $0x300] sm:$0xff]
  %v308 = vld [vmem:[%s210 + $0x308] sm:$0xff]
  %v309 = vld [vmem:[%s210 + $0x310] sm:$0xff]
  %v310 = vld [vmem:[%s210 + $0x318] sm:$0xff]
  %v311 = vld [vmem:[%s210 + $0x320] sm:$0xff]
  %v312 = vld [vmem:[%s210 + $0x328] sm:$0xff]
  %v313 = vld [vmem:[%s210 + $0x330] sm:$0xff]
  %v314 = vld [vmem:[%s210 + $0x338] sm:$0xff]
  %v315 = vld [vmem:[%s210 + $0x340] sm:$0xff]
  %v316 = vld [vmem:[%s210 + $0x348] sm:$0xff]
  %v317 = vld [vmem:[%s210 + $0x350] sm:$0xff]
  %v318 = vld [vmem:[%s210 + $0x358] sm:$0xff]
  %v319 = vld [vmem:[%s210 + $0x360] sm:$0xff]
  %v320 = vld [vmem:[%s210 + $0x368] sm:$0xff]
  %v321 = vld [vmem:[%s210 + $0x370] sm:$0xff]
  %v322 = vld [vmem:[%s210 + $0x378] sm:$0xff]
  %v323 = vld [vmem:[%s210 + $0x380] sm:$0xff]
  %v324 = vld [vmem:[%s210 + $0x388] sm:$0xff]
  %v325 = vld [vmem:[%s210 + $0x390] sm:$0xff]
  %v326 = vld [vmem:[%s210 + $0x398] sm:$0xff]
  %v327 = vld [vmem:[%s210 + $0x3a0] sm:$0xff]
  %v328 = vld [vmem:[%s210 + $0x3a8] sm:$0xff]
  %v329 = vld [vmem:[%s210 + $0x3b0] sm:$0xff]
  %v330 = vld [vmem:[%s210 + $0x3b8] sm:$0xff]
  %v331 = vld [vmem:[%s210 + $0x3c0] sm:$0xff]
  %v332 = vld [vmem:[%s210 + $0x3c8] sm:$0xff]
  %v333 = vld [vmem:[%s210 + $0x3d0] sm:$0xff]
  %v334 = vld [vmem:[%s210 + $0x3d8] sm:$0xff]
  %vm399 = vcmask 1045504
  %v400 = vrot.slane %v194, 2
  %v401 = vrot.slane %v22, 2
  %v402 = vsel %vm399, %v400, %v401
  %v403 = vrot.slane %v195, 2
  %v404 = vrot.slane %v23, 2
  %v405 = vsel %vm399, %v403, %v404
  %v406 = vrot.slane %v196, 2
  %v407 = vrot.slane %v24, 2
  %v408 = vsel %vm399, %v406, %v407
  %v409 = vrot.slane %v197, 2
  %v410 = vrot.slane %v25, 2
  %v411 = vsel %vm399, %v409, %v410
  %v412 = vrot.slane %v198, 2
  %v413 = vrot.slane %v26, 2
  %v414 = vsel %vm399, %v412, %v413
  %v415 = vrot.slane %v199, 2
  %v416 = vrot.slane %v27, 2
  %v417 = vsel %vm399, %v415, %v416
  %v418 = vrot.slane %v200, 2
  %v419 = vrot.slane %v28, 2
  %v420 = vsel %vm399, %v418, %v419
  %v421 = vrot.slane %v201, 2
  %v422 = vrot.slane %v29, 2
  %v423 = vsel %vm399, %v421, %v422
  %v424 = vrot.slane %v30, 2
  %v425 = vsel %vm399, %v401, %v424
  %v426 = vrot.slane %v31, 2
  %v427 = vsel %vm399, %v404, %v426
  %v428 = vrot.slane %v32, 2
  %v429 = vsel %vm399, %v407, %v428
  %v430 = vrot.slane %v33, 2
  %v431 = vsel %vm399, %v410, %v430
  %v432 = vrot.slane %v34, 2
  %v433 = vsel %vm399, %v413, %v432
  %v434 = vrot.slane %v35, 2
  %v435 = vsel %vm399, %v416, %v434
  %v436 = vrot.slane %v36, 2
  %v437 = vsel %vm399, %v419, %v436
  %v438 = vrot.slane %v37, 2
  %v439 = vsel %vm399, %v422, %v438
  %v440 = vrot.slane %v38, 2
  %v441 = vsel %vm399, %v424, %v440
  %v442 = vrot.slane %v39, 2
  %v443 = vsel %vm399, %v426, %v442
  %v444 = vrot.slane %v40, 2
  %v445 = vsel %vm399, %v428, %v444
  %v446 = vrot.slane %v41, 2
  %v447 = vsel %vm399, %v430, %v446
  %v448 = vrot.slane %v42, 2
  %v449 = vsel %vm399, %v432, %v448
  %v450 = vrot.slane %v43, 2
  %v451 = vsel %vm399, %v434, %v450
  %v452 = vrot.slane %v44, 2
  %v453 = vsel %vm399, %v436, %v452
  %v454 = vrot.slane %v45, 2
  %v455 = vsel %vm399, %v438, %v454
  %v456 = vrot.slane %v46, 2
  %v457 = vsel %vm399, %v440, %v456
  %v458 = vrot.slane %v47, 2
  %v459 = vsel %vm399, %v442, %v458
  %v460 = vrot.slane %v48, 2
  %v461 = vsel %vm399, %v444, %v460
  %v462 = vrot.slane %v49, 2
  %v463 = vsel %vm399, %v446, %v462
  %v464 = vrot.slane %v50, 2
  %v465 = vsel %vm399, %v448, %v464
  %v466 = vrot.slane %v51, 2
  %v467 = vsel %vm399, %v450, %v466
  %v468 = vrot.slane %v52, 2
  %v469 = vsel %vm399, %v452, %v468
  %v470 = vrot.slane %v53, 2
  %v471 = vsel %vm399, %v454, %v470
  %v472 = vrot.slane %v54, 2
  %v473 = vsel %vm399, %v456, %v472
  %v474 = vrot.slane %v55, 2
  %v475 = vsel %vm399, %v458, %v474
  %v476 = vrot.slane %v56, 2
  %v477 = vsel %vm399, %v460, %v476
  %v478 = vrot.slane %v57, 2
  %v479 = vsel %vm399, %v462, %v478
  %v480 = vrot.slane %v58, 2
  %v481 = vsel %vm399, %v464, %v480
  %v482 = vrot.slane %v59, 2
  %v483 = vsel %vm399, %v466, %v482
  %v484 = vrot.slane %v60, 2
  %v485 = vsel %vm399, %v468, %v484
  %v486 = vrot.slane %v61, 2
  %v487 = vsel %vm399, %v470, %v486
  %v488 = vrot.slane %v62, 2
  %v489 = vsel %vm399, %v472, %v488
  %v490 = vrot.slane %v63, 2
  %v491 = vsel %vm399, %v474, %v490
  %v492 = vrot.slane %v64, 2
  %v493 = vsel %vm399, %v476, %v492
  %v494 = vrot.slane %v65, 2
  %v495 = vsel %vm399, %v478, %v494
  %v496 = vrot.slane %v66, 2
  %v497 = vsel %vm399, %v480, %v496
  %v498 = vrot.slane %v67, 2
  %v499 = vsel %vm399, %v482, %v498
  %v500 = vrot.slane %v68, 2
  %v501 = vsel %vm399, %v484, %v500
  %v502 = vrot.slane %v69, 2
  %v503 = vsel %vm399, %v486, %v502
  %v504 = vrot.slane %v202, 2
  %v505 = vsel %vm399, %v488, %v504
  %v506 = vrot.slane %v203, 2
  %v507 = vsel %vm399, %v490, %v506
  %v508 = vrot.slane %v204, 2
  %v509 = vsel %vm399, %v492, %v508
  %v510 = vrot.slane %v205, 2
  %v511 = vsel %vm399, %v494, %v510
  %v512 = vrot.slane %v206, 2
  %v513 = vsel %vm399, %v496, %v512
  %v514 = vrot.slane %v207, 2
  %v515 = vsel %vm399, %v498, %v514
  %v516 = vrot.slane %v208, 2
  %v517 = vsel %vm399, %v500, %v516
  %v518 = vrot.slane %v209, 2
  %v519 = vsel %vm399, %v502, %v518
  %vm569 = vcmask 785408
  %v570 = vsel %vm569, %v423, 0
  %v572 = vsel %vm569, %v439, 0
  %v574 = vsel %vm569, %v455, 0
  %v576 = vsel %vm569, %v471, 0
  %v578 = vsel %vm569, %v487, 0
  %v580 = vsel %vm569, %v503, 0
  %v582 = vsel %vm569, %v519, 0
  %584 = vmatpush.msra.mxu0 %v226
  %585 = vmatpush.msra.mxu0 %v225
  %586 = vmatpush.msra.mxu0 %v224
  %587 = vmatpush.msra.mxu0 %v223
  %588 = vmatpush.msra.mxu0 %v222
  %589 = vmatpush.msra.mxu0 %v221
  %590 = vmatpush.msra.mxu0 %v220
  %591 = vmatpush.msra.mxu0 %v219
  %592 = vmatpush.msra.mxu0 %v218
  %593 = vmatpush.msra.mxu0 %v217
  %594 = vmatpush.msra.mxu0 %v216
  %595 = vmatpush.msra.mxu0 %v215
  %596 = vmatpush.msra.mxu0 %v214
  %597 = vmatpush.msra.mxu0 %v213
  %598 = vmatpush.msra.mxu0 %v212
  %599 = vmatpush.msra.mxu0 %v211
  %600 = vmatmul.f32.gmra.mxu0 %v402
  %v601 = vpop.f32.mrf.mxu0
  %v602 = vadd.f32 0.0, %v601
  %603 = vmatmul.f32.gmra.mxu0 %v425
  %v604 = vpop.f32.mrf.mxu0
  %v605 = vadd.f32 0.0, %v604
  %606 = vmatmul.f32.gmra.mxu0 %v441
  %v607 = vpop.f32.mrf.mxu0
  %v608 = vadd.f32 0.0, %v607
  %609 = vmatmul.f32.gmra.mxu0 %v457
  %v610 = vpop.f32.mrf.mxu0
  %v611 = vadd.f32 0.0, %v610
  %612 = vmatmul.f32.gmra.mxu0 %v473
  %v613 = vpop.f32.mrf.mxu0
  %v614 = vadd.f32 0.0, %v613
  %615 = vmatmul.f32.gmra.mxu0 %v489
  %v616 = vpop.f32.mrf.mxu0
  %v617 = vadd.f32 0.0, %v616
  %618 = vmatmul.f32.gmra.mxu0 %v505
  %v619 = vpop.f32.mrf.mxu0
  %v620 = vadd.f32 0.0, %v619
  %621 = vdwg.mxu0
  %622 = vmatpush.msra.mxu0 %v242
  %623 = vmatpush.msra.mxu0 %v241
  %624 = vmatpush.msra.mxu0 %v240
  %625 = vmatpush.msra.mxu0 %v239
  %626 = vmatpush.msra.mxu0 %v238
  %627 = vmatpush.msra.mxu0 %v237
  %628 = vmatpush.msra.mxu0 %v236
  %629 = vmatpush.msra.mxu0 %v235
  %630 = vmatpush.msra.mxu0 %v234
  %631 = vmatpush.msra.mxu0 %v233
  %632 = vmatpush.msra.mxu0 %v232
  %633 = vmatpush.msra.mxu0 %v231
  %634 = vmatpush.msra.mxu0 %v230
  %635 = vmatpush.msra.mxu0 %v229
  %636 = vmatpush.msra.mxu0 %v228
  %637 = vmatpush.msra.mxu0 %v227
  %638 = vmatmul.f32.gmra.mxu0 %v405
  %v639 = vpop.f32.mrf.mxu0
  %v640 = vadd.f32 %v602, %v639
  %641 = vmatmul.f32.gmra.mxu0 %v427
  %v642 = vpop.f32.mrf.mxu0
  %v643 = vadd.f32 %v605, %v642
  %644 = vmatmul.f32.gmra.mxu0 %v443
  %v645 = vpop.f32.mrf.mxu0
  %v646 = vadd.f32 %v608, %v645
  %647 = vmatmul.f32.gmra.mxu0 %v459
  %v648 = vpop.f32.mrf.mxu0
  %v649 = vadd.f32 %v611, %v648
  %650 = vmatmul.f32.gmra.mxu0 %v475
  %v651 = vpop.f32.mrf.mxu0
  %v652 = vadd.f32 %v614, %v651
  %653 = vmatmul.f32.gmra.mxu0 %v491
  %v654 = vpop.f32.mrf.mxu0
  %v655 = vadd.f32 %v617, %v654
  %656 = vmatmul.f32.gmra.mxu0 %v507
  %v657 = vpop.f32.mrf.mxu0
  %v658 = vadd.f32 %v620, %v657
  %659 = vdwg.mxu0
  %660 = vmatpush.msra.mxu0 %v258
  %661 = vmatpush.msra.mxu0 %v257
  %662 = vmatpush.msra.mxu0 %v256
  %663 = vmatpush.msra.mxu0 %v255
  %664 = vmatpush.msra.mxu0 %v254
  %665 = vmatpush.msra.mxu0 %v253
  %666 = vmatpush.msra.mxu0 %v252
  %667 = vmatpush.msra.mxu0 %v251
  %668 = vmatpush.msra.mxu0 %v250
  %669 = vmatpush.msra.mxu0 %v249
  %670 = vmatpush.msra.mxu0 %v248
  %671 = vmatpush.msra.mxu0 %v247
  %672 = vmatpush.msra.mxu0 %v246
  %673 = vmatpush.msra.mxu0 %v245
  %674 = vmatpush.msra.mxu0 %v244
  %675 = vmatpush.msra.mxu0 %v243
  %676 = vmatmul.f32.gmra.mxu0 %v408
  %v677 = vpop.f32.mrf.mxu0
  %v678 = vadd.f32 %v640, %v677
  %679 = vmatmul.f32.gmra.mxu0 %v429
  %v680 = vpop.f32.mrf.mxu0
  %v681 = vadd.f32 %v643, %v680
  %682 = vmatmul.f32.gmra.mxu0 %v445
  %v683 = vpop.f32.mrf.mxu0
  %v684 = vadd.f32 %v646, %v683
  %685 = vmatmul.f32.gmra.mxu0 %v461
  %v686 = vpop.f32.mrf.mxu0
  %v687 = vadd.f32 %v649, %v686
  %688 = vmatmul.f32.gmra.mxu0 %v477
  %v689 = vpop.f32.mrf.mxu0
  %v690 = vadd.f32 %v652, %v689
  %691 = vmatmul.f32.gmra.mxu0 %v493
  %v692 = vpop.f32.mrf.mxu0
  %v693 = vadd.f32 %v655, %v692
  %694 = vmatmul.f32.gmra.mxu0 %v509
  %v695 = vpop.f32.mrf.mxu0
  %v696 = vadd.f32 %v658, %v695
  %697 = vdwg.mxu0
  %698 = vmatpush.msra.mxu0 %v274
  %699 = vmatpush.msra.mxu0 %v273
  %700 = vmatpush.msra.mxu0 %v272
  %701 = vmatpush.msra.mxu0 %v271
  %702 = vmatpush.msra.mxu0 %v270
  %703 = vmatpush.msra.mxu0 %v269
  %704 = vmatpush.msra.mxu0 %v268
  %705 = vmatpush.msra.mxu0 %v267
  %706 = vmatpush.msra.mxu0 %v266
  %707 = vmatpush.msra.mxu0 %v265
  %708 = vmatpush.msra.mxu0 %v264
  %709 = vmatpush.msra.mxu0 %v263
  %710 = vmatpush.msra.mxu0 %v262
  %711 = vmatpush.msra.mxu0 %v261
  %712 = vmatpush.msra.mxu0 %v260
  %713 = vmatpush.msra.mxu0 %v259
  %714 = vmatmul.f32.gmra.mxu0 %v411
  %v715 = vpop.f32.mrf.mxu0
  %v716 = vadd.f32 %v678, %v715
  %717 = vmatmul.f32.gmra.mxu0 %v431
  %v718 = vpop.f32.mrf.mxu0
  %v719 = vadd.f32 %v681, %v718
  %720 = vmatmul.f32.gmra.mxu0 %v447
  %v721 = vpop.f32.mrf.mxu0
  %v722 = vadd.f32 %v684, %v721
  %723 = vmatmul.f32.gmra.mxu0 %v463
  %v724 = vpop.f32.mrf.mxu0
  %v725 = vadd.f32 %v687, %v724
  %726 = vmatmul.f32.gmra.mxu0 %v479
  %v727 = vpop.f32.mrf.mxu0
  %v728 = vadd.f32 %v690, %v727
  %729 = vmatmul.f32.gmra.mxu0 %v495
  %v730 = vpop.f32.mrf.mxu0
  %v731 = vadd.f32 %v693, %v730
  %732 = vmatmul.f32.gmra.mxu0 %v511
  %v733 = vpop.f32.mrf.mxu0
  %v734 = vadd.f32 %v696, %v733
  %735 = vdwg.mxu0
  %736 = vmatpush.msra.mxu0 %v290
  %737 = vmatpush.msra.mxu0 %v289
  %738 = vmatpush.msra.mxu0 %v288
  %739 = vmatpush.msra.mxu0 %v287
  %740 = vmatpush.msra.mxu0 %v286
  %741 = vmatpush.msra.mxu0 %v285
  %742 = vmatpush.msra.mxu0 %v284
  %743 = vmatpush.msra.mxu0 %v283
  %744 = vmatpush.msra.mxu0 %v282
  %745 = vmatpush.msra.mxu0 %v281
  %746 = vmatpush.msra.mxu0 %v280
  %747 = vmatpush.msra.mxu0 %v279
  %748 = vmatpush.msra.mxu0 %v278
  %749 = vmatpush.msra.mxu0 %v277
  %750 = vmatpush.msra.mxu0 %v276
  %751 = vmatpush.msra.mxu0 %v275
  %752 = vmatmul.f32.gmra.mxu0 %v414
  %v753 = vpop.f32.mrf.mxu0
  %v754 = vadd.f32 %v716, %v753
  %755 = vmatmul.f32.gmra.mxu0 %v433
  %v756 = vpop.f32.mrf.mxu0
  %v757 = vadd.f32 %v719, %v756
  %758 = vmatmul.f32.gmra.mxu0 %v449
  %v759 = vpop.f32.mrf.mxu0
  %v760 = vadd.f32 %v722, %v759
  %761 = vmatmul.f32.gmra.mxu0 %v465
  %v762 = vpop.f32.mrf.mxu0
  %v763 = vadd.f32 %v725, %v762
  %764 = vmatmul.f32.gmra.mxu0 %v481
  %v765 = vpop.f32.mrf.mxu0
  %v766 = vadd.f32 %v728, %v765
  %767 = vmatmul.f32.gmra.mxu0 %v497
  %v768 = vpop.f32.mrf.mxu0
  %v769 = vadd.f32 %v731, %v768
  %770 = vmatmul.f32.gmra.mxu0 %v513
  %v771 = vpop.f32.mrf.mxu0
  %v772 = vadd.f32 %v734, %v771
  %773 = vdwg.mxu0
  %774 = vmatpush.msra.mxu0 %v306
  %775 = vmatpush.msra.mxu0 %v305
  %776 = vmatpush.msra.mxu0 %v304
  %777 = vmatpush.msra.mxu0 %v303
  %778 = vmatpush.msra.mxu0 %v302
  %779 = vmatpush.msra.mxu0 %v301
  %780 = vmatpush.msra.mxu0 %v300
  %781 = vmatpush.msra.mxu0 %v299
  %782 = vmatpush.msra.mxu0 %v298
  %783 = vmatpush.msra.mxu0 %v297
  %784 = vmatpush.msra.mxu0 %v296
  %785 = vmatpush.msra.mxu0 %v295
  %786 = vmatpush.msra.mxu0 %v294
  %787 = vmatpush.msra.mxu0 %v293
  %788 = vmatpush.msra.mxu0 %v292
  %789 = vmatpush.msra.mxu0 %v291
  %790 = vmatmul.f32.gmra.mxu0 %v417
  %v791 = vpop.f32.mrf.mxu0
  %v792 = vadd.f32 %v754, %v791
  %793 = vmatmul.f32.gmra.mxu0 %v435
  %v794 = vpop.f32.mrf.mxu0
  %v795 = vadd.f32 %v757, %v794
  %796 = vmatmul.f32.gmra.mxu0 %v451
  %v797 = vpop.f32.mrf.mxu0
  %v798 = vadd.f32 %v760, %v797
  %799 = vmatmul.f32.gmra.mxu0 %v467
  %v800 = vpop.f32.mrf.mxu0
  %v801 = vadd.f32 %v763, %v800
  %802 = vmatmul.f32.gmra.mxu0 %v483
  %v803 = vpop.f32.mrf.mxu0
  %v804 = vadd.f32 %v766, %v803
  %805 = vmatmul.f32.gmra.mxu0 %v499
  %v806 = vpop.f32.mrf.mxu0
  %v807 = vadd.f32 %v769, %v806
  %808 = vmatmul.f32.gmra.mxu0 %v515
  %v809 = vpop.f32.mrf.mxu0
  %v810 = vadd.f32 %v772, %v809
  %811 = vdwg.mxu0
  %812 = vmatpush.msra.mxu0 %v322
  %813 = vmatpush.msra.mxu0 %v321
  %814 = vmatpush.msra.mxu0 %v320
  %815 = vmatpush.msra.mxu0 %v319
  %816 = vmatpush.msra.mxu0 %v318
  %817 = vmatpush.msra.mxu0 %v317
  %818 = vmatpush.msra.mxu0 %v316
  %819 = vmatpush.msra.mxu0 %v315
  %820 = vmatpush.msra.mxu0 %v314
  %821 = vmatpush.msra.mxu0 %v313
  %822 = vmatpush.msra.mxu0 %v312
  %823 = vmatpush.msra.mxu0 %v311
  %824 = vmatpush.msra.mxu0 %v310
  %825 = vmatpush.msra.mxu0 %v309
  %826 = vmatpush.msra.mxu0 %v308
  %827 = vmatpush.msra.mxu0 %v307
  %828 = vmatmul.f32.gmra.mxu0 %v420
  %v829 = vpop.f32.mrf.mxu0
  %v830 = vadd.f32 %v792, %v829
  %831 = vmatmul.f32.gmra.mxu0 %v437
  %v832 = vpop.f32.mrf.mxu0
  %v833 = vadd.f32 %v795, %v832
  %834 = vmatmul.f32.gmra.mxu0 %v453
  %v835 = vpop.f32.mrf.mxu0
  %v836 = vadd.f32 %v798, %v835
  %837 = vmatmul.f32.gmra.mxu0 %v469
  %v838 = vpop.f32.mrf.mxu0
  %v839 = vadd.f32 %v801, %v838
  %840 = vmatmul.f32.gmra.mxu0 %v485
  %v841 = vpop.f32.mrf.mxu0
  %v842 = vadd.f32 %v804, %v841
  %843 = vmatmul.f32.gmra.mxu0 %v501
  %v844 = vpop.f32.mrf.mxu0
  %v845 = vadd.f32 %v807, %v844
  %846 = vmatmul.f32.gmra.mxu0 %v517
  %v847 = vpop.f32.mrf.mxu0
  %v848 = vadd.f32 %v810, %v847
  %849 = vdwg.mxu0
  %850 = vmatpush.msra.mxu0 0.0
  %851 = vmatpush.msra.mxu0 0.0
  %852 = vmatpush.msra.mxu0 0.0
  %853 = vmatpush.msra.mxu0 0.0
  %854 = vmatpush.msra.mxu0 %v334
  %855 = vmatpush.msra.mxu0 %v333
  %856 = vmatpush.msra.mxu0 %v332
  %857 = vmatpush.msra.mxu0 %v331
  %858 = vmatpush.msra.mxu0 %v330
  %859 = vmatpush.msra.mxu0 %v329
  %860 = vmatpush.msra.mxu0 %v328
  %861 = vmatpush.msra.mxu0 %v327
  %862 = vmatpush.msra.mxu0 %v326
  %863 = vmatpush.msra.mxu0 %v325
  %864 = vmatpush.msra.mxu0 %v324
  %865 = vmatpush.msra.mxu0 %v323
  %866 = vmatmul.f32.gmra.mxu0 %v570
  %v867 = vpop.f32.mrf.mxu0
  %v868 = vadd.f32 %v830, %v867
  %869 = vmatmul.f32.gmra.mxu0 %v572
  %v870 = vpop.f32.mrf.mxu0
  %v871 = vadd.f32 %v833, %v870
  %872 = vmatmul.f32.gmra.mxu0 %v574
  %v873 = vpop.f32.mrf.mxu0
  %v874 = vadd.f32 %v836, %v873
  %875 = vmatmul.f32.gmra.mxu0 %v576
  %v876 = vpop.f32.mrf.mxu0
  %v877 = vadd.f32 %v839, %v876
  %878 = vmatmul.f32.gmra.mxu0 %v578
  %v879 = vpop.f32.mrf.mxu0
  %v880 = vadd.f32 %v842, %v879
  %881 = vmatmul.f32.gmra.mxu0 %v580
  %v882 = vpop.f32.mrf.mxu0
  %v883 = vadd.f32 %v845, %v882
  %884 = vmatmul.f32.gmra.mxu0 %v582
  %v885 = vpop.f32.mrf.mxu0
  %v886 = vadd.f32 %v848, %v885
  %887 = vdwg.mxu0
  %v889 = vsel %vm569, %v21, 0
  %v891 = vsel %vm569, %v29, 0
  %v893 = vsel %vm569, %v37, 0
  %v895 = vsel %vm569, %v45, 0
  %v897 = vsel %vm569, %v53, 0
  %v899 = vsel %vm569, %v61, 0
  %v901 = vsel %vm569, %v69, 0
  %903 = vmatpush.msra.mxu0 %v85
  %904 = vmatpush.msra.mxu0 %v84
  %905 = vmatpush.msra.mxu0 %v83
  %906 = vmatpush.msra.mxu0 %v82
  %907 = vmatpush.msra.mxu0 %v81
  %908 = vmatpush.msra.mxu0 %v80
  %909 = vmatpush.msra.mxu0 %v79
  %910 = vmatpush.msra.mxu0 %v78
  %911 = vmatpush.msra.mxu0 %v77
  %912 = vmatpush.msra.mxu0 %v76
  %913 = vmatpush.msra.mxu0 %v75
  %914 = vmatpush.msra.mxu0 %v74
  %915 = vmatpush.msra.mxu0 %v73
  %916 = vmatpush.msra.mxu0 %v72
  %917 = vmatpush.msra.mxu0 %v71
  %918 = vmatpush.msra.mxu0 %v70
  %919 = vmatmul.f32.gmra.mxu0 %v14
  %v920 = vpop.f32.mrf.mxu0
  %v921 = vadd.f32 %v868, %v920
  %922 = vmatmul.f32.gmra.mxu0 %v22
  %v923 = vpop.f32.mrf.mxu0
  %v924 = vadd.f32 %v871, %v923
  %925 = vmatmul.f32.gmra.mxu0 %v30
  %v926 = vpop.f32.mrf.mxu0
  %v927 = vadd.f32 %v874, %v926
  %928 = vmatmul.f32.gmra.mxu0 %v38
  %v929 = vpop.f32.mrf.mxu0
  %v930 = vadd.f32 %v877, %v929
  %931 = vmatmul.f32.gmra.mxu0 %v46
  %v932 = vpop.f32.mrf.mxu0
  %v933 = vadd.f32 %v880, %v932
  %934 = vmatmul.f32.gmra.mxu0 %v54
  %v935 = vpop.f32.mrf.mxu0
  %v936 = vadd.f32 %v883, %v935
  %937 = vmatmul.f32.gmra.mxu0 %v62
  %v938 = vpop.f32.mrf.mxu0
  %v939 = vadd.f32 %v886, %v938
  %940 = vdwg.mxu0
  %941 = vmatpush.msra.mxu0 %v101
  %942 = vmatpush.msra.mxu0 %v100
  %943 = vmatpush.msra.mxu0 %v99
  %944 = vmatpush.msra.mxu0 %v98
  %945 = vmatpush.msra.mxu0 %v97
  %946 = vmatpush.msra.mxu0 %v96
  %947 = vmatpush.msra.mxu0 %v95
  %948 = vmatpush.msra.mxu0 %v94
  %949 = vmatpush.msra.mxu0 %v93
  %950 = vmatpush.msra.mxu0 %v92
  %951 = vmatpush.msra.mxu0 %v91
  %952 = vmatpush.msra.mxu0 %v90
  %953 = vmatpush.msra.mxu0 %v89
  %954 = vmatpush.msra.mxu0 %v88
  %955 = vmatpush.msra.mxu0 %v87
  %956 = vmatpush.msra.mxu0 %v86
  %957 = vmatmul.f32.gmra.mxu0 %v15
  %v958 = vpop.f32.mrf.mxu0
  %v959 = vadd.f32 %v921, %v958
  %960 = vmatmul.f32.gmra.mxu0 %v23
  %v961 = vpop.f32.mrf.mxu0
  %v962 = vadd.f32 %v924, %v961
  %963 = vmatmul.f32.gmra.mxu0 %v31
  %v964 = vpop.f32.mrf.mxu0
  %v965 = vadd.f32 %v927, %v964
  %966 = vmatmul.f32.gmra.mxu0 %v39
  %v967 = vpop.f32.mrf.mxu0
  %v968 = vadd.f32 %v930, %v967
  %969 = vmatmul.f32.gmra.mxu0 %v47
  %v970 = vpop.f32.mrf.mxu0
  %v971 = vadd.f32 %v933, %v970
  %972 = vmatmul.f32.gmra.mxu0 %v55
  %v973 = vpop.f32.mrf.mxu0
  %v974 = vadd.f32 %v936, %v973
  %975 = vmatmul.f32.gmra.mxu0 %v63
  %v976 = vpop.f32.mrf.mxu0
  %v977 = vadd.f32 %v939, %v976
  %978 = vdwg.mxu0
  %979 = vmatpush.msra.mxu0 %v117
  %980 = vmatpush.msra.mxu0 %v116
  %981 = vmatpush.msra.mxu0 %v115
  %982 = vmatpush.msra.mxu0 %v114
  %983 = vmatpush.msra.mxu0 %v113
  %984 = vmatpush.msra.mxu0 %v112
  %985 = vmatpush.msra.mxu0 %v111
  %986 = vmatpush.msra.mxu0 %v110
  %987 = vmatpush.msra.mxu0 %v109
  %988 = vmatpush.msra.mxu0 %v108
  %989 = vmatpush.msra.mxu0 %v107
  %990 = vmatpush.msra.mxu0 %v106
  %991 = vmatpush.msra.mxu0 %v105
  %992 = vmatpush.msra.mxu0 %v104
  %993 = vmatpush.msra.mxu0 %v103
  %994 = vmatpush.msra.mxu0 %v102
  %995 = vmatmul.f32.gmra.mxu0 %v16
  %v996 = vpop.f32.mrf.mxu0
  %v997 = vadd.f32 %v959, %v996
  %998 = vmatmul.f32.gmra.mxu0 %v24
  %v999 = vpop.f32.mrf.mxu0
  %v1000 = vadd.f32 %v962, %v999
  %1001 = vmatmul.f32.gmra.mxu0 %v32
  %v1002 = vpop.f32.mrf.mxu0
  %v1003 = vadd.f32 %v965, %v1002
  %1004 = vmatmul.f32.gmra.mxu0 %v40
  %v1005 = vpop.f32.mrf.mxu0
  %v1006 = vadd.f32 %v968, %v1005
  %1007 = vmatmul.f32.gmra.mxu0 %v48
  %v1008 = vpop.f32.mrf.mxu0
  %v1009 = vadd.f32 %v971, %v1008
  %1010 = vmatmul.f32.gmra.mxu0 %v56
  %v1011 = vpop.f32.mrf.mxu0
  %v1012 = vadd.f32 %v974, %v1011
  %1013 = vmatmul.f32.gmra.mxu0 %v64
  %v1014 = vpop.f32.mrf.mxu0
  %v1015 = vadd.f32 %v977, %v1014
  %1016 = vdwg.mxu0
  %1017 = vmatpush.msra.mxu0 %v133
  %1018 = vmatpush.msra.mxu0 %v132
  %1019 = vmatpush.msra.mxu0 %v131
  %1020 = vmatpush.msra.mxu0 %v130
  %1021 = vmatpush.msra.mxu0 %v129
  %1022 = vmatpush.msra.mxu0 %v128
  %1023 = vmatpush.msra.mxu0 %v127
  %1024 = vmatpush.msra.mxu0 %v126
  %1025 = vmatpush.msra.mxu0 %v125
  %1026 = vmatpush.msra.mxu0 %v124
  %1027 = vmatpush.msra.mxu0 %v123
  %1028 = vmatpush.msra.mxu0 %v122
  %1029 = vmatpush.msra.mxu0 %v121
  %1030 = vmatpush.msra.mxu0 %v120
  %1031 = vmatpush.msra.mxu0 %v119
  %1032 = vmatpush.msra.mxu0 %v118
  %1033 = vmatmul.f32.gmra.mxu0 %v17
  %v1034 = vpop.f32.mrf.mxu0
  %v1035 = vadd.f32 %v997, %v1034
  %1036 = vmatmul.f32.gmra.mxu0 %v25
  %v1037 = vpop.f32.mrf.mxu0
  %v1038 = vadd.f32 %v1000, %v1037
  %1039 = vmatmul.f32.gmra.mxu0 %v33
  %v1040 = vpop.f32.mrf.mxu0
  %v1041 = vadd.f32 %v1003, %v1040
  %1042 = vmatmul.f32.gmra.mxu0 %v41
  %v1043 = vpop.f32.mrf.mxu0
  %v1044 = vadd.f32 %v1006, %v1043
  %1045 = vmatmul.f32.gmra.mxu0 %v49
  %v1046 = vpop.f32.mrf.mxu0
  %v1047 = vadd.f32 %v1009, %v1046
  %1048 = vmatmul.f32.gmra.mxu0 %v57
  %v1049 = vpop.f32.mrf.mxu0
  %v1050 = vadd.f32 %v1012, %v1049
  %1051 = vmatmul.f32.gmra.mxu0 %v65
  %v1052 = vpop.f32.mrf.mxu0
  %v1053 = vadd.f32 %v1015, %v1052
  %1054 = vdwg.mxu0
  %1055 = vmatpush.msra.mxu0 %v149
  %1056 = vmatpush.msra.mxu0 %v148
  %1057 = vmatpush.msra.mxu0 %v147
  %1058 = vmatpush.msra.mxu0 %v146
  %1059 = vmatpush.msra.mxu0 %v145
  %1060 = vmatpush.msra.mxu0 %v144
  %1061 = vmatpush.msra.mxu0 %v143
  %1062 = vmatpush.msra.mxu0 %v142
  %1063 = vmatpush.msra.mxu0 %v141
  %1064 = vmatpush.msra.mxu0 %v140
  %1065 = vmatpush.msra.mxu0 %v139
  %1066 = vmatpush.msra.mxu0 %v138
  %1067 = vmatpush.msra.mxu0 %v137
  %1068 = vmatpush.msra.mxu0 %v136
  %1069 = vmatpush.msra.mxu0 %v135
  %1070 = vmatpush.msra.mxu0 %v134
  %1071 = vmatmul.f32.gmra.mxu0 %v18
  %v1072 = vpop.f32.mrf.mxu0
  %v1073 = vadd.f32 %v1035, %v1072
  %1074 = vmatmul.f32.gmra.mxu0 %v26
  %v1075 = vpop.f32.mrf.mxu0
  %v1076 = vadd.f32 %v1038, %v1075
  %1077 = vmatmul.f32.gmra.mxu0 %v34
  %v1078 = vpop.f32.mrf.mxu0
  %v1079 = vadd.f32 %v1041, %v1078
  %1080 = vmatmul.f32.gmra.mxu0 %v42
  %v1081 = vpop.f32.mrf.mxu0
  %v1082 = vadd.f32 %v1044, %v1081
  %1083 = vmatmul.f32.gmra.mxu0 %v50
  %v1084 = vpop.f32.mrf.mxu0
  %v1085 = vadd.f32 %v1047, %v1084
  %1086 = vmatmul.f32.gmra.mxu0 %v58
  %v1087 = vpop.f32.mrf.mxu0
  %v1088 = vadd.f32 %v1050, %v1087
  %1089 = vmatmul.f32.gmra.mxu0 %v66
  %v1090 = vpop.f32.mrf.mxu0
  %v1091 = vadd.f32 %v1053, %v1090
  %1092 = vdwg.mxu0
  %1093 = vmatpush.msra.mxu0 %v165
  %1094 = vmatpush.msra.mxu0 %v164
  %1095 = vmatpush.msra.mxu0 %v163
  %1096 = vmatpush.msra.mxu0 %v162
  %1097 = vmatpush.msra.mxu0 %v161
  %1098 = vmatpush.msra.mxu0 %v160
  %1099 = vmatpush.msra.mxu0 %v159
  %1100 = vmatpush.msra.mxu0 %v158
  %1101 = vmatpush.msra.mxu0 %v157
  %1102 = vmatpush.msra.mxu0 %v156
  %1103 = vmatpush.msra.mxu0 %v155
  %1104 = vmatpush.msra.mxu0 %v154
  %1105 = vmatpush.msra.mxu0 %v153
  %1106 = vmatpush.msra.mxu0 %v152
  %1107 = vmatpush.msra.mxu0 %v151
  %1108 = vmatpush.msra.mxu0 %v150
  %1109 = vmatmul.f32.gmra.mxu0 %v19
  %v1110 = vpop.f32.mrf.mxu0
  %v1111 = vadd.f32 %v1073, %v1110
  %1112 = vmatmul.f32.gmra.mxu0 %v27
  %v1113 = vpop.f32.mrf.mxu0
  %v1114 = vadd.f32 %v1076, %v1113
  %1115 = vmatmul.f32.gmra.mxu0 %v35
  %v1116 = vpop.f32.mrf.mxu0
  %v1117 = vadd.f32 %v1079, %v1116
  %1118 = vmatmul.f32.gmra.mxu0 %v43
  %v1119 = vpop.f32.mrf.mxu0
  %v1120 = vadd.f32 %v1082, %v1119
  %1121 = vmatmul.f32.gmra.mxu0 %v51
  %v1122 = vpop.f32.mrf.mxu0
  %v1123 = vadd.f32 %v1085, %v1122
  %1124 = vmatmul.f32.gmra.mxu0 %v59
  %v1125 = vpop.f32.mrf.mxu0
  %v1126 = vadd.f32 %v1088, %v1125
  %1127 = vmatmul.f32.gmra.mxu0 %v67
  %v1128 = vpop.f32.mrf.mxu0
  %v1129 = vadd.f32 %v1091, %v1128
  %1130 = vdwg.mxu0
  %1131 = vmatpush.msra.mxu0 %v181
  %1132 = vmatpush.msra.mxu0 %v180
  %1133 = vmatpush.msra.mxu0 %v179
  %1134 = vmatpush.msra.mxu0 %v178
  %1135 = vmatpush.msra.mxu0 %v177
  %1136 = vmatpush.msra.mxu0 %v176
  %1137 = vmatpush.msra.mxu0 %v175
  %1138 = vmatpush.msra.mxu0 %v174
  %1139 = vmatpush.msra.mxu0 %v173
  %1140 = vmatpush.msra.mxu0 %v172
  %1141 = vmatpush.msra.mxu0 %v171
  %1142 = vmatpush.msra.mxu0 %v170
  %1143 = vmatpush.msra.mxu0 %v169
  %1144 = vmatpush.msra.mxu0 %v168
  %1145 = vmatpush.msra.mxu0 %v167
  %1146 = vmatpush.msra.mxu0 %v166
  %1147 = vmatmul.f32.gmra.mxu0 %v20
  %v1148 = vpop.f32.mrf.mxu0
  %v1149 = vadd.f32 %v1111, %v1148
  %1150 = vmatmul.f32.gmra.mxu0 %v28
  %v1151 = vpop.f32.mrf.mxu0
  %v1152 = vadd.f32 %v1114, %v1151
  %1153 = vmatmul.f32.gmra.mxu0 %v36
  %v1154 = vpop.f32.mrf.mxu0
  %v1155 = vadd.f32 %v1117, %v1154
  %1156 = vmatmul.f32.gmra.mxu0 %v44
  %v1157 = vpop.f32.mrf.mxu0
  %v1158 = vadd.f32 %v1120, %v1157
  %1159 = vmatmul.f32.gmra.mxu0 %v52
  %v1160 = vpop.f32.mrf.mxu0
  %v1161 = vadd.f32 %v1123, %v1160
  %1162 = vmatmul.f32.gmra.mxu0 %v60
  %v1163 = vpop.f32.mrf.mxu0
  %v1164 = vadd.f32 %v1126, %v1163
  %1165 = vmatmul.f32.gmra.mxu0 %v68
  %v1166 = vpop.f32.mrf.mxu0
  %v1167 = vadd.f32 %v1129, %v1166
  %1168 = vdwg.mxu0
  %1169 = vmatpush.msra.mxu0 0.0
  %1170 = vmatpush.msra.mxu0 0.0
  %1171 = vmatpush.msra.mxu0 0.0
  %1172 = vmatpush.msra.mxu0 0.0
  %1173 = vmatpush.msra.mxu0 %v193
  %1174 = vmatpush.msra.mxu0 %v192
  %1175 = vmatpush.msra.mxu0 %v191
  %1176 = vmatpush.msra.mxu0 %v190
  %1177 = vmatpush.msra.mxu0 %v189
  %1178 = vmatpush.msra.mxu0 %v188
  %1179 = vmatpush.msra.mxu0 %v187
  %1180 = vmatpush.msra.mxu0 %v186
  %1181 = vmatpush.msra.mxu0 %v185
  %1182 = vmatpush.msra.mxu0 %v184
  %1183 = vmatpush.msra.mxu0 %v183
  %1184 = vmatpush.msra.mxu0 %v182
  %1185 = vmatmul.f32.gmra.mxu0 %v889
  %v1186 = vpop.f32.mrf.mxu0
  %v1187 = vadd.f32 %v1149, %v1186
  %1188 = vmatmul.f32.gmra.mxu0 %v891
  %v1189 = vpop.f32.mrf.mxu0
  %v1190 = vadd.f32 %v1152, %v1189
  %1191 = vmatmul.f32.gmra.mxu0 %v893
  %v1192 = vpop.f32.mrf.mxu0
  %v1193 = vadd.f32 %v1155, %v1192
  %1194 = vmatmul.f32.gmra.mxu0 %v895
  %v1195 = vpop.f32.mrf.mxu0
  %v1196 = vadd.f32 %v1158, %v1195
  %1197 = vmatmul.f32.gmra.mxu0 %v897
  %v1198 = vpop.f32.mrf.mxu0
  %v1199 = vadd.f32 %v1161, %v1198
  %1200 = vmatmul.f32.gmra.mxu0 %v899
  %v1201 = vpop.f32.mrf.mxu0
  %v1202 = vadd.f32 %v1164, %v1201
  %1203 = vmatmul.f32.gmra.mxu0 %v901
  %v1204 = vpop.f32.mrf.mxu0
  %v1205 = vadd.f32 %v1167, %v1204
  %1206 = vdwg.mxu0
  %v1207 = vld [vmem:[%s0] sm:$0xf0]
  %v1208 = vld [vmem:[%s0 + $0x8] sm:$0xf0]
  %v1209 = vld [vmem:[%s0 + $0x10] sm:$0xf0]
  %v1210 = vld [vmem:[%s0 + $0x18] sm:$0xf0]
  %v1211 = vld [vmem:[%s0 + $0x20] sm:$0xf0]
  %v1212 = vld [vmem:[%s0 + $0x28] sm:$0xf0]
  %v1213 = vld [vmem:[%s0 + $0x30] sm:$0xf0]
  %v1214 = vld [vmem:[%s0 + $0x38] sm:$0xf0]
  %v1215 = vld [vmem:[%s0 + $0x1c0] sm:$0xf]
  %v1216 = vld [vmem:[%s0 + $0x1c8] sm:$0xf]
  %v1217 = vld [vmem:[%s0 + $0x1d0] sm:$0xf]
  %v1218 = vld [vmem:[%s0 + $0x1d8] sm:$0xf]
  %v1219 = vld [vmem:[%s0 + $0x1e0] sm:$0xf]
  %v1220 = vld [vmem:[%s0 + $0x1e8] sm:$0xf]
  %v1221 = vld [vmem:[%s0 + $0x1f0] sm:$0xf]
  %v1222 = vld [vmem:[%s0 + $0x1f8] sm:$0xf]
  %s1223 = scalar_lea.vmem %s1, 1984
  %v1224 = vld [vmem:[%s1223] sm:$0xff]
  %v1225 = vld [vmem:[%s1223 + $0x8] sm:$0xff]
  %v1226 = vld [vmem:[%s1223 + $0x10] sm:$0xff]
  %v1227 = vld [vmem:[%s1223 + $0x18] sm:$0xff]
  %v1228 = vld [vmem:[%s1223 + $0x20] sm:$0xff]
  %v1229 = vld [vmem:[%s1223 + $0x28] sm:$0xff]
  %v1230 = vld [vmem:[%s1223 + $0x30] sm:$0xff]
  %v1231 = vld [vmem:[%s1223 + $0x38] sm:$0xff]
  %v1232 = vld [vmem:[%s1223 + $0x40] sm:$0xff]
  %v1233 = vld [vmem:[%s1223 + $0x48] sm:$0xff]
  %v1234 = vld [vmem:[%s1223 + $0x50] sm:$0xff]
  %v1235 = vld [vmem:[%s1223 + $0x58] sm:$0xff]
  %v1236 = vld [vmem:[%s1223 + $0x60] sm:$0xff]
  %v1237 = vld [vmem:[%s1223 + $0x68] sm:$0xff]
  %v1238 = vld [vmem:[%s1223 + $0x70] sm:$0xff]
  %v1239 = vld [vmem:[%s1223 + $0x78] sm:$0xff]
  %v1240 = vld [vmem:[%s1223 + $0x80] sm:$0xff]
  %v1241 = vld [vmem:[%s1223 + $0x88] sm:$0xff]
  %v1242 = vld [vmem:[%s1223 + $0x90] sm:$0xff]
  %v1243 = vld [vmem:[%s1223 + $0x98] sm:$0xff]
  %v1244 = vld [vmem:[%s1223 + $0xa0] sm:$0xff]
  %v1245 = vld [vmem:[%s1223 + $0xa8] sm:$0xff]
  %v1246 = vld [vmem:[%s1223 + $0xb0] sm:$0xff]
  %v1247 = vld [vmem:[%s1223 + $0xb8] sm:$0xff]
  %v1248 = vld [vmem:[%s1223 + $0xc0] sm:$0xff]
  %v1249 = vld [vmem:[%s1223 + $0xc8] sm:$0xff]
  %v1250 = vld [vmem:[%s1223 + $0xd0] sm:$0xff]
  %v1251 = vld [vmem:[%s1223 + $0xd8] sm:$0xff]
  %v1252 = vld [vmem:[%s1223 + $0xe0] sm:$0xff]
  %v1253 = vld [vmem:[%s1223 + $0xe8] sm:$0xff]
  %v1254 = vld [vmem:[%s1223 + $0xf0] sm:$0xff]
  %v1255 = vld [vmem:[%s1223 + $0xf8] sm:$0xff]
  %v1256 = vld [vmem:[%s1223 + $0x100] sm:$0xff]
  %v1257 = vld [vmem:[%s1223 + $0x108] sm:$0xff]
  %v1258 = vld [vmem:[%s1223 + $0x110] sm:$0xff]
  %v1259 = vld [vmem:[%s1223 + $0x118] sm:$0xff]
  %v1260 = vld [vmem:[%s1223 + $0x120] sm:$0xff]
  %v1261 = vld [vmem:[%s1223 + $0x128] sm:$0xff]
  %v1262 = vld [vmem:[%s1223 + $0x130] sm:$0xff]
  %v1263 = vld [vmem:[%s1223 + $0x138] sm:$0xff]
  %v1264 = vld [vmem:[%s1223 + $0x140] sm:$0xff]
  %v1265 = vld [vmem:[%s1223 + $0x148] sm:$0xff]
  %v1266 = vld [vmem:[%s1223 + $0x150] sm:$0xff]
  %v1267 = vld [vmem:[%s1223 + $0x158] sm:$0xff]
  %v1268 = vld [vmem:[%s1223 + $0x160] sm:$0xff]
  %v1269 = vld [vmem:[%s1223 + $0x168] sm:$0xff]
  %v1270 = vld [vmem:[%s1223 + $0x170] sm:$0xff]
  %v1271 = vld [vmem:[%s1223 + $0x178] sm:$0xff]
  %v1272 = vld [vmem:[%s1223 + $0x180] sm:$0xff]
  %v1273 = vld [vmem:[%s1223 + $0x188] sm:$0xff]
  %v1274 = vld [vmem:[%s1223 + $0x190] sm:$0xff]
  %v1275 = vld [vmem:[%s1223 + $0x198] sm:$0xff]
  %v1276 = vld [vmem:[%s1223 + $0x1a0] sm:$0xff]
  %v1277 = vld [vmem:[%s1223 + $0x1a8] sm:$0xff]
  %v1278 = vld [vmem:[%s1223 + $0x1b0] sm:$0xff]
  %v1279 = vld [vmem:[%s1223 + $0x1b8] sm:$0xff]
  %v1280 = vld [vmem:[%s1223 + $0x1c0] sm:$0xff]
  %v1281 = vld [vmem:[%s1223 + $0x1c8] sm:$0xff]
  %v1282 = vld [vmem:[%s1223 + $0x1d0] sm:$0xff]
  %v1283 = vld [vmem:[%s1223 + $0x1d8] sm:$0xff]
  %v1284 = vld [vmem:[%s1223 + $0x1e0] sm:$0xff]
  %v1285 = vld [vmem:[%s1223 + $0x1e8] sm:$0xff]
  %v1286 = vld [vmem:[%s1223 + $0x1f0] sm:$0xff]
  %v1287 = vld [vmem:[%s1223 + $0x1f8] sm:$0xff]
  %v1288 = vld [vmem:[%s1223 + $0x200] sm:$0xff]
  %v1289 = vld [vmem:[%s1223 + $0x208] sm:$0xff]
  %v1290 = vld [vmem:[%s1223 + $0x210] sm:$0xff]
  %v1291 = vld [vmem:[%s1223 + $0x218] sm:$0xff]
  %v1292 = vld [vmem:[%s1223 + $0x220] sm:$0xff]
  %v1293 = vld [vmem:[%s1223 + $0x228] sm:$0xff]
  %v1294 = vld [vmem:[%s1223 + $0x230] sm:$0xff]
  %v1295 = vld [vmem:[%s1223 + $0x238] sm:$0xff]
  %v1296 = vld [vmem:[%s1223 + $0x240] sm:$0xff]
  %v1297 = vld [vmem:[%s1223 + $0x248] sm:$0xff]
  %v1298 = vld [vmem:[%s1223 + $0x250] sm:$0xff]
  %v1299 = vld [vmem:[%s1223 + $0x258] sm:$0xff]
  %v1300 = vld [vmem:[%s1223 + $0x260] sm:$0xff]
  %v1301 = vld [vmem:[%s1223 + $0x268] sm:$0xff]
  %v1302 = vld [vmem:[%s1223 + $0x270] sm:$0xff]
  %v1303 = vld [vmem:[%s1223 + $0x278] sm:$0xff]
  %v1304 = vld [vmem:[%s1223 + $0x280] sm:$0xff]
  %v1305 = vld [vmem:[%s1223 + $0x288] sm:$0xff]
  %v1306 = vld [vmem:[%s1223 + $0x290] sm:$0xff]
  %v1307 = vld [vmem:[%s1223 + $0x298] sm:$0xff]
  %v1308 = vld [vmem:[%s1223 + $0x2a0] sm:$0xff]
  %v1309 = vld [vmem:[%s1223 + $0x2a8] sm:$0xff]
  %v1310 = vld [vmem:[%s1223 + $0x2b0] sm:$0xff]
  %v1311 = vld [vmem:[%s1223 + $0x2b8] sm:$0xff]
  %v1312 = vld [vmem:[%s1223 + $0x2c0] sm:$0xff]
  %v1313 = vld [vmem:[%s1223 + $0x2c8] sm:$0xff]
  %v1314 = vld [vmem:[%s1223 + $0x2d0] sm:$0xff]
  %v1315 = vld [vmem:[%s1223 + $0x2d8] sm:$0xff]
  %v1316 = vld [vmem:[%s1223 + $0x2e0] sm:$0xff]
  %v1317 = vld [vmem:[%s1223 + $0x2e8] sm:$0xff]
  %v1318 = vld [vmem:[%s1223 + $0x2f0] sm:$0xff]
  %v1319 = vld [vmem:[%s1223 + $0x2f8] sm:$0xff]
  %v1320 = vld [vmem:[%s1223 + $0x300] sm:$0xff]
  %v1321 = vld [vmem:[%s1223 + $0x308] sm:$0xff]
  %v1322 = vld [vmem:[%s1223 + $0x310] sm:$0xff]
  %v1323 = vld [vmem:[%s1223 + $0x318] sm:$0xff]
  %v1324 = vld [vmem:[%s1223 + $0x320] sm:$0xff]
  %v1325 = vld [vmem:[%s1223 + $0x328] sm:$0xff]
  %v1326 = vld [vmem:[%s1223 + $0x330] sm:$0xff]
  %v1327 = vld [vmem:[%s1223 + $0x338] sm:$0xff]
  %v1328 = vld [vmem:[%s1223 + $0x340] sm:$0xff]
  %v1329 = vld [vmem:[%s1223 + $0x348] sm:$0xff]
  %v1330 = vld [vmem:[%s1223 + $0x350] sm:$0xff]
  %v1331 = vld [vmem:[%s1223 + $0x358] sm:$0xff]
  %v1332 = vld [vmem:[%s1223 + $0x360] sm:$0xff]
  %v1333 = vld [vmem:[%s1223 + $0x368] sm:$0xff]
  %v1334 = vld [vmem:[%s1223 + $0x370] sm:$0xff]
  %v1335 = vld [vmem:[%s1223 + $0x378] sm:$0xff]
  %v1336 = vld [vmem:[%s1223 + $0x380] sm:$0xff]
  %v1337 = vld [vmem:[%s1223 + $0x388] sm:$0xff]
  %v1338 = vld [vmem:[%s1223 + $0x390] sm:$0xff]
  %v1339 = vld [vmem:[%s1223 + $0x398] sm:$0xff]
  %v1340 = vld [vmem:[%s1223 + $0x3a0] sm:$0xff]
  %v1341 = vld [vmem:[%s1223 + $0x3a8] sm:$0xff]
  %v1342 = vld [vmem:[%s1223 + $0x3b0] sm:$0xff]
  %v1343 = vld [vmem:[%s1223 + $0x3b8] sm:$0xff]
  %v1344 = vld [vmem:[%s1223 + $0x3c0] sm:$0xff]
  %v1345 = vld [vmem:[%s1223 + $0x3c8] sm:$0xff]
  %v1346 = vld [vmem:[%s1223 + $0x3d0] sm:$0xff]
  %v1347 = vld [vmem:[%s1223 + $0x3d8] sm:$0xff]
  %vm1364 = vcmask 1043456
  %v1365 = vrot.slane %v1207, 4
  %v1366 = vrot.slane %v22, 4
  %v1367 = vsel %vm1364, %v1365, %v1366
  %v1368 = vrot.slane %v1208, 4
  %v1369 = vrot.slane %v23, 4
  %v1370 = vsel %vm1364, %v1368, %v1369
  %v1371 = vrot.slane %v1209, 4
  %v1372 = vrot.slane %v24, 4
  %v1373 = vsel %vm1364, %v1371, %v1372
  %v1374 = vrot.slane %v1210, 4
  %v1375 = vrot.slane %v25, 4
  %v1376 = vsel %vm1364, %v1374, %v1375
  %v1377 = vrot.slane %v1211, 4
  %v1378 = vrot.slane %v26, 4
  %v1379 = vsel %vm1364, %v1377, %v1378
  %v1380 = vrot.slane %v1212, 4
  %v1381 = vrot.slane %v27, 4
  %v1382 = vsel %vm1364, %v1380, %v1381
  %v1383 = vrot.slane %v1213, 4
  %v1384 = vrot.slane %v28, 4
  %v1385 = vsel %vm1364, %v1383, %v1384
  %v1386 = vrot.slane %v1214, 4
  %v1387 = vrot.slane %v29, 4
  %v1388 = vsel %vm1364, %v1386, %v1387
  %v1389 = vrot.slane %v30, 4
  %v1390 = vsel %vm1364, %v1366, %v1389
  %v1391 = vrot.slane %v31, 4
  %v1392 = vsel %vm1364, %v1369, %v1391
  %v1393 = vrot.slane %v32, 4
  %v1394 = vsel %vm1364, %v1372, %v1393
  %v1395 = vrot.slane %v33, 4
  %v1396 = vsel %vm1364, %v1375, %v1395
  %v1397 = vrot.slane %v34, 4
  %v1398 = vsel %vm1364, %v1378, %v1397
  %v1399 = vrot.slane %v35, 4
  %v1400 = vsel %vm1364, %v1381, %v1399
  %v1401 = vrot.slane %v36, 4
  %v1402 = vsel %vm1364, %v1384, %v1401
  %v1403 = vrot.slane %v37, 4
  %v1404 = vsel %vm1364, %v1387, %v1403
  %v1405 = vrot.slane %v38, 4
  %v1406 = vsel %vm1364, %v1389, %v1405
  %v1407 = vrot.slane %v39, 4
  %v1408 = vsel %vm1364, %v1391, %v1407
  %v1409 = vrot.slane %v40, 4
  %v1410 = vsel %vm1364, %v1393, %v1409
  %v1411 = vrot.slane %v41, 4
  %v1412 = vsel %vm1364, %v1395, %v1411
  %v1413 = vrot.slane %v42, 4
  %v1414 = vsel %vm1364, %v1397, %v1413
  %v1415 = vrot.slane %v43, 4
  %v1416 = vsel %vm1364, %v1399, %v1415
  %v1417 = vrot.slane %v44, 4
  %v1418 = vsel %vm1364, %v1401, %v1417
  %v1419 = vrot.slane %v45, 4
  %v1420 = vsel %vm1364, %v1403, %v1419
  %v1421 = vrot.slane %v46, 4
  %v1422 = vsel %vm1364, %v1405, %v1421
  %v1423 = vrot.slane %v47, 4
  %v1424 = vsel %vm1364, %v1407, %v1423
  %v1425 = vrot.slane %v48, 4
  %v1426 = vsel %vm1364, %v1409, %v1425
  %v1427 = vrot.slane %v49, 4
  %v1428 = vsel %vm1364, %v1411, %v1427
  %v1429 = vrot.slane %v50, 4
  %v1430 = vsel %vm1364, %v1413, %v1429
  %v1431 = vrot.slane %v51, 4
  %v1432 = vsel %vm1364, %v1415, %v1431
  %v1433 = vrot.slane %v52, 4
  %v1434 = vsel %vm1364, %v1417, %v1433
  %v1435 = vrot.slane %v53, 4
  %v1436 = vsel %vm1364, %v1419, %v1435
  %v1437 = vrot.slane %v54, 4
  %v1438 = vsel %vm1364, %v1421, %v1437
  %v1439 = vrot.slane %v55, 4
  %v1440 = vsel %vm1364, %v1423, %v1439
  %v1441 = vrot.slane %v56, 4
  %v1442 = vsel %vm1364, %v1425, %v1441
  %v1443 = vrot.slane %v57, 4
  %v1444 = vsel %vm1364, %v1427, %v1443
  %v1445 = vrot.slane %v58, 4
  %v1446 = vsel %vm1364, %v1429, %v1445
  %v1447 = vrot.slane %v59, 4
  %v1448 = vsel %vm1364, %v1431, %v1447
  %v1449 = vrot.slane %v60, 4
  %v1450 = vsel %vm1364, %v1433, %v1449
  %v1451 = vrot.slane %v61, 4
  %v1452 = vsel %vm1364, %v1435, %v1451
  %v1453 = vrot.slane %v62, 4
  %v1454 = vsel %vm1364, %v1437, %v1453
  %v1455 = vrot.slane %v63, 4
  %v1456 = vsel %vm1364, %v1439, %v1455
  %v1457 = vrot.slane %v64, 4
  %v1458 = vsel %vm1364, %v1441, %v1457
  %v1459 = vrot.slane %v65, 4
  %v1460 = vsel %vm1364, %v1443, %v1459
  %v1461 = vrot.slane %v66, 4
  %v1462 = vsel %vm1364, %v1445, %v1461
  %v1463 = vrot.slane %v67, 4
  %v1464 = vsel %vm1364, %v1447, %v1463
  %v1465 = vrot.slane %v68, 4
  %v1466 = vsel %vm1364, %v1449, %v1465
  %v1467 = vrot.slane %v69, 4
  %v1468 = vsel %vm1364, %v1451, %v1467
  %v1469 = vrot.slane %v1215, 4
  %v1470 = vsel %vm1364, %v1453, %v1469
  %v1471 = vrot.slane %v1216, 4
  %v1472 = vsel %vm1364, %v1455, %v1471
  %v1473 = vrot.slane %v1217, 4
  %v1474 = vsel %vm1364, %v1457, %v1473
  %v1475 = vrot.slane %v1218, 4
  %v1476 = vsel %vm1364, %v1459, %v1475
  %v1477 = vrot.slane %v1219, 4
  %v1478 = vsel %vm1364, %v1461, %v1477
  %v1479 = vrot.slane %v1220, 4
  %v1480 = vsel %vm1364, %v1463, %v1479
  %v1481 = vrot.slane %v1221, 4
  %v1482 = vsel %vm1364, %v1465, %v1481
  %v1483 = vrot.slane %v1222, 4
  %v1484 = vsel %vm1364, %v1467, %v1483
  %v1534 = vsel %vm569, %v1388, 0
  %v1536 = vsel %vm569, %v1404, 0
  %v1538 = vsel %vm569, %v1420, 0
  %v1540 = vsel %vm569, %v1436, 0
  %v1542 = vsel %vm569, %v1452, 0
  %v1544 = vsel %vm569, %v1468, 0
  %v1546 = vsel %vm569, %v1484, 0
  %1548 = vmatpush.msra.mxu0 %v1239
  %1549 = vmatpush.msra.mxu0 %v1238
  %1550 = vmatpush.msra.mxu0 %v1237
  %1551 = vmatpush.msra.mxu0 %v1236
  %1552 = vmatpush.msra.mxu0 %v1235
  %1553 = vmatpush.msra.mxu0 %v1234
  %1554 = vmatpush.msra.mxu0 %v1233
  %1555 = vmatpush.msra.mxu0 %v1232
  %1556 = vmatpush.msra.mxu0 %v1231
  %1557 = vmatpush.msra.mxu0 %v1230
  %1558 = vmatpush.msra.mxu0 %v1229
  %1559 = vmatpush.msra.mxu0 %v1228
  %1560 = vmatpush.msra.mxu0 %v1227
  %1561 = vmatpush.msra.mxu0 %v1226
  %1562 = vmatpush.msra.mxu0 %v1225
  %1563 = vmatpush.msra.mxu0 %v1224
  %1564 = vmatmul.f32.gmra.mxu0 %v1367
  %v1565 = vpop.f32.mrf.mxu0
  %v1566 = vadd.f32 0.0, %v1565
  %1567 = vmatmul.f32.gmra.mxu0 %v1390
  %v1568 = vpop.f32.mrf.mxu0
  %v1569 = vadd.f32 0.0, %v1568
  %1570 = vmatmul.f32.gmra.mxu0 %v1406
  %v1571 = vpop.f32.mrf.mxu0
  %v1572 = vadd.f32 0.0, %v1571
  %1573 = vmatmul.f32.gmra.mxu0 %v1422
  %v1574 = vpop.f32.mrf.mxu0
  %v1575 = vadd.f32 0.0, %v1574
  %1576 = vmatmul.f32.gmra.mxu0 %v1438
  %v1577 = vpop.f32.mrf.mxu0
  %v1578 = vadd.f32 0.0, %v1577
  %1579 = vmatmul.f32.gmra.mxu0 %v1454
  %v1580 = vpop.f32.mrf.mxu0
  %v1581 = vadd.f32 0.0, %v1580
  %1582 = vmatmul.f32.gmra.mxu0 %v1470
  %v1583 = vpop.f32.mrf.mxu0
  %v1584 = vadd.f32 0.0, %v1583
  %1585 = vdwg.mxu0
  %1586 = vmatpush.msra.mxu0 %v1255
  %1587 = vmatpush.msra.mxu0 %v1254
  %1588 = vmatpush.msra.mxu0 %v1253
  %1589 = vmatpush.msra.mxu0 %v1252
  %1590 = vmatpush.msra.mxu0 %v1251
  %1591 = vmatpush.msra.mxu0 %v1250
  %1592 = vmatpush.msra.mxu0 %v1249
  %1593 = vmatpush.msra.mxu0 %v1248
  %1594 = vmatpush.msra.mxu0 %v1247
  %1595 = vmatpush.msra.mxu0 %v1246
  %1596 = vmatpush.msra.mxu0 %v1245
  %1597 = vmatpush.msra.mxu0 %v1244
  %1598 = vmatpush.msra.mxu0 %v1243
  %1599 = vmatpush.msra.mxu0 %v1242
  %1600 = vmatpush.msra.mxu0 %v1241
  %1601 = vmatpush.msra.mxu0 %v1240
  %1602 = vmatmul.f32.gmra.mxu0 %v1370
  %v1603 = vpop.f32.mrf.mxu0
  %v1604 = vadd.f32 %v1566, %v1603
  %1605 = vmatmul.f32.gmra.mxu0 %v1392
  %v1606 = vpop.f32.mrf.mxu0
  %v1607 = vadd.f32 %v1569, %v1606
  %1608 = vmatmul.f32.gmra.mxu0 %v1408
  %v1609 = vpop.f32.mrf.mxu0
  %v1610 = vadd.f32 %v1572, %v1609
  %1611 = vmatmul.f32.gmra.mxu0 %v1424
  %v1612 = vpop.f32.mrf.mxu0
  %v1613 = vadd.f32 %v1575, %v1612
  %1614 = vmatmul.f32.gmra.mxu0 %v1440
  %v1615 = vpop.f32.mrf.mxu0
  %v1616 = vadd.f32 %v1578, %v1615
  %1617 = vmatmul.f32.gmra.mxu0 %v1456
  %v1618 = vpop.f32.mrf.mxu0
  %v1619 = vadd.f32 %v1581, %v1618
  %1620 = vmatmul.f32.gmra.mxu0 %v1472
  %v1621 = vpop.f32.mrf.mxu0
  %v1622 = vadd.f32 %v1584, %v1621
  %1623 = vdwg.mxu0
  %1624 = vmatpush.msra.mxu0 %v1271
  %1625 = vmatpush.msra.mxu0 %v1270
  %1626 = vmatpush.msra.mxu0 %v1269
  %1627 = vmatpush.msra.mxu0 %v1268
  %1628 = vmatpush.msra.mxu0 %v1267
  %1629 = vmatpush.msra.mxu0 %v1266
  %1630 = vmatpush.msra.mxu0 %v1265
  %1631 = vmatpush.msra.mxu0 %v1264
  %1632 = vmatpush.msra.mxu0 %v1263
  %1633 = vmatpush.msra.mxu0 %v1262
  %1634 = vmatpush.msra.mxu0 %v1261
  %1635 = vmatpush.msra.mxu0 %v1260
  %1636 = vmatpush.msra.mxu0 %v1259
  %1637 = vmatpush.msra.mxu0 %v1258
  %1638 = vmatpush.msra.mxu0 %v1257
  %1639 = vmatpush.msra.mxu0 %v1256
  %1640 = vmatmul.f32.gmra.mxu0 %v1373
  %v1641 = vpop.f32.mrf.mxu0
  %v1642 = vadd.f32 %v1604, %v1641
  %1643 = vmatmul.f32.gmra.mxu0 %v1394
  %v1644 = vpop.f32.mrf.mxu0
  %v1645 = vadd.f32 %v1607, %v1644
  %1646 = vmatmul.f32.gmra.mxu0 %v1410
  %v1647 = vpop.f32.mrf.mxu0
  %v1648 = vadd.f32 %v1610, %v1647
  %1649 = vmatmul.f32.gmra.mxu0 %v1426
  %v1650 = vpop.f32.mrf.mxu0
  %v1651 = vadd.f32 %v1613, %v1650
  %1652 = vmatmul.f32.gmra.mxu0 %v1442
  %v1653 = vpop.f32.mrf.mxu0
  %v1654 = vadd.f32 %v1616, %v1653
  %1655 = vmatmul.f32.gmra.mxu0 %v1458
  %v1656 = vpop.f32.mrf.mxu0
  %v1657 = vadd.f32 %v1619, %v1656
  %1658 = vmatmul.f32.gmra.mxu0 %v1474
  %v1659 = vpop.f32.mrf.mxu0
  %v1660 = vadd.f32 %v1622, %v1659
  %1661 = vdwg.mxu0
  %1662 = vmatpush.msra.mxu0 %v1287
  %1663 = vmatpush.msra.mxu0 %v1286
  %1664 = vmatpush.msra.mxu0 %v1285
  %1665 = vmatpush.msra.mxu0 %v1284
  %1666 = vmatpush.msra.mxu0 %v1283
  %1667 = vmatpush.msra.mxu0 %v1282
  %1668 = vmatpush.msra.mxu0 %v1281
  %1669 = vmatpush.msra.mxu0 %v1280
  %1670 = vmatpush.msra.mxu0 %v1279
  %1671 = vmatpush.msra.mxu0 %v1278
  %1672 = vmatpush.msra.mxu0 %v1277
  %1673 = vmatpush.msra.mxu0 %v1276
  %1674 = vmatpush.msra.mxu0 %v1275
  %1675 = vmatpush.msra.mxu0 %v1274
  %1676 = vmatpush.msra.mxu0 %v1273
  %1677 = vmatpush.msra.mxu0 %v1272
  %1678 = vmatmul.f32.gmra.mxu0 %v1376
  %v1679 = vpop.f32.mrf.mxu0
  %v1680 = vadd.f32 %v1642, %v1679
  %1681 = vmatmul.f32.gmra.mxu0 %v1396
  %v1682 = vpop.f32.mrf.mxu0
  %v1683 = vadd.f32 %v1645, %v1682
  %1684 = vmatmul.f32.gmra.mxu0 %v1412
  %v1685 = vpop.f32.mrf.mxu0
  %v1686 = vadd.f32 %v1648, %v1685
  %1687 = vmatmul.f32.gmra.mxu0 %v1428
  %v1688 = vpop.f32.mrf.mxu0
  %v1689 = vadd.f32 %v1651, %v1688
  %1690 = vmatmul.f32.gmra.mxu0 %v1444
  %v1691 = vpop.f32.mrf.mxu0
  %v1692 = vadd.f32 %v1654, %v1691
  %1693 = vmatmul.f32.gmra.mxu0 %v1460
  %v1694 = vpop.f32.mrf.mxu0
  %v1695 = vadd.f32 %v1657, %v1694
  %1696 = vmatmul.f32.gmra.mxu0 %v1476
  %v1697 = vpop.f32.mrf.mxu0
  %v1698 = vadd.f32 %v1660, %v1697
  %1699 = vdwg.mxu0
  %1700 = vmatpush.msra.mxu0 %v1303
  %1701 = vmatpush.msra.mxu0 %v1302
  %1702 = vmatpush.msra.mxu0 %v1301
  %1703 = vmatpush.msra.mxu0 %v1300
  %1704 = vmatpush.msra.mxu0 %v1299
  %1705 = vmatpush.msra.mxu0 %v1298
  %1706 = vmatpush.msra.mxu0 %v1297
  %1707 = vmatpush.msra.mxu0 %v1296
  %1708 = vmatpush.msra.mxu0 %v1295
  %1709 = vmatpush.msra.mxu0 %v1294
  %1710 = vmatpush.msra.mxu0 %v1293
  %1711 = vmatpush.msra.mxu0 %v1292
  %1712 = vmatpush.msra.mxu0 %v1291
  %1713 = vmatpush.msra.mxu0 %v1290
  %1714 = vmatpush.msra.mxu0 %v1289
  %1715 = vmatpush.msra.mxu0 %v1288
  %1716 = vmatmul.f32.gmra.mxu0 %v1379
  %v1717 = vpop.f32.mrf.mxu0
  %v1718 = vadd.f32 %v1680, %v1717
  %1719 = vmatmul.f32.gmra.mxu0 %v1398
  %v1720 = vpop.f32.mrf.mxu0
  %v1721 = vadd.f32 %v1683, %v1720
  %1722 = vmatmul.f32.gmra.mxu0 %v1414
  %v1723 = vpop.f32.mrf.mxu0
  %v1724 = vadd.f32 %v1686, %v1723
  %1725 = vmatmul.f32.gmra.mxu0 %v1430
  %v1726 = vpop.f32.mrf.mxu0
  %v1727 = vadd.f32 %v1689, %v1726
  %1728 = vmatmul.f32.gmra.mxu0 %v1446
  %v1729 = vpop.f32.mrf.mxu0
  %v1730 = vadd.f32 %v1692, %v1729
  %1731 = vmatmul.f32.gmra.mxu0 %v1462
  %v1732 = vpop.f32.mrf.mxu0
  %v1733 = vadd.f32 %v1695, %v1732
  %1734 = vmatmul.f32.gmra.mxu0 %v1478
  %v1735 = vpop.f32.mrf.mxu0
  %v1736 = vadd.f32 %v1698, %v1735
  %1737 = vdwg.mxu0
  %1738 = vmatpush.msra.mxu0 %v1319
  %1739 = vmatpush.msra.mxu0 %v1318
  %1740 = vmatpush.msra.mxu0 %v1317
  %1741 = vmatpush.msra.mxu0 %v1316
  %1742 = vmatpush.msra.mxu0 %v1315
  %1743 = vmatpush.msra.mxu0 %v1314
  %1744 = vmatpush.msra.mxu0 %v1313
  %1745 = vmatpush.msra.mxu0 %v1312
  %1746 = vmatpush.msra.mxu0 %v1311
  %1747 = vmatpush.msra.mxu0 %v1310
  %1748 = vmatpush.msra.mxu0 %v1309
  %1749 = vmatpush.msra.mxu0 %v1308
  %1750 = vmatpush.msra.mxu0 %v1307
  %1751 = vmatpush.msra.mxu0 %v1306
  %1752 = vmatpush.msra.mxu0 %v1305
  %1753 = vmatpush.msra.mxu0 %v1304
  %1754 = vmatmul.f32.gmra.mxu0 %v1382
  %v1755 = vpop.f32.mrf.mxu0
  %v1756 = vadd.f32 %v1718, %v1755
  %1757 = vmatmul.f32.gmra.mxu0 %v1400
  %v1758 = vpop.f32.mrf.mxu0
  %v1759 = vadd.f32 %v1721, %v1758
  %1760 = vmatmul.f32.gmra.mxu0 %v1416
  %v1761 = vpop.f32.mrf.mxu0
  %v1762 = vadd.f32 %v1724, %v1761
  %1763 = vmatmul.f32.gmra.mxu0 %v1432
  %v1764 = vpop.f32.mrf.mxu0
  %v1765 = vadd.f32 %v1727, %v1764
  %1766 = vmatmul.f32.gmra.mxu0 %v1448
  %v1767 = vpop.f32.mrf.mxu0
  %v1768 = vadd.f32 %v1730, %v1767
  %1769 = vmatmul.f32.gmra.mxu0 %v1464
  %v1770 = vpop.f32.mrf.mxu0
  %v1771 = vadd.f32 %v1733, %v1770
  %1772 = vmatmul.f32.gmra.mxu0 %v1480
  %v1773 = vpop.f32.mrf.mxu0
  %v1774 = vadd.f32 %v1736, %v1773
  %1775 = vdwg.mxu0
  %1776 = vmatpush.msra.mxu0 %v1335
  %1777 = vmatpush.msra.mxu0 %v1334
  %1778 = vmatpush.msra.mxu0 %v1333
  %1779 = vmatpush.msra.mxu0 %v1332
  %1780 = vmatpush.msra.mxu0 %v1331
  %1781 = vmatpush.msra.mxu0 %v1330
  %1782 = vmatpush.msra.mxu0 %v1329
  %1783 = vmatpush.msra.mxu0 %v1328
  %1784 = vmatpush.msra.mxu0 %v1327
  %1785 = vmatpush.msra.mxu0 %v1326
  %1786 = vmatpush.msra.mxu0 %v1325
  %1787 = vmatpush.msra.mxu0 %v1324
  %1788 = vmatpush.msra.mxu0 %v1323
  %1789 = vmatpush.msra.mxu0 %v1322
  %1790 = vmatpush.msra.mxu0 %v1321
  %1791 = vmatpush.msra.mxu0 %v1320
  %1792 = vmatmul.f32.gmra.mxu0 %v1385
  %v1793 = vpop.f32.mrf.mxu0
  %v1794 = vadd.f32 %v1756, %v1793
  %1795 = vmatmul.f32.gmra.mxu0 %v1402
  %v1796 = vpop.f32.mrf.mxu0
  %v1797 = vadd.f32 %v1759, %v1796
  %1798 = vmatmul.f32.gmra.mxu0 %v1418
  %v1799 = vpop.f32.mrf.mxu0
  %v1800 = vadd.f32 %v1762, %v1799
  %1801 = vmatmul.f32.gmra.mxu0 %v1434
  %v1802 = vpop.f32.mrf.mxu0
  %v1803 = vadd.f32 %v1765, %v1802
  %1804 = vmatmul.f32.gmra.mxu0 %v1450
  %v1805 = vpop.f32.mrf.mxu0
  %v1806 = vadd.f32 %v1768, %v1805
  %1807 = vmatmul.f32.gmra.mxu0 %v1466
  %v1808 = vpop.f32.mrf.mxu0
  %v1809 = vadd.f32 %v1771, %v1808
  %1810 = vmatmul.f32.gmra.mxu0 %v1482
  %v1811 = vpop.f32.mrf.mxu0
  %v1812 = vadd.f32 %v1774, %v1811
  %1813 = vdwg.mxu0
  %1814 = vmatpush.msra.mxu0 0.0
  %1815 = vmatpush.msra.mxu0 0.0
  %1816 = vmatpush.msra.mxu0 0.0
  %1817 = vmatpush.msra.mxu0 0.0
  %1818 = vmatpush.msra.mxu0 %v1347
  %1819 = vmatpush.msra.mxu0 %v1346
  %1820 = vmatpush.msra.mxu0 %v1345
  %1821 = vmatpush.msra.mxu0 %v1344
  %1822 = vmatpush.msra.mxu0 %v1343
  %1823 = vmatpush.msra.mxu0 %v1342
  %1824 = vmatpush.msra.mxu0 %v1341
  %1825 = vmatpush.msra.mxu0 %v1340
  %1826 = vmatpush.msra.mxu0 %v1339
  %1827 = vmatpush.msra.mxu0 %v1338
  %1828 = vmatpush.msra.mxu0 %v1337
  %1829 = vmatpush.msra.mxu0 %v1336
  %1830 = vmatmul.f32.gmra.mxu0 %v1534
  %v1831 = vpop.f32.mrf.mxu0
  %v1832 = vadd.f32 %v1794, %v1831
  %1833 = vmatmul.f32.gmra.mxu0 %v1536
  %v1834 = vpop.f32.mrf.mxu0
  %v1835 = vadd.f32 %v1797, %v1834
  %1836 = vmatmul.f32.gmra.mxu0 %v1538
  %v1837 = vpop.f32.mrf.mxu0
  %v1838 = vadd.f32 %v1800, %v1837
  %1839 = vmatmul.f32.gmra.mxu0 %v1540
  %v1840 = vpop.f32.mrf.mxu0
  %v1841 = vadd.f32 %v1803, %v1840
  %1842 = vmatmul.f32.gmra.mxu0 %v1542
  %v1843 = vpop.f32.mrf.mxu0
  %v1844 = vadd.f32 %v1806, %v1843
  %1845 = vmatmul.f32.gmra.mxu0 %v1544
  %v1846 = vpop.f32.mrf.mxu0
  %v1847 = vadd.f32 %v1809, %v1846
  %1848 = vmatmul.f32.gmra.mxu0 %v1546
  %v1849 = vpop.f32.mrf.mxu0
  %v1850 = vadd.f32 %v1812, %v1849
  %1851 = vdwg.mxu0
  %v1852 = vadd.f32 %v1187, %v1832
  %v1853 = vadd.f32 %v1190, %v1835
  %v1854 = vadd.f32 %v1193, %v1838
  %v1855 = vadd.f32 %v1196, %v1841
  %v1856 = vadd.f32 %v1199, %v1844
  %v1857 = vadd.f32 %v1202, %v1847
  %v1858 = vadd.f32 %v1205, %v1850
  %v1859 = vld [vmem:[%s0] sm:$0xc0]
  %v1860 = vld [vmem:[%s0 + $0x8] sm:$0xc0]
  %v1861 = vld [vmem:[%s0 + $0x10] sm:$0xc0]
  %v1862 = vld [vmem:[%s0 + $0x18] sm:$0xc0]
  %v1863 = vld [vmem:[%s0 + $0x20] sm:$0xc0]
  %v1864 = vld [vmem:[%s0 + $0x28] sm:$0xc0]
  %v1865 = vld [vmem:[%s0 + $0x30] sm:$0xc0]
  %v1866 = vld [vmem:[%s0 + $0x38] sm:$0xc0]
  %v1867 = vld [vmem:[%s0 + $0x1c0] sm:$0x3f]
  %v1868 = vld [vmem:[%s0 + $0x1c8] sm:$0x3f]
  %v1869 = vld [vmem:[%s0 + $0x1d0] sm:$0x3f]
  %v1870 = vld [vmem:[%s0 + $0x1d8] sm:$0x3f]
  %v1871 = vld [vmem:[%s0 + $0x1e0] sm:$0x3f]
  %v1872 = vld [vmem:[%s0 + $0x1e8] sm:$0x3f]
  %v1873 = vld [vmem:[%s0 + $0x1f0] sm:$0x3f]
  %v1874 = vld [vmem:[%s0 + $0x1f8] sm:$0x3f]
  %s1875 = scalar_lea.vmem %s1, 2976
  %v1876 = vld [vmem:[%s1875] sm:$0xff]
  %v1877 = vld [vmem:[%s1875 + $0x8] sm:$0xff]
  %v1878 = vld [vmem:[%s1875 + $0x10] sm:$0xff]
  %v1879 = vld [vmem:[%s1875 + $0x18] sm:$0xff]
  %v1880 = vld [vmem:[%s1875 + $0x20] sm:$0xff]
  %v1881 = vld [vmem:[%s1875 + $0x28] sm:$0xff]
  %v1882 = vld [vmem:[%s1875 + $0x30] sm:$0xff]
  %v1883 = vld [vmem:[%s1875 + $0x38] sm:$0xff]
  %v1884 = vld [vmem:[%s1875 + $0x40] sm:$0xff]
  %v1885 = vld [vmem:[%s1875 + $0x48] sm:$0xff]
  %v1886 = vld [vmem:[%s1875 + $0x50] sm:$0xff]
  %v1887 = vld [vmem:[%s1875 + $0x58] sm:$0xff]
  %v1888 = vld [vmem:[%s1875 + $0x60] sm:$0xff]
  %v1889 = vld [vmem:[%s1875 + $0x68] sm:$0xff]
  %v1890 = vld [vmem:[%s1875 + $0x70] sm:$0xff]
  %v1891 = vld [vmem:[%s1875 + $0x78] sm:$0xff]
  %v1892 = vld [vmem:[%s1875 + $0x80] sm:$0xff]
  %v1893 = vld [vmem:[%s1875 + $0x88] sm:$0xff]
  %v1894 = vld [vmem:[%s1875 + $0x90] sm:$0xff]
  %v1895 = vld [vmem:[%s1875 + $0x98] sm:$0xff]
  %v1896 = vld [vmem:[%s1875 + $0xa0] sm:$0xff]
  %v1897 = vld [vmem:[%s1875 + $0xa8] sm:$0xff]
  %v1898 = vld [vmem:[%s1875 + $0xb0] sm:$0xff]
  %v1899 = vld [vmem:[%s1875 + $0xb8] sm:$0xff]
  %v1900 = vld [vmem:[%s1875 + $0xc0] sm:$0xff]
  %v1901 = vld [vmem:[%s1875 + $0xc8] sm:$0xff]
  %v1902 = vld [vmem:[%s1875 + $0xd0] sm:$0xff]
  %v1903 = vld [vmem:[%s1875 + $0xd8] sm:$0xff]
  %v1904 = vld [vmem:[%s1875 + $0xe0] sm:$0xff]
  %v1905 = vld [vmem:[%s1875 + $0xe8] sm:$0xff]
  %v1906 = vld [vmem:[%s1875 + $0xf0] sm:$0xff]
  %v1907 = vld [vmem:[%s1875 + $0xf8] sm:$0xff]
  %v1908 = vld [vmem:[%s1875 + $0x100] sm:$0xff]
  %v1909 = vld [vmem:[%s1875 + $0x108] sm:$0xff]
  %v1910 = vld [vmem:[%s1875 + $0x110] sm:$0xff]
  %v1911 = vld [vmem:[%s1875 + $0x118] sm:$0xff]
  %v1912 = vld [vmem:[%s1875 + $0x120] sm:$0xff]
  %v1913 = vld [vmem:[%s1875 + $0x128] sm:$0xff]
  %v1914 = vld [vmem:[%s1875 + $0x130] sm:$0xff]
  %v1915 = vld [vmem:[%s1875 + $0x138] sm:$0xff]
  %v1916 = vld [vmem:[%s1875 + $0x140] sm:$0xff]
  %v1917 = vld [vmem:[%s1875 + $0x148] sm:$0xff]
  %v1918 = vld [vmem:[%s1875 + $0x150] sm:$0xff]
  %v1919 = vld [vmem:[%s1875 + $0x158] sm:$0xff]
  %v1920 = vld [vmem:[%s1875 + $0x160] sm:$0xff]
  %v1921 = vld [vmem:[%s1875 + $0x168] sm:$0xff]
  %v1922 = vld [vmem:[%s1875 + $0x170] sm:$0xff]
  %v1923 = vld [vmem:[%s1875 + $0x178] sm:$0xff]
  %v1924 = vld [vmem:[%s1875 + $0x180] sm:$0xff]
  %v1925 = vld [vmem:[%s1875 + $0x188] sm:$0xff]
  %v1926 = vld [vmem:[%s1875 + $0x190] sm:$0xff]
  %v1927 = vld [vmem:[%s1875 + $0x198] sm:$0xff]
  %v1928 = vld [vmem:[%s1875 + $0x1a0] sm:$0xff]
  %v1929 = vld [vmem:[%s1875 + $0x1a8] sm:$0xff]
  %v1930 = vld [vmem:[%s1875 + $0x1b0] sm:$0xff]
  %v1931 = vld [vmem:[%s1875 + $0x1b8] sm:$0xff]
  %v1932 = vld [vmem:[%s1875 + $0x1c0] sm:$0xff]
  %v1933 = vld [vmem:[%s1875 + $0x1c8] sm:$0xff]
  %v1934 = vld [vmem:[%s1875 + $0x1d0] sm:$0xff]
  %v1935 = vld [vmem:[%s1875 + $0x1d8] sm:$0xff]
  %v1936 = vld [vmem:[%s1875 + $0x1e0] sm:$0xff]
  %v1937 = vld [vmem:[%s1875 + $0x1e8] sm:$0xff]
  %v1938 = vld [vmem:[%s1875 + $0x1f0] sm:$0xff]
  %v1939 = vld [vmem:[%s1875 + $0x1f8] sm:$0xff]
  %v1940 = vld [vmem:[%s1875 + $0x200] sm:$0xff]
  %v1941 = vld [vmem:[%s1875 + $0x208] sm:$0xff]
  %v1942 = vld [vmem:[%s1875 + $0x210] sm:$0xff]
  %v1943 = vld [vmem:[%s1875 + $0x218] sm:$0xff]
  %v1944 = vld [vmem:[%s1875 + $0x220] sm:$0xff]
  %v1945 = vld [vmem:[%s1875 + $0x228] sm:$0xff]
  %v1946 = vld [vmem:[%s1875 + $0x230] sm:$0xff]
  %v1947 = vld [vmem:[%s1875 + $0x238] sm:$0xff]
  %v1948 = vld [vmem:[%s1875 + $0x240] sm:$0xff]
  %v1949 = vld [vmem:[%s1875 + $0x248] sm:$0xff]
  %v1950 = vld [vmem:[%s1875 + $0x250] sm:$0xff]
  %v1951 = vld [vmem:[%s1875 + $0x258] sm:$0xff]
  %v1952 = vld [vmem:[%s1875 + $0x260] sm:$0xff]
  %v1953 = vld [vmem:[%s1875 + $0x268] sm:$0xff]
  %v1954 = vld [vmem:[%s1875 + $0x270] sm:$0xff]
  %v1955 = vld [vmem:[%s1875 + $0x278] sm:$0xff]
  %v1956 = vld [vmem:[%s1875 + $0x280] sm:$0xff]
  %v1957 = vld [vmem:[%s1875 + $0x288] sm:$0xff]
  %v1958 = vld [vmem:[%s1875 + $0x290] sm:$0xff]
  %v1959 = vld [vmem:[%s1875 + $0x298] sm:$0xff]
  %v1960 = vld [vmem:[%s1875 + $0x2a0] sm:$0xff]
  %v1961 = vld [vmem:[%s1875 + $0x2a8] sm:$0xff]
  %v1962 = vld [vmem:[%s1875 + $0x2b0] sm:$0xff]
  %v1963 = vld [vmem:[%s1875 + $0x2b8] sm:$0xff]
  %v1964 = vld [vmem:[%s1875 + $0x2c0] sm:$0xff]
  %v1965 = vld [vmem:[%s1875 + $0x2c8] sm:$0xff]
  %v1966 = vld [vmem:[%s1875 + $0x2d0] sm:$0xff]
  %v1967 = vld [vmem:[%s1875 + $0x2d8] sm:$0xff]
  %v1968 = vld [vmem:[%s1875 + $0x2e0] sm:$0xff]
  %v1969 = vld [vmem:[%s1875 + $0x2e8] sm:$0xff]
  %v1970 = vld [vmem:[%s1875 + $0x2f0] sm:$0xff]
  %v1971 = vld [vmem:[%s1875 + $0x2f8] sm:$0xff]
  %v1972 = vld [vmem:[%s1875 + $0x300] sm:$0xff]
  %v1973 = vld [vmem:[%s1875 + $0x308] sm:$0xff]
  %v1974 = vld [vmem:[%s1875 + $0x310] sm:$0xff]
  %v1975 = vld [vmem:[%s1875 + $0x318] sm:$0xff]
  %v1976 = vld [vmem:[%s1875 + $0x320] sm:$0xff]
  %v1977 = vld [vmem:[%s1875 + $0x328] sm:$0xff]
  %v1978 = vld [vmem:[%s1875 + $0x330] sm:$0xff]
  %v1979 = vld [vmem:[%s1875 + $0x338] sm:$0xff]
  %v1980 = vld [vmem:[%s1875 + $0x340] sm:$0xff]
  %v1981 = vld [vmem:[%s1875 + $0x348] sm:$0xff]
  %v1982 = vld [vmem:[%s1875 + $0x350] sm:$0xff]
  %v1983 = vld [vmem:[%s1875 + $0x358] sm:$0xff]
  %v1984 = vld [vmem:[%s1875 + $0x360] sm:$0xff]
  %v1985 = vld [vmem:[%s1875 + $0x368] sm:$0xff]
  %v1986 = vld [vmem:[%s1875 + $0x370] sm:$0xff]
  %v1987 = vld [vmem:[%s1875 + $0x378] sm:$0xff]
  %v1988 = vld [vmem:[%s1875 + $0x380] sm:$0xff]
  %v1989 = vld [vmem:[%s1875 + $0x388] sm:$0xff]
  %v1990 = vld [vmem:[%s1875 + $0x390] sm:$0xff]
  %v1991 = vld [vmem:[%s1875 + $0x398] sm:$0xff]
  %v1992 = vld [vmem:[%s1875 + $0x3a0] sm:$0xff]
  %v1993 = vld [vmem:[%s1875 + $0x3a8] sm:$0xff]
  %v1994 = vld [vmem:[%s1875 + $0x3b0] sm:$0xff]
  %v1995 = vld [vmem:[%s1875 + $0x3b8] sm:$0xff]
  %v1996 = vld [vmem:[%s1875 + $0x3c0] sm:$0xff]
  %v1997 = vld [vmem:[%s1875 + $0x3c8] sm:$0xff]
  %v1998 = vld [vmem:[%s1875 + $0x3d0] sm:$0xff]
  %v1999 = vld [vmem:[%s1875 + $0x3d8] sm:$0xff]
  %vm2016 = vcmask 1041408
  %v2017 = vrot.slane %v1859, 6
  %v2018 = vrot.slane %v22, 6
  %v2019 = vsel %vm2016, %v2017, %v2018
  %v2020 = vrot.slane %v1860, 6
  %v2021 = vrot.slane %v23, 6
  %v2022 = vsel %vm2016, %v2020, %v2021
  %v2023 = vrot.slane %v1861, 6
  %v2024 = vrot.slane %v24, 6
  %v2025 = vsel %vm2016, %v2023, %v2024
  %v2026 = vrot.slane %v1862, 6
  %v2027 = vrot.slane %v25, 6
  %v2028 = vsel %vm2016, %v2026, %v2027
  %v2029 = vrot.slane %v1863, 6
  %v2030 = vrot.slane %v26, 6
  %v2031 = vsel %vm2016, %v2029, %v2030
  %v2032 = vrot.slane %v1864, 6
  %v2033 = vrot.slane %v27, 6
  %v2034 = vsel %vm2016, %v2032, %v2033
  %v2035 = vrot.slane %v1865, 6
  %v2036 = vrot.slane %v28, 6
  %v2037 = vsel %vm2016, %v2035, %v2036
  %v2038 = vrot.slane %v1866, 6
  %v2039 = vrot.slane %v29, 6
  %v2040 = vsel %vm2016, %v2038, %v2039
  %v2041 = vrot.slane %v30, 6
  %v2042 = vsel %vm2016, %v2018, %v2041
  %v2043 = vrot.slane %v31, 6
  %v2044 = vsel %vm2016, %v2021, %v2043
  %v2045 = vrot.slane %v32, 6
  %v2046 = vsel %vm2016, %v2024, %v2045
  %v2047 = vrot.slane %v33, 6
  %v2048 = vsel %vm2016, %v2027, %v2047
  %v2049 = vrot.slane %v34, 6
  %v2050 = vsel %vm2016, %v2030, %v2049
  %v2051 = vrot.slane %v35, 6
  %v2052 = vsel %vm2016, %v2033, %v2051
  %v2053 = vrot.slane %v36, 6
  %v2054 = vsel %vm2016, %v2036, %v2053
  %v2055 = vrot.slane %v37, 6
  %v2056 = vsel %vm2016, %v2039, %v2055
  %v2057 = vrot.slane %v38, 6
  %v2058 = vsel %vm2016, %v2041, %v2057
  %v2059 = vrot.slane %v39, 6
  %v2060 = vsel %vm2016, %v2043, %v2059
  %v2061 = vrot.slane %v40, 6
  %v2062 = vsel %vm2016, %v2045, %v2061
  %v2063 = vrot.slane %v41, 6
  %v2064 = vsel %vm2016, %v2047, %v2063
  %v2065 = vrot.slane %v42, 6
  %v2066 = vsel %vm2016, %v2049, %v2065
  %v2067 = vrot.slane %v43, 6
  %v2068 = vsel %vm2016, %v2051, %v2067
  %v2069 = vrot.slane %v44, 6
  %v2070 = vsel %vm2016, %v2053, %v2069
  %v2071 = vrot.slane %v45, 6
  %v2072 = vsel %vm2016, %v2055, %v2071
  %v2073 = vrot.slane %v46, 6
  %v2074 = vsel %vm2016, %v2057, %v2073
  %v2075 = vrot.slane %v47, 6
  %v2076 = vsel %vm2016, %v2059, %v2075
  %v2077 = vrot.slane %v48, 6
  %v2078 = vsel %vm2016, %v2061, %v2077
  %v2079 = vrot.slane %v49, 6
  %v2080 = vsel %vm2016, %v2063, %v2079
  %v2081 = vrot.slane %v50, 6
  %v2082 = vsel %vm2016, %v2065, %v2081
  %v2083 = vrot.slane %v51, 6
  %v2084 = vsel %vm2016, %v2067, %v2083
  %v2085 = vrot.slane %v52, 6
  %v2086 = vsel %vm2016, %v2069, %v2085
  %v2087 = vrot.slane %v53, 6
  %v2088 = vsel %vm2016, %v2071, %v2087
  %v2089 = vrot.slane %v54, 6
  %v2090 = vsel %vm2016, %v2073, %v2089
  %v2091 = vrot.slane %v55, 6
  %v2092 = vsel %vm2016, %v2075, %v2091
  %v2093 = vrot.slane %v56, 6
  %v2094 = vsel %vm2016, %v2077, %v2093
  %v2095 = vrot.slane %v57, 6
  %v2096 = vsel %vm2016, %v2079, %v2095
  %v2097 = vrot.slane %v58, 6
  %v2098 = vsel %vm2016, %v2081, %v2097
  %v2099 = vrot.slane %v59, 6
  %v2100 = vsel %vm2016, %v2083, %v2099
  %v2101 = vrot.slane %v60, 6
  %v2102 = vsel %vm2016, %v2085, %v2101
  %v2103 = vrot.slane %v61, 6
  %v2104 = vsel %vm2016, %v2087, %v2103
  %v2105 = vrot.slane %v62, 6
  %v2106 = vsel %vm2016, %v2089, %v2105
  %v2107 = vrot.slane %v63, 6
  %v2108 = vsel %vm2016, %v2091, %v2107
  %v2109 = vrot.slane %v64, 6
  %v2110 = vsel %vm2016, %v2093, %v2109
  %v2111 = vrot.slane %v65, 6
  %v2112 = vsel %vm2016, %v2095, %v2111
  %v2113 = vrot.slane %v66, 6
  %v2114 = vsel %vm2016, %v2097, %v2113
  %v2115 = vrot.slane %v67, 6
  %v2116 = vsel %vm2016, %v2099, %v2115
  %v2117 = vrot.slane %v68, 6
  %v2118 = vsel %vm2016, %v2101, %v2117
  %v2119 = vrot.slane %v69, 6
  %v2120 = vsel %vm2016, %v2103, %v2119
  %v2121 = vrot.slane %v1867, 6
  %v2122 = vsel %vm2016, %v2105, %v2121
  %v2123 = vrot.slane %v1868, 6
  %v2124 = vsel %vm2016, %v2107, %v2123
  %v2125 = vrot.slane %v1869, 6
  %v2126 = vsel %vm2016, %v2109, %v2125
  %v2127 = vrot.slane %v1870, 6
  %v2128 = vsel %vm2016, %v2111, %v2127
  %v2129 = vrot.slane %v1871, 6
  %v2130 = vsel %vm2016, %v2113, %v2129
  %v2131 = vrot.slane %v1872, 6
  %v2132 = vsel %vm2016, %v2115, %v2131
  %v2133 = vrot.slane %v1873, 6
  %v2134 = vsel %vm2016, %v2117, %v2133
  %v2135 = vrot.slane %v1874, 6
  %v2136 = vsel %vm2016, %v2119, %v2135
  %v2186 = vsel %vm569, %v2040, 0
  %v2188 = vsel %vm569, %v2056, 0
  %v2190 = vsel %vm569, %v2072, 0
  %v2192 = vsel %vm569, %v2088, 0
  %v2194 = vsel %vm569, %v2104, 0
  %v2196 = vsel %vm569, %v2120, 0
  %v2198 = vsel %vm569, %v2136, 0
  %2200 = vmatpush.msra.mxu0 %v1891
  %2201 = vmatpush.msra.mxu0 %v1890
  %2202 = vmatpush.msra.mxu0 %v1889
  %2203 = vmatpush.msra.mxu0 %v1888
  %2204 = vmatpush.msra.mxu0 %v1887
  %2205 = vmatpush.msra.mxu0 %v1886
  %2206 = vmatpush.msra.mxu0 %v1885
  %2207 = vmatpush.msra.mxu0 %v1884
  %2208 = vmatpush.msra.mxu0 %v1883
  %2209 = vmatpush.msra.mxu0 %v1882
  %2210 = vmatpush.msra.mxu0 %v1881
  %2211 = vmatpush.msra.mxu0 %v1880
  %2212 = vmatpush.msra.mxu0 %v1879
  %2213 = vmatpush.msra.mxu0 %v1878
  %2214 = vmatpush.msra.mxu0 %v1877
  %2215 = vmatpush.msra.mxu0 %v1876
  %2216 = vmatmul.f32.gmra.mxu0 %v2019
  %v2217 = vpop.f32.mrf.mxu0
  %v2218 = vadd.f32 0.0, %v2217
  %2219 = vmatmul.f32.gmra.mxu0 %v2042
  %v2220 = vpop.f32.mrf.mxu0
  %v2221 = vadd.f32 0.0, %v2220
  %2222 = vmatmul.f32.gmra.mxu0 %v2058
  %v2223 = vpop.f32.mrf.mxu0
  %v2224 = vadd.f32 0.0, %v2223
  %2225 = vmatmul.f32.gmra.mxu0 %v2074
  %v2226 = vpop.f32.mrf.mxu0
  %v2227 = vadd.f32 0.0, %v2226
  %2228 = vmatmul.f32.gmra.mxu0 %v2090
  %v2229 = vpop.f32.mrf.mxu0
  %v2230 = vadd.f32 0.0, %v2229
  %2231 = vmatmul.f32.gmra.mxu0 %v2106
  %v2232 = vpop.f32.mrf.mxu0
  %v2233 = vadd.f32 0.0, %v2232
  %2234 = vmatmul.f32.gmra.mxu0 %v2122
  %v2235 = vpop.f32.mrf.mxu0
  %v2236 = vadd.f32 0.0, %v2235
  %2237 = vdwg.mxu0
  %2238 = vmatpush.msra.mxu0 %v1907
  %2239 = vmatpush.msra.mxu0 %v1906
  %2240 = vmatpush.msra.mxu0 %v1905
  %2241 = vmatpush.msra.mxu0 %v1904
  %2242 = vmatpush.msra.mxu0 %v1903
  %2243 = vmatpush.msra.mxu0 %v1902
  %2244 = vmatpush.msra.mxu0 %v1901
  %2245 = vmatpush.msra.mxu0 %v1900
  %2246 = vmatpush.msra.mxu0 %v1899
  %2247 = vmatpush.msra.mxu0 %v1898
  %2248 = vmatpush.msra.mxu0 %v1897
  %2249 = vmatpush.msra.mxu0 %v1896
  %2250 = vmatpush.msra.mxu0 %v1895
  %2251 = vmatpush.msra.mxu0 %v1894
  %2252 = vmatpush.msra.mxu0 %v1893
  %2253 = vmatpush.msra.mxu0 %v1892
  %2254 = vmatmul.f32.gmra.mxu0 %v2022
  %v2255 = vpop.f32.mrf.mxu0
  %v2256 = vadd.f32 %v2218, %v2255
  %2257 = vmatmul.f32.gmra.mxu0 %v2044
  %v2258 = vpop.f32.mrf.mxu0
  %v2259 = vadd.f32 %v2221, %v2258
  %2260 = vmatmul.f32.gmra.mxu0 %v2060
  %v2261 = vpop.f32.mrf.mxu0
  %v2262 = vadd.f32 %v2224, %v2261
  %2263 = vmatmul.f32.gmra.mxu0 %v2076
  %v2264 = vpop.f32.mrf.mxu0
  %v2265 = vadd.f32 %v2227, %v2264
  %2266 = vmatmul.f32.gmra.mxu0 %v2092
  %v2267 = vpop.f32.mrf.mxu0
  %v2268 = vadd.f32 %v2230, %v2267
  %2269 = vmatmul.f32.gmra.mxu0 %v2108
  %v2270 = vpop.f32.mrf.mxu0
  %v2271 = vadd.f32 %v2233, %v2270
  %2272 = vmatmul.f32.gmra.mxu0 %v2124
  %v2273 = vpop.f32.mrf.mxu0
  %v2274 = vadd.f32 %v2236, %v2273
  %2275 = vdwg.mxu0
  %2276 = vmatpush.msra.mxu0 %v1923
  %2277 = vmatpush.msra.mxu0 %v1922
  %2278 = vmatpush.msra.mxu0 %v1921
  %2279 = vmatpush.msra.mxu0 %v1920
  %2280 = vmatpush.msra.mxu0 %v1919
  %2281 = vmatpush.msra.mxu0 %v1918
  %2282 = vmatpush.msra.mxu0 %v1917
  %2283 = vmatpush.msra.mxu0 %v1916
  %2284 = vmatpush.msra.mxu0 %v1915
  %2285 = vmatpush.msra.mxu0 %v1914
  %2286 = vmatpush.msra.mxu0 %v1913
  %2287 = vmatpush.msra.mxu0 %v1912
  %2288 = vmatpush.msra.mxu0 %v1911
  %2289 = vmatpush.msra.mxu0 %v1910
  %2290 = vmatpush.msra.mxu0 %v1909
  %2291 = vmatpush.msra.mxu0 %v1908
  %2292 = vmatmul.f32.gmra.mxu0 %v2025
  %v2293 = vpop.f32.mrf.mxu0
  %v2294 = vadd.f32 %v2256, %v2293
  %2295 = vmatmul.f32.gmra.mxu0 %v2046
  %v2296 = vpop.f32.mrf.mxu0
  %v2297 = vadd.f32 %v2259, %v2296
  %2298 = vmatmul.f32.gmra.mxu0 %v2062
  %v2299 = vpop.f32.mrf.mxu0
  %v2300 = vadd.f32 %v2262, %v2299
  %2301 = vmatmul.f32.gmra.mxu0 %v2078
  %v2302 = vpop.f32.mrf.mxu0
  %v2303 = vadd.f32 %v2265, %v2302
  %2304 = vmatmul.f32.gmra.mxu0 %v2094
  %v2305 = vpop.f32.mrf.mxu0
  %v2306 = vadd.f32 %v2268, %v2305
  %2307 = vmatmul.f32.gmra.mxu0 %v2110
  %v2308 = vpop.f32.mrf.mxu0
  %v2309 = vadd.f32 %v2271, %v2308
  %2310 = vmatmul.f32.gmra.mxu0 %v2126
  %v2311 = vpop.f32.mrf.mxu0
  %v2312 = vadd.f32 %v2274, %v2311
  %2313 = vdwg.mxu0
  %2314 = vmatpush.msra.mxu0 %v1939
  %2315 = vmatpush.msra.mxu0 %v1938
  %2316 = vmatpush.msra.mxu0 %v1937
  %2317 = vmatpush.msra.mxu0 %v1936
  %2318 = vmatpush.msra.mxu0 %v1935
  %2319 = vmatpush.msra.mxu0 %v1934
  %2320 = vmatpush.msra.mxu0 %v1933
  %2321 = vmatpush.msra.mxu0 %v1932
  %2322 = vmatpush.msra.mxu0 %v1931
  %2323 = vmatpush.msra.mxu0 %v1930
  %2324 = vmatpush.msra.mxu0 %v1929
  %2325 = vmatpush.msra.mxu0 %v1928
  %2326 = vmatpush.msra.mxu0 %v1927
  %2327 = vmatpush.msra.mxu0 %v1926
  %2328 = vmatpush.msra.mxu0 %v1925
  %2329 = vmatpush.msra.mxu0 %v1924
  %2330 = vmatmul.f32.gmra.mxu0 %v2028
  %v2331 = vpop.f32.mrf.mxu0
  %v2332 = vadd.f32 %v2294, %v2331
  %2333 = vmatmul.f32.gmra.mxu0 %v2048
  %v2334 = vpop.f32.mrf.mxu0
  %v2335 = vadd.f32 %v2297, %v2334
  %2336 = vmatmul.f32.gmra.mxu0 %v2064
  %v2337 = vpop.f32.mrf.mxu0
  %v2338 = vadd.f32 %v2300, %v2337
  %2339 = vmatmul.f32.gmra.mxu0 %v2080
  %v2340 = vpop.f32.mrf.mxu0
  %v2341 = vadd.f32 %v2303, %v2340
  %2342 = vmatmul.f32.gmra.mxu0 %v2096
  %v2343 = vpop.f32.mrf.mxu0
  %v2344 = vadd.f32 %v2306, %v2343
  %2345 = vmatmul.f32.gmra.mxu0 %v2112
  %v2346 = vpop.f32.mrf.mxu0
  %v2347 = vadd.f32 %v2309, %v2346
  %2348 = vmatmul.f32.gmra.mxu0 %v2128
  %v2349 = vpop.f32.mrf.mxu0
  %v2350 = vadd.f32 %v2312, %v2349
  %2351 = vdwg.mxu0
  %2352 = vmatpush.msra.mxu0 %v1955
  %2353 = vmatpush.msra.mxu0 %v1954
  %2354 = vmatpush.msra.mxu0 %v1953
  %2355 = vmatpush.msra.mxu0 %v1952
  %2356 = vmatpush.msra.mxu0 %v1951
  %2357 = vmatpush.msra.mxu0 %v1950
  %2358 = vmatpush.msra.mxu0 %v1949
  %2359 = vmatpush.msra.mxu0 %v1948
  %2360 = vmatpush.msra.mxu0 %v1947
  %2361 = vmatpush.msra.mxu0 %v1946
  %2362 = vmatpush.msra.mxu0 %v1945
  %2363 = vmatpush.msra.mxu0 %v1944
  %2364 = vmatpush.msra.mxu0 %v1943
  %2365 = vmatpush.msra.mxu0 %v1942
  %2366 = vmatpush.msra.mxu0 %v1941
  %2367 = vmatpush.msra.mxu0 %v1940
  %2368 = vmatmul.f32.gmra.mxu0 %v2031
  %v2369 = vpop.f32.mrf.mxu0
  %v2370 = vadd.f32 %v2332, %v2369
  %2371 = vmatmul.f32.gmra.mxu0 %v2050
  %v2372 = vpop.f32.mrf.mxu0
  %v2373 = vadd.f32 %v2335, %v2372
  %2374 = vmatmul.f32.gmra.mxu0 %v2066
  %v2375 = vpop.f32.mrf.mxu0
  %v2376 = vadd.f32 %v2338, %v2375
  %2377 = vmatmul.f32.gmra.mxu0 %v2082
  %v2378 = vpop.f32.mrf.mxu0
  %v2379 = vadd.f32 %v2341, %v2378
  %2380 = vmatmul.f32.gmra.mxu0 %v2098
  %v2381 = vpop.f32.mrf.mxu0
  %v2382 = vadd.f32 %v2344, %v2381
  %2383 = vmatmul.f32.gmra.mxu0 %v2114
  %v2384 = vpop.f32.mrf.mxu0
  %v2385 = vadd.f32 %v2347, %v2384
  %2386 = vmatmul.f32.gmra.mxu0 %v2130
  %v2387 = vpop.f32.mrf.mxu0
  %v2388 = vadd.f32 %v2350, %v2387
  %2389 = vdwg.mxu0
  %2390 = vmatpush.msra.mxu0 %v1971
  %2391 = vmatpush.msra.mxu0 %v1970
  %2392 = vmatpush.msra.mxu0 %v1969
  %2393 = vmatpush.msra.mxu0 %v1968
  %2394 = vmatpush.msra.mxu0 %v1967
  %2395 = vmatpush.msra.mxu0 %v1966
  %2396 = vmatpush.msra.mxu0 %v1965
  %2397 = vmatpush.msra.mxu0 %v1964
  %2398 = vmatpush.msra.mxu0 %v1963
  %2399 = vmatpush.msra.mxu0 %v1962
  %2400 = vmatpush.msra.mxu0 %v1961
  %2401 = vmatpush.msra.mxu0 %v1960
  %2402 = vmatpush.msra.mxu0 %v1959
  %2403 = vmatpush.msra.mxu0 %v1958
  %2404 = vmatpush.msra.mxu0 %v1957
  %2405 = vmatpush.msra.mxu0 %v1956
  %2406 = vmatmul.f32.gmra.mxu0 %v2034
  %v2407 = vpop.f32.mrf.mxu0
  %v2408 = vadd.f32 %v2370, %v2407
  %2409 = vmatmul.f32.gmra.mxu0 %v2052
  %v2410 = vpop.f32.mrf.mxu0
  %v2411 = vadd.f32 %v2373, %v2410
  %2412 = vmatmul.f32.gmra.mxu0 %v2068
  %v2413 = vpop.f32.mrf.mxu0
  %v2414 = vadd.f32 %v2376, %v2413
  %2415 = vmatmul.f32.gmra.mxu0 %v2084
  %v2416 = vpop.f32.mrf.mxu0
  %v2417 = vadd.f32 %v2379, %v2416
  %2418 = vmatmul.f32.gmra.mxu0 %v2100
  %v2419 = vpop.f32.mrf.mxu0
  %v2420 = vadd.f32 %v2382, %v2419
  %2421 = vmatmul.f32.gmra.mxu0 %v2116
  %v2422 = vpop.f32.mrf.mxu0
  %v2423 = vadd.f32 %v2385, %v2422
  %2424 = vmatmul.f32.gmra.mxu0 %v2132
  %v2425 = vpop.f32.mrf.mxu0
  %v2426 = vadd.f32 %v2388, %v2425
  %2427 = vdwg.mxu0
  %2428 = vmatpush.msra.mxu0 %v1987
  %2429 = vmatpush.msra.mxu0 %v1986
  %2430 = vmatpush.msra.mxu0 %v1985
  %2431 = vmatpush.msra.mxu0 %v1984
  %2432 = vmatpush.msra.mxu0 %v1983
  %2433 = vmatpush.msra.mxu0 %v1982
  %2434 = vmatpush.msra.mxu0 %v1981
  %2435 = vmatpush.msra.mxu0 %v1980
  %2436 = vmatpush.msra.mxu0 %v1979
  %2437 = vmatpush.msra.mxu0 %v1978
  %2438 = vmatpush.msra.mxu0 %v1977
  %2439 = vmatpush.msra.mxu0 %v1976
  %2440 = vmatpush.msra.mxu0 %v1975
  %2441 = vmatpush.msra.mxu0 %v1974
  %2442 = vmatpush.msra.mxu0 %v1973
  %2443 = vmatpush.msra.mxu0 %v1972
  %2444 = vmatmul.f32.gmra.mxu0 %v2037
  %v2445 = vpop.f32.mrf.mxu0
  %v2446 = vadd.f32 %v2408, %v2445
  %2447 = vmatmul.f32.gmra.mxu0 %v2054
  %v2448 = vpop.f32.mrf.mxu0
  %v2449 = vadd.f32 %v2411, %v2448
  %2450 = vmatmul.f32.gmra.mxu0 %v2070
  %v2451 = vpop.f32.mrf.mxu0
  %v2452 = vadd.f32 %v2414, %v2451
  %2453 = vmatmul.f32.gmra.mxu0 %v2086
  %v2454 = vpop.f32.mrf.mxu0
  %v2455 = vadd.f32 %v2417, %v2454
  %2456 = vmatmul.f32.gmra.mxu0 %v2102
  %v2457 = vpop.f32.mrf.mxu0
  %v2458 = vadd.f32 %v2420, %v2457
  %2459 = vmatmul.f32.gmra.mxu0 %v2118
  %v2460 = vpop.f32.mrf.mxu0
  %v2461 = vadd.f32 %v2423, %v2460
  %2462 = vmatmul.f32.gmra.mxu0 %v2134
  %v2463 = vpop.f32.mrf.mxu0
  %v2464 = vadd.f32 %v2426, %v2463
  %2465 = vdwg.mxu0
  %2466 = vmatpush.msra.mxu0 0.0
  %2467 = vmatpush.msra.mxu0 0.0
  %2468 = vmatpush.msra.mxu0 0.0
  %2469 = vmatpush.msra.mxu0 0.0
  %2470 = vmatpush.msra.mxu0 %v1999
  %2471 = vmatpush.msra.mxu0 %v1998
  %2472 = vmatpush.msra.mxu0 %v1997
  %2473 = vmatpush.msra.mxu0 %v1996
  %2474 = vmatpush.msra.mxu0 %v1995
  %2475 = vmatpush.msra.mxu0 %v1994
  %2476 = vmatpush.msra.mxu0 %v1993
  %2477 = vmatpush.msra.mxu0 %v1992
  %2478 = vmatpush.msra.mxu0 %v1991
  %2479 = vmatpush.msra.mxu0 %v1990
  %2480 = vmatpush.msra.mxu0 %v1989
  %2481 = vmatpush.msra.mxu0 %v1988
  %2482 = vmatmul.f32.gmra.mxu0 %v2186
  %v2483 = vpop.f32.mrf.mxu0
  %v2484 = vadd.f32 %v2446, %v2483
  %2485 = vmatmul.f32.gmra.mxu0 %v2188
  %v2486 = vpop.f32.mrf.mxu0
  %v2487 = vadd.f32 %v2449, %v2486
  %2488 = vmatmul.f32.gmra.mxu0 %v2190
  %v2489 = vpop.f32.mrf.mxu0
  %v2490 = vadd.f32 %v2452, %v2489
  %2491 = vmatmul.f32.gmra.mxu0 %v2192
  %v2492 = vpop.f32.mrf.mxu0
  %v2493 = vadd.f32 %v2455, %v2492
  %2494 = vmatmul.f32.gmra.mxu0 %v2194
  %v2495 = vpop.f32.mrf.mxu0
  %v2496 = vadd.f32 %v2458, %v2495
  %2497 = vmatmul.f32.gmra.mxu0 %v2196
  %v2498 = vpop.f32.mrf.mxu0
  %v2499 = vadd.f32 %v2461, %v2498
  %2500 = vmatmul.f32.gmra.mxu0 %v2198
  %v2501 = vpop.f32.mrf.mxu0
  %v2502 = vadd.f32 %v2464, %v2501
  %2503 = vdwg.mxu0
  %v2504 = vadd.f32 %v1852, %v2484
  %v2505 = vadd.f32 %v1853, %v2487
  %v2506 = vadd.f32 %v1854, %v2490
  %v2507 = vadd.f32 %v1855, %v2493
  %v2508 = vadd.f32 %v1856, %v2496
  %v2509 = vadd.f32 %v1857, %v2499
  %v2510 = vadd.f32 %v1858, %v2502
  %v2511 = vld [vmem:[%s2] sm:$0x1]
  %v2513 = vperm.slane %v2511, 0
  %v2515 = vadd.f32 %v2504, %v2513
  %v2516 = vadd.f32 %v2505, %v2513
  %v2517 = vadd.f32 %v2506, %v2513
  %v2518 = vadd.f32 %v2507, %v2513
  %v2519 = vadd.f32 %v2508, %v2513
  %v2520 = vadd.f32 %v2509, %v2513
  %v2521 = vadd.f32 %v2510, %v2513
  %v2522 = vtanh.pop %v2515
  %v2523 = vtanh.pop %v2516
  %v2524 = vtanh.pop %v2517
  %v2525 = vtanh.pop %v2518
  %v2526 = vtanh.pop %v2519
  %v2527 = vtanh.pop %v2520
  %v2528 = vtanh.pop %v2521
  %vm2529 = vcmask 228352
  %2530 = vst.msk [vmem:[%s3] sm:$0xff] %vm2529, %v2522
  %2531 = vst.msk [vmem:[%s3 + $0x8] sm:$0xff] %vm2529, %v2523
  %2532 = vst.msk [vmem:[%s3 + $0x10] sm:$0xff] %vm2529, %v2524
  %2533 = vst.msk [vmem:[%s3 + $0x18] sm:$0xff] %vm2529, %v2525
  %2534 = vst.msk [vmem:[%s3 + $0x20] sm:$0xff] %vm2529, %v2526
  %2535 = vst.msk [vmem:[%s3 + $0x28] sm:$0xff] %vm2529, %v2527
  %2536 = vst.msk [vmem:[%s3 + $0x30] sm:$0xff] %vm2529, %v2528
  // Predicated region
  $region14: #{generator_forward.7} parent=0 // pred_check
    _
  $region15: #{generator_forward.7} parent=0 // pred_check_branch
    %2538 = sbr.rel (0) target = $region17
  $region16: #{generator_forward.7} parent=0 // pred_region
    _
  $region17: #{generator_forward.7} parent=0 // pred_fallthru
    _
  // Predicated region
  $region18: #{generator_forward.7} parent=0 // pred_check
    _
  $region19: #{generator_forward.7} parent=0 // pred_check_branch
    %2540 = sbr.rel (0) target = $region21
  $region20: #{generator_forward.7} parent=0 // pred_region
    _
  $region21: #{generator_forward.7} parent=0 // pred_fallthru
    _

</llo_original>
